<compile_context>
chip_gen: v5e
topology: v5e:2x2
jax: 0.10.0
libtpu: 0.0.40
codegen_flags: <defaults>
</compile_context>

<pallas_src>
import functools

import jax
import jax.numpy as jnp
from jax.experimental import pallas as pl
from jax.experimental.pallas import tpu as pltpu

LN_EPS = 1e-5  # nn.LayerNorm default


def _round_up(n, m):
    return (n + m - 1) // m * m


# ----------------------------------------------------------------------------
# Fused kernel: one grid step = TB batch elements (TB*S matmul rows).
#   LN -> fused QKV -> per-head attention via lane masks -> single out-projection ->
#   residual -> LN -> GELU FFN -> residual -> final LN -> mean over seq -> class_fc.
# ----------------------------------------------------------------------------
def _ect_fused_kernel(n_head, d_real,
                      x_ref, vecs_ref, wqkv_ref, wo_ref, w1_ref, w2_ref, wc_ref,
                      o_ref):
    f32, bf16 = jnp.float32, jnp.bfloat16
    x3 = x_ref[...]                                   # (TB, S, Dp) f32, padded lanes zero
    TB, S, Dp = x3.shape
    Fp = w1_ref.shape[1]
    Op = wc_ref.shape[1]
    rows = TB * S
    x = x3.reshape(rows, Dp)                          # S multiple of 8 -> layout-free reshape
    hd = d_real // n_head
    scale = 1.0 / float(hd) ** 0.5
    inv_d = 1.0 / d_real

    # Consolidated bias/LN rows (see pack_params); every slice starts at lane 0 (aligned).
    ln1_g = vecs_ref[0:1, 0:Dp]
    ln1_b = vecs_ref[1:2, 0:Dp]
    bo    = vecs_ref[2:3, 0:Dp]
    ln2_g = vecs_ref[3:4, 0:Dp]
    ln2_b = vecs_ref[4:5, 0:Dp]
    b2    = vecs_ref[5:6, 0:Dp]
    lnf_g = vecs_ref[6:7, 0:Dp]
    lnf_b = vecs_ref[7:8, 0:Dp]
    bqkv  = vecs_ref[8:9, 0:3 * Dp]
    b1    = vecs_ref[9:10, 0:Fp]
    bc    = vecs_ref[10:11, 0:Op]

    def ln(z, g, b):
        # Padded lanes of z are exactly zero, so plain sums * 1/d_real give the real-lane
        # moments; gamma/beta are zero on padded lanes so the output stays zero there.
        mu = jnp.sum(z, axis=-1, keepdims=True) * inv_d
        ex2 = jnp.sum(z * z, axis=-1, keepdims=True) * inv_d
        var = jnp.maximum(ex2 - mu * mu, 0.0)
        return (z - mu) * jax.lax.rsqrt(var + LN_EPS) * g + b

    # --- pre-LN multi-head self-attention (fused QKV over all TB*S rows) ---
    h = ln(x, ln1_g, ln1_b)
    qkv = jnp.dot(h.astype(bf16), wqkv_ref[...], preferred_element_type=f32) + bqkv
    qkv3 = qkv.astype(bf16).reshape(TB, S, 3 * Dp)
    q = qkv3[:, :, 0:Dp]
    k = qkv3[:, :, Dp:2 * Dp]
    v = qkv3[:, :, 2 * Dp:3 * Dp]

    # Per-head contraction via lane masks: masking K restricts the score contraction to head
    # hh's dims; masking V makes each P@V term land only in head hh's lanes, so the sum over
    # heads directly yields the concatenated-head layout (no unaligned slices, no concat).
    lane = jax.lax.broadcasted_iota(jnp.int32, (TB, S, Dp), 2)
    attn3 = jnp.zeros((TB, S, Dp), f32)
    for hh in range(n_head):                          # static unrolled head loop
        hm = (lane >= hh * hd) & (lane < (hh + 1) * hd)
        kh = jnp.where(hm, k, jnp.zeros_like(k))
        vh = jnp.where(hm, v, jnp.zeros_like(v))
        s = jax.lax.dot_general(q, kh, (((2,), (2,)), ((0,), (0,))),
                                preferred_element_type=f32) * scale      # (TB, S, S)
        m = jnp.max(s, axis=-1, keepdims=True)
        e = jnp.exp(s - m)
        p = e / jnp.sum(e, axis=-1, keepdims=True)
        attn3 = attn3 + jax.lax.dot_general(p.astype(bf16), vh,
                                            (((2,), (1,)), ((0,), (0,))),
                                            preferred_element_type=f32)  # (TB, S, Dp)

    # Single out-projection matmul over the already-concatenated head outputs.
    proj = jnp.dot(attn3.reshape(rows, Dp).astype(bf16), wo_ref[...],
                   preferred_element_type=f32) + bo
    x2 = x + proj                                     # residual (dropout = identity in eval)

    # --- pre-LN feed-forward (hidden = r_ff * D, GELU) ---
    h2 = ln(x2, ln2_g, ln2_b)
    ff = jnp.dot(h2.astype(bf16), w1_ref[...], preferred_element_type=f32) + b1
    # TODO(synk): PyTorch nn.GELU() default is exact erf; tanh approximation used here.
    ff = jax.nn.gelu(ff, approximate=True)
    ff = jnp.dot(ff.astype(bf16), w2_ref[...], preferred_element_type=f32) + b2
    y = x2 + ff                                       # (rows, Dp), padded lanes still zero

    # --- fused ECT head: LayerNorm -> mean over sequence -> class_fc ---
    zn = ln(y, lnf_g, lnf_b).reshape(TB, S, Dp)
    pooled = jnp.sum(zn, axis=1) * (1.0 / S)                                  # (TB, Dp)
    logits = jnp.dot(pooled.astype(bf16), wc_ref[...],
                     preferred_element_type=f32) + bc                        # (TB, Op)
    o_ref[...] = logits.reshape(TB, 1, Op)


# ----------------------------------------------------------------------------
# Wrapper: pads x on the lane dim, picks a batch block, one pallas_call, slices logits.
# ----------------------------------------------------------------------------
def ect_forward(x, p, n_head, d_real, o_real):
    B, S, D = x.shape
    Dp = p["wo"].shape[0]
    Fp = p["w1"].shape[1]
    Op = p["wc"].shape[1]
    if D < Dp:
        x = jnp.pad(x, ((0, 0), (0, 0), (0, Dp - D)))

    # Batch block: target ~256 MXU rows per grid step (fills a 256-wide systolic array);
    # for small batches process everything in a single grid step -> weights streamed once.
    tb = B if B * S <= 256 else max(1, 256 // S)
    while B % tb:
        tb -= 1
    n_steps = B // tb

    def wspec(arr):
        # Constant operands: untiled, constant block index -> single-buffer the pipeline.
        return pl.BlockSpec(arr.shape, lambda b: (0, 0), pipeline_mode=pl.Buffered(1))

    weight_bytes = sum(int(v.size) * v.dtype.itemsize for v in p.values())
    rows_total = B * S
    flops = (2 * rows_total * Dp * (3 * Dp)          # fused QKV
             + 4 * B * n_head * S * S * Dp           # scores + P@V (masked contraction)
             + 2 * rows_total * Dp * Dp              # out-projection
             + 4 * rows_total * Dp * Fp              # FFN (two matmuls)
             + 2 * B * Dp * Op)                      # classifier
    transcendentals = rows_total * (n_head * S + Fp) + 3 * rows_total
    bytes_accessed = weight_bytes + rows_total * Dp * 4 + B * Op * 4

    # Explicit VMEM budget: x block (double-buffered) + single-buffered weights + f32
    # intermediates (qkv, ff, residuals) + margin.  Stays far below v7x's 64 MiB physical.
    est = (2 * tb * S * Dp * 4 + weight_bytes
           + tb * S * (3 * Dp + Fp + 4 * Dp) * 4 + (4 << 20))
    vmem_limit = int(min(max(est, 32 << 20), 60 << 20))

    out = pl.pallas_call(
        functools.partial(_ect_fused_kernel, n_head, d_real),
        out_shape=jax.ShapeDtypeStruct((B, 1, Op), jnp.float32),
        grid_spec=pl.GridSpec(
            grid=(n_steps,),
            in_specs=[
                pl.BlockSpec((tb, S, Dp), lambda b: (b, 0, 0)),   # x (batch block)
                wspec(p["vecs"]),
                wspec(p["wqkv"]),
                wspec(p["wo"]),
                wspec(p["w1"]),
                wspec(p["w2"]),
                wspec(p["wc"]),
            ],
            out_specs=pl.BlockSpec((tb, 1, Op), lambda b: (b, 0, 0)),
        ),
        compiler_params=pltpu.CompilerParams(
            dimension_semantics=("arbitrary",) if n_steps == 1 else ("parallel",),
            vmem_limit_bytes=vmem_limit),
        cost_estimate=pl.CostEstimate(flops=int(flops),
                                      transcendentals=int(transcendentals),
                                      bytes_accessed=int(bytes_accessed)),
    )(x, p["vecs"], p["wqkv"], p["wo"], p["w1"], p["w2"], p["wc"])
    return out.reshape(B, Op)[:, :o_real]


# ----------------------------------------------------------------------------
# Parameter packing: dense weights padded to 128-lane multiples (no per-head slots),
# bf16 weights, all (1, n)-shaped LN/bias vectors stacked into ONE f32 operand.
# Only the LAST block is packed: the reference loop applies every block to the original x
# and keeps only the last output, so this is output-identical.
# ----------------------------------------------------------------------------
def pack_params(params, n_head):
    blk = params["blocks"][-1]
    D = params["ln_g"].shape[-1]
    O = params["wc"].shape[-1]
    F = blk["w1"].shape[-1]
    Dp = _round_up(D, 128)
    Fp = _round_up(F, 128)
    Op = _round_up(O, 128)
    W = max(3 * Dp, Fp, Op)
    bf16 = jnp.bfloat16

    def pad2(w, r, c):
        return jnp.pad(w, ((0, r - w.shape[0]), (0, c - w.shape[1])))

    def padc(v, c):
        v = jnp.asarray(v, jnp.float32).reshape(1, -1)
        return jnp.pad(v, ((0, 0), (0, c - v.shape[1])))

    # QKV bias row laid out to match the wqkv column layout (each projection padded to Dp).
    bqkv_row = jnp.concatenate([padc(blk["bq"], Dp), padc(blk["bk"], Dp),
                                padc(blk["bv"], Dp)], axis=1)                # (1, 3*Dp)

    vecs = jnp.concatenate([
        padc(blk["ln1_g"], W), padc(blk["ln1_b"], W),        # rows 0,1
        padc(blk["bo"], W),                                  # row 2
        padc(blk["ln2_g"], W), padc(blk["ln2_b"], W),        # rows 3,4
        padc(blk["b2"], W),                                  # row 5
        padc(params["ln_g"], W), padc(params["ln_b"], W),    # rows 6,7
        padc(bqkv_row, W),                                   # row 8
        padc(blk["b1"], W),                                  # row 9
        padc(params["bc"], W),                               # row 10
    ], axis=0).astype(jnp.float32)                           # (11, W) f32

    wqkv = jnp.concatenate([pad2(blk["wq"], Dp, Dp), pad2(blk["wk"], Dp, Dp),
                            pad2(blk["wv"], Dp, Dp)], axis=1).astype(bf16)   # (Dp, 3*Dp)

    return dict(
        vecs=vecs,
        wqkv=wqkv,
        wo=pad2(blk["wo"], Dp, Dp).astype(bf16),
        w1=pad2(blk["w1"], Dp, Fp).astype(bf16),
        w2=pad2(blk["w2"], Fp, Dp).astype(bf16),
        wc=pad2(params["wc"], Dp, Op).astype(bf16),
    )


# ----------------------------------------------------------------------------
# Deterministic synthetic parameter initialization (PyTorch-style layout, f32).
# ----------------------------------------------------------------------------
def init_params(key, embed_dim, output_dim, num_blocks, r_ff=4):
    def normal(k, shape, scale=0.02):
        return scale * jax.random.normal(k, shape, jnp.float32)

    keys = jax.random.split(key, num_blocks + 1)
    Fdim = r_ff * embed_dim
    blocks = []
    for i in range(num_blocks):
        bk = jax.random.split(keys[i], 6)
        blocks.append(dict(
            ln1_g=jnp.ones((1, embed_dim), jnp.float32),
            ln1_b=jnp.zeros((1, embed_dim), jnp.float32),
            wq=normal(bk[0], (embed_dim, embed_dim)),
            bq=jnp.zeros((1, embed_dim), jnp.float32),
            wk=normal(bk[1], (embed_dim, embed_dim)),
            bk=jnp.zeros((1, embed_dim), jnp.float32),
            wv=normal(bk[2], (embed_dim, embed_dim)),
            bv=jnp.zeros((1, embed_dim), jnp.float32),
            wo=normal(bk[3], (embed_dim, embed_dim)),
            bo=jnp.zeros((1, embed_dim), jnp.float32),
            ln2_g=jnp.ones((1, embed_dim), jnp.float32),
            ln2_b=jnp.zeros((1, embed_dim), jnp.float32),
            w1=normal(bk[4], (embed_dim, Fdim)),
            b1=jnp.zeros((1, Fdim), jnp.float32),
            w2=normal(bk[5], (Fdim, embed_dim)),
            b2=jnp.zeros((1, embed_dim), jnp.float32),
        ))
    hk = jax.random.split(keys[-1], 2)
    return dict(
        blocks=blocks,
        ln_g=jnp.ones((1, embed_dim), jnp.float32),
        ln_b=jnp.zeros((1, embed_dim), jnp.float32),
        wc=normal(hk[0], (embed_dim, output_dim)),
        bc=jnp.zeros((1, output_dim), jnp.float32),
    )


if __name__ == "__main__":
    # model_name '8M' -> embed_dim = 320 (smallest option in the module)
    EMBED_DIM = 320
    OUTPUT_DIM = 10
    NUM_BLOCKS = 2
    N_HEAD = 4        # head_dim = 80
    B, S = 2, 8

    key = jax.random.PRNGKey(0)
    xkey, pkey = jax.random.split(key)
    x = jax.random.normal(xkey, (B, S, EMBED_DIM), jnp.float32)  # fasta_embeds
    params = init_params(pkey, EMBED_DIM, OUTPUT_DIM, NUM_BLOCKS)
    packed = pack_params(params, N_HEAD)             # one-time weight packing (bf16, padded)

    fwd = jax.jit(lambda xx, pp: ect_forward(xx, pp, N_HEAD, EMBED_DIM, OUTPUT_DIM))
    out = fwd(x, packed)
    jax.block_until_ready(out)
    assert out.shape == (B, OUTPUT_DIM)
    assert bool(jnp.isfinite(out).all())
    print("KERNEL_OK")
</pallas_src>

<mosaic_0001>
module attributes {stable_mosaic.version = 11 : i64} {
  func.func @_ect_fused_kernel(%arg0: i32, %arg1: memref<2x8x384xf32, #tpu.memory_space<vmem>>, %arg2: memref<11x1280xf32, #tpu.memory_space<vmem>>, %arg3: memref<384x1152xbf16, #tpu.memory_space<vmem>>, %arg4: memref<384x384xbf16, #tpu.memory_space<vmem>>, %arg5: memref<384x1280xbf16, #tpu.memory_space<vmem>>, %arg6: memref<1280x384xbf16, #tpu.memory_space<vmem>>, %arg7: memref<384x128xbf16, #tpu.memory_space<vmem>>, %arg8: memref<2x1x128xf32, #tpu.memory_space<vmem>>) attributes {dimension_semantics = [#tpu.dimension_semantics<arbitrary>], iteration_bounds = array<i64: 1>, scalar_prefetch = 0 : i64, scratch_operands = 0 : i64, tpu.core_type = #tpu.core_type<tc>, window_params = [{transform_indices = @transform_0, window_bounds = array<i64: 2, 8, 384>}, {pipeline_mode = #tpu.pipeline_mode<synchronous>, transform_indices = @transform_1, window_bounds = array<i64: 11, 1280>}, {pipeline_mode = #tpu.pipeline_mode<synchronous>, transform_indices = @transform_2, window_bounds = array<i64: 384, 1152>}, {pipeline_mode = #tpu.pipeline_mode<synchronous>, transform_indices = @transform_3, window_bounds = array<i64: 384, 384>}, {pipeline_mode = #tpu.pipeline_mode<synchronous>, transform_indices = @transform_4, window_bounds = array<i64: 384, 1280>}, {pipeline_mode = #tpu.pipeline_mode<synchronous>, transform_indices = @transform_5, window_bounds = array<i64: 1280, 384>}, {pipeline_mode = #tpu.pipeline_mode<synchronous>, transform_indices = @transform_6, window_bounds = array<i64: 384, 128>}, {transform_indices = @transform_7, window_bounds = array<i64: 2, 1, 128>}]} {
    %c0 = arith.constant 0 : index
    %c0_0 = arith.constant 0 : index
    %c0_1 = arith.constant 0 : index
    %0 = vector.load %arg1[%c0, %c0_0, %c0_1] : memref<2x8x384xf32, #tpu.memory_space<vmem>>, vector<2x8x384xf32>
    %1 = vector.shape_cast %0 : vector<2x8x384xf32> to vector<16x384xf32>
    %c0_2 = arith.constant 0 : index
    %c0_3 = arith.constant 0 : index
    %2 = vector.load %arg2[%c0_2, %c0_3] : memref<11x1280xf32, #tpu.memory_space<vmem>>, vector<1x384xf32>
    %c1 = arith.constant 1 : index
    %c0_4 = arith.constant 0 : index
    %3 = vector.load %arg2[%c1, %c0_4] : memref<11x1280xf32, #tpu.memory_space<vmem>>, vector<1x384xf32>
    %c2 = arith.constant 2 : index
    %c0_5 = arith.constant 0 : index
    %4 = vector.load %arg2[%c2, %c0_5] : memref<11x1280xf32, #tpu.memory_space<vmem>>, vector<1x384xf32>
    %c3 = arith.constant 3 : index
    %c0_6 = arith.constant 0 : index
    %5 = vector.load %arg2[%c3, %c0_6] : memref<11x1280xf32, #tpu.memory_space<vmem>>, vector<1x384xf32>
    %c4 = arith.constant 4 : index
    %c0_7 = arith.constant 0 : index
    %6 = vector.load %arg2[%c4, %c0_7] : memref<11x1280xf32, #tpu.memory_space<vmem>>, vector<1x384xf32>
    %c5 = arith.constant 5 : index
    %c0_8 = arith.constant 0 : index
    %7 = vector.load %arg2[%c5, %c0_8] : memref<11x1280xf32, #tpu.memory_space<vmem>>, vector<1x384xf32>
    %c6 = arith.constant 6 : index
    %c0_9 = arith.constant 0 : index
    %8 = vector.load %arg2[%c6, %c0_9] : memref<11x1280xf32, #tpu.memory_space<vmem>>, vector<1x384xf32>
    %c7 = arith.constant 7 : index
    %c0_10 = arith.constant 0 : index
    %9 = vector.load %arg2[%c7, %c0_10] : memref<11x1280xf32, #tpu.memory_space<vmem>>, vector<1x384xf32>
    %c8 = arith.constant 8 : index
    %c0_11 = arith.constant 0 : index
    %10 = vector.load %arg2[%c8, %c0_11] : memref<11x1280xf32, #tpu.memory_space<vmem>>, vector<1x1152xf32>
    %c9 = arith.constant 9 : index
    %c0_12 = arith.constant 0 : index
    %11 = vector.load %arg2[%c9, %c0_12] : memref<11x1280xf32, #tpu.memory_space<vmem>>, vector<1x1280xf32>
    %c10 = arith.constant 10 : index
    %c0_13 = arith.constant 0 : index
    %12 = vector.load %arg2[%c10, %c0_13] : memref<11x1280xf32, #tpu.memory_space<vmem>>, vector<1x128xf32>
    %cst = arith.constant dense<0.000000e+00> : vector<16xf32>
    %13 = vector.multi_reduction <add>, %1, %cst [1] : vector<16x384xf32> to vector<16xf32>
    %14 = vector.shape_cast %13 : vector<16xf32> to vector<16x1xf32>
    %cst_14 = arith.constant 3.125000e-03 : f32
    %15 = vector.broadcast %cst_14 : f32 to vector<16x1xf32>
    %16 = arith.mulf %14, %15 : vector<16x1xf32>
    %17 = arith.mulf %1, %1 : vector<16x384xf32>
    %cst_15 = arith.constant dense<0.000000e+00> : vector<16xf32>
    %18 = vector.multi_reduction <add>, %17, %cst_15 [1] : vector<16x384xf32> to vector<16xf32>
    %19 = vector.shape_cast %18 : vector<16xf32> to vector<16x1xf32>
    %cst_16 = arith.constant 3.125000e-03 : f32
    %20 = vector.broadcast %cst_16 : f32 to vector<16x1xf32>
    %21 = arith.mulf %19, %20 : vector<16x1xf32>
    %22 = arith.mulf %16, %16 : vector<16x1xf32>
    %23 = arith.subf %21, %22 : vector<16x1xf32>
    %cst_17 = arith.constant 0.000000e+00 : f32
    %24 = vector.broadcast %cst_17 : f32 to vector<16x1xf32>
    %25 = arith.maximumf %23, %24 : vector<16x1xf32>
    %26 = vector.broadcast %16 : vector<16x1xf32> to vector<16x384xf32>
    %27 = arith.subf %1, %26 : vector<16x384xf32>
    %cst_18 = arith.constant 9.99999974E-6 : f32
    %28 = vector.broadcast %cst_18 : f32 to vector<16x1xf32>
    %29 = arith.addf %25, %28 : vector<16x1xf32>
    %30 = math.rsqrt %29 : vector<16x1xf32>
    %31 = vector.broadcast %30 : vector<16x1xf32> to vector<16x384xf32>
    %32 = arith.mulf %27, %31 : vector<16x384xf32>
    %33 = vector.broadcast %2 : vector<1x384xf32> to vector<16x384xf32>
    %34 = arith.mulf %32, %33 : vector<16x384xf32>
    %35 = vector.broadcast %3 : vector<1x384xf32> to vector<16x384xf32>
    %36 = arith.addf %34, %35 : vector<16x384xf32>
    %37 = arith.truncf %36 : vector<16x384xf32> to vector<16x384xbf16>
    %c0_19 = arith.constant 0 : index
    %c0_20 = arith.constant 0 : index
    %38 = vector.load %arg3[%c0_19, %c0_20] : memref<384x1152xbf16, #tpu.memory_space<vmem>>, vector<384x1152xbf16>
    %cst_21 = arith.constant dense<0.000000e+00> : vector<16x1152xf32>
    %39 = tpu.matmul %37, %38, %cst_21 {dimension_numbers = #tpu.dot_dimension_numbers<[1], [0], [0], [1], [0, 0, 1, 1], [], []>} : vector<16x384xbf16>, vector<384x1152xbf16>, vector<16x1152xf32> -> vector<16x1152xf32>
    %40 = vector.broadcast %10 : vector<1x1152xf32> to vector<16x1152xf32>
    %41 = arith.addf %39, %40 : vector<16x1152xf32>
    %42 = arith.truncf %41 : vector<16x1152xf32> to vector<16x1152xbf16>
    %43 = vector.shape_cast %42 : vector<16x1152xbf16> to vector<2x8x1152xbf16>
    %44 = vector.extract_strided_slice %43 {offsets = [0, 0, 0], sizes = [2, 8, 384], strides = [1, 1, 1]} : vector<2x8x1152xbf16> to vector<2x8x384xbf16>
    %45 = vector.extract_strided_slice %43 {offsets = [0, 0, 384], sizes = [2, 8, 384], strides = [1, 1, 1]} : vector<2x8x1152xbf16> to vector<2x8x384xbf16>
    %46 = vector.extract_strided_slice %43 {offsets = [0, 0, 768], sizes = [2, 8, 384], strides = [1, 1, 1]} : vector<2x8x1152xbf16> to vector<2x8x384xbf16>
    %47 = tpu.iota {dimensions = array<i32: 2>} : vector<2x8x384xi32>
    %cst_22 = arith.constant 0.000000e+00 : f32
    %48 = vector.broadcast %cst_22 : f32 to vector<2x8x384xf32>
    %c0_i32 = arith.constant 0 : i32
    %49 = vector.broadcast %c0_i32 : i32 to vector<2x8x384xi32>
    %50 = arith.cmpi sge, %47, %49 : vector<2x8x384xi32>
    %c80_i32 = arith.constant 80 : i32
    %51 = vector.broadcast %c80_i32 : i32 to vector<2x8x384xi32>
    %52 = arith.cmpi slt, %47, %51 : vector<2x8x384xi32>
    %53 = arith.andi %50, %52 : vector<2x8x384xi1>
    %cst_23 = arith.constant 0.000000e+00 : bf16
    %54 = vector.broadcast %cst_23 : bf16 to vector<2x8x384xbf16>
    %55 = arith.select %53, %45, %54 : vector<2x8x384xi1>, vector<2x8x384xbf16>
    %cst_24 = arith.constant 0.000000e+00 : bf16
    %56 = vector.broadcast %cst_24 : bf16 to vector<2x8x384xbf16>
    %57 = arith.select %53, %46, %56 : vector<2x8x384xi1>, vector<2x8x384xbf16>
    %cst_25 = arith.constant dense<0.000000e+00> : vector<2x8x8xf32>
    %58 = tpu.matmul %44, %55, %cst_25 {dimension_numbers = #tpu.dot_dimension_numbers<[2], [2], [1], [1], [0, 0, 0, 1, 1, 1], [0], [0]>} : vector<2x8x384xbf16>, vector<2x8x384xbf16>, vector<2x8x8xf32> -> vector<2x8x8xf32>
    %cst_26 = arith.constant 0.111803398 : f32
    %59 = vector.broadcast %cst_26 : f32 to vector<2x8x8xf32>
    %60 = arith.mulf %58, %59 : vector<2x8x8xf32>
    %cst_27 = arith.constant dense<0xFF800000> : vector<2x8xf32>
    %61 = vector.multi_reduction <maximumf>, %60, %cst_27 [2] : vector<2x8x8xf32> to vector<2x8xf32>
    %62 = vector.shape_cast %61 : vector<2x8xf32> to vector<2x8x1xf32>
    %63 = vector.broadcast %62 : vector<2x8x1xf32> to vector<2x8x8xf32>
    %64 = arith.subf %60, %63 : vector<2x8x8xf32>
    %65 = math.exp %64 : vector<2x8x8xf32>
    %cst_28 = arith.constant dense<0.000000e+00> : vector<2x8xf32>
    %66 = vector.multi_reduction <add>, %65, %cst_28 [2] : vector<2x8x8xf32> to vector<2x8xf32>
    %67 = vector.shape_cast %66 : vector<2x8xf32> to vector<2x8x1xf32>
    %68 = vector.broadcast %67 : vector<2x8x1xf32> to vector<2x8x8xf32>
    %69 = arith.divf %65, %68 : vector<2x8x8xf32>
    %70 = arith.truncf %69 : vector<2x8x8xf32> to vector<2x8x8xbf16>
    %cst_29 = arith.constant dense<0.000000e+00> : vector<2x8x384xf32>
    %71 = tpu.matmul %70, %57, %cst_29 {dimension_numbers = #tpu.dot_dimension_numbers<[2], [1], [1], [2], [0, 0, 0, 1, 1, 2], [0], [0]>} : vector<2x8x8xbf16>, vector<2x8x384xbf16>, vector<2x8x384xf32> -> vector<2x8x384xf32>
    %72 = arith.addf %48, %71 : vector<2x8x384xf32>
    %c80_i32_30 = arith.constant 80 : i32
    %73 = vector.broadcast %c80_i32_30 : i32 to vector<2x8x384xi32>
    %74 = arith.cmpi sge, %47, %73 : vector<2x8x384xi32>
    %c160_i32 = arith.constant 160 : i32
    %75 = vector.broadcast %c160_i32 : i32 to vector<2x8x384xi32>
    %76 = arith.cmpi slt, %47, %75 : vector<2x8x384xi32>
    %77 = arith.andi %74, %76 : vector<2x8x384xi1>
    %cst_31 = arith.constant 0.000000e+00 : bf16
    %78 = vector.broadcast %cst_31 : bf16 to vector<2x8x384xbf16>
    %79 = arith.select %77, %45, %78 : vector<2x8x384xi1>, vector<2x8x384xbf16>
    %cst_32 = arith.constant 0.000000e+00 : bf16
    %80 = vector.broadcast %cst_32 : bf16 to vector<2x8x384xbf16>
    %81 = arith.select %77, %46, %80 : vector<2x8x384xi1>, vector<2x8x384xbf16>
    %cst_33 = arith.constant dense<0.000000e+00> : vector<2x8x8xf32>
    %82 = tpu.matmul %44, %79, %cst_33 {dimension_numbers = #tpu.dot_dimension_numbers<[2], [2], [1], [1], [0, 0, 0, 1, 1, 1], [0], [0]>} : vector<2x8x384xbf16>, vector<2x8x384xbf16>, vector<2x8x8xf32> -> vector<2x8x8xf32>
    %cst_34 = arith.constant 0.111803398 : f32
    %83 = vector.broadcast %cst_34 : f32 to vector<2x8x8xf32>
    %84 = arith.mulf %82, %83 : vector<2x8x8xf32>
    %cst_35 = arith.constant dense<0xFF800000> : vector<2x8xf32>
    %85 = vector.multi_reduction <maximumf>, %84, %cst_35 [2] : vector<2x8x8xf32> to vector<2x8xf32>
    %86 = vector.shape_cast %85 : vector<2x8xf32> to vector<2x8x1xf32>
    %87 = vector.broadcast %86 : vector<2x8x1xf32> to vector<2x8x8xf32>
    %88 = arith.subf %84, %87 : vector<2x8x8xf32>
    %89 = math.exp %88 : vector<2x8x8xf32>
    %cst_36 = arith.constant dense<0.000000e+00> : vector<2x8xf32>
    %90 = vector.multi_reduction <add>, %89, %cst_36 [2] : vector<2x8x8xf32> to vector<2x8xf32>
    %91 = vector.shape_cast %90 : vector<2x8xf32> to vector<2x8x1xf32>
    %92 = vector.broadcast %91 : vector<2x8x1xf32> to vector<2x8x8xf32>
    %93 = arith.divf %89, %92 : vector<2x8x8xf32>
    %94 = arith.truncf %93 : vector<2x8x8xf32> to vector<2x8x8xbf16>
    %cst_37 = arith.constant dense<0.000000e+00> : vector<2x8x384xf32>
    %95 = tpu.matmul %94, %81, %cst_37 {dimension_numbers = #tpu.dot_dimension_numbers<[2], [1], [1], [2], [0, 0, 0, 1, 1, 2], [0], [0]>} : vector<2x8x8xbf16>, vector<2x8x384xbf16>, vector<2x8x384xf32> -> vector<2x8x384xf32>
    %96 = arith.addf %72, %95 : vector<2x8x384xf32>
    %c160_i32_38 = arith.constant 160 : i32
    %97 = vector.broadcast %c160_i32_38 : i32 to vector<2x8x384xi32>
    %98 = arith.cmpi sge, %47, %97 : vector<2x8x384xi32>
    %c240_i32 = arith.constant 240 : i32
    %99 = vector.broadcast %c240_i32 : i32 to vector<2x8x384xi32>
    %100 = arith.cmpi slt, %47, %99 : vector<2x8x384xi32>
    %101 = arith.andi %98, %100 : vector<2x8x384xi1>
    %cst_39 = arith.constant 0.000000e+00 : bf16
    %102 = vector.broadcast %cst_39 : bf16 to vector<2x8x384xbf16>
    %103 = arith.select %101, %45, %102 : vector<2x8x384xi1>, vector<2x8x384xbf16>
    %cst_40 = arith.constant 0.000000e+00 : bf16
    %104 = vector.broadcast %cst_40 : bf16 to vector<2x8x384xbf16>
    %105 = arith.select %101, %46, %104 : vector<2x8x384xi1>, vector<2x8x384xbf16>
    %cst_41 = arith.constant dense<0.000000e+00> : vector<2x8x8xf32>
    %106 = tpu.matmul %44, %103, %cst_41 {dimension_numbers = #tpu.dot_dimension_numbers<[2], [2], [1], [1], [0, 0, 0, 1, 1, 1], [0], [0]>} : vector<2x8x384xbf16>, vector<2x8x384xbf16>, vector<2x8x8xf32> -> vector<2x8x8xf32>
    %cst_42 = arith.constant 0.111803398 : f32
    %107 = vector.broadcast %cst_42 : f32 to vector<2x8x8xf32>
    %108 = arith.mulf %106, %107 : vector<2x8x8xf32>
    %cst_43 = arith.constant dense<0xFF800000> : vector<2x8xf32>
    %109 = vector.multi_reduction <maximumf>, %108, %cst_43 [2] : vector<2x8x8xf32> to vector<2x8xf32>
    %110 = vector.shape_cast %109 : vector<2x8xf32> to vector<2x8x1xf32>
    %111 = vector.broadcast %110 : vector<2x8x1xf32> to vector<2x8x8xf32>
    %112 = arith.subf %108, %111 : vector<2x8x8xf32>
    %113 = math.exp %112 : vector<2x8x8xf32>
    %cst_44 = arith.constant dense<0.000000e+00> : vector<2x8xf32>
    %114 = vector.multi_reduction <add>, %113, %cst_44 [2] : vector<2x8x8xf32> to vector<2x8xf32>
    %115 = vector.shape_cast %114 : vector<2x8xf32> to vector<2x8x1xf32>
    %116 = vector.broadcast %115 : vector<2x8x1xf32> to vector<2x8x8xf32>
    %117 = arith.divf %113, %116 : vector<2x8x8xf32>
    %118 = arith.truncf %117 : vector<2x8x8xf32> to vector<2x8x8xbf16>
    %cst_45 = arith.constant dense<0.000000e+00> : vector<2x8x384xf32>
    %119 = tpu.matmul %118, %105, %cst_45 {dimension_numbers = #tpu.dot_dimension_numbers<[2], [1], [1], [2], [0, 0, 0, 1, 1, 2], [0], [0]>} : vector<2x8x8xbf16>, vector<2x8x384xbf16>, vector<2x8x384xf32> -> vector<2x8x384xf32>
    %120 = arith.addf %96, %119 : vector<2x8x384xf32>
    %c240_i32_46 = arith.constant 240 : i32
    %121 = vector.broadcast %c240_i32_46 : i32 to vector<2x8x384xi32>
    %122 = arith.cmpi sge, %47, %121 : vector<2x8x384xi32>
    %c320_i32 = arith.constant 320 : i32
    %123 = vector.broadcast %c320_i32 : i32 to vector<2x8x384xi32>
    %124 = arith.cmpi slt, %47, %123 : vector<2x8x384xi32>
    %125 = arith.andi %122, %124 : vector<2x8x384xi1>
    %cst_47 = arith.constant 0.000000e+00 : bf16
    %126 = vector.broadcast %cst_47 : bf16 to vector<2x8x384xbf16>
    %127 = arith.select %125, %45, %126 : vector<2x8x384xi1>, vector<2x8x384xbf16>
    %cst_48 = arith.constant 0.000000e+00 : bf16
    %128 = vector.broadcast %cst_48 : bf16 to vector<2x8x384xbf16>
    %129 = arith.select %125, %46, %128 : vector<2x8x384xi1>, vector<2x8x384xbf16>
    %cst_49 = arith.constant dense<0.000000e+00> : vector<2x8x8xf32>
    %130 = tpu.matmul %44, %127, %cst_49 {dimension_numbers = #tpu.dot_dimension_numbers<[2], [2], [1], [1], [0, 0, 0, 1, 1, 1], [0], [0]>} : vector<2x8x384xbf16>, vector<2x8x384xbf16>, vector<2x8x8xf32> -> vector<2x8x8xf32>
    %cst_50 = arith.constant 0.111803398 : f32
    %131 = vector.broadcast %cst_50 : f32 to vector<2x8x8xf32>
    %132 = arith.mulf %130, %131 : vector<2x8x8xf32>
    %cst_51 = arith.constant dense<0xFF800000> : vector<2x8xf32>
    %133 = vector.multi_reduction <maximumf>, %132, %cst_51 [2] : vector<2x8x8xf32> to vector<2x8xf32>
    %134 = vector.shape_cast %133 : vector<2x8xf32> to vector<2x8x1xf32>
    %135 = vector.broadcast %134 : vector<2x8x1xf32> to vector<2x8x8xf32>
    %136 = arith.subf %132, %135 : vector<2x8x8xf32>
    %137 = math.exp %136 : vector<2x8x8xf32>
    %cst_52 = arith.constant dense<0.000000e+00> : vector<2x8xf32>
    %138 = vector.multi_reduction <add>, %137, %cst_52 [2] : vector<2x8x8xf32> to vector<2x8xf32>
    %139 = vector.shape_cast %138 : vector<2x8xf32> to vector<2x8x1xf32>
    %140 = vector.broadcast %139 : vector<2x8x1xf32> to vector<2x8x8xf32>
    %141 = arith.divf %137, %140 : vector<2x8x8xf32>
    %142 = arith.truncf %141 : vector<2x8x8xf32> to vector<2x8x8xbf16>
    %cst_53 = arith.constant dense<0.000000e+00> : vector<2x8x384xf32>
    %143 = tpu.matmul %142, %129, %cst_53 {dimension_numbers = #tpu.dot_dimension_numbers<[2], [1], [1], [2], [0, 0, 0, 1, 1, 2], [0], [0]>} : vector<2x8x8xbf16>, vector<2x8x384xbf16>, vector<2x8x384xf32> -> vector<2x8x384xf32>
    %144 = arith.addf %120, %143 : vector<2x8x384xf32>
    %145 = vector.shape_cast %144 : vector<2x8x384xf32> to vector<16x384xf32>
    %146 = arith.truncf %145 : vector<16x384xf32> to vector<16x384xbf16>
    %c0_54 = arith.constant 0 : index
    %c0_55 = arith.constant 0 : index
    %147 = vector.load %arg4[%c0_54, %c0_55] : memref<384x384xbf16, #tpu.memory_space<vmem>>, vector<384x384xbf16>
    %cst_56 = arith.constant dense<0.000000e+00> : vector<16x384xf32>
    %148 = tpu.matmul %146, %147, %cst_56 {dimension_numbers = #tpu.dot_dimension_numbers<[1], [0], [0], [1], [0, 0, 1, 1], [], []>} : vector<16x384xbf16>, vector<384x384xbf16>, vector<16x384xf32> -> vector<16x384xf32>
    %149 = vector.broadcast %4 : vector<1x384xf32> to vector<16x384xf32>
    %150 = arith.addf %148, %149 : vector<16x384xf32>
    %151 = arith.addf %1, %150 : vector<16x384xf32>
    %cst_57 = arith.constant dense<0.000000e+00> : vector<16xf32>
    %152 = vector.multi_reduction <add>, %151, %cst_57 [1] : vector<16x384xf32> to vector<16xf32>
    %153 = vector.shape_cast %152 : vector<16xf32> to vector<16x1xf32>
    %cst_58 = arith.constant 3.125000e-03 : f32
    %154 = vector.broadcast %cst_58 : f32 to vector<16x1xf32>
    %155 = arith.mulf %153, %154 : vector<16x1xf32>
    %156 = arith.mulf %151, %151 : vector<16x384xf32>
    %cst_59 = arith.constant dense<0.000000e+00> : vector<16xf32>
    %157 = vector.multi_reduction <add>, %156, %cst_59 [1] : vector<16x384xf32> to vector<16xf32>
    %158 = vector.shape_cast %157 : vector<16xf32> to vector<16x1xf32>
    %cst_60 = arith.constant 3.125000e-03 : f32
    %159 = vector.broadcast %cst_60 : f32 to vector<16x1xf32>
    %160 = arith.mulf %158, %159 : vector<16x1xf32>
    %161 = arith.mulf %155, %155 : vector<16x1xf32>
    %162 = arith.subf %160, %161 : vector<16x1xf32>
    %cst_61 = arith.constant 0.000000e+00 : f32
    %163 = vector.broadcast %cst_61 : f32 to vector<16x1xf32>
    %164 = arith.maximumf %162, %163 : vector<16x1xf32>
    %165 = vector.broadcast %155 : vector<16x1xf32> to vector<16x384xf32>
    %166 = arith.subf %151, %165 : vector<16x384xf32>
    %cst_62 = arith.constant 9.99999974E-6 : f32
    %167 = vector.broadcast %cst_62 : f32 to vector<16x1xf32>
    %168 = arith.addf %164, %167 : vector<16x1xf32>
    %169 = math.rsqrt %168 : vector<16x1xf32>
    %170 = vector.broadcast %169 : vector<16x1xf32> to vector<16x384xf32>
    %171 = arith.mulf %166, %170 : vector<16x384xf32>
    %172 = vector.broadcast %5 : vector<1x384xf32> to vector<16x384xf32>
    %173 = arith.mulf %171, %172 : vector<16x384xf32>
    %174 = vector.broadcast %6 : vector<1x384xf32> to vector<16x384xf32>
    %175 = arith.addf %173, %174 : vector<16x384xf32>
    %176 = arith.truncf %175 : vector<16x384xf32> to vector<16x384xbf16>
    %c0_63 = arith.constant 0 : index
    %c0_64 = arith.constant 0 : index
    %177 = vector.load %arg5[%c0_63, %c0_64] : memref<384x1280xbf16, #tpu.memory_space<vmem>>, vector<384x1280xbf16>
    %cst_65 = arith.constant dense<0.000000e+00> : vector<16x1280xf32>
    %178 = tpu.matmul %176, %177, %cst_65 {dimension_numbers = #tpu.dot_dimension_numbers<[1], [0], [0], [1], [0, 0, 1, 1], [], []>} : vector<16x384xbf16>, vector<384x1280xbf16>, vector<16x1280xf32> -> vector<16x1280xf32>
    %179 = vector.broadcast %11 : vector<1x1280xf32> to vector<16x1280xf32>
    %180 = arith.addf %178, %179 : vector<16x1280xf32>
    %181 = arith.mulf %180, %180 : vector<16x1280xf32>
    %182 = arith.mulf %180, %181 : vector<16x1280xf32>
    %cst_66 = arith.constant 4.471500e-02 : f32
    %183 = vector.broadcast %cst_66 : f32 to vector<16x1280xf32>
    %184 = arith.mulf %183, %182 : vector<16x1280xf32>
    %185 = arith.addf %180, %184 : vector<16x1280xf32>
    %cst_67 = arith.constant 0.797884583 : f32
    %186 = vector.broadcast %cst_67 : f32 to vector<16x1280xf32>
    %187 = arith.mulf %186, %185 : vector<16x1280xf32>
    %188 = math.tanh %187 : vector<16x1280xf32>
    %cst_68 = arith.constant 1.000000e+00 : f32
    %189 = vector.broadcast %cst_68 : f32 to vector<16x1280xf32>
    %190 = arith.addf %189, %188 : vector<16x1280xf32>
    %cst_69 = arith.constant 5.000000e-01 : f32
    %191 = vector.broadcast %cst_69 : f32 to vector<16x1280xf32>
    %192 = arith.mulf %191, %190 : vector<16x1280xf32>
    %193 = arith.mulf %180, %192 : vector<16x1280xf32>
    %194 = arith.truncf %193 : vector<16x1280xf32> to vector<16x1280xbf16>
    %c0_70 = arith.constant 0 : index
    %c0_71 = arith.constant 0 : index
    %195 = vector.load %arg6[%c0_70, %c0_71] : memref<1280x384xbf16, #tpu.memory_space<vmem>>, vector<1280x384xbf16>
    %cst_72 = arith.constant dense<0.000000e+00> : vector<16x384xf32>
    %196 = tpu.matmul %194, %195, %cst_72 {dimension_numbers = #tpu.dot_dimension_numbers<[1], [0], [0], [1], [0, 0, 1, 1], [], []>} : vector<16x1280xbf16>, vector<1280x384xbf16>, vector<16x384xf32> -> vector<16x384xf32>
    %197 = vector.broadcast %7 : vector<1x384xf32> to vector<16x384xf32>
    %198 = arith.addf %196, %197 : vector<16x384xf32>
    %199 = arith.addf %151, %198 : vector<16x384xf32>
    %cst_73 = arith.constant dense<0.000000e+00> : vector<16xf32>
    %200 = vector.multi_reduction <add>, %199, %cst_73 [1] : vector<16x384xf32> to vector<16xf32>
    %201 = vector.shape_cast %200 : vector<16xf32> to vector<16x1xf32>
    %cst_74 = arith.constant 3.125000e-03 : f32
    %202 = vector.broadcast %cst_74 : f32 to vector<16x1xf32>
    %203 = arith.mulf %201, %202 : vector<16x1xf32>
    %204 = arith.mulf %199, %199 : vector<16x384xf32>
    %cst_75 = arith.constant dense<0.000000e+00> : vector<16xf32>
    %205 = vector.multi_reduction <add>, %204, %cst_75 [1] : vector<16x384xf32> to vector<16xf32>
    %206 = vector.shape_cast %205 : vector<16xf32> to vector<16x1xf32>
    %cst_76 = arith.constant 3.125000e-03 : f32
    %207 = vector.broadcast %cst_76 : f32 to vector<16x1xf32>
    %208 = arith.mulf %206, %207 : vector<16x1xf32>
    %209 = arith.mulf %203, %203 : vector<16x1xf32>
    %210 = arith.subf %208, %209 : vector<16x1xf32>
    %cst_77 = arith.constant 0.000000e+00 : f32
    %211 = vector.broadcast %cst_77 : f32 to vector<16x1xf32>
    %212 = arith.maximumf %210, %211 : vector<16x1xf32>
    %213 = vector.broadcast %203 : vector<16x1xf32> to vector<16x384xf32>
    %214 = arith.subf %199, %213 : vector<16x384xf32>
    %cst_78 = arith.constant 9.99999974E-6 : f32
    %215 = vector.broadcast %cst_78 : f32 to vector<16x1xf32>
    %216 = arith.addf %212, %215 : vector<16x1xf32>
    %217 = math.rsqrt %216 : vector<16x1xf32>
    %218 = vector.broadcast %217 : vector<16x1xf32> to vector<16x384xf32>
    %219 = arith.mulf %214, %218 : vector<16x384xf32>
    %220 = vector.broadcast %8 : vector<1x384xf32> to vector<16x384xf32>
    %221 = arith.mulf %219, %220 : vector<16x384xf32>
    %222 = vector.broadcast %9 : vector<1x384xf32> to vector<16x384xf32>
    %223 = arith.addf %221, %222 : vector<16x384xf32>
    %224 = vector.shape_cast %223 : vector<16x384xf32> to vector<2x8x384xf32>
    %cst_79 = arith.constant dense<0.000000e+00> : vector<2x384xf32>
    %225 = vector.multi_reduction <add>, %224, %cst_79 [1] : vector<2x8x384xf32> to vector<2x384xf32>
    %cst_80 = arith.constant 1.250000e-01 : f32
    %226 = vector.broadcast %cst_80 : f32 to vector<2x384xf32>
    %227 = arith.mulf %225, %226 : vector<2x384xf32>
    %228 = arith.truncf %227 : vector<2x384xf32> to vector<2x384xbf16>
    %c0_81 = arith.constant 0 : index
    %c0_82 = arith.constant 0 : index
    %229 = vector.load %arg7[%c0_81, %c0_82] : memref<384x128xbf16, #tpu.memory_space<vmem>>, vector<384x128xbf16>
    %cst_83 = arith.constant dense<0.000000e+00> : vector<2x128xf32>
    %230 = tpu.matmul %228, %229, %cst_83 {dimension_numbers = #tpu.dot_dimension_numbers<[1], [0], [0], [1], [0, 0, 1, 1], [], []>} : vector<2x384xbf16>, vector<384x128xbf16>, vector<2x128xf32> -> vector<2x128xf32>
    %231 = vector.broadcast %12 : vector<1x128xf32> to vector<2x128xf32>
    %232 = arith.addf %230, %231 : vector<2x128xf32>
    %233 = vector.shape_cast %232 : vector<2x128xf32> to vector<2x1x128xf32>
    %c0_84 = arith.constant 0 : index
    %c0_85 = arith.constant 0 : index
    %c0_86 = arith.constant 0 : index
    %234 = vector.load %arg8[%c0_84, %c0_85, %c0_86] : memref<2x1x128xf32, #tpu.memory_space<vmem>>, vector<2x1x128xf32>
    tpu.vector_store %arg8[%c0_84, %c0_85, %c0_86], %233 {strides = array<i32>} : memref<2x1x128xf32, #tpu.memory_space<vmem>>, vector<2x1x128xf32>,
    return
  }
  func.func @transform_0(%arg0: i32) -> (i32, i32, i32) {
    %c0_i32 = arith.constant 0 : i32
    %c0_i32_0 = arith.constant 0 : i32
    %c0_i32_1 = arith.constant 0 : i32
    return %arg0, %c0_i32, %c0_i32_0 : i32, i32, i32
  }
  func.func @transform_1(%arg0: i32) -> (i32, i32) {
    %c0_i32 = arith.constant 0 : i32
    %c0_i32_0 = arith.constant 0 : i32
    %c0_i32_1 = arith.constant 0 : i32
    return %c0_i32, %c0_i32_0 : i32, i32
  }
  func.func @transform_2(%arg0: i32) -> (i32, i32) {
    %c0_i32 = arith.constant 0 : i32
    %c0_i32_0 = arith.constant 0 : i32
    %c0_i32_1 = arith.constant 0 : i32
    return %c0_i32, %c0_i32_0 : i32, i32
  }
  func.func @transform_3(%arg0: i32) -> (i32, i32) {
    %c0_i32 = arith.constant 0 : i32
    %c0_i32_0 = arith.constant 0 : i32
    %c0_i32_1 = arith.constant 0 : i32
    return %c0_i32, %c0_i32_0 : i32, i32
  }
  func.func @transform_4(%arg0: i32) -> (i32, i32) {
    %c0_i32 = arith.constant 0 : i32
    %c0_i32_0 = arith.constant 0 : i32
    %c0_i32_1 = arith.constant 0 : i32
    return %c0_i32, %c0_i32_0 : i32, i32
  }
  func.func @transform_5(%arg0: i32) -> (i32, i32) {
    %c0_i32 = arith.constant 0 : i32
    %c0_i32_0 = arith.constant 0 : i32
    %c0_i32_1 = arith.constant 0 : i32
    return %c0_i32, %c0_i32_0 : i32, i32
  }
  func.func @transform_6(%arg0: i32) -> (i32, i32) {
    %c0_i32 = arith.constant 0 : i32
    %c0_i32_0 = arith.constant 0 : i32
    %c0_i32_1 = arith.constant 0 : i32
    return %c0_i32, %c0_i32_0 : i32, i32
  }
  func.func @transform_7(%arg0: i32) -> (i32, i32, i32) {
    %c0_i32 = arith.constant 0 : i32
    %c0_i32_0 = arith.constant 0 : i32
    %c0_i32_1 = arith.constant 0 : i32
    return %arg0, %c0_i32, %c0_i32_0 : i32, i32, i32
  }
}

</mosaic_0001>

<llo_original>
// kernel: _lambda_.1
$region0: #{_lambda_.1}
  #allocation0 [shape = 'u32[]', space=smem, size = 0x4, offset = 0x4, fixed_abs, tag = 'smem constant byte address 0x4 - core index']
  #allocation1 [shape = 'u32[72,128]{1,0:T(1,128)}', space=vmem, size = 0x9000, scoped, tag = 'internal scratch']
  %s0 = inlined_call_operand.vmem [shape: f32[2,8,384], index: 0, kind: input, shape index: {}]
  %s1 = inlined_call_operand.hbm [shape: f32[11,1280], index: 1, kind: input, shape index: {}]
  %s2 = inlined_call_operand.hbm [shape: bf16[384,1152], index: 2, kind: input, shape index: {}]
  %s3 = inlined_call_operand.hbm [shape: bf16[384,384], index: 3, kind: input, shape index: {}]
  %s4 = inlined_call_operand.hbm [shape: bf16[384,1280], index: 4, kind: input, shape index: {}]
  %s5 = inlined_call_operand.hbm [shape: bf16[1280,384], index: 5, kind: input, shape index: {}]
  %s6 = inlined_call_operand.hbm [shape: bf16[384,128], index: 6, kind: input, shape index: {}]
  %s7 = inlined_call_operand.hbm [shape: f32[2,1,128], index: 7, kind: output, shape index: {}]
  %s8 = sld [smem:[#allocation0]]
  $region62: #{_lambda_.1} parent=0
    _
  %s10 = ssub.s32 1, %s8
  %s11 = scalar_select 0, %s10, %s8
  $region1: #{_lambda_.1} parent=0
    #allocation2 [shape = 'u8[81920]{0}', space=vmem, size = 0x14000, scoped, tag = 'input window, operand 1, single buffered']
    #allocation3 [shape = 's32[1]{0}', space=sflag, size = 0x4, scoped, tag = 'scoped memory for _lambda_.1']
    #allocation4 [shape = 's32[1]{0}', space=sflag, size = 0x4, scoped, tag = 'scoped memory for _lambda_.1']
    #allocation5 [shape = 'u8[884736]{0}', space=vmem, size = 0xd8000, scoped, tag = 'input window, operand 2, single buffered']
    #allocation6 [shape = 's32[1]{0}', space=sflag, size = 0x4, scoped, tag = 'scoped memory for _lambda_.1']
    #allocation7 [shape = 'u8[294912]{0}', space=vmem, size = 0x48000, scoped, tag = 'input window, operand 3, single buffered']
    #allocation8 [shape = 'u8[983040]{0}', space=vmem, size = 0xf0000, scoped, tag = 'input window, operand 4, single buffered']
    #allocation9 [shape = 's32[1]{0}', space=sflag, size = 0x4, scoped, tag = 'scoped memory for _lambda_.1']
    #allocation10 [shape = 'u8[983040]{0}', space=vmem, size = 0xf0000, scoped, tag = 'input window, operand 5, single buffered']
    #allocation11 [shape = 'u8[98304]{0}', space=vmem, size = 0x18000, scoped, tag = 'input window, operand 6, single buffered']
    #allocation12 [shape = 's32[1]{0}', space=sflag, size = 0x4, scoped, tag = 'scoped memory for _lambda_.1']
    #allocation13 [shape = 'u8[1024]{0}', space=vmem, size = 0x400, scoped, tag = 'output window, operand 0, single buffered']
    %12 = vsyncpa [#allocation3], 0
    %13 = vsyncpa [#allocation6], 0
    %14 = vsyncpa [#allocation9], 0
    %15 = vsyncpa [#allocation12], 0
    %16 = vsyncpa [#allocation4], 0
    // Predicated region
    $region2: #{_lambda_.1} parent=1 // pred_check
      _
    $region3: #{_lambda_.1} parent=1 // pred_check_branch
      %18 = sbr.rel (0) target = $region5
    $region4: #{_lambda_.1} parent=1 // pred_region
      _
    $region5: #{_lambda_.1} parent=1 // pred_fallthru
      _
    // Predicated region
    $region6: #{_lambda_.1} parent=1 // pred_check
      _
    $region7: #{_lambda_.1} parent=1 // pred_check_branch
      %20 = sbr.rel (0) target = $region9
    $region8: #{_lambda_.1} parent=1 // pred_region
      %22 = vsyncadd [#allocation3], 0
      %s23 = sshll.u32 %s1, 4
      %s24 = int_to_ptr.hbm [resolvable:$true] %s23
      %s25 = sshll.u32 [#allocation2], 4
      %s26 = int_to_ptr.vmem [resolvable:$true] %s25
      %31 = dma.hbm_to_vmem [thread:$0]  %s24, 2560, %s26, [#allocation3], 1280, 1280, 80
    $region9: #{_lambda_.1} parent=1 // pred_fallthru
      _
    // Predicated region
    $region10: #{_lambda_.1} parent=1 // pred_check
      _
    $region11: #{_lambda_.1} parent=1 // pred_check_branch
      %33 = sbr.rel (0) target = $region13
    $region12: #{_lambda_.1} parent=1 // pred_region
      %35 = vsyncadd [#allocation6], 0
      %s36 = sshll.u32 %s2, 4
      %s37 = int_to_ptr.hbm [resolvable:$true] %s36
      %s38 = sshll.u32 [#allocation5], 4
      %s39 = int_to_ptr.vmem [resolvable:$true] %s38
      %44 = dma.hbm_to_vmem [thread:$0]  %s37, 27648, %s39, [#allocation6], 576, 576, 36
    $region13: #{_lambda_.1} parent=1 // pred_fallthru
      _
    // Predicated region
    $region14: #{_lambda_.1} parent=1 // pred_check
      _
    $region15: #{_lambda_.1} parent=1 // pred_check_branch
      %46 = sbr.rel (0) target = $region17
    $region16: #{_lambda_.1} parent=1 // pred_region
      %48 = vsyncadd [#allocation6], 0
      %s49 = sshll.u32 %s3, 4
      %s50 = int_to_ptr.hbm [resolvable:$true] %s49
      %s51 = sshll.u32 [#allocation7], 4
      %s52 = int_to_ptr.vmem [resolvable:$true] %s51
      %57 = dma.hbm_to_vmem [thread:$0]  %s50, 9216, %s52, [#allocation6], 192, 192, 12
    $region17: #{_lambda_.1} parent=1 // pred_fallthru
      _
    // Predicated region
    $region18: #{_lambda_.1} parent=1 // pred_check
      _
    $region19: #{_lambda_.1} parent=1 // pred_check_branch
      %59 = sbr.rel (0) target = $region21
    $region20: #{_lambda_.1} parent=1 // pred_region
      %61 = vsyncadd [#allocation9], 0
      %s62 = sshll.u32 %s4, 4
      %s63 = int_to_ptr.hbm [resolvable:$true] %s62
      %s64 = sshll.u32 [#allocation8], 4
      %s65 = int_to_ptr.vmem [resolvable:$true] %s64
      %70 = dma.hbm_to_vmem [thread:$0]  %s63, 30720, %s65, [#allocation9], 640, 640, 40
    $region21: #{_lambda_.1} parent=1 // pred_fallthru
      _
    // Predicated region
    $region22: #{_lambda_.1} parent=1 // pred_check
      _
    $region23: #{_lambda_.1} parent=1 // pred_check_branch
      %72 = sbr.rel (0) target = $region25
    $region24: #{_lambda_.1} parent=1 // pred_region
      %74 = vsyncadd [#allocation9], 0
      %s75 = sshll.u32 %s5, 4
      %s76 = int_to_ptr.hbm [resolvable:$true] %s75
      %s77 = sshll.u32 [#allocation10], 4
      %s78 = int_to_ptr.vmem [resolvable:$true] %s77
      %83 = dma.hbm_to_vmem [thread:$0]  %s76, 30720, %s78, [#allocation9], 192, 192, 12
    $region25: #{_lambda_.1} parent=1 // pred_fallthru
      _
    // Predicated region
    $region26: #{_lambda_.1} parent=1 // pred_check
      _
    $region27: #{_lambda_.1} parent=1 // pred_check_branch
      %85 = sbr.rel (0) target = $region29
    $region28: #{_lambda_.1} parent=1 // pred_region
      %87 = vsyncadd [#allocation12], 0
      %s88 = sshll.u32 %s6, 4
      %s89 = int_to_ptr.hbm [resolvable:$true] %s88
      %s90 = sshll.u32 [#allocation11], 4
      %s91 = int_to_ptr.vmem [resolvable:$true] %s90
      %96 = dma.hbm_to_vmem [thread:$0]  %s89, 3072, %s91, [#allocation12], 64, 64, 4
    $region29: #{_lambda_.1} parent=1 // pred_fallthru
      _
    // Predicated region
    $region30: #{_lambda_.1} parent=1 // pred_check
      _
    $region31: #{_lambda_.1} parent=1 // pred_check_branch
      %98 = sbr.rel (0) target = $region33
    $region32: #{_lambda_.1} parent=1 // pred_region
      %100 = dma.done [#allocation3], 2560
    $region33: #{_lambda_.1} parent=1 // pred_fallthru
      _
    // Predicated region
    $region34: #{_lambda_.1} parent=1 // pred_check
      _
    $region35: #{_lambda_.1} parent=1 // pred_check_branch
      %102 = sbr.rel (0) target = $region37
    $region36: #{_lambda_.1} parent=1 // pred_region
      %104 = dma.done [#allocation6], 27648
    $region37: #{_lambda_.1} parent=1 // pred_fallthru
      _
    // Predicated region
    $region38: #{_lambda_.1} parent=1 // pred_check
      _
    $region39: #{_lambda_.1} parent=1 // pred_check_branch
      %106 = sbr.rel (0) target = $region41
    $region40: #{_lambda_.1} parent=1 // pred_region
      %108 = dma.done [#allocation6], 9216
    $region41: #{_lambda_.1} parent=1 // pred_fallthru
      _
    // Predicated region
    $region42: #{_lambda_.1} parent=1 // pred_check
      _
    $region43: #{_lambda_.1} parent=1 // pred_check_branch
      %110 = sbr.rel (0) target = $region45
    $region44: #{_lambda_.1} parent=1 // pred_region
      %112 = dma.done [#allocation9], 30720
    $region45: #{_lambda_.1} parent=1 // pred_fallthru
      _
    // Predicated region
    $region46: #{_lambda_.1} parent=1 // pred_check
      _
    $region47: #{_lambda_.1} parent=1 // pred_check_branch
      %114 = sbr.rel (0) target = $region49
    $region48: #{_lambda_.1} parent=1 // pred_region
      %116 = dma.done [#allocation9], 30720
    $region49: #{_lambda_.1} parent=1 // pred_fallthru
      _
    // Predicated region
    $region50: #{_lambda_.1} parent=1 // pred_check
      _
    $region51: #{_lambda_.1} parent=1 // pred_check_branch
      %118 = sbr.rel (0) target = $region53
    $region52: #{_lambda_.1} parent=1 // pred_region
      %120 = dma.done [#allocation12], 3072
    $region53: #{_lambda_.1} parent=1 // pred_fallthru
      _
    %v122 = vld [vmem:[%s0] sm:$0xff]
    %v123 = vld [vmem:[%s0 + $0x8] sm:$0xff]
    %v124 = vld [vmem:[%s0 + $0x10] sm:$0xff]
    %v125 = vld [vmem:[%s0 + $0x18] sm:$0xff]
    %v126 = vld [vmem:[%s0 + $0x20] sm:$0xff]
    %v127 = vld [vmem:[%s0 + $0x28] sm:$0xff]
    %v128 = vld [vmem:[#allocation2] ss:$8 sm:$0x7]
    %s129 = scalar_lea.vmem [#allocation2], 1
    %v130 = vld [vmem:[%s129] ss:$8 sm:$0x7]
    %s131 = scalar_lea.vmem [#allocation2], 2
    %v132 = vld [vmem:[%s131] ss:$8 sm:$0x7]
    %s133 = scalar_lea.vmem [#allocation2], 3
    %v134 = vld [vmem:[%s133] ss:$8 sm:$0x7]
    %s135 = scalar_lea.vmem [#allocation2], 4
    %v136 = vld [vmem:[%s135] ss:$8 sm:$0x7]
    %s137 = scalar_lea.vmem [#allocation2], 5
    %v138 = vld [vmem:[%s137] ss:$8 sm:$0x7]
    %s139 = scalar_lea.vmem [#allocation2], 6
    %v140 = vld [vmem:[%s139] ss:$8 sm:$0x7]
    %s141 = scalar_lea.vmem [#allocation2], 7
    %v142 = vld [vmem:[%s141] ss:$8 sm:$0x7]
    %s143 = scalar_lea.vmem [#allocation2], 80
    %v144 = vld [vmem:[%s143] ss:$8 sm:$0xf]
    %v145 = vld [vmem:[%s143] ss:$8 sm:$0xf0]
    %v146 = vor.u32 %v144, %v145
    %s147 = scalar_lea.vmem [#allocation2], 144
    %v148 = vld [vmem:[%s147] ss:$8 sm:$0x1]
    %s149 = scalar_lea.vmem [#allocation2], 81
    %v150 = vld [vmem:[%s149] ss:$8 sm:$0xf]
    %v151 = vld [vmem:[%s149] ss:$8 sm:$0xf0]
    %v152 = vor.u32 %v150, %v151
    %s153 = scalar_lea.vmem [#allocation2], 145
    %v154 = vld [vmem:[%s153] ss:$8 sm:$0x3]
    %v155 = vld [vmem:[#allocation2 + $0x52] ss:$0 sm:$0xff]
    %v156 = vadd.f32 %v122, %v123
    %v157 = vadd.f32 %v156, %v124
    %158 = vadd.xlane.f32.xlu0 %v157
    %v159 = vpop.xlane.xlu0 %158
    %v160 = vadd.f32 %v125, %v126
    %v161 = vadd.f32 %v160, %v127
    %162 = vadd.xlane.f32.xlu0 %v161
    %v163 = vpop.xlane.xlu0 %162
    %v164 = vmul.f32 %v159, 0.003125
    %v165 = vmul.f32 %v163, 0.003125
    %v166 = vmul.f32 %v122, %v122
    %v167 = vmul.f32 %v123, %v123
    %v168 = vmul.f32 %v124, %v124
    %v169 = vmul.f32 %v125, %v125
    %v170 = vmul.f32 %v126, %v126
    %v171 = vmul.f32 %v127, %v127
    %v172 = vadd.f32 %v166, %v167
    %v173 = vadd.f32 %v172, %v168
    %174 = vadd.xlane.f32.xlu0 %v173
    %v175 = vpop.xlane.xlu0 %174
    %v176 = vadd.f32 %v169, %v170
    %v177 = vadd.f32 %v176, %v171
    %178 = vadd.xlane.f32.xlu0 %v177
    %v179 = vpop.xlane.xlu0 %178
    %v180 = vmul.f32 %v175, 0.003125
    %v181 = vmul.f32 %v179, 0.003125
    %v182 = vmul.f32 %v164, %v164
    %v183 = vmul.f32 %v165, %v165
    %v184 = vsub.f32 %v180, %v182
    %v185 = vsub.f32 %v181, %v183
    %v186 = vmax.f32 %v184, 0.0
    %v187 = vmax.f32 %v185, 0.0
    %v188 = vsub.f32 %v122, %v164
    %v189 = vsub.f32 %v123, %v164
    %v190 = vsub.f32 %v124, %v164
    %v191 = vsub.f32 %v125, %v165
    %v192 = vsub.f32 %v126, %v165
    %v193 = vsub.f32 %v127, %v165
    %v194 = vadd.f32 %v186, 1e-05
    %v195 = vadd.f32 %v187, 1e-05
    %v196 = vrsqrt.pop %v194
    %v197 = vmul.f32 %v196, %v194
    %v198 = vmul.f32 %v197, %v196
    %v199 = vmul.f32 0.5, %v198
    %v200 = vsub.f32 1.5, %v199
    %v201 = vmul.f32 %v196, %v200
    %vm202 = vweird.f32 %v194
    %vm203 = vweird.f32 %v196
    %vm204 = vmor %vm202, %vm203
    %v205 = vsel %vm204, %v196, %v201
    %v206 = vrsqrt.pop %v195
    %v207 = vmul.f32 %v206, %v195
    %v208 = vmul.f32 %v207, %v206
    %v209 = vmul.f32 0.5, %v208
    %v210 = vsub.f32 1.5, %v209
    %v211 = vmul.f32 %v206, %v210
    %vm212 = vweird.f32 %v195
    %vm213 = vweird.f32 %v206
    %vm214 = vmor %vm212, %vm213
    %v215 = vsel %vm214, %v206, %v211
    %v216 = vmul.f32 %v188, %v205
    %v217 = vmul.f32 %v189, %v205
    %v218 = vmul.f32 %v190, %v205
    %v219 = vmul.f32 %v191, %v215
    %v220 = vmul.f32 %v192, %v215
    %v221 = vmul.f32 %v193, %v215
    %v223 = vperm.slane %v128, 0
    %v224 = vperm.slane %v128, 1
    %v225 = vperm.slane %v128, 2
    %v229 = vmul.f32 %v216, %v223
    %v230 = vmul.f32 %v217, %v224
    %v231 = vmul.f32 %v218, %v225
    %v232 = vmul.f32 %v219, %v223
    %v233 = vmul.f32 %v220, %v224
    %v234 = vmul.f32 %v221, %v225
    %v236 = vperm.slane %v130, 0
    %v237 = vperm.slane %v130, 1
    %v238 = vperm.slane %v130, 2
    %v242 = vadd.f32 %v229, %v236
    %v243 = vadd.f32 %v230, %v237
    %v244 = vadd.f32 %v231, %v238
    %v245 = vadd.f32 %v232, %v236
    %v246 = vadd.f32 %v233, %v237
    %v247 = vadd.f32 %v234, %v238
    %v248 = vpack.c.bf16 %v245, %v242
    %v249 = vpack.c.bf16 %v246, %v243
    %v250 = vpack.c.bf16 %v247, %v244
    %v251 = vld [vmem:[#allocation5] sm:$0xff]
    %v252 = vld [vmem:[#allocation5 + $0x8] sm:$0xff]
    %v253 = vld [vmem:[#allocation5 + $0x10] sm:$0xff]
    %v254 = vld [vmem:[#allocation5 + $0x18] sm:$0xff]
    %v255 = vld [vmem:[#allocation5 + $0x20] sm:$0xf]
    %v256 = vld [vmem:[#allocation5 + $0x24] sm:$0xff]
    %v257 = vld [vmem:[#allocation5 + $0x2c] sm:$0xff]
    %v258 = vld [vmem:[#allocation5 + $0x34] sm:$0xff]
    %v259 = vld [vmem:[#allocation5 + $0x3c] sm:$0xff]
    %v260 = vld [vmem:[#allocation5 + $0x44] sm:$0xf]
    %v261 = vld [vmem:[#allocation5 + $0x48] sm:$0xff]
    %v262 = vld [vmem:[#allocation5 + $0x50] sm:$0xff]
    %v263 = vld [vmem:[#allocation5 + $0x58] sm:$0xff]
    %v264 = vld [vmem:[#allocation5 + $0x60] sm:$0xff]
    %v265 = vld [vmem:[#allocation5 + $0x68] sm:$0xf]
    %v266 = vld [vmem:[#allocation5 + $0x6c] sm:$0xff]
    %v267 = vld [vmem:[#allocation5 + $0x74] sm:$0xff]
    %v268 = vld [vmem:[#allocation5 + $0x7c] sm:$0xff]
    %v269 = vld [vmem:[#allocation5 + $0x84] sm:$0xff]
    %v270 = vld [vmem:[#allocation5 + $0x8c] sm:$0xf]
    %v271 = vld [vmem:[#allocation5 + $0x90] sm:$0xff]
    %v272 = vld [vmem:[#allocation5 + $0x98] sm:$0xff]
    %v273 = vld [vmem:[#allocation5 + $0xa0] sm:$0xff]
    %v274 = vld [vmem:[#allocation5 + $0xa8] sm:$0xff]
    %v275 = vld [vmem:[#allocation5 + $0xb0] sm:$0xf]
    %v276 = vld [vmem:[#allocation5 + $0xb4] sm:$0xff]
    %v277 = vld [vmem:[#allocation5 + $0xbc] sm:$0xff]
    %v278 = vld [vmem:[#allocation5 + $0xc4] sm:$0xff]
    %v279 = vld [vmem:[#allocation5 + $0xcc] sm:$0xff]
    %v280 = vld [vmem:[#allocation5 + $0xd4] sm:$0xf]
    %v281 = vld [vmem:[#allocation5 + $0xd8] sm:$0xff]
    %v282 = vld [vmem:[#allocation5 + $0xe0] sm:$0xff]
    %v283 = vld [vmem:[#allocation5 + $0xe8] sm:$0xff]
    %v284 = vld [vmem:[#allocation5 + $0xf0] sm:$0xff]
    %v285 = vld [vmem:[#allocation5 + $0xf8] sm:$0xf]
    %v286 = vld [vmem:[#allocation5 + $0xfc] sm:$0xff]
    %v287 = vld [vmem:[#allocation5 + $0x104] sm:$0xff]
    %v288 = vld [vmem:[#allocation5 + $0x10c] sm:$0xff]
    %v289 = vld [vmem:[#allocation5 + $0x114] sm:$0xff]
    %v290 = vld [vmem:[#allocation5 + $0x11c] sm:$0xf]
    %v291 = vld [vmem:[#allocation5 + $0x120] sm:$0xff]
    %v292 = vld [vmem:[#allocation5 + $0x128] sm:$0xff]
    %v293 = vld [vmem:[#allocation5 + $0x130] sm:$0xff]
    %v294 = vld [vmem:[#allocation5 + $0x138] sm:$0xff]
    %v295 = vld [vmem:[#allocation5 + $0x140] sm:$0xf]
    %v296 = vld [vmem:[#allocation5 + $0x144] sm:$0xff]
    %v297 = vld [vmem:[#allocation5 + $0x14c] sm:$0xff]
    %v298 = vld [vmem:[#allocation5 + $0x154] sm:$0xff]
    %v299 = vld [vmem:[#allocation5 + $0x15c] sm:$0xff]
    %v300 = vld [vmem:[#allocation5 + $0x164] sm:$0xf]
    %v301 = vld [vmem:[#allocation5 + $0x168] sm:$0xff]
    %v302 = vld [vmem:[#allocation5 + $0x170] sm:$0xff]
    %v303 = vld [vmem:[#allocation5 + $0x178] sm:$0xff]
    %v304 = vld [vmem:[#allocation5 + $0x180] sm:$0xff]
    %v305 = vld [vmem:[#allocation5 + $0x188] sm:$0xf]
    %v306 = vld [vmem:[#allocation5 + $0x18c] sm:$0xff]
    %v307 = vld [vmem:[#allocation5 + $0x194] sm:$0xff]
    %v308 = vld [vmem:[#allocation5 + $0x19c] sm:$0xff]
    %v309 = vld [vmem:[#allocation5 + $0x1a4] sm:$0xff]
    %v310 = vld [vmem:[#allocation5 + $0x1ac] sm:$0xf]
    %v311 = vld [vmem:[#allocation5 + $0x1b0] sm:$0xff]
    %v312 = vld [vmem:[#allocation5 + $0x1b8] sm:$0xff]
    %v313 = vld [vmem:[#allocation5 + $0x1c0] sm:$0xff]
    %v314 = vld [vmem:[#allocation5 + $0x1c8] sm:$0xff]
    %v315 = vld [vmem:[#allocation5 + $0x1d0] sm:$0xf]
    %v316 = vld [vmem:[#allocation5 + $0x1d4] sm:$0xff]
    %v317 = vld [vmem:[#allocation5 + $0x1dc] sm:$0xff]
    %v318 = vld [vmem:[#allocation5 + $0x1e4] sm:$0xff]
    %v319 = vld [vmem:[#allocation5 + $0x1ec] sm:$0xff]
    %v320 = vld [vmem:[#allocation5 + $0x1f4] sm:$0xf]
    %v321 = vld [vmem:[#allocation5 + $0x1f8] sm:$0xff]
    %v322 = vld [vmem:[#allocation5 + $0x200] sm:$0xff]
    %v323 = vld [vmem:[#allocation5 + $0x208] sm:$0xff]
    %v324 = vld [vmem:[#allocation5 + $0x210] sm:$0xff]
    %v325 = vld [vmem:[#allocation5 + $0x218] sm:$0xf]
    %v326 = vld [vmem:[#allocation5 + $0x21c] sm:$0xff]
    %v327 = vld [vmem:[#allocation5 + $0x224] sm:$0xff]
    %v328 = vld [vmem:[#allocation5 + $0x22c] sm:$0xff]
    %v329 = vld [vmem:[#allocation5 + $0x234] sm:$0xff]
    %v330 = vld [vmem:[#allocation5 + $0x23c] sm:$0xf]
    %v331 = vld [vmem:[#allocation5 + $0x240] sm:$0xff]
    %v332 = vld [vmem:[#allocation5 + $0x248] sm:$0xff]
    %v333 = vld [vmem:[#allocation5 + $0x250] sm:$0xff]
    %v334 = vld [vmem:[#allocation5 + $0x258] sm:$0xff]
    %v335 = vld [vmem:[#allocation5 + $0x260] sm:$0xf]
    %v336 = vld [vmem:[#allocation5 + $0x264] sm:$0xff]
    %v337 = vld [vmem:[#allocation5 + $0x26c] sm:$0xff]
    %v338 = vld [vmem:[#allocation5 + $0x274] sm:$0xff]
    %v339 = vld [vmem:[#allocation5 + $0x27c] sm:$0xff]
    %v340 = vld [vmem:[#allocation5 + $0x284] sm:$0xf]
    %v341 = vld [vmem:[#allocation5 + $0x288] sm:$0xff]
    %v342 = vld [vmem:[#allocation5 + $0x290] sm:$0xff]
    %v343 = vld [vmem:[#allocation5 + $0x298] sm:$0xff]
    %v344 = vld [vmem:[#allocation5 + $0x2a0] sm:$0xff]
    %v345 = vld [vmem:[#allocation5 + $0x2a8] sm:$0xf]
    %v346 = vld [vmem:[#allocation5 + $0x2ac] sm:$0xff]
    %v347 = vld [vmem:[#allocation5 + $0x2b4] sm:$0xff]
    %v348 = vld [vmem:[#allocation5 + $0x2bc] sm:$0xff]
    %v349 = vld [vmem:[#allocation5 + $0x2c4] sm:$0xff]
    %v350 = vld [vmem:[#allocation5 + $0x2cc] sm:$0xf]
    %v351 = vld [vmem:[#allocation5 + $0x2d0] sm:$0xff]
    %v352 = vld [vmem:[#allocation5 + $0x2d8] sm:$0xff]
    %v353 = vld [vmem:[#allocation5 + $0x2e0] sm:$0xff]
    %v354 = vld [vmem:[#allocation5 + $0x2e8] sm:$0xff]
    %v355 = vld [vmem:[#allocation5 + $0x2f0] sm:$0xf]
    %v356 = vld [vmem:[#allocation5 + $0x2f4] sm:$0xff]
    %v357 = vld [vmem:[#allocation5 + $0x2fc] sm:$0xff]
    %v358 = vld [vmem:[#allocation5 + $0x304] sm:$0xff]
    %v359 = vld [vmem:[#allocation5 + $0x30c] sm:$0xff]
    %v360 = vld [vmem:[#allocation5 + $0x314] sm:$0xf]
    %v361 = vld [vmem:[#allocation5 + $0x318] sm:$0xff]
    %v362 = vld [vmem:[#allocation5 + $0x320] sm:$0xff]
    %v363 = vld [vmem:[#allocation5 + $0x328] sm:$0xff]
    %v364 = vld [vmem:[#allocation5 + $0x330] sm:$0xff]
    %v365 = vld [vmem:[#allocation5 + $0x338] sm:$0xf]
    %v366 = vld [vmem:[#allocation5 + $0x33c] sm:$0xff]
    %v367 = vld [vmem:[#allocation5 + $0x344] sm:$0xff]
    %v368 = vld [vmem:[#allocation5 + $0x34c] sm:$0xff]
    %v369 = vld [vmem:[#allocation5 + $0x354] sm:$0xff]
    %v370 = vld [vmem:[#allocation5 + $0x35c] sm:$0xf]
    %v371 = vld [vmem:[#allocation5 + $0x360] sm:$0xff]
    %v372 = vld [vmem:[#allocation5 + $0x368] sm:$0xff]
    %v373 = vld [vmem:[#allocation5 + $0x370] sm:$0xff]
    %v374 = vld [vmem:[#allocation5 + $0x378] sm:$0xff]
    %v375 = vld [vmem:[#allocation5 + $0x380] sm:$0xf]
    %v376 = vld [vmem:[#allocation5 + $0x384] sm:$0xff]
    %v377 = vld [vmem:[#allocation5 + $0x38c] sm:$0xff]
    %v378 = vld [vmem:[#allocation5 + $0x394] sm:$0xff]
    %v379 = vld [vmem:[#allocation5 + $0x39c] sm:$0xff]
    %v380 = vld [vmem:[#allocation5 + $0x3a4] sm:$0xf]
    %v381 = vld [vmem:[#allocation5 + $0x3a8] sm:$0xff]
    %v382 = vld [vmem:[#allocation5 + $0x3b0] sm:$0xff]
    %v383 = vld [vmem:[#allocation5 + $0x3b8] sm:$0xff]
    %v384 = vld [vmem:[#allocation5 + $0x3c0] sm:$0xff]
    %v385 = vld [vmem:[#allocation5 + $0x3c8] sm:$0xf]
    %v386 = vld [vmem:[#allocation5 + $0x3cc] sm:$0xff]
    %v387 = vld [vmem:[#allocation5 + $0x3d4] sm:$0xff]
    %v388 = vld [vmem:[#allocation5 + $0x3dc] sm:$0xff]
    %v389 = vld [vmem:[#allocation5 + $0x3e4] sm:$0xff]
    %v390 = vld [vmem:[#allocation5 + $0x3ec] sm:$0xf]
    %v391 = vld [vmem:[#allocation5 + $0x3f0] sm:$0xff]
    %v392 = vld [vmem:[#allocation5 + $0x3f8] sm:$0xff]
    %v393 = vld [vmem:[#allocation5 + $0x400] sm:$0xff]
    %v394 = vld [vmem:[#allocation5 + $0x408] sm:$0xff]
    %v395 = vld [vmem:[#allocation5 + $0x410] sm:$0xf]
    %v396 = vld [vmem:[#allocation5 + $0x414] sm:$0xff]
    %v397 = vld [vmem:[#allocation5 + $0x41c] sm:$0xff]
    %v398 = vld [vmem:[#allocation5 + $0x424] sm:$0xff]
    %v399 = vld [vmem:[#allocation5 + $0x42c] sm:$0xff]
    %v400 = vld [vmem:[#allocation5 + $0x434] sm:$0xf]
    %v401 = vld [vmem:[#allocation5 + $0x438] sm:$0xff]
    %v402 = vld [vmem:[#allocation5 + $0x440] sm:$0xff]
    %v403 = vld [vmem:[#allocation5 + $0x448] sm:$0xff]
    %v404 = vld [vmem:[#allocation5 + $0x450] sm:$0xff]
    %v405 = vld [vmem:[#allocation5 + $0x458] sm:$0xf]
    %v406 = vld [vmem:[#allocation5 + $0x45c] sm:$0xff]
    %v407 = vld [vmem:[#allocation5 + $0x464] sm:$0xff]
    %v408 = vld [vmem:[#allocation5 + $0x46c] sm:$0xff]
    %v409 = vld [vmem:[#allocation5 + $0x474] sm:$0xff]
    %v410 = vld [vmem:[#allocation5 + $0x47c] sm:$0xf]
    %v411 = vld [vmem:[#allocation5 + $0x480] sm:$0xff]
    %v412 = vld [vmem:[#allocation5 + $0x488] sm:$0xff]
    %v413 = vld [vmem:[#allocation5 + $0x490] sm:$0xff]
    %v414 = vld [vmem:[#allocation5 + $0x498] sm:$0xff]
    %v415 = vld [vmem:[#allocation5 + $0x4a0] sm:$0xf]
    %v416 = vld [vmem:[#allocation5 + $0x4a4] sm:$0xff]
    %v417 = vld [vmem:[#allocation5 + $0x4ac] sm:$0xff]
    %v418 = vld [vmem:[#allocation5 + $0x4b4] sm:$0xff]
    %v419 = vld [vmem:[#allocation5 + $0x4bc] sm:$0xff]
    %v420 = vld [vmem:[#allocation5 + $0x4c4] sm:$0xf]
    %v421 = vld [vmem:[#allocation5 + $0x4c8] sm:$0xff]
    %v422 = vld [vmem:[#allocation5 + $0x4d0] sm:$0xff]
    %v423 = vld [vmem:[#allocation5 + $0x4d8] sm:$0xff]
    %v424 = vld [vmem:[#allocation5 + $0x4e0] sm:$0xff]
    %v425 = vld [vmem:[#allocation5 + $0x4e8] sm:$0xf]
    %v426 = vld [vmem:[#allocation5 + $0x4ec] sm:$0xff]
    %v427 = vld [vmem:[#allocation5 + $0x4f4] sm:$0xff]
    %v428 = vld [vmem:[#allocation5 + $0x4fc] sm:$0xff]
    %v429 = vld [vmem:[#allocation5 + $0x504] sm:$0xff]
    %v430 = vld [vmem:[#allocation5 + $0x50c] sm:$0xf]
    %v431 = vld [vmem:[#allocation5 + $0x510] sm:$0xff]
    %v432 = vld [vmem:[#allocation5 + $0x518] sm:$0xff]
    %v433 = vld [vmem:[#allocation5 + $0x520] sm:$0xff]
    %v434 = vld [vmem:[#allocation5 + $0x528] sm:$0xff]
    %v435 = vld [vmem:[#allocation5 + $0x530] sm:$0xf]
    %v436 = vld [vmem:[#allocation5 + $0x534] sm:$0xff]
    %v437 = vld [vmem:[#allocation5 + $0x53c] sm:$0xff]
    %v438 = vld [vmem:[#allocation5 + $0x544] sm:$0xff]
    %v439 = vld [vmem:[#allocation5 + $0x54c] sm:$0xff]
    %v440 = vld [vmem:[#allocation5 + $0x554] sm:$0xf]
    %v441 = vld [vmem:[#allocation5 + $0x558] sm:$0xff]
    %v442 = vld [vmem:[#allocation5 + $0x560] sm:$0xff]
    %v443 = vld [vmem:[#allocation5 + $0x568] sm:$0xff]
    %v444 = vld [vmem:[#allocation5 + $0x570] sm:$0xff]
    %v445 = vld [vmem:[#allocation5 + $0x578] sm:$0xf]
    %v446 = vld [vmem:[#allocation5 + $0x57c] sm:$0xff]
    %v447 = vld [vmem:[#allocation5 + $0x584] sm:$0xff]
    %v448 = vld [vmem:[#allocation5 + $0x58c] sm:$0xff]
    %v449 = vld [vmem:[#allocation5 + $0x594] sm:$0xff]
    %v450 = vld [vmem:[#allocation5 + $0x59c] sm:$0xf]
    %v451 = vld [vmem:[#allocation5 + $0x5a0] sm:$0xff]
    %v452 = vld [vmem:[#allocation5 + $0x5a8] sm:$0xff]
    %v453 = vld [vmem:[#allocation5 + $0x5b0] sm:$0xff]
    %v454 = vld [vmem:[#allocation5 + $0x5b8] sm:$0xff]
    %v455 = vld [vmem:[#allocation5 + $0x5c0] sm:$0xf]
    %v456 = vld [vmem:[#allocation5 + $0x5c4] sm:$0xff]
    %v457 = vld [vmem:[#allocation5 + $0x5cc] sm:$0xff]
    %v458 = vld [vmem:[#allocation5 + $0x5d4] sm:$0xff]
    %v459 = vld [vmem:[#allocation5 + $0x5dc] sm:$0xff]
    %v460 = vld [vmem:[#allocation5 + $0x5e4] sm:$0xf]
    %v461 = vld [vmem:[#allocation5 + $0x5e8] sm:$0xff]
    %v462 = vld [vmem:[#allocation5 + $0x5f0] sm:$0xff]
    %v463 = vld [vmem:[#allocation5 + $0x5f8] sm:$0xff]
    %v464 = vld [vmem:[#allocation5 + $0x600] sm:$0xff]
    %v465 = vld [vmem:[#allocation5 + $0x608] sm:$0xf]
    %v466 = vld [vmem:[#allocation5 + $0x60c] sm:$0xff]
    %v467 = vld [vmem:[#allocation5 + $0x614] sm:$0xff]
    %v468 = vld [vmem:[#allocation5 + $0x61c] sm:$0xff]
    %v469 = vld [vmem:[#allocation5 + $0x624] sm:$0xff]
    %v470 = vld [vmem:[#allocation5 + $0x62c] sm:$0xf]
    %v471 = vld [vmem:[#allocation5 + $0x630] sm:$0xff]
    %v472 = vld [vmem:[#allocation5 + $0x638] sm:$0xff]
    %v473 = vld [vmem:[#allocation5 + $0x640] sm:$0xff]
    %v474 = vld [vmem:[#allocation5 + $0x648] sm:$0xff]
    %v475 = vld [vmem:[#allocation5 + $0x650] sm:$0xf]
    %v476 = vld [vmem:[#allocation5 + $0x654] sm:$0xff]
    %v477 = vld [vmem:[#allocation5 + $0x65c] sm:$0xff]
    %v478 = vld [vmem:[#allocation5 + $0x664] sm:$0xff]
    %v479 = vld [vmem:[#allocation5 + $0x66c] sm:$0xff]
    %v480 = vld [vmem:[#allocation5 + $0x674] sm:$0xf]
    %v481 = vld [vmem:[#allocation5 + $0x678] sm:$0xff]
    %v482 = vld [vmem:[#allocation5 + $0x680] sm:$0xff]
    %v483 = vld [vmem:[#allocation5 + $0x688] sm:$0xff]
    %v484 = vld [vmem:[#allocation5 + $0x690] sm:$0xff]
    %v485 = vld [vmem:[#allocation5 + $0x698] sm:$0xf]
    %v486 = vld [vmem:[#allocation5 + $0x69c] sm:$0xff]
    %v487 = vld [vmem:[#allocation5 + $0x6a4] sm:$0xff]
    %v488 = vld [vmem:[#allocation5 + $0x6ac] sm:$0xff]
    %v489 = vld [vmem:[#allocation5 + $0x6b4] sm:$0xff]
    %v490 = vld [vmem:[#allocation5 + $0x6bc] sm:$0xf]
    %v493 = vperm.slane %v146, 0
    %v494 = vperm.slane %v146, 1
    %v495 = vperm.slane %v146, 2
    %v496 = vperm.slane %v146, 3
    %v497 = vperm.slane %v146, 4
    %v498 = vperm.slane %v146, 5
    %v499 = vperm.slane %v146, 6
    %v500 = vperm.slane %v146, 7
    %v501 = vperm.slane %v148, 0
    %v751 = vunpack.c.l.b16 %v251
    %v752 = vunpack.c.h.b16 %v251
    %v753 = vunpack.c.l.b16 %v252
    %v754 = vunpack.c.h.b16 %v252
    %v755 = vunpack.c.l.b16 %v253
    %v756 = vunpack.c.h.b16 %v253
    %v757 = vunpack.c.l.b16 %v254
    %v758 = vunpack.c.h.b16 %v254
    %v759 = vunpack.c.l.b16 %v255
    %v760 = vunpack.c.l.b16 %v256
    %v761 = vunpack.c.h.b16 %v256
    %v762 = vunpack.c.l.b16 %v257
    %v763 = vunpack.c.h.b16 %v257
    %v764 = vunpack.c.l.b16 %v258
    %v765 = vunpack.c.h.b16 %v258
    %v766 = vunpack.c.l.b16 %v259
    %v767 = vunpack.c.h.b16 %v259
    %v768 = vunpack.c.l.b16 %v260
    %v769 = vunpack.c.l.b16 %v261
    %v770 = vunpack.c.h.b16 %v261
    %v771 = vunpack.c.l.b16 %v262
    %v772 = vunpack.c.h.b16 %v262
    %v773 = vunpack.c.l.b16 %v263
    %v774 = vunpack.c.h.b16 %v263
    %v775 = vunpack.c.l.b16 %v264
    %v776 = vunpack.c.h.b16 %v264
    %v777 = vunpack.c.l.b16 %v265
    %v778 = vunpack.c.l.b16 %v266
    %v779 = vunpack.c.h.b16 %v266
    %v780 = vunpack.c.l.b16 %v267
    %v781 = vunpack.c.h.b16 %v267
    %v782 = vunpack.c.l.b16 %v268
    %v783 = vunpack.c.h.b16 %v268
    %v784 = vunpack.c.l.b16 %v269
    %v785 = vunpack.c.h.b16 %v269
    %v786 = vunpack.c.l.b16 %v270
    %v787 = vunpack.c.l.b16 %v271
    %v788 = vunpack.c.h.b16 %v271
    %v789 = vunpack.c.l.b16 %v272
    %v790 = vunpack.c.h.b16 %v272
    %v791 = vunpack.c.l.b16 %v273
    %v792 = vunpack.c.h.b16 %v273
    %v793 = vunpack.c.l.b16 %v274
    %v794 = vunpack.c.h.b16 %v274
    %v795 = vunpack.c.l.b16 %v275
    %v796 = vunpack.c.l.b16 %v276
    %v797 = vunpack.c.h.b16 %v276
    %v798 = vunpack.c.l.b16 %v277
    %v799 = vunpack.c.h.b16 %v277
    %v800 = vunpack.c.l.b16 %v278
    %v801 = vunpack.c.h.b16 %v278
    %v802 = vunpack.c.l.b16 %v279
    %v803 = vunpack.c.h.b16 %v279
    %v804 = vunpack.c.l.b16 %v280
    %v805 = vunpack.c.l.b16 %v281
    %v806 = vunpack.c.h.b16 %v281
    %v807 = vunpack.c.l.b16 %v282
    %v808 = vunpack.c.h.b16 %v282
    %v809 = vunpack.c.l.b16 %v283
    %v810 = vunpack.c.h.b16 %v283
    %v811 = vunpack.c.l.b16 %v284
    %v812 = vunpack.c.h.b16 %v284
    %v813 = vunpack.c.l.b16 %v285
    %v814 = vunpack.c.l.b16 %v286
    %v815 = vunpack.c.h.b16 %v286
    %v816 = vunpack.c.l.b16 %v287
    %v817 = vunpack.c.h.b16 %v287
    %v818 = vunpack.c.l.b16 %v288
    %v819 = vunpack.c.h.b16 %v288
    %v820 = vunpack.c.l.b16 %v289
    %v821 = vunpack.c.h.b16 %v289
    %v822 = vunpack.c.l.b16 %v290
    %v823 = vunpack.c.l.b16 %v291
    %v824 = vunpack.c.h.b16 %v291
    %v825 = vunpack.c.l.b16 %v292
    %v826 = vunpack.c.h.b16 %v292
    %v827 = vunpack.c.l.b16 %v293
    %v828 = vunpack.c.h.b16 %v293
    %v829 = vunpack.c.l.b16 %v294
    %v830 = vunpack.c.h.b16 %v294
    %v831 = vunpack.c.l.b16 %v295
    %v832 = vunpack.c.l.b16 %v296
    %v833 = vunpack.c.h.b16 %v296
    %v834 = vunpack.c.l.b16 %v297
    %v835 = vunpack.c.h.b16 %v297
    %v836 = vunpack.c.l.b16 %v298
    %v837 = vunpack.c.h.b16 %v298
    %v838 = vunpack.c.l.b16 %v299
    %v839 = vunpack.c.h.b16 %v299
    %v840 = vunpack.c.l.b16 %v300
    %v841 = vunpack.c.l.b16 %v301
    %v842 = vunpack.c.h.b16 %v301
    %v843 = vunpack.c.l.b16 %v302
    %v844 = vunpack.c.h.b16 %v302
    %v845 = vunpack.c.l.b16 %v303
    %v846 = vunpack.c.h.b16 %v303
    %v847 = vunpack.c.l.b16 %v304
    %v848 = vunpack.c.h.b16 %v304
    %v849 = vunpack.c.l.b16 %v305
    %v850 = vunpack.c.l.b16 %v306
    %v851 = vunpack.c.h.b16 %v306
    %v852 = vunpack.c.l.b16 %v307
    %v853 = vunpack.c.h.b16 %v307
    %v854 = vunpack.c.l.b16 %v308
    %v855 = vunpack.c.h.b16 %v308
    %v856 = vunpack.c.l.b16 %v309
    %v857 = vunpack.c.h.b16 %v309
    %v858 = vunpack.c.l.b16 %v310
    %v859 = vunpack.c.l.b16 %v311
    %v860 = vunpack.c.h.b16 %v311
    %v861 = vunpack.c.l.b16 %v312
    %v862 = vunpack.c.h.b16 %v312
    %v863 = vunpack.c.l.b16 %v313
    %v864 = vunpack.c.h.b16 %v313
    %v865 = vunpack.c.l.b16 %v314
    %v866 = vunpack.c.h.b16 %v314
    %v867 = vunpack.c.l.b16 %v315
    %v868 = vunpack.c.l.b16 %v316
    %v869 = vunpack.c.h.b16 %v316
    %v870 = vunpack.c.l.b16 %v317
    %v871 = vunpack.c.h.b16 %v317
    %v872 = vunpack.c.l.b16 %v318
    %v873 = vunpack.c.h.b16 %v318
    %v874 = vunpack.c.l.b16 %v319
    %v875 = vunpack.c.h.b16 %v319
    %v876 = vunpack.c.l.b16 %v320
    %v877 = vunpack.c.l.b16 %v321
    %v878 = vunpack.c.h.b16 %v321
    %v879 = vunpack.c.l.b16 %v322
    %v880 = vunpack.c.h.b16 %v322
    %v881 = vunpack.c.l.b16 %v323
    %v882 = vunpack.c.h.b16 %v323
    %v883 = vunpack.c.l.b16 %v324
    %v884 = vunpack.c.h.b16 %v324
    %v885 = vunpack.c.l.b16 %v325
    %v886 = vunpack.c.l.b16 %v326
    %v887 = vunpack.c.h.b16 %v326
    %v888 = vunpack.c.l.b16 %v327
    %v889 = vunpack.c.h.b16 %v327
    %v890 = vunpack.c.l.b16 %v328
    %v891 = vunpack.c.h.b16 %v328
    %v892 = vunpack.c.l.b16 %v329
    %v893 = vunpack.c.h.b16 %v329
    %v894 = vunpack.c.l.b16 %v330
    %v895 = vunpack.c.l.b16 %v331
    %v896 = vunpack.c.h.b16 %v331
    %v897 = vunpack.c.l.b16 %v332
    %v898 = vunpack.c.h.b16 %v332
    %v899 = vunpack.c.l.b16 %v333
    %v900 = vunpack.c.h.b16 %v333
    %v901 = vunpack.c.l.b16 %v334
    %v902 = vunpack.c.h.b16 %v334
    %v903 = vunpack.c.l.b16 %v335
    %v904 = vunpack.c.l.b16 %v336
    %v905 = vunpack.c.h.b16 %v336
    %v906 = vunpack.c.l.b16 %v337
    %v907 = vunpack.c.h.b16 %v337
    %v908 = vunpack.c.l.b16 %v338
    %v909 = vunpack.c.h.b16 %v338
    %v910 = vunpack.c.l.b16 %v339
    %v911 = vunpack.c.h.b16 %v339
    %v912 = vunpack.c.l.b16 %v340
    %v913 = vunpack.c.l.b16 %v341
    %v914 = vunpack.c.h.b16 %v341
    %v915 = vunpack.c.l.b16 %v342
    %v916 = vunpack.c.h.b16 %v342
    %v917 = vunpack.c.l.b16 %v343
    %v918 = vunpack.c.h.b16 %v343
    %v919 = vunpack.c.l.b16 %v344
    %v920 = vunpack.c.h.b16 %v344
    %v921 = vunpack.c.l.b16 %v345
    %v922 = vunpack.c.l.b16 %v346
    %v923 = vunpack.c.h.b16 %v346
    %v924 = vunpack.c.l.b16 %v347
    %v925 = vunpack.c.h.b16 %v347
    %v926 = vunpack.c.l.b16 %v348
    %v927 = vunpack.c.h.b16 %v348
    %v928 = vunpack.c.l.b16 %v349
    %v929 = vunpack.c.h.b16 %v349
    %v930 = vunpack.c.l.b16 %v350
    %v931 = vunpack.c.l.b16 %v351
    %v932 = vunpack.c.h.b16 %v351
    %v933 = vunpack.c.l.b16 %v352
    %v934 = vunpack.c.h.b16 %v352
    %v935 = vunpack.c.l.b16 %v353
    %v936 = vunpack.c.h.b16 %v353
    %v937 = vunpack.c.l.b16 %v354
    %v938 = vunpack.c.h.b16 %v354
    %v939 = vunpack.c.l.b16 %v355
    %v940 = vunpack.c.l.b16 %v356
    %v941 = vunpack.c.h.b16 %v356
    %v942 = vunpack.c.l.b16 %v357
    %v943 = vunpack.c.h.b16 %v357
    %v944 = vunpack.c.l.b16 %v358
    %v945 = vunpack.c.h.b16 %v358
    %v946 = vunpack.c.l.b16 %v359
    %v947 = vunpack.c.h.b16 %v359
    %v948 = vunpack.c.l.b16 %v360
    %v949 = vunpack.c.l.b16 %v361
    %v950 = vunpack.c.h.b16 %v361
    %v951 = vunpack.c.l.b16 %v362
    %v952 = vunpack.c.h.b16 %v362
    %v953 = vunpack.c.l.b16 %v363
    %v954 = vunpack.c.h.b16 %v363
    %v955 = vunpack.c.l.b16 %v364
    %v956 = vunpack.c.h.b16 %v364
    %v957 = vunpack.c.l.b16 %v365
    %v958 = vunpack.c.l.b16 %v366
    %v959 = vunpack.c.h.b16 %v366
    %v960 = vunpack.c.l.b16 %v367
    %v961 = vunpack.c.h.b16 %v367
    %v962 = vunpack.c.l.b16 %v368
    %v963 = vunpack.c.h.b16 %v368
    %v964 = vunpack.c.l.b16 %v369
    %v965 = vunpack.c.h.b16 %v369
    %v966 = vunpack.c.l.b16 %v370
    %v967 = vunpack.c.l.b16 %v371
    %v968 = vunpack.c.h.b16 %v371
    %v969 = vunpack.c.l.b16 %v372
    %v970 = vunpack.c.h.b16 %v372
    %v971 = vunpack.c.l.b16 %v373
    %v972 = vunpack.c.h.b16 %v373
    %v973 = vunpack.c.l.b16 %v374
    %v974 = vunpack.c.h.b16 %v374
    %v975 = vunpack.c.l.b16 %v375
    %v976 = vunpack.c.l.b16 %v376
    %v977 = vunpack.c.h.b16 %v376
    %v978 = vunpack.c.l.b16 %v377
    %v979 = vunpack.c.h.b16 %v377
    %v980 = vunpack.c.l.b16 %v378
    %v981 = vunpack.c.h.b16 %v378
    %v982 = vunpack.c.l.b16 %v379
    %v983 = vunpack.c.h.b16 %v379
    %v984 = vunpack.c.l.b16 %v380
    %v985 = vunpack.c.l.b16 %v381
    %v986 = vunpack.c.h.b16 %v381
    %v987 = vunpack.c.l.b16 %v382
    %v988 = vunpack.c.h.b16 %v382
    %v989 = vunpack.c.l.b16 %v383
    %v990 = vunpack.c.h.b16 %v383
    %v991 = vunpack.c.l.b16 %v384
    %v992 = vunpack.c.h.b16 %v384
    %v993 = vunpack.c.l.b16 %v385
    %v994 = vunpack.c.l.b16 %v386
    %v995 = vunpack.c.h.b16 %v386
    %v996 = vunpack.c.l.b16 %v387
    %v997 = vunpack.c.h.b16 %v387
    %v998 = vunpack.c.l.b16 %v388
    %v999 = vunpack.c.h.b16 %v388
    %v1000 = vunpack.c.l.b16 %v389
    %v1001 = vunpack.c.h.b16 %v389
    %v1002 = vunpack.c.l.b16 %v390
    %v1003 = vunpack.c.l.b16 %v391
    %v1004 = vunpack.c.h.b16 %v391
    %v1005 = vunpack.c.l.b16 %v392
    %v1006 = vunpack.c.h.b16 %v392
    %v1007 = vunpack.c.l.b16 %v393
    %v1008 = vunpack.c.h.b16 %v393
    %v1009 = vunpack.c.l.b16 %v394
    %v1010 = vunpack.c.h.b16 %v394
    %v1011 = vunpack.c.l.b16 %v395
    %v1012 = vunpack.c.l.b16 %v396
    %v1013 = vunpack.c.h.b16 %v396
    %v1014 = vunpack.c.l.b16 %v397
    %v1015 = vunpack.c.h.b16 %v397
    %v1016 = vunpack.c.l.b16 %v398
    %v1017 = vunpack.c.h.b16 %v398
    %v1018 = vunpack.c.l.b16 %v399
    %v1019 = vunpack.c.h.b16 %v399
    %v1020 = vunpack.c.l.b16 %v400
    %v1021 = vunpack.c.l.b16 %v401
    %v1022 = vunpack.c.h.b16 %v401
    %v1023 = vunpack.c.l.b16 %v402
    %v1024 = vunpack.c.h.b16 %v402
    %v1025 = vunpack.c.l.b16 %v403
    %v1026 = vunpack.c.h.b16 %v403
    %v1027 = vunpack.c.l.b16 %v404
    %v1028 = vunpack.c.h.b16 %v404
    %v1029 = vunpack.c.l.b16 %v405
    %v1030 = vunpack.c.l.b16 %v406
    %v1031 = vunpack.c.h.b16 %v406
    %v1032 = vunpack.c.l.b16 %v407
    %v1033 = vunpack.c.h.b16 %v407
    %v1034 = vunpack.c.l.b16 %v408
    %v1035 = vunpack.c.h.b16 %v408
    %v1036 = vunpack.c.l.b16 %v409
    %v1037 = vunpack.c.h.b16 %v409
    %v1038 = vunpack.c.l.b16 %v410
    %v1039 = vunpack.c.l.b16 %v411
    %v1040 = vunpack.c.h.b16 %v411
    %v1041 = vunpack.c.l.b16 %v412
    %v1042 = vunpack.c.h.b16 %v412
    %v1043 = vunpack.c.l.b16 %v413
    %v1044 = vunpack.c.h.b16 %v413
    %v1045 = vunpack.c.l.b16 %v414
    %v1046 = vunpack.c.h.b16 %v414
    %v1047 = vunpack.c.l.b16 %v415
    %v1048 = vunpack.c.l.b16 %v416
    %v1049 = vunpack.c.h.b16 %v416
    %v1050 = vunpack.c.l.b16 %v417
    %v1051 = vunpack.c.h.b16 %v417
    %v1052 = vunpack.c.l.b16 %v418
    %v1053 = vunpack.c.h.b16 %v418
    %v1054 = vunpack.c.l.b16 %v419
    %v1055 = vunpack.c.h.b16 %v419
    %v1056 = vunpack.c.l.b16 %v420
    %v1057 = vunpack.c.l.b16 %v421
    %v1058 = vunpack.c.h.b16 %v421
    %v1059 = vunpack.c.l.b16 %v422
    %v1060 = vunpack.c.h.b16 %v422
    %v1061 = vunpack.c.l.b16 %v423
    %v1062 = vunpack.c.h.b16 %v423
    %v1063 = vunpack.c.l.b16 %v424
    %v1064 = vunpack.c.h.b16 %v424
    %v1065 = vunpack.c.l.b16 %v425
    %v1066 = vunpack.c.l.b16 %v426
    %v1067 = vunpack.c.h.b16 %v426
    %v1068 = vunpack.c.l.b16 %v427
    %v1069 = vunpack.c.h.b16 %v427
    %v1070 = vunpack.c.l.b16 %v428
    %v1071 = vunpack.c.h.b16 %v428
    %v1072 = vunpack.c.l.b16 %v429
    %v1073 = vunpack.c.h.b16 %v429
    %v1074 = vunpack.c.l.b16 %v430
    %v1075 = vunpack.c.l.b16 %v431
    %v1076 = vunpack.c.h.b16 %v431
    %v1077 = vunpack.c.l.b16 %v432
    %v1078 = vunpack.c.h.b16 %v432
    %v1079 = vunpack.c.l.b16 %v433
    %v1080 = vunpack.c.h.b16 %v433
    %v1081 = vunpack.c.l.b16 %v434
    %v1082 = vunpack.c.h.b16 %v434
    %v1083 = vunpack.c.l.b16 %v435
    %v1084 = vunpack.c.l.b16 %v436
    %v1085 = vunpack.c.h.b16 %v436
    %v1086 = vunpack.c.l.b16 %v437
    %v1087 = vunpack.c.h.b16 %v437
    %v1088 = vunpack.c.l.b16 %v438
    %v1089 = vunpack.c.h.b16 %v438
    %v1090 = vunpack.c.l.b16 %v439
    %v1091 = vunpack.c.h.b16 %v439
    %v1092 = vunpack.c.l.b16 %v440
    %v1093 = vunpack.c.l.b16 %v441
    %v1094 = vunpack.c.h.b16 %v441
    %v1095 = vunpack.c.l.b16 %v442
    %v1096 = vunpack.c.h.b16 %v442
    %v1097 = vunpack.c.l.b16 %v443
    %v1098 = vunpack.c.h.b16 %v443
    %v1099 = vunpack.c.l.b16 %v444
    %v1100 = vunpack.c.h.b16 %v444
    %v1101 = vunpack.c.l.b16 %v445
    %v1102 = vunpack.c.l.b16 %v446
    %v1103 = vunpack.c.h.b16 %v446
    %v1104 = vunpack.c.l.b16 %v447
    %v1105 = vunpack.c.h.b16 %v447
    %v1106 = vunpack.c.l.b16 %v448
    %v1107 = vunpack.c.h.b16 %v448
    %v1108 = vunpack.c.l.b16 %v449
    %v1109 = vunpack.c.h.b16 %v449
    %v1110 = vunpack.c.l.b16 %v450
    %v1111 = vunpack.c.l.b16 %v451
    %v1112 = vunpack.c.h.b16 %v451
    %v1113 = vunpack.c.l.b16 %v452
    %v1114 = vunpack.c.h.b16 %v452
    %v1115 = vunpack.c.l.b16 %v453
    %v1116 = vunpack.c.h.b16 %v453
    %v1117 = vunpack.c.l.b16 %v454
    %v1118 = vunpack.c.h.b16 %v454
    %v1119 = vunpack.c.l.b16 %v455
    %v1120 = vunpack.c.l.b16 %v456
    %v1121 = vunpack.c.h.b16 %v456
    %v1122 = vunpack.c.l.b16 %v457
    %v1123 = vunpack.c.h.b16 %v457
    %v1124 = vunpack.c.l.b16 %v458
    %v1125 = vunpack.c.h.b16 %v458
    %v1126 = vunpack.c.l.b16 %v459
    %v1127 = vunpack.c.h.b16 %v459
    %v1128 = vunpack.c.l.b16 %v460
    %v1129 = vunpack.c.l.b16 %v461
    %v1130 = vunpack.c.h.b16 %v461
    %v1131 = vunpack.c.l.b16 %v462
    %v1132 = vunpack.c.h.b16 %v462
    %v1133 = vunpack.c.l.b16 %v463
    %v1134 = vunpack.c.h.b16 %v463
    %v1135 = vunpack.c.l.b16 %v464
    %v1136 = vunpack.c.h.b16 %v464
    %v1137 = vunpack.c.l.b16 %v465
    %v1138 = vunpack.c.l.b16 %v466
    %v1139 = vunpack.c.h.b16 %v466
    %v1140 = vunpack.c.l.b16 %v467
    %v1141 = vunpack.c.h.b16 %v467
    %v1142 = vunpack.c.l.b16 %v468
    %v1143 = vunpack.c.h.b16 %v468
    %v1144 = vunpack.c.l.b16 %v469
    %v1145 = vunpack.c.h.b16 %v469
    %v1146 = vunpack.c.l.b16 %v470
    %v1147 = vunpack.c.l.b16 %v471
    %v1148 = vunpack.c.h.b16 %v471
    %v1149 = vunpack.c.l.b16 %v472
    %v1150 = vunpack.c.h.b16 %v472
    %v1151 = vunpack.c.l.b16 %v473
    %v1152 = vunpack.c.h.b16 %v473
    %v1153 = vunpack.c.l.b16 %v474
    %v1154 = vunpack.c.h.b16 %v474
    %v1155 = vunpack.c.l.b16 %v475
    %v1156 = vunpack.c.l.b16 %v476
    %v1157 = vunpack.c.h.b16 %v476
    %v1158 = vunpack.c.l.b16 %v477
    %v1159 = vunpack.c.h.b16 %v477
    %v1160 = vunpack.c.l.b16 %v478
    %v1161 = vunpack.c.h.b16 %v478
    %v1162 = vunpack.c.l.b16 %v479
    %v1163 = vunpack.c.h.b16 %v479
    %v1164 = vunpack.c.l.b16 %v480
    %v1165 = vunpack.c.l.b16 %v481
    %v1166 = vunpack.c.h.b16 %v481
    %v1167 = vunpack.c.l.b16 %v482
    %v1168 = vunpack.c.h.b16 %v482
    %v1169 = vunpack.c.l.b16 %v483
    %v1170 = vunpack.c.h.b16 %v483
    %v1171 = vunpack.c.l.b16 %v484
    %v1172 = vunpack.c.h.b16 %v484
    %v1173 = vunpack.c.l.b16 %v485
    %v1174 = vunpack.c.l.b16 %v486
    %v1175 = vunpack.c.h.b16 %v486
    %v1176 = vunpack.c.l.b16 %v487
    %v1177 = vunpack.c.h.b16 %v487
    %v1178 = vunpack.c.l.b16 %v488
    %v1179 = vunpack.c.h.b16 %v488
    %v1180 = vunpack.c.l.b16 %v489
    %v1181 = vunpack.c.h.b16 %v489
    %v1182 = vunpack.c.l.b16 %v490
    %v1183 = vpack.c.b16 %v760, %v751
    %v1184 = vpack.c.b16 %v761, %v752
    %v1185 = vpack.c.b16 %v762, %v753
    %v1186 = vpack.c.b16 %v763, %v754
    %v1187 = vpack.c.b16 %v764, %v755
    %v1188 = vpack.c.b16 %v765, %v756
    %v1189 = vpack.c.b16 %v766, %v757
    %v1190 = vpack.c.b16 %v767, %v758
    %v1191 = vpack.c.b16 %v768, %v759
    %v1192 = vpack.c.b16 %v778, %v769
    %v1193 = vpack.c.b16 %v779, %v770
    %v1194 = vpack.c.b16 %v780, %v771
    %v1195 = vpack.c.b16 %v781, %v772
    %v1196 = vpack.c.b16 %v782, %v773
    %v1197 = vpack.c.b16 %v783, %v774
    %v1198 = vpack.c.b16 %v784, %v775
    %v1199 = vpack.c.b16 %v785, %v776
    %v1200 = vpack.c.b16 %v786, %v777
    %v1201 = vpack.c.b16 %v796, %v787
    %v1202 = vpack.c.b16 %v797, %v788
    %v1203 = vpack.c.b16 %v798, %v789
    %v1204 = vpack.c.b16 %v799, %v790
    %v1205 = vpack.c.b16 %v800, %v791
    %v1206 = vpack.c.b16 %v801, %v792
    %v1207 = vpack.c.b16 %v802, %v793
    %v1208 = vpack.c.b16 %v803, %v794
    %v1209 = vpack.c.b16 %v804, %v795
    %v1210 = vpack.c.b16 %v814, %v805
    %v1211 = vpack.c.b16 %v815, %v806
    %v1212 = vpack.c.b16 %v816, %v807
    %v1213 = vpack.c.b16 %v817, %v808
    %v1214 = vpack.c.b16 %v818, %v809
    %v1215 = vpack.c.b16 %v819, %v810
    %v1216 = vpack.c.b16 %v820, %v811
    %v1217 = vpack.c.b16 %v821, %v812
    %v1218 = vpack.c.b16 %v822, %v813
    %v1219 = vpack.c.b16 %v832, %v823
    %v1220 = vpack.c.b16 %v833, %v824
    %v1221 = vpack.c.b16 %v834, %v825
    %v1222 = vpack.c.b16 %v835, %v826
    %v1223 = vpack.c.b16 %v836, %v827
    %v1224 = vpack.c.b16 %v837, %v828
    %v1225 = vpack.c.b16 %v838, %v829
    %v1226 = vpack.c.b16 %v839, %v830
    %v1227 = vpack.c.b16 %v840, %v831
    %v1228 = vpack.c.b16 %v850, %v841
    %v1229 = vpack.c.b16 %v851, %v842
    %v1230 = vpack.c.b16 %v852, %v843
    %v1231 = vpack.c.b16 %v853, %v844
    %v1232 = vpack.c.b16 %v854, %v845
    %v1233 = vpack.c.b16 %v855, %v846
    %v1234 = vpack.c.b16 %v856, %v847
    %v1235 = vpack.c.b16 %v857, %v848
    %v1236 = vpack.c.b16 %v858, %v849
    %v1237 = vpack.c.b16 %v868, %v859
    %v1238 = vpack.c.b16 %v869, %v860
    %v1239 = vpack.c.b16 %v870, %v861
    %v1240 = vpack.c.b16 %v871, %v862
    %v1241 = vpack.c.b16 %v872, %v863
    %v1242 = vpack.c.b16 %v873, %v864
    %v1243 = vpack.c.b16 %v874, %v865
    %v1244 = vpack.c.b16 %v875, %v866
    %v1245 = vpack.c.b16 %v876, %v867
    %v1246 = vpack.c.b16 %v886, %v877
    %v1247 = vpack.c.b16 %v887, %v878
    %v1248 = vpack.c.b16 %v888, %v879
    %v1249 = vpack.c.b16 %v889, %v880
    %v1250 = vpack.c.b16 %v890, %v881
    %v1251 = vpack.c.b16 %v891, %v882
    %v1252 = vpack.c.b16 %v892, %v883
    %v1253 = vpack.c.b16 %v893, %v884
    %v1254 = vpack.c.b16 %v894, %v885
    %v1255 = vpack.c.b16 %v904, %v895
    %v1256 = vpack.c.b16 %v905, %v896
    %v1257 = vpack.c.b16 %v906, %v897
    %v1258 = vpack.c.b16 %v907, %v898
    %v1259 = vpack.c.b16 %v908, %v899
    %v1260 = vpack.c.b16 %v909, %v900
    %v1261 = vpack.c.b16 %v910, %v901
    %v1262 = vpack.c.b16 %v911, %v902
    %v1263 = vpack.c.b16 %v912, %v903
    %v1264 = vpack.c.b16 %v922, %v913
    %v1265 = vpack.c.b16 %v923, %v914
    %v1266 = vpack.c.b16 %v924, %v915
    %v1267 = vpack.c.b16 %v925, %v916
    %v1268 = vpack.c.b16 %v926, %v917
    %v1269 = vpack.c.b16 %v927, %v918
    %v1270 = vpack.c.b16 %v928, %v919
    %v1271 = vpack.c.b16 %v929, %v920
    %v1272 = vpack.c.b16 %v930, %v921
    %v1273 = vpack.c.b16 %v940, %v931
    %v1274 = vpack.c.b16 %v941, %v932
    %v1275 = vpack.c.b16 %v942, %v933
    %v1276 = vpack.c.b16 %v943, %v934
    %v1277 = vpack.c.b16 %v944, %v935
    %v1278 = vpack.c.b16 %v945, %v936
    %v1279 = vpack.c.b16 %v946, %v937
    %v1280 = vpack.c.b16 %v947, %v938
    %v1281 = vpack.c.b16 %v948, %v939
    %v1282 = vpack.c.b16 %v958, %v949
    %v1283 = vpack.c.b16 %v959, %v950
    %v1284 = vpack.c.b16 %v960, %v951
    %v1285 = vpack.c.b16 %v961, %v952
    %v1286 = vpack.c.b16 %v962, %v953
    %v1287 = vpack.c.b16 %v963, %v954
    %v1288 = vpack.c.b16 %v964, %v955
    %v1289 = vpack.c.b16 %v965, %v956
    %v1290 = vpack.c.b16 %v966, %v957
    %v1291 = vpack.c.b16 %v976, %v967
    %v1292 = vpack.c.b16 %v977, %v968
    %v1293 = vpack.c.b16 %v978, %v969
    %v1294 = vpack.c.b16 %v979, %v970
    %v1295 = vpack.c.b16 %v980, %v971
    %v1296 = vpack.c.b16 %v981, %v972
    %v1297 = vpack.c.b16 %v982, %v973
    %v1298 = vpack.c.b16 %v983, %v974
    %v1299 = vpack.c.b16 %v984, %v975
    %v1300 = vpack.c.b16 %v994, %v985
    %v1301 = vpack.c.b16 %v995, %v986
    %v1302 = vpack.c.b16 %v996, %v987
    %v1303 = vpack.c.b16 %v997, %v988
    %v1304 = vpack.c.b16 %v998, %v989
    %v1305 = vpack.c.b16 %v999, %v990
    %v1306 = vpack.c.b16 %v1000, %v991
    %v1307 = vpack.c.b16 %v1001, %v992
    %v1308 = vpack.c.b16 %v1002, %v993
    %v1309 = vpack.c.b16 %v1012, %v1003
    %v1310 = vpack.c.b16 %v1013, %v1004
    %v1311 = vpack.c.b16 %v1014, %v1005
    %v1312 = vpack.c.b16 %v1015, %v1006
    %v1313 = vpack.c.b16 %v1016, %v1007
    %v1314 = vpack.c.b16 %v1017, %v1008
    %v1315 = vpack.c.b16 %v1018, %v1009
    %v1316 = vpack.c.b16 %v1019, %v1010
    %v1317 = vpack.c.b16 %v1020, %v1011
    %v1318 = vpack.c.b16 %v1030, %v1021
    %v1319 = vpack.c.b16 %v1031, %v1022
    %v1320 = vpack.c.b16 %v1032, %v1023
    %v1321 = vpack.c.b16 %v1033, %v1024
    %v1322 = vpack.c.b16 %v1034, %v1025
    %v1323 = vpack.c.b16 %v1035, %v1026
    %v1324 = vpack.c.b16 %v1036, %v1027
    %v1325 = vpack.c.b16 %v1037, %v1028
    %v1326 = vpack.c.b16 %v1038, %v1029
    %v1327 = vpack.c.b16 %v1048, %v1039
    %v1328 = vpack.c.b16 %v1049, %v1040
    %v1329 = vpack.c.b16 %v1050, %v1041
    %v1330 = vpack.c.b16 %v1051, %v1042
    %v1331 = vpack.c.b16 %v1052, %v1043
    %v1332 = vpack.c.b16 %v1053, %v1044
    %v1333 = vpack.c.b16 %v1054, %v1045
    %v1334 = vpack.c.b16 %v1055, %v1046
    %v1335 = vpack.c.b16 %v1056, %v1047
    %v1336 = vpack.c.b16 %v1066, %v1057
    %v1337 = vpack.c.b16 %v1067, %v1058
    %v1338 = vpack.c.b16 %v1068, %v1059
    %v1339 = vpack.c.b16 %v1069, %v1060
    %v1340 = vpack.c.b16 %v1070, %v1061
    %v1341 = vpack.c.b16 %v1071, %v1062
    %v1342 = vpack.c.b16 %v1072, %v1063
    %v1343 = vpack.c.b16 %v1073, %v1064
    %v1344 = vpack.c.b16 %v1074, %v1065
    %v1345 = vpack.c.b16 %v1084, %v1075
    %v1346 = vpack.c.b16 %v1085, %v1076
    %v1347 = vpack.c.b16 %v1086, %v1077
    %v1348 = vpack.c.b16 %v1087, %v1078
    %v1349 = vpack.c.b16 %v1088, %v1079
    %v1350 = vpack.c.b16 %v1089, %v1080
    %v1351 = vpack.c.b16 %v1090, %v1081
    %v1352 = vpack.c.b16 %v1091, %v1082
    %v1353 = vpack.c.b16 %v1092, %v1083
    %v1354 = vpack.c.b16 %v1102, %v1093
    %v1355 = vpack.c.b16 %v1103, %v1094
    %v1356 = vpack.c.b16 %v1104, %v1095
    %v1357 = vpack.c.b16 %v1105, %v1096
    %v1358 = vpack.c.b16 %v1106, %v1097
    %v1359 = vpack.c.b16 %v1107, %v1098
    %v1360 = vpack.c.b16 %v1108, %v1099
    %v1361 = vpack.c.b16 %v1109, %v1100
    %v1362 = vpack.c.b16 %v1110, %v1101
    %v1363 = vpack.c.b16 %v1120, %v1111
    %v1364 = vpack.c.b16 %v1121, %v1112
    %v1365 = vpack.c.b16 %v1122, %v1113
    %v1366 = vpack.c.b16 %v1123, %v1114
    %v1367 = vpack.c.b16 %v1124, %v1115
    %v1368 = vpack.c.b16 %v1125, %v1116
    %v1369 = vpack.c.b16 %v1126, %v1117
    %v1370 = vpack.c.b16 %v1127, %v1118
    %v1371 = vpack.c.b16 %v1128, %v1119
    %v1372 = vpack.c.b16 %v1138, %v1129
    %v1373 = vpack.c.b16 %v1139, %v1130
    %v1374 = vpack.c.b16 %v1140, %v1131
    %v1375 = vpack.c.b16 %v1141, %v1132
    %v1376 = vpack.c.b16 %v1142, %v1133
    %v1377 = vpack.c.b16 %v1143, %v1134
    %v1378 = vpack.c.b16 %v1144, %v1135
    %v1379 = vpack.c.b16 %v1145, %v1136
    %v1380 = vpack.c.b16 %v1146, %v1137
    %v1381 = vpack.c.b16 %v1156, %v1147
    %v1382 = vpack.c.b16 %v1157, %v1148
    %v1383 = vpack.c.b16 %v1158, %v1149
    %v1384 = vpack.c.b16 %v1159, %v1150
    %v1385 = vpack.c.b16 %v1160, %v1151
    %v1386 = vpack.c.b16 %v1161, %v1152
    %v1387 = vpack.c.b16 %v1162, %v1153
    %v1388 = vpack.c.b16 %v1163, %v1154
    %v1389 = vpack.c.b16 %v1164, %v1155
    %v1390 = vpack.c.b16 %v1174, %v1165
    %v1391 = vpack.c.b16 %v1175, %v1166
    %v1392 = vpack.c.b16 %v1176, %v1167
    %v1393 = vpack.c.b16 %v1177, %v1168
    %v1394 = vpack.c.b16 %v1178, %v1169
    %v1395 = vpack.c.b16 %v1179, %v1170
    %v1396 = vpack.c.b16 %v1180, %v1171
    %v1397 = vpack.c.b16 %v1181, %v1172
    %v1398 = vpack.c.b16 %v1182, %v1173
    %1615 = vmatpush.bf16.msra.mxu0 %v1246
    %1616 = vmatpush.bf16.msra.mxu0 %v1237
    %1617 = vmatpush.bf16.msra.mxu0 %v1228
    %1618 = vmatpush.bf16.msra.mxu0 %v1219
    %1619 = vmatpush.bf16.msra.mxu0 %v1210
    %1620 = vmatpush.bf16.msra.mxu0 %v1201
    %1621 = vmatpush.bf16.msra.mxu0 %v1192
    %1622 = vmatpush.bf16.msra.mxu0 %v1183
    %1623 = vmatmul.bf16.gmra.mxu0 %v248
    %v1624 = vpop.f32.mrf.mxu0
    %v1625 = vadd.f32 %v493, %v1624
    %v1626 = vpop.f32.mrf.mxu0
    %v1627 = vadd.f32 %v493, %v1626
    %1628 = vdwg.mxu0
    %1629 = vmatpush.bf16.msra.mxu0 %v1318
    %1630 = vmatpush.bf16.msra.mxu0 %v1309
    %1631 = vmatpush.bf16.msra.mxu0 %v1300
    %1632 = vmatpush.bf16.msra.mxu0 %v1291
    %1633 = vmatpush.bf16.msra.mxu0 %v1282
    %1634 = vmatpush.bf16.msra.mxu0 %v1273
    %1635 = vmatpush.bf16.msra.mxu0 %v1264
    %1636 = vmatpush.bf16.msra.mxu0 %v1255
    %1637 = vmatmul.bf16.gmra.mxu0 %v249
    %v1638 = vpop.f32.mrf.mxu0
    %v1639 = vadd.f32 %v1625, %v1638
    %v1640 = vpop.f32.mrf.mxu0
    %v1641 = vadd.f32 %v1627, %v1640
    %1642 = vdwg.mxu0
    %1643 = vmatpush.bf16.msra.mxu0 %v1390
    %1644 = vmatpush.bf16.msra.mxu0 %v1381
    %1645 = vmatpush.bf16.msra.mxu0 %v1372
    %1646 = vmatpush.bf16.msra.mxu0 %v1363
    %1647 = vmatpush.bf16.msra.mxu0 %v1354
    %1648 = vmatpush.bf16.msra.mxu0 %v1345
    %1649 = vmatpush.bf16.msra.mxu0 %v1336
    %1650 = vmatpush.bf16.msra.mxu0 %v1327
    %1651 = vmatmul.bf16.gmra.mxu0 %v250
    %v1652 = vpop.f32.mrf.mxu0
    %v1653 = vadd.f32 %v1639, %v1652
    %v1654 = vpop.f32.mrf.mxu0
    %v1655 = vadd.f32 %v1641, %v1654
    %1656 = vdwg.mxu0
    %1657 = vmatpush.bf16.msra.mxu0 %v1247
    %1658 = vmatpush.bf16.msra.mxu0 %v1238
    %1659 = vmatpush.bf16.msra.mxu0 %v1229
    %1660 = vmatpush.bf16.msra.mxu0 %v1220
    %1661 = vmatpush.bf16.msra.mxu0 %v1211
    %1662 = vmatpush.bf16.msra.mxu0 %v1202
    %1663 = vmatpush.bf16.msra.mxu0 %v1193
    %1664 = vmatpush.bf16.msra.mxu0 %v1184
    %1665 = vmatmul.bf16.gmra.mxu0 %v248
    %v1666 = vpop.f32.mrf.mxu0
    %v1667 = vadd.f32 %v494, %v1666
    %v1668 = vpop.f32.mrf.mxu0
    %v1669 = vadd.f32 %v494, %v1668
    %1670 = vdwg.mxu0
    %1671 = vmatpush.bf16.msra.mxu0 %v1319
    %1672 = vmatpush.bf16.msra.mxu0 %v1310
    %1673 = vmatpush.bf16.msra.mxu0 %v1301
    %1674 = vmatpush.bf16.msra.mxu0 %v1292
    %1675 = vmatpush.bf16.msra.mxu0 %v1283
    %1676 = vmatpush.bf16.msra.mxu0 %v1274
    %1677 = vmatpush.bf16.msra.mxu0 %v1265
    %1678 = vmatpush.bf16.msra.mxu0 %v1256
    %1679 = vmatmul.bf16.gmra.mxu0 %v249
    %v1680 = vpop.f32.mrf.mxu0
    %v1681 = vadd.f32 %v1667, %v1680
    %v1682 = vpop.f32.mrf.mxu0
    %v1683 = vadd.f32 %v1669, %v1682
    %1684 = vdwg.mxu0
    %1685 = vmatpush.bf16.msra.mxu0 %v1391
    %1686 = vmatpush.bf16.msra.mxu0 %v1382
    %1687 = vmatpush.bf16.msra.mxu0 %v1373
    %1688 = vmatpush.bf16.msra.mxu0 %v1364
    %1689 = vmatpush.bf16.msra.mxu0 %v1355
    %1690 = vmatpush.bf16.msra.mxu0 %v1346
    %1691 = vmatpush.bf16.msra.mxu0 %v1337
    %1692 = vmatpush.bf16.msra.mxu0 %v1328
    %1693 = vmatmul.bf16.gmra.mxu0 %v250
    %v1694 = vpop.f32.mrf.mxu0
    %v1695 = vadd.f32 %v1681, %v1694
    %v1696 = vpop.f32.mrf.mxu0
    %v1697 = vadd.f32 %v1683, %v1696
    %1698 = vdwg.mxu0
    %1699 = vmatpush.bf16.msra.mxu0 %v1248
    %1700 = vmatpush.bf16.msra.mxu0 %v1239
    %1701 = vmatpush.bf16.msra.mxu0 %v1230
    %1702 = vmatpush.bf16.msra.mxu0 %v1221
    %1703 = vmatpush.bf16.msra.mxu0 %v1212
    %1704 = vmatpush.bf16.msra.mxu0 %v1203
    %1705 = vmatpush.bf16.msra.mxu0 %v1194
    %1706 = vmatpush.bf16.msra.mxu0 %v1185
    %1707 = vmatmul.bf16.gmra.mxu0 %v248
    %v1708 = vpop.f32.mrf.mxu0
    %v1709 = vadd.f32 %v495, %v1708
    %v1710 = vpop.f32.mrf.mxu0
    %v1711 = vadd.f32 %v495, %v1710
    %1712 = vdwg.mxu0
    %1713 = vmatpush.bf16.msra.mxu0 %v1320
    %1714 = vmatpush.bf16.msra.mxu0 %v1311
    %1715 = vmatpush.bf16.msra.mxu0 %v1302
    %1716 = vmatpush.bf16.msra.mxu0 %v1293
    %1717 = vmatpush.bf16.msra.mxu0 %v1284
    %1718 = vmatpush.bf16.msra.mxu0 %v1275
    %1719 = vmatpush.bf16.msra.mxu0 %v1266
    %1720 = vmatpush.bf16.msra.mxu0 %v1257
    %1721 = vmatmul.bf16.gmra.mxu0 %v249
    %v1722 = vpop.f32.mrf.mxu0
    %v1723 = vadd.f32 %v1709, %v1722
    %v1724 = vpop.f32.mrf.mxu0
    %v1725 = vadd.f32 %v1711, %v1724
    %1726 = vdwg.mxu0
    %1727 = vmatpush.bf16.msra.mxu0 %v1392
    %1728 = vmatpush.bf16.msra.mxu0 %v1383
    %1729 = vmatpush.bf16.msra.mxu0 %v1374
    %1730 = vmatpush.bf16.msra.mxu0 %v1365
    %1731 = vmatpush.bf16.msra.mxu0 %v1356
    %1732 = vmatpush.bf16.msra.mxu0 %v1347
    %1733 = vmatpush.bf16.msra.mxu0 %v1338
    %1734 = vmatpush.bf16.msra.mxu0 %v1329
    %1735 = vmatmul.bf16.gmra.mxu0 %v250
    %v1736 = vpop.f32.mrf.mxu0
    %v1737 = vadd.f32 %v1723, %v1736
    %v1738 = vpop.f32.mrf.mxu0
    %v1739 = vadd.f32 %v1725, %v1738
    %1740 = vdwg.mxu0
    %1741 = vmatpush.bf16.msra.mxu0 %v1249
    %1742 = vmatpush.bf16.msra.mxu0 %v1240
    %1743 = vmatpush.bf16.msra.mxu0 %v1231
    %1744 = vmatpush.bf16.msra.mxu0 %v1222
    %1745 = vmatpush.bf16.msra.mxu0 %v1213
    %1746 = vmatpush.bf16.msra.mxu0 %v1204
    %1747 = vmatpush.bf16.msra.mxu0 %v1195
    %1748 = vmatpush.bf16.msra.mxu0 %v1186
    %1749 = vmatmul.bf16.gmra.mxu0 %v248
    %v1750 = vpop.f32.mrf.mxu0
    %v1751 = vadd.f32 %v496, %v1750
    %v1752 = vpop.f32.mrf.mxu0
    %v1753 = vadd.f32 %v496, %v1752
    %1754 = vdwg.mxu0
    %1755 = vmatpush.bf16.msra.mxu0 %v1321
    %1756 = vmatpush.bf16.msra.mxu0 %v1312
    %1757 = vmatpush.bf16.msra.mxu0 %v1303
    %1758 = vmatpush.bf16.msra.mxu0 %v1294
    %1759 = vmatpush.bf16.msra.mxu0 %v1285
    %1760 = vmatpush.bf16.msra.mxu0 %v1276
    %1761 = vmatpush.bf16.msra.mxu0 %v1267
    %1762 = vmatpush.bf16.msra.mxu0 %v1258
    %1763 = vmatmul.bf16.gmra.mxu0 %v249
    %v1764 = vpop.f32.mrf.mxu0
    %v1765 = vadd.f32 %v1751, %v1764
    %v1766 = vpop.f32.mrf.mxu0
    %v1767 = vadd.f32 %v1753, %v1766
    %1768 = vdwg.mxu0
    %1769 = vmatpush.bf16.msra.mxu0 %v1393
    %1770 = vmatpush.bf16.msra.mxu0 %v1384
    %1771 = vmatpush.bf16.msra.mxu0 %v1375
    %1772 = vmatpush.bf16.msra.mxu0 %v1366
    %1773 = vmatpush.bf16.msra.mxu0 %v1357
    %1774 = vmatpush.bf16.msra.mxu0 %v1348
    %1775 = vmatpush.bf16.msra.mxu0 %v1339
    %1776 = vmatpush.bf16.msra.mxu0 %v1330
    %1777 = vmatmul.bf16.gmra.mxu0 %v250
    %v1778 = vpop.f32.mrf.mxu0
    %v1779 = vadd.f32 %v1765, %v1778
    %v1780 = vpop.f32.mrf.mxu0
    %v1781 = vadd.f32 %v1767, %v1780
    %1782 = vdwg.mxu0
    %1783 = vmatpush.bf16.msra.mxu0 %v1250
    %1784 = vmatpush.bf16.msra.mxu0 %v1241
    %1785 = vmatpush.bf16.msra.mxu0 %v1232
    %1786 = vmatpush.bf16.msra.mxu0 %v1223
    %1787 = vmatpush.bf16.msra.mxu0 %v1214
    %1788 = vmatpush.bf16.msra.mxu0 %v1205
    %1789 = vmatpush.bf16.msra.mxu0 %v1196
    %1790 = vmatpush.bf16.msra.mxu0 %v1187
    %1791 = vmatmul.bf16.gmra.mxu0 %v248
    %v1792 = vpop.f32.mrf.mxu0
    %v1793 = vadd.f32 %v497, %v1792
    %v1794 = vpop.f32.mrf.mxu0
    %v1795 = vadd.f32 %v497, %v1794
    %1796 = vdwg.mxu0
    %1797 = vmatpush.bf16.msra.mxu0 %v1322
    %1798 = vmatpush.bf16.msra.mxu0 %v1313
    %1799 = vmatpush.bf16.msra.mxu0 %v1304
    %1800 = vmatpush.bf16.msra.mxu0 %v1295
    %1801 = vmatpush.bf16.msra.mxu0 %v1286
    %1802 = vmatpush.bf16.msra.mxu0 %v1277
    %1803 = vmatpush.bf16.msra.mxu0 %v1268
    %1804 = vmatpush.bf16.msra.mxu0 %v1259
    %1805 = vmatmul.bf16.gmra.mxu0 %v249
    %v1806 = vpop.f32.mrf.mxu0
    %v1807 = vadd.f32 %v1793, %v1806
    %v1808 = vpop.f32.mrf.mxu0
    %v1809 = vadd.f32 %v1795, %v1808
    %1810 = vdwg.mxu0
    %1811 = vmatpush.bf16.msra.mxu0 %v1394
    %1812 = vmatpush.bf16.msra.mxu0 %v1385
    %1813 = vmatpush.bf16.msra.mxu0 %v1376
    %1814 = vmatpush.bf16.msra.mxu0 %v1367
    %1815 = vmatpush.bf16.msra.mxu0 %v1358
    %1816 = vmatpush.bf16.msra.mxu0 %v1349
    %1817 = vmatpush.bf16.msra.mxu0 %v1340
    %1818 = vmatpush.bf16.msra.mxu0 %v1331
    %1819 = vmatmul.bf16.gmra.mxu0 %v250
    %v1820 = vpop.f32.mrf.mxu0
    %v1821 = vadd.f32 %v1807, %v1820
    %v1822 = vpop.f32.mrf.mxu0
    %v1823 = vadd.f32 %v1809, %v1822
    %1824 = vdwg.mxu0
    %1825 = vmatpush.bf16.msra.mxu0 %v1251
    %1826 = vmatpush.bf16.msra.mxu0 %v1242
    %1827 = vmatpush.bf16.msra.mxu0 %v1233
    %1828 = vmatpush.bf16.msra.mxu0 %v1224
    %1829 = vmatpush.bf16.msra.mxu0 %v1215
    %1830 = vmatpush.bf16.msra.mxu0 %v1206
    %1831 = vmatpush.bf16.msra.mxu0 %v1197
    %1832 = vmatpush.bf16.msra.mxu0 %v1188
    %1833 = vmatmul.bf16.gmra.mxu0 %v248
    %v1834 = vpop.f32.mrf.mxu0
    %v1835 = vadd.f32 %v498, %v1834
    %v1836 = vpop.f32.mrf.mxu0
    %v1837 = vadd.f32 %v498, %v1836
    %1838 = vdwg.mxu0
    %1839 = vmatpush.bf16.msra.mxu0 %v1323
    %1840 = vmatpush.bf16.msra.mxu0 %v1314
    %1841 = vmatpush.bf16.msra.mxu0 %v1305
    %1842 = vmatpush.bf16.msra.mxu0 %v1296
    %1843 = vmatpush.bf16.msra.mxu0 %v1287
    %1844 = vmatpush.bf16.msra.mxu0 %v1278
    %1845 = vmatpush.bf16.msra.mxu0 %v1269
    %1846 = vmatpush.bf16.msra.mxu0 %v1260
    %1847 = vmatmul.bf16.gmra.mxu0 %v249
    %v1848 = vpop.f32.mrf.mxu0
    %v1849 = vadd.f32 %v1835, %v1848
    %v1850 = vpop.f32.mrf.mxu0
    %v1851 = vadd.f32 %v1837, %v1850
    %1852 = vdwg.mxu0
    %1853 = vmatpush.bf16.msra.mxu0 %v1395
    %1854 = vmatpush.bf16.msra.mxu0 %v1386
    %1855 = vmatpush.bf16.msra.mxu0 %v1377
    %1856 = vmatpush.bf16.msra.mxu0 %v1368
    %1857 = vmatpush.bf16.msra.mxu0 %v1359
    %1858 = vmatpush.bf16.msra.mxu0 %v1350
    %1859 = vmatpush.bf16.msra.mxu0 %v1341
    %1860 = vmatpush.bf16.msra.mxu0 %v1332
    %1861 = vmatmul.bf16.gmra.mxu0 %v250
    %v1862 = vpop.f32.mrf.mxu0
    %v1863 = vadd.f32 %v1849, %v1862
    %v1864 = vpop.f32.mrf.mxu0
    %v1865 = vadd.f32 %v1851, %v1864
    %1866 = vdwg.mxu0
    %1867 = vmatpush.bf16.msra.mxu0 %v1252
    %1868 = vmatpush.bf16.msra.mxu0 %v1243
    %1869 = vmatpush.bf16.msra.mxu0 %v1234
    %1870 = vmatpush.bf16.msra.mxu0 %v1225
    %1871 = vmatpush.bf16.msra.mxu0 %v1216
    %1872 = vmatpush.bf16.msra.mxu0 %v1207
    %1873 = vmatpush.bf16.msra.mxu0 %v1198
    %1874 = vmatpush.bf16.msra.mxu0 %v1189
    %1875 = vmatmul.bf16.gmra.mxu0 %v248
    %v1876 = vpop.f32.mrf.mxu0
    %v1877 = vadd.f32 %v499, %v1876
    %v1878 = vpop.f32.mrf.mxu0
    %v1879 = vadd.f32 %v499, %v1878
    %1880 = vdwg.mxu0
    %1881 = vmatpush.bf16.msra.mxu0 %v1324
    %1882 = vmatpush.bf16.msra.mxu0 %v1315
    %1883 = vmatpush.bf16.msra.mxu0 %v1306
    %1884 = vmatpush.bf16.msra.mxu0 %v1297
    %1885 = vmatpush.bf16.msra.mxu0 %v1288
    %1886 = vmatpush.bf16.msra.mxu0 %v1279
    %1887 = vmatpush.bf16.msra.mxu0 %v1270
    %1888 = vmatpush.bf16.msra.mxu0 %v1261
    %1889 = vmatmul.bf16.gmra.mxu0 %v249
    %v1890 = vpop.f32.mrf.mxu0
    %v1891 = vadd.f32 %v1877, %v1890
    %v1892 = vpop.f32.mrf.mxu0
    %v1893 = vadd.f32 %v1879, %v1892
    %1894 = vdwg.mxu0
    %1895 = vmatpush.bf16.msra.mxu0 %v1396
    %1896 = vmatpush.bf16.msra.mxu0 %v1387
    %1897 = vmatpush.bf16.msra.mxu0 %v1378
    %1898 = vmatpush.bf16.msra.mxu0 %v1369
    %1899 = vmatpush.bf16.msra.mxu0 %v1360
    %1900 = vmatpush.bf16.msra.mxu0 %v1351
    %1901 = vmatpush.bf16.msra.mxu0 %v1342
    %1902 = vmatpush.bf16.msra.mxu0 %v1333
    %1903 = vmatmul.bf16.gmra.mxu0 %v250
    %v1904 = vpop.f32.mrf.mxu0
    %v1905 = vadd.f32 %v1891, %v1904
    %v1906 = vpop.f32.mrf.mxu0
    %v1907 = vadd.f32 %v1893, %v1906
    %1908 = vdwg.mxu0
    %1909 = vmatpush.bf16.msra.mxu0 %v1253
    %1910 = vmatpush.bf16.msra.mxu0 %v1244
    %1911 = vmatpush.bf16.msra.mxu0 %v1235
    %1912 = vmatpush.bf16.msra.mxu0 %v1226
    %1913 = vmatpush.bf16.msra.mxu0 %v1217
    %1914 = vmatpush.bf16.msra.mxu0 %v1208
    %1915 = vmatpush.bf16.msra.mxu0 %v1199
    %1916 = vmatpush.bf16.msra.mxu0 %v1190
    %1917 = vmatmul.bf16.gmra.mxu0 %v248
    %v1918 = vpop.f32.mrf.mxu0
    %v1919 = vadd.f32 %v500, %v1918
    %v1920 = vpop.f32.mrf.mxu0
    %v1921 = vadd.f32 %v500, %v1920
    %1922 = vdwg.mxu0
    %1923 = vmatpush.bf16.msra.mxu0 %v1325
    %1924 = vmatpush.bf16.msra.mxu0 %v1316
    %1925 = vmatpush.bf16.msra.mxu0 %v1307
    %1926 = vmatpush.bf16.msra.mxu0 %v1298
    %1927 = vmatpush.bf16.msra.mxu0 %v1289
    %1928 = vmatpush.bf16.msra.mxu0 %v1280
    %1929 = vmatpush.bf16.msra.mxu0 %v1271
    %1930 = vmatpush.bf16.msra.mxu0 %v1262
    %1931 = vmatmul.bf16.gmra.mxu0 %v249
    %v1932 = vpop.f32.mrf.mxu0
    %v1933 = vadd.f32 %v1919, %v1932
    %v1934 = vpop.f32.mrf.mxu0
    %v1935 = vadd.f32 %v1921, %v1934
    %1936 = vdwg.mxu0
    %1937 = vmatpush.bf16.msra.mxu0 %v1397
    %1938 = vmatpush.bf16.msra.mxu0 %v1388
    %1939 = vmatpush.bf16.msra.mxu0 %v1379
    %1940 = vmatpush.bf16.msra.mxu0 %v1370
    %1941 = vmatpush.bf16.msra.mxu0 %v1361
    %1942 = vmatpush.bf16.msra.mxu0 %v1352
    %1943 = vmatpush.bf16.msra.mxu0 %v1343
    %1944 = vmatpush.bf16.msra.mxu0 %v1334
    %1945 = vmatmul.bf16.gmra.mxu0 %v250
    %v1946 = vpop.f32.mrf.mxu0
    %v1947 = vadd.f32 %v1933, %v1946
    %v1948 = vpop.f32.mrf.mxu0
    %v1949 = vadd.f32 %v1935, %v1948
    %1950 = vdwg.mxu0
    %1951 = vmatpush.bf16.msra.mxu0 %v1254
    %1952 = vmatpush.bf16.msra.mxu0 %v1245
    %1953 = vmatpush.bf16.msra.mxu0 %v1236
    %1954 = vmatpush.bf16.msra.mxu0 %v1227
    %1955 = vmatpush.bf16.msra.mxu0 %v1218
    %1956 = vmatpush.bf16.msra.mxu0 %v1209
    %1957 = vmatpush.bf16.msra.mxu0 %v1200
    %1958 = vmatpush.bf16.msra.mxu0 %v1191
    %1959 = vmatmul.bf16.gmra.mxu0 %v248
    %v1960 = vpop.f32.mrf.mxu0
    %v1961 = vadd.f32 %v501, %v1960
    %v1962 = vpop.f32.mrf.mxu0
    %v1963 = vadd.f32 %v501, %v1962
    %1964 = vdwg.mxu0
    %1965 = vmatpush.bf16.msra.mxu0 %v1326
    %1966 = vmatpush.bf16.msra.mxu0 %v1317
    %1967 = vmatpush.bf16.msra.mxu0 %v1308
    %1968 = vmatpush.bf16.msra.mxu0 %v1299
    %1969 = vmatpush.bf16.msra.mxu0 %v1290
    %1970 = vmatpush.bf16.msra.mxu0 %v1281
    %1971 = vmatpush.bf16.msra.mxu0 %v1272
    %1972 = vmatpush.bf16.msra.mxu0 %v1263
    %1973 = vmatmul.bf16.gmra.mxu0 %v249
    %v1974 = vpop.f32.mrf.mxu0
    %v1975 = vadd.f32 %v1961, %v1974
    %v1976 = vpop.f32.mrf.mxu0
    %v1977 = vadd.f32 %v1963, %v1976
    %1978 = vdwg.mxu0
    %1979 = vmatpush.bf16.msra.mxu0 %v1398
    %1980 = vmatpush.bf16.msra.mxu0 %v1389
    %1981 = vmatpush.bf16.msra.mxu0 %v1380
    %1982 = vmatpush.bf16.msra.mxu0 %v1371
    %1983 = vmatpush.bf16.msra.mxu0 %v1362
    %1984 = vmatpush.bf16.msra.mxu0 %v1353
    %1985 = vmatpush.bf16.msra.mxu0 %v1344
    %1986 = vmatpush.bf16.msra.mxu0 %v1335
    %1987 = vmatmul.bf16.gmra.mxu0 %v250
    %v1988 = vpop.f32.mrf.mxu0
    %v1989 = vadd.f32 %v1975, %v1988
    %v1990 = vpop.f32.mrf.mxu0
    %v1991 = vadd.f32 %v1977, %v1990
    %1992 = vdwg.mxu0
    %v1993 = vpack.c.bf16 %v1695, %v1653
    %v1994 = vpack.c.bf16 %v1779, %v1737
    %v1995 = vpack.c.bf16 %v1863, %v1821
    %v1996 = vpack.c.bf16 %v1947, %v1905
    %v1997 = vpack.c.bf16 %v1989, %v1989
    %v1998 = vpack.c.bf16 %v1697, %v1655
    %v1999 = vpack.c.bf16 %v1781, %v1739
    %v2000 = vpack.c.bf16 %v1865, %v1823
    %v2001 = vpack.c.bf16 %v1949, %v1907
    %v2002 = vpack.c.bf16 %v1991, %v1991
    %v2003 = vlaneseq
    %v2004 = vand.u32 %v2003, 127
    %v2005 = vadd.s32 %v2004, 128
    %v2006 = vadd.s32 %v2004, 256
    %vm2007 = vcmp.ge.s32.totalorder %v2004, 0
    %vm2008 = vcmp.ge.s32.totalorder %v2005, 0
    %vm2009 = vcmp.ge.s32.totalorder %v2006, 0
    %vm2010 = vcmp.lt.s32.totalorder %v2004, 80
    %vm2011 = vcmp.lt.s32.totalorder %v2005, 80
    %vm2012 = vcmp.lt.s32.totalorder %v2006, 80
    %vm2013 = vmand %vm2007, %vm2010
    %vm2014 = vmand %vm2008, %vm2011
    %vm2015 = vmand %vm2009, %vm2012
    %vm2016 = vmpackc.low %vm2014, %vm2013
    %vm2017 = vmpackc.low %vm2015, %vm2015
    %v2022 = vrot.slane %v1994, 4
    %v2023 = vrot.slane %v1995, 4
    %v2024 = vrot.slane %v1999, 4
    %v2025 = vrot.slane %v2000, 4
    %vm2026 = vcmask 1043456
    %v2027 = vsel %vm2026, %v2022, %v2023
    %v2028 = vsel %vm2026, %v2024, %v2025
    %v2033 = vsel %vm2016, %v2027, 0
    %v2034 = vsel %vm2017, %v2023, 0
    %v2035 = vsel %vm2016, %v2028, 0
    %v2036 = vsel %vm2017, %v2025, 0
    %v2037 = vsel %vm2016, %v1996, 0
    %v2038 = vsel %vm2017, %v1997, 0
    %v2039 = vsel %vm2016, %v2001, 0
    %v2040 = vsel %vm2017, %v2002, 0
    %v2042 = vunpack.c.l.b16 %v1993
    %v2043 = vunpack.c.h.b16 %v1993
    %v2044 = vunpack.c.l.b16 %v1994
    %v2045 = vpack.c.b16 %v2042, %v2042
    %v2046 = vpack.c.b16 %v2043, %v2043
    %v2047 = vpack.c.b16 %v2044, %v2044
    %v2053 = vunpack.c.l.b16 %v2033
    %v2054 = vunpack.c.h.b16 %v2033
    %v2055 = vunpack.c.l.b16 %v2034
    %v2056 = vpack.c.b16 %v2053, %v2053
    %v2057 = vpack.c.b16 %v2054, %v2054
    %v2058 = vpack.c.b16 %v2055, %v2055
    %2062 = vmatpush.bf16.xpose.msra.mxu0 0
    %2063 = vmatpush.bf16.xpose.msra.mxu0 0
    %2064 = vmatpush.bf16.xpose.msra.mxu0 0
    %2065 = vmatpush.bf16.xpose.msra.mxu0 0
    %2066 = vmatpush.bf16.xpose.msra.mxu0 0
    %2067 = vmatpush.bf16.xpose.msra.mxu0 0
    %2068 = vmatpush.bf16.xpose.msra.mxu0 0
    %2069 = vmatpush.bf16.xpose.msra.mxu0 %v2056
    %2070 = vmatmul.bf16.gmra.mxu0 %v2045
    %v2071 = vpop.f32.mrf.mxu0
    %v2072 = vadd.f32 0.0, %v2071
    %v2073 = vpop.f32.mrf.mxu0
    %2074 = vdwg.mxu0
    %2075 = vmatpush.bf16.xpose.msra.mxu0 0
    %2076 = vmatpush.bf16.xpose.msra.mxu0 0
    %2077 = vmatpush.bf16.xpose.msra.mxu0 0
    %2078 = vmatpush.bf16.xpose.msra.mxu0 0
    %2079 = vmatpush.bf16.xpose.msra.mxu0 0
    %2080 = vmatpush.bf16.xpose.msra.mxu0 0
    %2081 = vmatpush.bf16.xpose.msra.mxu0 0
    %2082 = vmatpush.bf16.xpose.msra.mxu0 %v2057
    %2083 = vmatmul.bf16.gmra.mxu0 %v2046
    %v2084 = vpop.f32.mrf.mxu0
    %v2085 = vadd.f32 %v2072, %v2084
    %v2086 = vpop.f32.mrf.mxu0
    %2087 = vdwg.mxu0
    %2088 = vmatpush.bf16.xpose.msra.mxu0 0
    %2089 = vmatpush.bf16.xpose.msra.mxu0 0
    %2090 = vmatpush.bf16.xpose.msra.mxu0 0
    %2091 = vmatpush.bf16.xpose.msra.mxu0 0
    %2092 = vmatpush.bf16.xpose.msra.mxu0 0
    %2093 = vmatpush.bf16.xpose.msra.mxu0 0
    %2094 = vmatpush.bf16.xpose.msra.mxu0 0
    %2095 = vmatpush.bf16.xpose.msra.mxu0 %v2058
    %2096 = vmatmul.bf16.gmra.mxu0 %v2047
    %v2097 = vpop.f32.mrf.mxu0
    %v2098 = vadd.f32 %v2085, %v2097
    %v2099 = vpop.f32.mrf.mxu0
    %2100 = vdwg.mxu0
    %v2102 = vunpack.c.l.b16 %v1998
    %v2103 = vunpack.c.h.b16 %v1998
    %v2104 = vunpack.c.l.b16 %v1999
    %v2105 = vpack.c.b16 %v2102, %v2102
    %v2106 = vpack.c.b16 %v2103, %v2103
    %v2107 = vpack.c.b16 %v2104, %v2104
    %v2113 = vunpack.c.l.b16 %v2035
    %v2114 = vunpack.c.h.b16 %v2035
    %v2115 = vunpack.c.l.b16 %v2036
    %v2116 = vpack.c.b16 %v2113, %v2113
    %v2117 = vpack.c.b16 %v2114, %v2114
    %v2118 = vpack.c.b16 %v2115, %v2115
    %2122 = vmatpush.bf16.xpose.msra.mxu0 0
    %2123 = vmatpush.bf16.xpose.msra.mxu0 0
    %2124 = vmatpush.bf16.xpose.msra.mxu0 0
    %2125 = vmatpush.bf16.xpose.msra.mxu0 0
    %2126 = vmatpush.bf16.xpose.msra.mxu0 0
    %2127 = vmatpush.bf16.xpose.msra.mxu0 0
    %2128 = vmatpush.bf16.xpose.msra.mxu0 0
    %2129 = vmatpush.bf16.xpose.msra.mxu0 %v2116
    %2130 = vmatmul.bf16.gmra.mxu0 %v2105
    %v2131 = vpop.f32.mrf.mxu0
    %v2132 = vadd.f32 0.0, %v2131
    %v2133 = vpop.f32.mrf.mxu0
    %2134 = vdwg.mxu0
    %2135 = vmatpush.bf16.xpose.msra.mxu0 0
    %2136 = vmatpush.bf16.xpose.msra.mxu0 0
    %2137 = vmatpush.bf16.xpose.msra.mxu0 0
    %2138 = vmatpush.bf16.xpose.msra.mxu0 0
    %2139 = vmatpush.bf16.xpose.msra.mxu0 0
    %2140 = vmatpush.bf16.xpose.msra.mxu0 0
    %2141 = vmatpush.bf16.xpose.msra.mxu0 0
    %2142 = vmatpush.bf16.xpose.msra.mxu0 %v2117
    %2143 = vmatmul.bf16.gmra.mxu0 %v2106
    %v2144 = vpop.f32.mrf.mxu0
    %v2145 = vadd.f32 %v2132, %v2144
    %v2146 = vpop.f32.mrf.mxu0
    %2147 = vdwg.mxu0
    %2148 = vmatpush.bf16.xpose.msra.mxu0 0
    %2149 = vmatpush.bf16.xpose.msra.mxu0 0
    %2150 = vmatpush.bf16.xpose.msra.mxu0 0
    %2151 = vmatpush.bf16.xpose.msra.mxu0 0
    %2152 = vmatpush.bf16.xpose.msra.mxu0 0
    %2153 = vmatpush.bf16.xpose.msra.mxu0 0
    %2154 = vmatpush.bf16.xpose.msra.mxu0 0
    %2155 = vmatpush.bf16.xpose.msra.mxu0 %v2118
    %2156 = vmatmul.bf16.gmra.mxu0 %v2107
    %v2157 = vpop.f32.mrf.mxu0
    %v2158 = vadd.f32 %v2145, %v2157
    %v2159 = vpop.f32.mrf.mxu0
    %2160 = vdwg.mxu0
    %v2161 = vmul.f32 %v2098, 0.1118034
    %v2162 = vmul.f32 %v2158, 0.1118034
    %vm2163 = vcmask 64512
    %v2164 = vsel %vm2163, %v2161, -inf
    %2165 = vmax.xlane.f32.xlu0 %v2164
    %v2166 = vpop.xlane.xlu0 %2165
    %v2167 = vsel %vm2163, %v2162, -inf
    %2168 = vmax.xlane.f32.xlu0 %v2167
    %v2169 = vpop.xlane.xlu0 %2168
    %v2170 = vsub.f32 %v2161, %v2166
    %v2171 = vsub.f32 %v2162, %v2169
    %v2172 = vmul.f32 %v2170, 1.442695
    %v2173 = vpow.pop %v2172
    %v2174 = vmul.f32 %v2171, 1.442695
    %v2175 = vpow.pop %v2174
    %v2176 = vsel %vm2163, %v2173, 0.0
    %2177 = vadd.xlane.f32.xlu0 %v2176
    %v2178 = vpop.xlane.xlu0 %2177
    %v2179 = vsel %vm2163, %v2175, 0.0
    %2180 = vadd.xlane.f32.xlu0 %v2179
    %v2181 = vpop.xlane.xlu0 %2180
    %v2182 = vrcp.pop %v2178
    %v2183 = vmul.f32 %v2178, %v2182
    %v2184 = vsub.f32 1.0, %v2183
    %v2185 = vmul.f32 %v2182, %v2184
    %v2186 = vadd.f32 %v2182, %v2185
    %vm2187 = vweird.f32 %v2178
    %vm2188 = vweird.f32 %v2182
    %vm2189 = vmor %vm2187, %vm2188
    %v2190 = vsel %vm2189, %v2182, %v2186
    %v2191 = vand.u32 2147483647, %v2178
    %vm2192 = vcmp.eq.f32.partialorder %v2191, 8.507059e+37
    %v2193 = vand.u32 %v2178, 2147483648
    %v2194 = vor.u32 1.1754944e-38, %v2193
    %v2195 = vsel %vm2192, %v2194, %v2190
    %v2196 = vmul.f32 %v2173, %v2195
    %v2197 = vrcp.pop %v2181
    %v2198 = vmul.f32 %v2181, %v2197
    %v2199 = vsub.f32 1.0, %v2198
    %v2200 = vmul.f32 %v2197, %v2199
    %v2201 = vadd.f32 %v2197, %v2200
    %vm2202 = vweird.f32 %v2181
    %vm2203 = vweird.f32 %v2197
    %vm2204 = vmor %vm2202, %vm2203
    %v2205 = vsel %vm2204, %v2197, %v2201
    %v2206 = vand.u32 2147483647, %v2181
    %vm2207 = vcmp.eq.f32.partialorder %v2206, 8.507059e+37
    %v2208 = vand.u32 %v2181, 2147483648
    %v2209 = vor.u32 1.1754944e-38, %v2208
    %v2210 = vsel %vm2207, %v2209, %v2205
    %v2211 = vmul.f32 %v2175, %v2210
    %v2212 = vpack.c.bf16 %v2196, %v2196
    %v2213 = vpack.c.bf16 %v2211, %v2211
    %vm2214 = vcmp.ge.s32.totalorder %v2004, 80
    %vm2215 = vcmp.ge.s32.totalorder %v2005, 80
    %vm2216 = vcmp.ge.s32.totalorder %v2006, 80
    %vm2217 = vcmp.lt.s32.totalorder %v2004, 160
    %vm2218 = vcmp.lt.s32.totalorder %v2005, 160
    %vm2219 = vcmp.lt.s32.totalorder %v2006, 160
    %vm2220 = vmand %vm2214, %vm2217
    %vm2221 = vmand %vm2215, %vm2218
    %vm2222 = vmand %vm2216, %vm2219
    %vm2223 = vmpackc.low %vm2221, %vm2220
    %vm2224 = vmpackc.low %vm2222, %vm2222
    %v2225 = vsel %vm2223, %v2027, 0
    %v2226 = vsel %vm2224, %v2023, 0
    %v2227 = vsel %vm2223, %v2028, 0
    %v2228 = vsel %vm2224, %v2025, 0
    %v2229 = vsel %vm2223, %v1996, 0
    %v2230 = vsel %vm2224, %v1997, 0
    %v2231 = vsel %vm2223, %v2001, 0
    %v2232 = vsel %vm2224, %v2002, 0
    %v2235 = vunpack.c.l.b16 %v2225
    %v2236 = vunpack.c.h.b16 %v2225
    %v2237 = vunpack.c.l.b16 %v2226
    %v2238 = vpack.c.b16 %v2235, %v2235
    %v2239 = vpack.c.b16 %v2236, %v2236
    %v2240 = vpack.c.b16 %v2237, %v2237
    %2244 = vmatpush.bf16.xpose.msra.mxu0 0
    %2245 = vmatpush.bf16.xpose.msra.mxu0 0
    %2246 = vmatpush.bf16.xpose.msra.mxu0 0
    %2247 = vmatpush.bf16.xpose.msra.mxu0 0
    %2248 = vmatpush.bf16.xpose.msra.mxu0 0
    %2249 = vmatpush.bf16.xpose.msra.mxu0 0
    %2250 = vmatpush.bf16.xpose.msra.mxu0 0
    %2251 = vmatpush.bf16.xpose.msra.mxu0 %v2238
    %2252 = vmatmul.bf16.gmra.mxu0 %v2045
    %v2253 = vpop.f32.mrf.mxu0
    %v2254 = vadd.f32 0.0, %v2253
    %v2255 = vpop.f32.mrf.mxu0
    %2256 = vdwg.mxu0
    %2257 = vmatpush.bf16.xpose.msra.mxu0 0
    %2258 = vmatpush.bf16.xpose.msra.mxu0 0
    %2259 = vmatpush.bf16.xpose.msra.mxu0 0
    %2260 = vmatpush.bf16.xpose.msra.mxu0 0
    %2261 = vmatpush.bf16.xpose.msra.mxu0 0
    %2262 = vmatpush.bf16.xpose.msra.mxu0 0
    %2263 = vmatpush.bf16.xpose.msra.mxu0 0
    %2264 = vmatpush.bf16.xpose.msra.mxu0 %v2239
    %2265 = vmatmul.bf16.gmra.mxu0 %v2046
    %v2266 = vpop.f32.mrf.mxu0
    %v2267 = vadd.f32 %v2254, %v2266
    %v2268 = vpop.f32.mrf.mxu0
    %2269 = vdwg.mxu0
    %2270 = vmatpush.bf16.xpose.msra.mxu0 0
    %2271 = vmatpush.bf16.xpose.msra.mxu0 0
    %2272 = vmatpush.bf16.xpose.msra.mxu0 0
    %2273 = vmatpush.bf16.xpose.msra.mxu0 0
    %2274 = vmatpush.bf16.xpose.msra.mxu0 0
    %2275 = vmatpush.bf16.xpose.msra.mxu0 0
    %2276 = vmatpush.bf16.xpose.msra.mxu0 0
    %2277 = vmatpush.bf16.xpose.msra.mxu0 %v2240
    %2278 = vmatmul.bf16.gmra.mxu0 %v2047
    %v2279 = vpop.f32.mrf.mxu0
    %v2280 = vadd.f32 %v2267, %v2279
    %v2281 = vpop.f32.mrf.mxu0
    %2282 = vdwg.mxu0
    %v2285 = vunpack.c.l.b16 %v2227
    %v2286 = vunpack.c.h.b16 %v2227
    %v2287 = vunpack.c.l.b16 %v2228
    %v2288 = vpack.c.b16 %v2285, %v2285
    %v2289 = vpack.c.b16 %v2286, %v2286
    %v2290 = vpack.c.b16 %v2287, %v2287
    %2294 = vmatpush.bf16.xpose.msra.mxu0 0
    %2295 = vmatpush.bf16.xpose.msra.mxu0 0
    %2296 = vmatpush.bf16.xpose.msra.mxu0 0
    %2297 = vmatpush.bf16.xpose.msra.mxu0 0
    %2298 = vmatpush.bf16.xpose.msra.mxu0 0
    %2299 = vmatpush.bf16.xpose.msra.mxu0 0
    %2300 = vmatpush.bf16.xpose.msra.mxu0 0
    %2301 = vmatpush.bf16.xpose.msra.mxu0 %v2288
    %2302 = vmatmul.bf16.gmra.mxu0 %v2105
    %v2303 = vpop.f32.mrf.mxu0
    %v2304 = vadd.f32 0.0, %v2303
    %v2305 = vpop.f32.mrf.mxu0
    %2306 = vdwg.mxu0
    %2307 = vmatpush.bf16.xpose.msra.mxu0 0
    %2308 = vmatpush.bf16.xpose.msra.mxu0 0
    %2309 = vmatpush.bf16.xpose.msra.mxu0 0
    %2310 = vmatpush.bf16.xpose.msra.mxu0 0
    %2311 = vmatpush.bf16.xpose.msra.mxu0 0
    %2312 = vmatpush.bf16.xpose.msra.mxu0 0
    %2313 = vmatpush.bf16.xpose.msra.mxu0 0
    %2314 = vmatpush.bf16.xpose.msra.mxu0 %v2289
    %2315 = vmatmul.bf16.gmra.mxu0 %v2106
    %v2316 = vpop.f32.mrf.mxu0
    %v2317 = vadd.f32 %v2304, %v2316
    %v2318 = vpop.f32.mrf.mxu0
    %2319 = vdwg.mxu0
    %2320 = vmatpush.bf16.xpose.msra.mxu0 0
    %2321 = vmatpush.bf16.xpose.msra.mxu0 0
    %2322 = vmatpush.bf16.xpose.msra.mxu0 0
    %2323 = vmatpush.bf16.xpose.msra.mxu0 0
    %2324 = vmatpush.bf16.xpose.msra.mxu0 0
    %2325 = vmatpush.bf16.xpose.msra.mxu0 0
    %2326 = vmatpush.bf16.xpose.msra.mxu0 0
    %2327 = vmatpush.bf16.xpose.msra.mxu0 %v2290
    %2328 = vmatmul.bf16.gmra.mxu0 %v2107
    %v2329 = vpop.f32.mrf.mxu0
    %v2330 = vadd.f32 %v2317, %v2329
    %v2331 = vpop.f32.mrf.mxu0
    %2332 = vdwg.mxu0
    %v2333 = vmul.f32 %v2280, 0.1118034
    %v2334 = vmul.f32 %v2330, 0.1118034
    %v2335 = vsel %vm2163, %v2333, -inf
    %2336 = vmax.xlane.f32.xlu0 %v2335
    %v2337 = vpop.xlane.xlu0 %2336
    %v2338 = vsel %vm2163, %v2334, -inf
    %2339 = vmax.xlane.f32.xlu0 %v2338
    %v2340 = vpop.xlane.xlu0 %2339
    %v2341 = vsub.f32 %v2333, %v2337
    %v2342 = vsub.f32 %v2334, %v2340
    %v2343 = vmul.f32 %v2341, 1.442695
    %v2344 = vpow.pop %v2343
    %v2345 = vmul.f32 %v2342, 1.442695
    %v2346 = vpow.pop %v2345
    %v2347 = vsel %vm2163, %v2344, 0.0
    %2348 = vadd.xlane.f32.xlu0 %v2347
    %v2349 = vpop.xlane.xlu0 %2348
    %v2350 = vsel %vm2163, %v2346, 0.0
    %2351 = vadd.xlane.f32.xlu0 %v2350
    %v2352 = vpop.xlane.xlu0 %2351
    %v2353 = vrcp.pop %v2349
    %v2354 = vmul.f32 %v2349, %v2353
    %v2355 = vsub.f32 1.0, %v2354
    %v2356 = vmul.f32 %v2353, %v2355
    %v2357 = vadd.f32 %v2353, %v2356
    %vm2358 = vweird.f32 %v2349
    %vm2359 = vweird.f32 %v2353
    %vm2360 = vmor %vm2358, %vm2359
    %v2361 = vsel %vm2360, %v2353, %v2357
    %v2362 = vand.u32 2147483647, %v2349
    %vm2363 = vcmp.eq.f32.partialorder %v2362, 8.507059e+37
    %v2364 = vand.u32 %v2349, 2147483648
    %v2365 = vor.u32 1.1754944e-38, %v2364
    %v2366 = vsel %vm2363, %v2365, %v2361
    %v2367 = vmul.f32 %v2344, %v2366
    %v2368 = vrcp.pop %v2352
    %v2369 = vmul.f32 %v2352, %v2368
    %v2370 = vsub.f32 1.0, %v2369
    %v2371 = vmul.f32 %v2368, %v2370
    %v2372 = vadd.f32 %v2368, %v2371
    %vm2373 = vweird.f32 %v2352
    %vm2374 = vweird.f32 %v2368
    %vm2375 = vmor %vm2373, %vm2374
    %v2376 = vsel %vm2375, %v2368, %v2372
    %v2377 = vand.u32 2147483647, %v2352
    %vm2378 = vcmp.eq.f32.partialorder %v2377, 8.507059e+37
    %v2379 = vand.u32 %v2352, 2147483648
    %v2380 = vor.u32 1.1754944e-38, %v2379
    %v2381 = vsel %vm2378, %v2380, %v2376
    %v2382 = vmul.f32 %v2346, %v2381
    %v2383 = vpack.c.bf16 %v2367, %v2367
    %v2384 = vpack.c.bf16 %v2382, %v2382
    %v2387 = vunpack.c.l.b16 %v2229
    %v2388 = vunpack.c.h.b16 %v2229
    %v2389 = vunpack.c.l.b16 %v2230
    %v2390 = vpack.c.b16 %v2387, %v2387
    %v2391 = vpack.c.b16 %v2388, %v2388
    %v2392 = vpack.c.b16 %v2389, %v2389
    %v2394 = vsel %vm2163, %v2383, 0
    %vm2396 = vcmask 1043456
    %v2398 = vsel %vm2396, %v2390, 0
    %v2401 = vsel %vm2396, %v2391, 0
    %v2404 = vsel %vm2396, %v2392, 0
    %2406 = vmatpush.bf16.msra.mxu0 0
    %2407 = vmatpush.bf16.msra.mxu0 0
    %2408 = vmatpush.bf16.msra.mxu0 0
    %2409 = vmatpush.bf16.msra.mxu0 0
    %2410 = vmatpush.bf16.msra.mxu0 0
    %2411 = vmatpush.bf16.msra.mxu0 0
    %2412 = vmatpush.bf16.msra.mxu0 0
    %2413 = vmatpush.bf16.msra.mxu0 %v2398
    %2414 = vmatmul.bf16.gmra.mxu0 %v2394
    %v2415 = vpop.f32.mrf.mxu0
    %v2416 = vadd.f32 0.0, %v2415
    %v2417 = vpop.f32.mrf.mxu0
    %2418 = vdwg.mxu0
    %2419 = vmatpush.bf16.msra.mxu0 0
    %2420 = vmatpush.bf16.msra.mxu0 0
    %2421 = vmatpush.bf16.msra.mxu0 0
    %2422 = vmatpush.bf16.msra.mxu0 0
    %2423 = vmatpush.bf16.msra.mxu0 0
    %2424 = vmatpush.bf16.msra.mxu0 0
    %2425 = vmatpush.bf16.msra.mxu0 0
    %2426 = vmatpush.bf16.msra.mxu0 %v2401
    %2427 = vmatmul.bf16.gmra.mxu0 %v2394
    %v2428 = vpop.f32.mrf.mxu0
    %v2429 = vadd.f32 0.0, %v2428
    %v2430 = vpop.f32.mrf.mxu0
    %2431 = vdwg.mxu0
    %2432 = vmatpush.bf16.msra.mxu0 0
    %2433 = vmatpush.bf16.msra.mxu0 0
    %2434 = vmatpush.bf16.msra.mxu0 0
    %2435 = vmatpush.bf16.msra.mxu0 0
    %2436 = vmatpush.bf16.msra.mxu0 0
    %2437 = vmatpush.bf16.msra.mxu0 0
    %2438 = vmatpush.bf16.msra.mxu0 0
    %2439 = vmatpush.bf16.msra.mxu0 %v2404
    %2440 = vmatmul.bf16.gmra.mxu0 %v2394
    %v2441 = vpop.f32.mrf.mxu0
    %v2442 = vadd.f32 0.0, %v2441
    %v2443 = vpop.f32.mrf.mxu0
    %2444 = vdwg.mxu0
    %v2447 = vunpack.c.l.b16 %v2231
    %v2448 = vunpack.c.h.b16 %v2231
    %v2449 = vunpack.c.l.b16 %v2232
    %v2450 = vpack.c.b16 %v2447, %v2447
    %v2451 = vpack.c.b16 %v2448, %v2448
    %v2452 = vpack.c.b16 %v2449, %v2449
    %v2454 = vsel %vm2163, %v2384, 0
    %v2457 = vsel %vm2396, %v2450, 0
    %v2460 = vsel %vm2396, %v2451, 0
    %v2463 = vsel %vm2396, %v2452, 0
    %2465 = vmatpush.bf16.msra.mxu0 0
    %2466 = vmatpush.bf16.msra.mxu0 0
    %2467 = vmatpush.bf16.msra.mxu0 0
    %2468 = vmatpush.bf16.msra.mxu0 0
    %2469 = vmatpush.bf16.msra.mxu0 0
    %2470 = vmatpush.bf16.msra.mxu0 0
    %2471 = vmatpush.bf16.msra.mxu0 0
    %2472 = vmatpush.bf16.msra.mxu0 %v2457
    %2473 = vmatmul.bf16.gmra.mxu0 %v2454
    %v2474 = vpop.f32.mrf.mxu0
    %v2475 = vadd.f32 0.0, %v2474
    %v2476 = vpop.f32.mrf.mxu0
    %2477 = vdwg.mxu0
    %2478 = vmatpush.bf16.msra.mxu0 0
    %2479 = vmatpush.bf16.msra.mxu0 0
    %2480 = vmatpush.bf16.msra.mxu0 0
    %2481 = vmatpush.bf16.msra.mxu0 0
    %2482 = vmatpush.bf16.msra.mxu0 0
    %2483 = vmatpush.bf16.msra.mxu0 0
    %2484 = vmatpush.bf16.msra.mxu0 0
    %2485 = vmatpush.bf16.msra.mxu0 %v2460
    %2486 = vmatmul.bf16.gmra.mxu0 %v2454
    %v2487 = vpop.f32.mrf.mxu0
    %v2488 = vadd.f32 0.0, %v2487
    %v2489 = vpop.f32.mrf.mxu0
    %2490 = vdwg.mxu0
    %2491 = vmatpush.bf16.msra.mxu0 0
    %2492 = vmatpush.bf16.msra.mxu0 0
    %2493 = vmatpush.bf16.msra.mxu0 0
    %2494 = vmatpush.bf16.msra.mxu0 0
    %2495 = vmatpush.bf16.msra.mxu0 0
    %2496 = vmatpush.bf16.msra.mxu0 0
    %2497 = vmatpush.bf16.msra.mxu0 0
    %2498 = vmatpush.bf16.msra.mxu0 %v2463
    %2499 = vmatmul.bf16.gmra.mxu0 %v2454
    %v2500 = vpop.f32.mrf.mxu0
    %v2501 = vadd.f32 0.0, %v2500
    %v2502 = vpop.f32.mrf.mxu0
    %2503 = vdwg.mxu0
    %v2506 = vunpack.c.l.b16 %v2037
    %v2507 = vunpack.c.h.b16 %v2037
    %v2508 = vunpack.c.l.b16 %v2038
    %v2509 = vpack.c.b16 %v2506, %v2506
    %v2510 = vpack.c.b16 %v2507, %v2507
    %v2511 = vpack.c.b16 %v2508, %v2508
    %v2513 = vsel %vm2163, %v2212, 0
    %v2516 = vsel %vm2396, %v2509, 0
    %v2519 = vsel %vm2396, %v2510, 0
    %v2522 = vsel %vm2396, %v2511, 0
    %2524 = vmatpush.bf16.msra.mxu0 0
    %2525 = vmatpush.bf16.msra.mxu0 0
    %2526 = vmatpush.bf16.msra.mxu0 0
    %2527 = vmatpush.bf16.msra.mxu0 0
    %2528 = vmatpush.bf16.msra.mxu0 0
    %2529 = vmatpush.bf16.msra.mxu0 0
    %2530 = vmatpush.bf16.msra.mxu0 0
    %2531 = vmatpush.bf16.msra.mxu0 %v2516
    %2532 = vmatmul.bf16.gmra.mxu0 %v2513
    %v2533 = vpop.f32.mrf.mxu0
    %v2534 = vadd.f32 %v2416, %v2533
    %v2535 = vpop.f32.mrf.mxu0
    %2536 = vdwg.mxu0
    %2537 = vmatpush.bf16.msra.mxu0 0
    %2538 = vmatpush.bf16.msra.mxu0 0
    %2539 = vmatpush.bf16.msra.mxu0 0
    %2540 = vmatpush.bf16.msra.mxu0 0
    %2541 = vmatpush.bf16.msra.mxu0 0
    %2542 = vmatpush.bf16.msra.mxu0 0
    %2543 = vmatpush.bf16.msra.mxu0 0
    %2544 = vmatpush.bf16.msra.mxu0 %v2519
    %2545 = vmatmul.bf16.gmra.mxu0 %v2513
    %v2546 = vpop.f32.mrf.mxu0
    %v2547 = vadd.f32 %v2429, %v2546
    %v2548 = vpop.f32.mrf.mxu0
    %2549 = vdwg.mxu0
    %2550 = vmatpush.bf16.msra.mxu0 0
    %2551 = vmatpush.bf16.msra.mxu0 0
    %2552 = vmatpush.bf16.msra.mxu0 0
    %2553 = vmatpush.bf16.msra.mxu0 0
    %2554 = vmatpush.bf16.msra.mxu0 0
    %2555 = vmatpush.bf16.msra.mxu0 0
    %2556 = vmatpush.bf16.msra.mxu0 0
    %2557 = vmatpush.bf16.msra.mxu0 %v2522
    %2558 = vmatmul.bf16.gmra.mxu0 %v2513
    %v2559 = vpop.f32.mrf.mxu0
    %v2560 = vadd.f32 %v2442, %v2559
    %v2561 = vpop.f32.mrf.mxu0
    %2562 = vdwg.mxu0
    %v2565 = vunpack.c.l.b16 %v2039
    %v2566 = vunpack.c.h.b16 %v2039
    %v2567 = vunpack.c.l.b16 %v2040
    %v2568 = vpack.c.b16 %v2565, %v2565
    %v2569 = vpack.c.b16 %v2566, %v2566
    %v2570 = vpack.c.b16 %v2567, %v2567
    %v2572 = vsel %vm2163, %v2213, 0
    %v2575 = vsel %vm2396, %v2568, 0
    %v2578 = vsel %vm2396, %v2569, 0
    %v2581 = vsel %vm2396, %v2570, 0
    %2583 = vmatpush.bf16.msra.mxu0 0
    %2584 = vmatpush.bf16.msra.mxu0 0
    %2585 = vmatpush.bf16.msra.mxu0 0
    %2586 = vmatpush.bf16.msra.mxu0 0
    %2587 = vmatpush.bf16.msra.mxu0 0
    %2588 = vmatpush.bf16.msra.mxu0 0
    %2589 = vmatpush.bf16.msra.mxu0 0
    %2590 = vmatpush.bf16.msra.mxu0 %v2575
    %2591 = vmatmul.bf16.gmra.mxu0 %v2572
    %v2592 = vpop.f32.mrf.mxu0
    %v2593 = vadd.f32 %v2475, %v2592
    %v2594 = vpop.f32.mrf.mxu0
    %2595 = vdwg.mxu0
    %2596 = vmatpush.bf16.msra.mxu0 0
    %2597 = vmatpush.bf16.msra.mxu0 0
    %2598 = vmatpush.bf16.msra.mxu0 0
    %2599 = vmatpush.bf16.msra.mxu0 0
    %2600 = vmatpush.bf16.msra.mxu0 0
    %2601 = vmatpush.bf16.msra.mxu0 0
    %2602 = vmatpush.bf16.msra.mxu0 0
    %2603 = vmatpush.bf16.msra.mxu0 %v2578
    %2604 = vmatmul.bf16.gmra.mxu0 %v2572
    %v2605 = vpop.f32.mrf.mxu0
    %v2606 = vadd.f32 %v2488, %v2605
    %v2607 = vpop.f32.mrf.mxu0
    %2608 = vdwg.mxu0
    %2609 = vmatpush.bf16.msra.mxu0 0
    %2610 = vmatpush.bf16.msra.mxu0 0
    %2611 = vmatpush.bf16.msra.mxu0 0
    %2612 = vmatpush.bf16.msra.mxu0 0
    %2613 = vmatpush.bf16.msra.mxu0 0
    %2614 = vmatpush.bf16.msra.mxu0 0
    %2615 = vmatpush.bf16.msra.mxu0 0
    %2616 = vmatpush.bf16.msra.mxu0 %v2581
    %2617 = vmatmul.bf16.gmra.mxu0 %v2572
    %v2618 = vpop.f32.mrf.mxu0
    %v2619 = vadd.f32 %v2501, %v2618
    %v2620 = vpop.f32.mrf.mxu0
    %2621 = vdwg.mxu0
    %vm2622 = vcmp.ge.s32.totalorder %v2004, 160
    %vm2623 = vcmp.ge.s32.totalorder %v2005, 160
    %vm2624 = vcmp.ge.s32.totalorder %v2006, 160
    %vm2625 = vcmp.lt.s32.totalorder %v2004, 240
    %vm2626 = vcmp.lt.s32.totalorder %v2005, 240
    %vm2627 = vcmp.lt.s32.totalorder %v2006, 240
    %vm2628 = vmand %vm2622, %vm2625
    %vm2629 = vmand %vm2623, %vm2626
    %vm2630 = vmand %vm2624, %vm2627
    %vm2631 = vmpackc.low %vm2629, %vm2628
    %vm2632 = vmpackc.low %vm2630, %vm2630
    %v2633 = vsel %vm2631, %v2027, 0
    %v2634 = vsel %vm2632, %v2023, 0
    %v2635 = vsel %vm2631, %v2028, 0
    %v2636 = vsel %vm2632, %v2025, 0
    %v2637 = vsel %vm2631, %v1996, 0
    %v2638 = vsel %vm2632, %v1997, 0
    %v2639 = vsel %vm2631, %v2001, 0
    %v2640 = vsel %vm2632, %v2002, 0
    %v2643 = vunpack.c.l.b16 %v2633
    %v2644 = vunpack.c.h.b16 %v2633
    %v2645 = vunpack.c.l.b16 %v2634
    %v2646 = vpack.c.b16 %v2643, %v2643
    %v2647 = vpack.c.b16 %v2644, %v2644
    %v2648 = vpack.c.b16 %v2645, %v2645
    %2652 = vmatpush.bf16.xpose.msra.mxu0 0
    %2653 = vmatpush.bf16.xpose.msra.mxu0 0
    %2654 = vmatpush.bf16.xpose.msra.mxu0 0
    %2655 = vmatpush.bf16.xpose.msra.mxu0 0
    %2656 = vmatpush.bf16.xpose.msra.mxu0 0
    %2657 = vmatpush.bf16.xpose.msra.mxu0 0
    %2658 = vmatpush.bf16.xpose.msra.mxu0 0
    %2659 = vmatpush.bf16.xpose.msra.mxu0 %v2646
    %2660 = vmatmul.bf16.gmra.mxu0 %v2045
    %v2661 = vpop.f32.mrf.mxu0
    %v2662 = vadd.f32 0.0, %v2661
    %v2663 = vpop.f32.mrf.mxu0
    %2664 = vdwg.mxu0
    %2665 = vmatpush.bf16.xpose.msra.mxu0 0
    %2666 = vmatpush.bf16.xpose.msra.mxu0 0
    %2667 = vmatpush.bf16.xpose.msra.mxu0 0
    %2668 = vmatpush.bf16.xpose.msra.mxu0 0
    %2669 = vmatpush.bf16.xpose.msra.mxu0 0
    %2670 = vmatpush.bf16.xpose.msra.mxu0 0
    %2671 = vmatpush.bf16.xpose.msra.mxu0 0
    %2672 = vmatpush.bf16.xpose.msra.mxu0 %v2647
    %2673 = vmatmul.bf16.gmra.mxu0 %v2046
    %v2674 = vpop.f32.mrf.mxu0
    %v2675 = vadd.f32 %v2662, %v2674
    %v2676 = vpop.f32.mrf.mxu0
    %2677 = vdwg.mxu0
    %2678 = vmatpush.bf16.xpose.msra.mxu0 0
    %2679 = vmatpush.bf16.xpose.msra.mxu0 0
    %2680 = vmatpush.bf16.xpose.msra.mxu0 0
    %2681 = vmatpush.bf16.xpose.msra.mxu0 0
    %2682 = vmatpush.bf16.xpose.msra.mxu0 0
    %2683 = vmatpush.bf16.xpose.msra.mxu0 0
    %2684 = vmatpush.bf16.xpose.msra.mxu0 0
    %2685 = vmatpush.bf16.xpose.msra.mxu0 %v2648
    %2686 = vmatmul.bf16.gmra.mxu0 %v2047
    %v2687 = vpop.f32.mrf.mxu0
    %v2688 = vadd.f32 %v2675, %v2687
    %v2689 = vpop.f32.mrf.mxu0
    %2690 = vdwg.mxu0
    %v2693 = vunpack.c.l.b16 %v2635
    %v2694 = vunpack.c.h.b16 %v2635
    %v2695 = vunpack.c.l.b16 %v2636
    %v2696 = vpack.c.b16 %v2693, %v2693
    %v2697 = vpack.c.b16 %v2694, %v2694
    %v2698 = vpack.c.b16 %v2695, %v2695
    %2702 = vmatpush.bf16.xpose.msra.mxu0 0
    %2703 = vmatpush.bf16.xpose.msra.mxu0 0
    %2704 = vmatpush.bf16.xpose.msra.mxu0 0
    %2705 = vmatpush.bf16.xpose.msra.mxu0 0
    %2706 = vmatpush.bf16.xpose.msra.mxu0 0
    %2707 = vmatpush.bf16.xpose.msra.mxu0 0
    %2708 = vmatpush.bf16.xpose.msra.mxu0 0
    %2709 = vmatpush.bf16.xpose.msra.mxu0 %v2696
    %2710 = vmatmul.bf16.gmra.mxu0 %v2105
    %v2711 = vpop.f32.mrf.mxu0
    %v2712 = vadd.f32 0.0, %v2711
    %v2713 = vpop.f32.mrf.mxu0
    %2714 = vdwg.mxu0
    %2715 = vmatpush.bf16.xpose.msra.mxu0 0
    %2716 = vmatpush.bf16.xpose.msra.mxu0 0
    %2717 = vmatpush.bf16.xpose.msra.mxu0 0
    %2718 = vmatpush.bf16.xpose.msra.mxu0 0
    %2719 = vmatpush.bf16.xpose.msra.mxu0 0
    %2720 = vmatpush.bf16.xpose.msra.mxu0 0
    %2721 = vmatpush.bf16.xpose.msra.mxu0 0
    %2722 = vmatpush.bf16.xpose.msra.mxu0 %v2697
    %2723 = vmatmul.bf16.gmra.mxu0 %v2106
    %v2724 = vpop.f32.mrf.mxu0
    %v2725 = vadd.f32 %v2712, %v2724
    %v2726 = vpop.f32.mrf.mxu0
    %2727 = vdwg.mxu0
    %2728 = vmatpush.bf16.xpose.msra.mxu0 0
    %2729 = vmatpush.bf16.xpose.msra.mxu0 0
    %2730 = vmatpush.bf16.xpose.msra.mxu0 0
    %2731 = vmatpush.bf16.xpose.msra.mxu0 0
    %2732 = vmatpush.bf16.xpose.msra.mxu0 0
    %2733 = vmatpush.bf16.xpose.msra.mxu0 0
    %2734 = vmatpush.bf16.xpose.msra.mxu0 0
    %2735 = vmatpush.bf16.xpose.msra.mxu0 %v2698
    %2736 = vmatmul.bf16.gmra.mxu0 %v2107
    %v2737 = vpop.f32.mrf.mxu0
    %v2738 = vadd.f32 %v2725, %v2737
    %v2739 = vpop.f32.mrf.mxu0
    %2740 = vdwg.mxu0
    %v2741 = vmul.f32 %v2688, 0.1118034
    %v2742 = vmul.f32 %v2738, 0.1118034
    %v2743 = vsel %vm2163, %v2741, -inf
    %2744 = vmax.xlane.f32.xlu0 %v2743
    %v2745 = vpop.xlane.xlu0 %2744
    %v2746 = vsel %vm2163, %v2742, -inf
    %2747 = vmax.xlane.f32.xlu0 %v2746
    %v2748 = vpop.xlane.xlu0 %2747
    %v2749 = vsub.f32 %v2741, %v2745
    %v2750 = vsub.f32 %v2742, %v2748
    %v2751 = vmul.f32 %v2749, 1.442695
    %v2752 = vpow.pop %v2751
    %v2753 = vmul.f32 %v2750, 1.442695
    %v2754 = vpow.pop %v2753
    %v2755 = vsel %vm2163, %v2752, 0.0
    %2756 = vadd.xlane.f32.xlu0 %v2755
    %v2757 = vpop.xlane.xlu0 %2756
    %v2758 = vsel %vm2163, %v2754, 0.0
    %2759 = vadd.xlane.f32.xlu0 %v2758
    %v2760 = vpop.xlane.xlu0 %2759
    %v2761 = vrcp.pop %v2757
    %v2762 = vmul.f32 %v2757, %v2761
    %v2763 = vsub.f32 1.0, %v2762
    %v2764 = vmul.f32 %v2761, %v2763
    %v2765 = vadd.f32 %v2761, %v2764
    %vm2766 = vweird.f32 %v2757
    %vm2767 = vweird.f32 %v2761
    %vm2768 = vmor %vm2766, %vm2767
    %v2769 = vsel %vm2768, %v2761, %v2765
    %v2770 = vand.u32 2147483647, %v2757
    %vm2771 = vcmp.eq.f32.partialorder %v2770, 8.507059e+37
    %v2772 = vand.u32 %v2757, 2147483648
    %v2773 = vor.u32 1.1754944e-38, %v2772
    %v2774 = vsel %vm2771, %v2773, %v2769
    %v2775 = vmul.f32 %v2752, %v2774
    %v2776 = vrcp.pop %v2760
    %v2777 = vmul.f32 %v2760, %v2776
    %v2778 = vsub.f32 1.0, %v2777
    %v2779 = vmul.f32 %v2776, %v2778
    %v2780 = vadd.f32 %v2776, %v2779
    %vm2781 = vweird.f32 %v2760
    %vm2782 = vweird.f32 %v2776
    %vm2783 = vmor %vm2781, %vm2782
    %v2784 = vsel %vm2783, %v2776, %v2780
    %v2785 = vand.u32 2147483647, %v2760
    %vm2786 = vcmp.eq.f32.partialorder %v2785, 8.507059e+37
    %v2787 = vand.u32 %v2760, 2147483648
    %v2788 = vor.u32 1.1754944e-38, %v2787
    %v2789 = vsel %vm2786, %v2788, %v2784
    %v2790 = vmul.f32 %v2754, %v2789
    %v2791 = vpack.c.bf16 %v2775, %v2775
    %v2792 = vpack.c.bf16 %v2790, %v2790
    %v2795 = vunpack.c.l.b16 %v2637
    %v2796 = vunpack.c.h.b16 %v2637
    %v2797 = vunpack.c.l.b16 %v2638
    %v2798 = vpack.c.b16 %v2795, %v2795
    %v2799 = vpack.c.b16 %v2796, %v2796
    %v2800 = vpack.c.b16 %v2797, %v2797
    %v2802 = vsel %vm2163, %v2791, 0
    %v2805 = vsel %vm2396, %v2798, 0
    %v2808 = vsel %vm2396, %v2799, 0
    %v2811 = vsel %vm2396, %v2800, 0
    %2813 = vmatpush.bf16.msra.mxu0 0
    %2814 = vmatpush.bf16.msra.mxu0 0
    %2815 = vmatpush.bf16.msra.mxu0 0
    %2816 = vmatpush.bf16.msra.mxu0 0
    %2817 = vmatpush.bf16.msra.mxu0 0
    %2818 = vmatpush.bf16.msra.mxu0 0
    %2819 = vmatpush.bf16.msra.mxu0 0
    %2820 = vmatpush.bf16.msra.mxu0 %v2805
    %2821 = vmatmul.bf16.gmra.mxu0 %v2802
    %v2822 = vpop.f32.mrf.mxu0
    %v2823 = vadd.f32 0.0, %v2822
    %v2824 = vpop.f32.mrf.mxu0
    %2825 = vdwg.mxu0
    %2826 = vmatpush.bf16.msra.mxu0 0
    %2827 = vmatpush.bf16.msra.mxu0 0
    %2828 = vmatpush.bf16.msra.mxu0 0
    %2829 = vmatpush.bf16.msra.mxu0 0
    %2830 = vmatpush.bf16.msra.mxu0 0
    %2831 = vmatpush.bf16.msra.mxu0 0
    %2832 = vmatpush.bf16.msra.mxu0 0
    %2833 = vmatpush.bf16.msra.mxu0 %v2808
    %2834 = vmatmul.bf16.gmra.mxu0 %v2802
    %v2835 = vpop.f32.mrf.mxu0
    %v2836 = vadd.f32 0.0, %v2835
    %v2837 = vpop.f32.mrf.mxu0
    %2838 = vdwg.mxu0
    %2839 = vmatpush.bf16.msra.mxu0 0
    %2840 = vmatpush.bf16.msra.mxu0 0
    %2841 = vmatpush.bf16.msra.mxu0 0
    %2842 = vmatpush.bf16.msra.mxu0 0
    %2843 = vmatpush.bf16.msra.mxu0 0
    %2844 = vmatpush.bf16.msra.mxu0 0
    %2845 = vmatpush.bf16.msra.mxu0 0
    %2846 = vmatpush.bf16.msra.mxu0 %v2811
    %2847 = vmatmul.bf16.gmra.mxu0 %v2802
    %v2848 = vpop.f32.mrf.mxu0
    %v2849 = vadd.f32 0.0, %v2848
    %v2850 = vpop.f32.mrf.mxu0
    %2851 = vdwg.mxu0
    %v2854 = vunpack.c.l.b16 %v2639
    %v2855 = vunpack.c.h.b16 %v2639
    %v2856 = vunpack.c.l.b16 %v2640
    %v2857 = vpack.c.b16 %v2854, %v2854
    %v2858 = vpack.c.b16 %v2855, %v2855
    %v2859 = vpack.c.b16 %v2856, %v2856
    %v2861 = vsel %vm2163, %v2792, 0
    %v2864 = vsel %vm2396, %v2857, 0
    %v2867 = vsel %vm2396, %v2858, 0
    %v2870 = vsel %vm2396, %v2859, 0
    %2872 = vmatpush.bf16.msra.mxu0 0
    %2873 = vmatpush.bf16.msra.mxu0 0
    %2874 = vmatpush.bf16.msra.mxu0 0
    %2875 = vmatpush.bf16.msra.mxu0 0
    %2876 = vmatpush.bf16.msra.mxu0 0
    %2877 = vmatpush.bf16.msra.mxu0 0
    %2878 = vmatpush.bf16.msra.mxu0 0
    %2879 = vmatpush.bf16.msra.mxu0 %v2864
    %2880 = vmatmul.bf16.gmra.mxu0 %v2861
    %v2881 = vpop.f32.mrf.mxu0
    %v2882 = vadd.f32 0.0, %v2881
    %v2883 = vpop.f32.mrf.mxu0
    %2884 = vdwg.mxu0
    %2885 = vmatpush.bf16.msra.mxu0 0
    %2886 = vmatpush.bf16.msra.mxu0 0
    %2887 = vmatpush.bf16.msra.mxu0 0
    %2888 = vmatpush.bf16.msra.mxu0 0
    %2889 = vmatpush.bf16.msra.mxu0 0
    %2890 = vmatpush.bf16.msra.mxu0 0
    %2891 = vmatpush.bf16.msra.mxu0 0
    %2892 = vmatpush.bf16.msra.mxu0 %v2867
    %2893 = vmatmul.bf16.gmra.mxu0 %v2861
    %v2894 = vpop.f32.mrf.mxu0
    %v2895 = vadd.f32 0.0, %v2894
    %v2896 = vpop.f32.mrf.mxu0
    %2897 = vdwg.mxu0
    %2898 = vmatpush.bf16.msra.mxu0 0
    %2899 = vmatpush.bf16.msra.mxu0 0
    %2900 = vmatpush.bf16.msra.mxu0 0
    %2901 = vmatpush.bf16.msra.mxu0 0
    %2902 = vmatpush.bf16.msra.mxu0 0
    %2903 = vmatpush.bf16.msra.mxu0 0
    %2904 = vmatpush.bf16.msra.mxu0 0
    %2905 = vmatpush.bf16.msra.mxu0 %v2870
    %2906 = vmatmul.bf16.gmra.mxu0 %v2861
    %v2907 = vpop.f32.mrf.mxu0
    %v2908 = vadd.f32 0.0, %v2907
    %v2909 = vpop.f32.mrf.mxu0
    %2910 = vdwg.mxu0
    %v2911 = vadd.f32 %v2534, %v2823
    %v2912 = vadd.f32 %v2547, %v2836
    %v2913 = vadd.f32 %v2560, %v2849
    %v2914 = vadd.f32 %v2593, %v2882
    %v2915 = vadd.f32 %v2606, %v2895
    %v2916 = vadd.f32 %v2619, %v2908
    %vm2917 = vcmp.ge.s32.totalorder %v2004, 240
    %vm2918 = vcmp.ge.s32.totalorder %v2005, 240
    %vm2919 = vcmp.ge.s32.totalorder %v2006, 240
    %vm2920 = vcmp.lt.s32.totalorder %v2004, 320
    %vm2921 = vcmp.lt.s32.totalorder %v2005, 320
    %vm2922 = vcmp.lt.s32.totalorder %v2006, 320
    %vm2923 = vmand %vm2917, %vm2920
    %vm2924 = vmand %vm2918, %vm2921
    %vm2925 = vmand %vm2919, %vm2922
    %vm2926 = vmpackc.low %vm2924, %vm2923
    %vm2927 = vmpackc.low %vm2925, %vm2925
    %v2928 = vsel %vm2926, %v2027, 0
    %v2929 = vsel %vm2927, %v2023, 0
    %v2930 = vsel %vm2926, %v2028, 0
    %v2931 = vsel %vm2927, %v2025, 0
    %v2932 = vsel %vm2926, %v1996, 0
    %v2933 = vsel %vm2927, %v1997, 0
    %v2934 = vsel %vm2926, %v2001, 0
    %v2935 = vsel %vm2927, %v2002, 0
    %v2938 = vunpack.c.l.b16 %v2928
    %v2939 = vunpack.c.h.b16 %v2928
    %v2940 = vunpack.c.l.b16 %v2929
    %v2941 = vpack.c.b16 %v2938, %v2938
    %v2942 = vpack.c.b16 %v2939, %v2939
    %v2943 = vpack.c.b16 %v2940, %v2940
    %2947 = vmatpush.bf16.xpose.msra.mxu0 0
    %2948 = vmatpush.bf16.xpose.msra.mxu0 0
    %2949 = vmatpush.bf16.xpose.msra.mxu0 0
    %2950 = vmatpush.bf16.xpose.msra.mxu0 0
    %2951 = vmatpush.bf16.xpose.msra.mxu0 0
    %2952 = vmatpush.bf16.xpose.msra.mxu0 0
    %2953 = vmatpush.bf16.xpose.msra.mxu0 0
    %2954 = vmatpush.bf16.xpose.msra.mxu0 %v2941
    %2955 = vmatmul.bf16.gmra.mxu0 %v2045
    %v2956 = vpop.f32.mrf.mxu0
    %v2957 = vadd.f32 0.0, %v2956
    %v2958 = vpop.f32.mrf.mxu0
    %2959 = vdwg.mxu0
    %2960 = vmatpush.bf16.xpose.msra.mxu0 0
    %2961 = vmatpush.bf16.xpose.msra.mxu0 0
    %2962 = vmatpush.bf16.xpose.msra.mxu0 0
    %2963 = vmatpush.bf16.xpose.msra.mxu0 0
    %2964 = vmatpush.bf16.xpose.msra.mxu0 0
    %2965 = vmatpush.bf16.xpose.msra.mxu0 0
    %2966 = vmatpush.bf16.xpose.msra.mxu0 0
    %2967 = vmatpush.bf16.xpose.msra.mxu0 %v2942
    %2968 = vmatmul.bf16.gmra.mxu0 %v2046
    %v2969 = vpop.f32.mrf.mxu0
    %v2970 = vadd.f32 %v2957, %v2969
    %v2971 = vpop.f32.mrf.mxu0
    %2972 = vdwg.mxu0
    %2973 = vmatpush.bf16.xpose.msra.mxu0 0
    %2974 = vmatpush.bf16.xpose.msra.mxu0 0
    %2975 = vmatpush.bf16.xpose.msra.mxu0 0
    %2976 = vmatpush.bf16.xpose.msra.mxu0 0
    %2977 = vmatpush.bf16.xpose.msra.mxu0 0
    %2978 = vmatpush.bf16.xpose.msra.mxu0 0
    %2979 = vmatpush.bf16.xpose.msra.mxu0 0
    %2980 = vmatpush.bf16.xpose.msra.mxu0 %v2943
    %2981 = vmatmul.bf16.gmra.mxu0 %v2047
    %v2982 = vpop.f32.mrf.mxu0
    %v2983 = vadd.f32 %v2970, %v2982
    %v2984 = vpop.f32.mrf.mxu0
    %2985 = vdwg.mxu0
    %v2988 = vunpack.c.l.b16 %v2930
    %v2989 = vunpack.c.h.b16 %v2930
    %v2990 = vunpack.c.l.b16 %v2931
    %v2991 = vpack.c.b16 %v2988, %v2988
    %v2992 = vpack.c.b16 %v2989, %v2989
    %v2993 = vpack.c.b16 %v2990, %v2990
    %2997 = vmatpush.bf16.xpose.msra.mxu0 0
    %2998 = vmatpush.bf16.xpose.msra.mxu0 0
    %2999 = vmatpush.bf16.xpose.msra.mxu0 0
    %3000 = vmatpush.bf16.xpose.msra.mxu0 0
    %3001 = vmatpush.bf16.xpose.msra.mxu0 0
    %3002 = vmatpush.bf16.xpose.msra.mxu0 0
    %3003 = vmatpush.bf16.xpose.msra.mxu0 0
    %3004 = vmatpush.bf16.xpose.msra.mxu0 %v2991
    %3005 = vmatmul.bf16.gmra.mxu0 %v2105
    %v3006 = vpop.f32.mrf.mxu0
    %v3007 = vadd.f32 0.0, %v3006
    %v3008 = vpop.f32.mrf.mxu0
    %3009 = vdwg.mxu0
    %3010 = vmatpush.bf16.xpose.msra.mxu0 0
    %3011 = vmatpush.bf16.xpose.msra.mxu0 0
    %3012 = vmatpush.bf16.xpose.msra.mxu0 0
    %3013 = vmatpush.bf16.xpose.msra.mxu0 0
    %3014 = vmatpush.bf16.xpose.msra.mxu0 0
    %3015 = vmatpush.bf16.xpose.msra.mxu0 0
    %3016 = vmatpush.bf16.xpose.msra.mxu0 0
    %3017 = vmatpush.bf16.xpose.msra.mxu0 %v2992
    %3018 = vmatmul.bf16.gmra.mxu0 %v2106
    %v3019 = vpop.f32.mrf.mxu0
    %v3020 = vadd.f32 %v3007, %v3019
    %v3021 = vpop.f32.mrf.mxu0
    %3022 = vdwg.mxu0
    %3023 = vmatpush.bf16.xpose.msra.mxu0 0
    %3024 = vmatpush.bf16.xpose.msra.mxu0 0
    %3025 = vmatpush.bf16.xpose.msra.mxu0 0
    %3026 = vmatpush.bf16.xpose.msra.mxu0 0
    %3027 = vmatpush.bf16.xpose.msra.mxu0 0
    %3028 = vmatpush.bf16.xpose.msra.mxu0 0
    %3029 = vmatpush.bf16.xpose.msra.mxu0 0
    %3030 = vmatpush.bf16.xpose.msra.mxu0 %v2993
    %3031 = vmatmul.bf16.gmra.mxu0 %v2107
    %v3032 = vpop.f32.mrf.mxu0
    %v3033 = vadd.f32 %v3020, %v3032
    %v3034 = vpop.f32.mrf.mxu0
    %3035 = vdwg.mxu0
    %v3036 = vmul.f32 %v2983, 0.1118034
    %v3037 = vmul.f32 %v3033, 0.1118034
    %v3038 = vsel %vm2163, %v3036, -inf
    %3039 = vmax.xlane.f32.xlu0 %v3038
    %v3040 = vpop.xlane.xlu0 %3039
    %v3041 = vsel %vm2163, %v3037, -inf
    %3042 = vmax.xlane.f32.xlu0 %v3041
    %v3043 = vpop.xlane.xlu0 %3042
    %v3044 = vsub.f32 %v3036, %v3040
    %v3045 = vsub.f32 %v3037, %v3043
    %v3046 = vmul.f32 %v3044, 1.442695
    %v3047 = vpow.pop %v3046
    %v3048 = vmul.f32 %v3045, 1.442695
    %v3049 = vpow.pop %v3048
    %v3050 = vsel %vm2163, %v3047, 0.0
    %3051 = vadd.xlane.f32.xlu0 %v3050
    %v3052 = vpop.xlane.xlu0 %3051
    %v3053 = vsel %vm2163, %v3049, 0.0
    %3054 = vadd.xlane.f32.xlu0 %v3053
    %v3055 = vpop.xlane.xlu0 %3054
    %v3056 = vrcp.pop %v3052
    %v3057 = vmul.f32 %v3052, %v3056
    %v3058 = vsub.f32 1.0, %v3057
    %v3059 = vmul.f32 %v3056, %v3058
    %v3060 = vadd.f32 %v3056, %v3059
    %vm3061 = vweird.f32 %v3052
    %vm3062 = vweird.f32 %v3056
    %vm3063 = vmor %vm3061, %vm3062
    %v3064 = vsel %vm3063, %v3056, %v3060
    %v3065 = vand.u32 2147483647, %v3052
    %vm3066 = vcmp.eq.f32.partialorder %v3065, 8.507059e+37
    %v3067 = vand.u32 %v3052, 2147483648
    %v3068 = vor.u32 1.1754944e-38, %v3067
    %v3069 = vsel %vm3066, %v3068, %v3064
    %v3070 = vmul.f32 %v3047, %v3069
    %v3071 = vrcp.pop %v3055
    %v3072 = vmul.f32 %v3055, %v3071
    %v3073 = vsub.f32 1.0, %v3072
    %v3074 = vmul.f32 %v3071, %v3073
    %v3075 = vadd.f32 %v3071, %v3074
    %vm3076 = vweird.f32 %v3055
    %vm3077 = vweird.f32 %v3071
    %vm3078 = vmor %vm3076, %vm3077
    %v3079 = vsel %vm3078, %v3071, %v3075
    %v3080 = vand.u32 2147483647, %v3055
    %vm3081 = vcmp.eq.f32.partialorder %v3080, 8.507059e+37
    %v3082 = vand.u32 %v3055, 2147483648
    %v3083 = vor.u32 1.1754944e-38, %v3082
    %v3084 = vsel %vm3081, %v3083, %v3079
    %v3085 = vmul.f32 %v3049, %v3084
    %v3086 = vpack.c.bf16 %v3070, %v3070
    %v3087 = vpack.c.bf16 %v3085, %v3085
    %v3090 = vunpack.c.l.b16 %v2932
    %v3091 = vunpack.c.h.b16 %v2932
    %v3092 = vunpack.c.l.b16 %v2933
    %v3093 = vpack.c.b16 %v3090, %v3090
    %v3094 = vpack.c.b16 %v3091, %v3091
    %v3095 = vpack.c.b16 %v3092, %v3092
    %v3097 = vsel %vm2163, %v3086, 0
    %v3100 = vsel %vm2396, %v3093, 0
    %v3103 = vsel %vm2396, %v3094, 0
    %v3106 = vsel %vm2396, %v3095, 0
    %3108 = vmatpush.bf16.msra.mxu0 0
    %3109 = vmatpush.bf16.msra.mxu0 0
    %3110 = vmatpush.bf16.msra.mxu0 0
    %3111 = vmatpush.bf16.msra.mxu0 0
    %3112 = vmatpush.bf16.msra.mxu0 0
    %3113 = vmatpush.bf16.msra.mxu0 0
    %3114 = vmatpush.bf16.msra.mxu0 0
    %3115 = vmatpush.bf16.msra.mxu0 %v3100
    %3116 = vmatmul.bf16.gmra.mxu0 %v3097
    %v3117 = vpop.f32.mrf.mxu0
    %v3118 = vadd.f32 0.0, %v3117
    %v3119 = vpop.f32.mrf.mxu0
    %3120 = vdwg.mxu0
    %3121 = vmatpush.bf16.msra.mxu0 0
    %3122 = vmatpush.bf16.msra.mxu0 0
    %3123 = vmatpush.bf16.msra.mxu0 0
    %3124 = vmatpush.bf16.msra.mxu0 0
    %3125 = vmatpush.bf16.msra.mxu0 0
    %3126 = vmatpush.bf16.msra.mxu0 0
    %3127 = vmatpush.bf16.msra.mxu0 0
    %3128 = vmatpush.bf16.msra.mxu0 %v3103
    %3129 = vmatmul.bf16.gmra.mxu0 %v3097
    %v3130 = vpop.f32.mrf.mxu0
    %v3131 = vadd.f32 0.0, %v3130
    %v3132 = vpop.f32.mrf.mxu0
    %3133 = vdwg.mxu0
    %3134 = vmatpush.bf16.msra.mxu0 0
    %3135 = vmatpush.bf16.msra.mxu0 0
    %3136 = vmatpush.bf16.msra.mxu0 0
    %3137 = vmatpush.bf16.msra.mxu0 0
    %3138 = vmatpush.bf16.msra.mxu0 0
    %3139 = vmatpush.bf16.msra.mxu0 0
    %3140 = vmatpush.bf16.msra.mxu0 0
    %3141 = vmatpush.bf16.msra.mxu0 %v3106
    %3142 = vmatmul.bf16.gmra.mxu0 %v3097
    %v3143 = vpop.f32.mrf.mxu0
    %v3144 = vadd.f32 0.0, %v3143
    %v3145 = vpop.f32.mrf.mxu0
    %3146 = vdwg.mxu0
    %v3149 = vunpack.c.l.b16 %v2934
    %v3150 = vunpack.c.h.b16 %v2934
    %v3151 = vunpack.c.l.b16 %v2935
    %v3152 = vpack.c.b16 %v3149, %v3149
    %v3153 = vpack.c.b16 %v3150, %v3150
    %v3154 = vpack.c.b16 %v3151, %v3151
    %v3156 = vsel %vm2163, %v3087, 0
    %v3159 = vsel %vm2396, %v3152, 0
    %v3162 = vsel %vm2396, %v3153, 0
    %v3165 = vsel %vm2396, %v3154, 0
    %3167 = vmatpush.bf16.msra.mxu0 0
    %3168 = vmatpush.bf16.msra.mxu0 0
    %3169 = vmatpush.bf16.msra.mxu0 0
    %3170 = vmatpush.bf16.msra.mxu0 0
    %3171 = vmatpush.bf16.msra.mxu0 0
    %3172 = vmatpush.bf16.msra.mxu0 0
    %3173 = vmatpush.bf16.msra.mxu0 0
    %3174 = vmatpush.bf16.msra.mxu0 %v3159
    %3175 = vmatmul.bf16.gmra.mxu0 %v3156
    %v3176 = vpop.f32.mrf.mxu0
    %v3177 = vadd.f32 0.0, %v3176
    %v3178 = vpop.f32.mrf.mxu0
    %3179 = vdwg.mxu0
    %3180 = vmatpush.bf16.msra.mxu0 0
    %3181 = vmatpush.bf16.msra.mxu0 0
    %3182 = vmatpush.bf16.msra.mxu0 0
    %3183 = vmatpush.bf16.msra.mxu0 0
    %3184 = vmatpush.bf16.msra.mxu0 0
    %3185 = vmatpush.bf16.msra.mxu0 0
    %3186 = vmatpush.bf16.msra.mxu0 0
    %3187 = vmatpush.bf16.msra.mxu0 %v3162
    %3188 = vmatmul.bf16.gmra.mxu0 %v3156
    %v3189 = vpop.f32.mrf.mxu0
    %v3190 = vadd.f32 0.0, %v3189
    %v3191 = vpop.f32.mrf.mxu0
    %3192 = vdwg.mxu0
    %3193 = vmatpush.bf16.msra.mxu0 0
    %3194 = vmatpush.bf16.msra.mxu0 0
    %3195 = vmatpush.bf16.msra.mxu0 0
    %3196 = vmatpush.bf16.msra.mxu0 0
    %3197 = vmatpush.bf16.msra.mxu0 0
    %3198 = vmatpush.bf16.msra.mxu0 0
    %3199 = vmatpush.bf16.msra.mxu0 0
    %3200 = vmatpush.bf16.msra.mxu0 %v3165
    %3201 = vmatmul.bf16.gmra.mxu0 %v3156
    %v3202 = vpop.f32.mrf.mxu0
    %v3203 = vadd.f32 0.0, %v3202
    %v3204 = vpop.f32.mrf.mxu0
    %3205 = vdwg.mxu0
    %v3206 = vadd.f32 %v2911, %v3118
    %v3207 = vadd.f32 %v2912, %v3131
    %v3208 = vadd.f32 %v2913, %v3144
    %v3209 = vadd.f32 %v2914, %v3177
    %v3210 = vadd.f32 %v2915, %v3190
    %v3211 = vadd.f32 %v2916, %v3203
    %v3212 = vpack.c.bf16 %v3209, %v3206
    %v3213 = vpack.c.bf16 %v3210, %v3207
    %v3214 = vpack.c.bf16 %v3211, %v3208
    %v3215 = vld [vmem:[#allocation7] sm:$0xff]
    %v3216 = vld [vmem:[#allocation7 + $0x8] sm:$0xf]
    %v3217 = vld [vmem:[#allocation7 + $0xc] sm:$0xff]
    %v3218 = vld [vmem:[#allocation7 + $0x14] sm:$0xf]
    %v3219 = vld [vmem:[#allocation7 + $0x18] sm:$0xff]
    %v3220 = vld [vmem:[#allocation7 + $0x20] sm:$0xf]
    %v3221 = vld [vmem:[#allocation7 + $0x24] sm:$0xff]
    %v3222 = vld [vmem:[#allocation7 + $0x2c] sm:$0xf]
    %v3223 = vld [vmem:[#allocation7 + $0x30] sm:$0xff]
    %v3224 = vld [vmem:[#allocation7 + $0x38] sm:$0xf]
    %v3225 = vld [vmem:[#allocation7 + $0x3c] sm:$0xff]
    %v3226 = vld [vmem:[#allocation7 + $0x44] sm:$0xf]
    %v3227 = vld [vmem:[#allocation7 + $0x48] sm:$0xff]
    %v3228 = vld [vmem:[#allocation7 + $0x50] sm:$0xf]
    %v3229 = vld [vmem:[#allocation7 + $0x54] sm:$0xff]
    %v3230 = vld [vmem:[#allocation7 + $0x5c] sm:$0xf]
    %v3231 = vld [vmem:[#allocation7 + $0x60] sm:$0xff]
    %v3232 = vld [vmem:[#allocation7 + $0x68] sm:$0xf]
    %v3233 = vld [vmem:[#allocation7 + $0x6c] sm:$0xff]
    %v3234 = vld [vmem:[#allocation7 + $0x74] sm:$0xf]
    %v3235 = vld [vmem:[#allocation7 + $0x78] sm:$0xff]
    %v3236 = vld [vmem:[#allocation7 + $0x80] sm:$0xf]
    %v3237 = vld [vmem:[#allocation7 + $0x84] sm:$0xff]
    %v3238 = vld [vmem:[#allocation7 + $0x8c] sm:$0xf]
    %v3239 = vld [vmem:[#allocation7 + $0x90] sm:$0xff]
    %v3240 = vld [vmem:[#allocation7 + $0x98] sm:$0xf]
    %v3241 = vld [vmem:[#allocation7 + $0x9c] sm:$0xff]
    %v3242 = vld [vmem:[#allocation7 + $0xa4] sm:$0xf]
    %v3243 = vld [vmem:[#allocation7 + $0xa8] sm:$0xff]
    %v3244 = vld [vmem:[#allocation7 + $0xb0] sm:$0xf]
    %v3245 = vld [vmem:[#allocation7 + $0xb4] sm:$0xff]
    %v3246 = vld [vmem:[#allocation7 + $0xbc] sm:$0xf]
    %v3247 = vld [vmem:[#allocation7 + $0xc0] sm:$0xff]
    %v3248 = vld [vmem:[#allocation7 + $0xc8] sm:$0xf]
    %v3249 = vld [vmem:[#allocation7 + $0xcc] sm:$0xff]
    %v3250 = vld [vmem:[#allocation7 + $0xd4] sm:$0xf]
    %v3251 = vld [vmem:[#allocation7 + $0xd8] sm:$0xff]
    %v3252 = vld [vmem:[#allocation7 + $0xe0] sm:$0xf]
    %v3253 = vld [vmem:[#allocation7 + $0xe4] sm:$0xff]
    %v3254 = vld [vmem:[#allocation7 + $0xec] sm:$0xf]
    %v3255 = vld [vmem:[#allocation7 + $0xf0] sm:$0xff]
    %v3256 = vld [vmem:[#allocation7 + $0xf8] sm:$0xf]
    %v3257 = vld [vmem:[#allocation7 + $0xfc] sm:$0xff]
    %v3258 = vld [vmem:[#allocation7 + $0x104] sm:$0xf]
    %v3259 = vld [vmem:[#allocation7 + $0x108] sm:$0xff]
    %v3260 = vld [vmem:[#allocation7 + $0x110] sm:$0xf]
    %v3261 = vld [vmem:[#allocation7 + $0x114] sm:$0xff]
    %v3262 = vld [vmem:[#allocation7 + $0x11c] sm:$0xf]
    %v3263 = vld [vmem:[#allocation7 + $0x120] sm:$0xff]
    %v3264 = vld [vmem:[#allocation7 + $0x128] sm:$0xf]
    %v3265 = vld [vmem:[#allocation7 + $0x12c] sm:$0xff]
    %v3266 = vld [vmem:[#allocation7 + $0x134] sm:$0xf]
    %v3267 = vld [vmem:[#allocation7 + $0x138] sm:$0xff]
    %v3268 = vld [vmem:[#allocation7 + $0x140] sm:$0xf]
    %v3269 = vld [vmem:[#allocation7 + $0x144] sm:$0xff]
    %v3270 = vld [vmem:[#allocation7 + $0x14c] sm:$0xf]
    %v3271 = vld [vmem:[#allocation7 + $0x150] sm:$0xff]
    %v3272 = vld [vmem:[#allocation7 + $0x158] sm:$0xf]
    %v3273 = vld [vmem:[#allocation7 + $0x15c] sm:$0xff]
    %v3274 = vld [vmem:[#allocation7 + $0x164] sm:$0xf]
    %v3275 = vld [vmem:[#allocation7 + $0x168] sm:$0xff]
    %v3276 = vld [vmem:[#allocation7 + $0x170] sm:$0xf]
    %v3277 = vld [vmem:[#allocation7 + $0x174] sm:$0xff]
    %v3278 = vld [vmem:[#allocation7 + $0x17c] sm:$0xf]
    %v3279 = vld [vmem:[#allocation7 + $0x180] sm:$0xff]
    %v3280 = vld [vmem:[#allocation7 + $0x188] sm:$0xf]
    %v3281 = vld [vmem:[#allocation7 + $0x18c] sm:$0xff]
    %v3282 = vld [vmem:[#allocation7 + $0x194] sm:$0xf]
    %v3283 = vld [vmem:[#allocation7 + $0x198] sm:$0xff]
    %v3284 = vld [vmem:[#allocation7 + $0x1a0] sm:$0xf]
    %v3285 = vld [vmem:[#allocation7 + $0x1a4] sm:$0xff]
    %v3286 = vld [vmem:[#allocation7 + $0x1ac] sm:$0xf]
    %v3287 = vld [vmem:[#allocation7 + $0x1b0] sm:$0xff]
    %v3288 = vld [vmem:[#allocation7 + $0x1b8] sm:$0xf]
    %v3289 = vld [vmem:[#allocation7 + $0x1bc] sm:$0xff]
    %v3290 = vld [vmem:[#allocation7 + $0x1c4] sm:$0xf]
    %v3291 = vld [vmem:[#allocation7 + $0x1c8] sm:$0xff]
    %v3292 = vld [vmem:[#allocation7 + $0x1d0] sm:$0xf]
    %v3293 = vld [vmem:[#allocation7 + $0x1d4] sm:$0xff]
    %v3294 = vld [vmem:[#allocation7 + $0x1dc] sm:$0xf]
    %v3295 = vld [vmem:[#allocation7 + $0x1e0] sm:$0xff]
    %v3296 = vld [vmem:[#allocation7 + $0x1e8] sm:$0xf]
    %v3297 = vld [vmem:[#allocation7 + $0x1ec] sm:$0xff]
    %v3298 = vld [vmem:[#allocation7 + $0x1f4] sm:$0xf]
    %v3299 = vld [vmem:[#allocation7 + $0x1f8] sm:$0xff]
    %v3300 = vld [vmem:[#allocation7 + $0x200] sm:$0xf]
    %v3301 = vld [vmem:[#allocation7 + $0x204] sm:$0xff]
    %v3302 = vld [vmem:[#allocation7 + $0x20c] sm:$0xf]
    %v3303 = vld [vmem:[#allocation7 + $0x210] sm:$0xff]
    %v3304 = vld [vmem:[#allocation7 + $0x218] sm:$0xf]
    %v3305 = vld [vmem:[#allocation7 + $0x21c] sm:$0xff]
    %v3306 = vld [vmem:[#allocation7 + $0x224] sm:$0xf]
    %v3307 = vld [vmem:[#allocation7 + $0x228] sm:$0xff]
    %v3308 = vld [vmem:[#allocation7 + $0x230] sm:$0xf]
    %v3309 = vld [vmem:[#allocation7 + $0x234] sm:$0xff]
    %v3310 = vld [vmem:[#allocation7 + $0x23c] sm:$0xf]
    %v3312 = vperm.slane %v132, 0
    %v3313 = vperm.slane %v132, 1
    %v3314 = vperm.slane %v132, 2
    %v3414 = vunpack.c.l.b16 %v3215
    %v3415 = vunpack.c.h.b16 %v3215
    %v3416 = vunpack.c.l.b16 %v3216
    %v3417 = vunpack.c.l.b16 %v3217
    %v3418 = vunpack.c.h.b16 %v3217
    %v3419 = vunpack.c.l.b16 %v3218
    %v3420 = vunpack.c.l.b16 %v3219
    %v3421 = vunpack.c.h.b16 %v3219
    %v3422 = vunpack.c.l.b16 %v3220
    %v3423 = vunpack.c.l.b16 %v3221
    %v3424 = vunpack.c.h.b16 %v3221
    %v3425 = vunpack.c.l.b16 %v3222
    %v3426 = vunpack.c.l.b16 %v3223
    %v3427 = vunpack.c.h.b16 %v3223
    %v3428 = vunpack.c.l.b16 %v3224
    %v3429 = vunpack.c.l.b16 %v3225
    %v3430 = vunpack.c.h.b16 %v3225
    %v3431 = vunpack.c.l.b16 %v3226
    %v3432 = vunpack.c.l.b16 %v3227
    %v3433 = vunpack.c.h.b16 %v3227
    %v3434 = vunpack.c.l.b16 %v3228
    %v3435 = vunpack.c.l.b16 %v3229
    %v3436 = vunpack.c.h.b16 %v3229
    %v3437 = vunpack.c.l.b16 %v3230
    %v3438 = vunpack.c.l.b16 %v3231
    %v3439 = vunpack.c.h.b16 %v3231
    %v3440 = vunpack.c.l.b16 %v3232
    %v3441 = vunpack.c.l.b16 %v3233
    %v3442 = vunpack.c.h.b16 %v3233
    %v3443 = vunpack.c.l.b16 %v3234
    %v3444 = vunpack.c.l.b16 %v3235
    %v3445 = vunpack.c.h.b16 %v3235
    %v3446 = vunpack.c.l.b16 %v3236
    %v3447 = vunpack.c.l.b16 %v3237
    %v3448 = vunpack.c.h.b16 %v3237
    %v3449 = vunpack.c.l.b16 %v3238
    %v3450 = vunpack.c.l.b16 %v3239
    %v3451 = vunpack.c.h.b16 %v3239
    %v3452 = vunpack.c.l.b16 %v3240
    %v3453 = vunpack.c.l.b16 %v3241
    %v3454 = vunpack.c.h.b16 %v3241
    %v3455 = vunpack.c.l.b16 %v3242
    %v3456 = vunpack.c.l.b16 %v3243
    %v3457 = vunpack.c.h.b16 %v3243
    %v3458 = vunpack.c.l.b16 %v3244
    %v3459 = vunpack.c.l.b16 %v3245
    %v3460 = vunpack.c.h.b16 %v3245
    %v3461 = vunpack.c.l.b16 %v3246
    %v3462 = vunpack.c.l.b16 %v3247
    %v3463 = vunpack.c.h.b16 %v3247
    %v3464 = vunpack.c.l.b16 %v3248
    %v3465 = vunpack.c.l.b16 %v3249
    %v3466 = vunpack.c.h.b16 %v3249
    %v3467 = vunpack.c.l.b16 %v3250
    %v3468 = vunpack.c.l.b16 %v3251
    %v3469 = vunpack.c.h.b16 %v3251
    %v3470 = vunpack.c.l.b16 %v3252
    %v3471 = vunpack.c.l.b16 %v3253
    %v3472 = vunpack.c.h.b16 %v3253
    %v3473 = vunpack.c.l.b16 %v3254
    %v3474 = vunpack.c.l.b16 %v3255
    %v3475 = vunpack.c.h.b16 %v3255
    %v3476 = vunpack.c.l.b16 %v3256
    %v3477 = vunpack.c.l.b16 %v3257
    %v3478 = vunpack.c.h.b16 %v3257
    %v3479 = vunpack.c.l.b16 %v3258
    %v3480 = vunpack.c.l.b16 %v3259
    %v3481 = vunpack.c.h.b16 %v3259
    %v3482 = vunpack.c.l.b16 %v3260
    %v3483 = vunpack.c.l.b16 %v3261
    %v3484 = vunpack.c.h.b16 %v3261
    %v3485 = vunpack.c.l.b16 %v3262
    %v3486 = vunpack.c.l.b16 %v3263
    %v3487 = vunpack.c.h.b16 %v3263
    %v3488 = vunpack.c.l.b16 %v3264
    %v3489 = vunpack.c.l.b16 %v3265
    %v3490 = vunpack.c.h.b16 %v3265
    %v3491 = vunpack.c.l.b16 %v3266
    %v3492 = vunpack.c.l.b16 %v3267
    %v3493 = vunpack.c.h.b16 %v3267
    %v3494 = vunpack.c.l.b16 %v3268
    %v3495 = vunpack.c.l.b16 %v3269
    %v3496 = vunpack.c.h.b16 %v3269
    %v3497 = vunpack.c.l.b16 %v3270
    %v3498 = vunpack.c.l.b16 %v3271
    %v3499 = vunpack.c.h.b16 %v3271
    %v3500 = vunpack.c.l.b16 %v3272
    %v3501 = vunpack.c.l.b16 %v3273
    %v3502 = vunpack.c.h.b16 %v3273
    %v3503 = vunpack.c.l.b16 %v3274
    %v3504 = vunpack.c.l.b16 %v3275
    %v3505 = vunpack.c.h.b16 %v3275
    %v3506 = vunpack.c.l.b16 %v3276
    %v3507 = vunpack.c.l.b16 %v3277
    %v3508 = vunpack.c.h.b16 %v3277
    %v3509 = vunpack.c.l.b16 %v3278
    %v3510 = vunpack.c.l.b16 %v3279
    %v3511 = vunpack.c.h.b16 %v3279
    %v3512 = vunpack.c.l.b16 %v3280
    %v3513 = vunpack.c.l.b16 %v3281
    %v3514 = vunpack.c.h.b16 %v3281
    %v3515 = vunpack.c.l.b16 %v3282
    %v3516 = vunpack.c.l.b16 %v3283
    %v3517 = vunpack.c.h.b16 %v3283
    %v3518 = vunpack.c.l.b16 %v3284
    %v3519 = vunpack.c.l.b16 %v3285
    %v3520 = vunpack.c.h.b16 %v3285
    %v3521 = vunpack.c.l.b16 %v3286
    %v3522 = vunpack.c.l.b16 %v3287
    %v3523 = vunpack.c.h.b16 %v3287
    %v3524 = vunpack.c.l.b16 %v3288
    %v3525 = vunpack.c.l.b16 %v3289
    %v3526 = vunpack.c.h.b16 %v3289
    %v3527 = vunpack.c.l.b16 %v3290
    %v3528 = vunpack.c.l.b16 %v3291
    %v3529 = vunpack.c.h.b16 %v3291
    %v3530 = vunpack.c.l.b16 %v3292
    %v3531 = vunpack.c.l.b16 %v3293
    %v3532 = vunpack.c.h.b16 %v3293
    %v3533 = vunpack.c.l.b16 %v3294
    %v3534 = vunpack.c.l.b16 %v3295
    %v3535 = vunpack.c.h.b16 %v3295
    %v3536 = vunpack.c.l.b16 %v3296
    %v3537 = vunpack.c.l.b16 %v3297
    %v3538 = vunpack.c.h.b16 %v3297
    %v3539 = vunpack.c.l.b16 %v3298
    %v3540 = vunpack.c.l.b16 %v3299
    %v3541 = vunpack.c.h.b16 %v3299
    %v3542 = vunpack.c.l.b16 %v3300
    %v3543 = vunpack.c.l.b16 %v3301
    %v3544 = vunpack.c.h.b16 %v3301
    %v3545 = vunpack.c.l.b16 %v3302
    %v3546 = vunpack.c.l.b16 %v3303
    %v3547 = vunpack.c.h.b16 %v3303
    %v3548 = vunpack.c.l.b16 %v3304
    %v3549 = vunpack.c.l.b16 %v3305
    %v3550 = vunpack.c.h.b16 %v3305
    %v3551 = vunpack.c.l.b16 %v3306
    %v3552 = vunpack.c.l.b16 %v3307
    %v3553 = vunpack.c.h.b16 %v3307
    %v3554 = vunpack.c.l.b16 %v3308
    %v3555 = vunpack.c.l.b16 %v3309
    %v3556 = vunpack.c.h.b16 %v3309
    %v3557 = vunpack.c.l.b16 %v3310
    %v3558 = vpack.c.b16 %v3417, %v3414
    %v3559 = vpack.c.b16 %v3418, %v3415
    %v3560 = vpack.c.b16 %v3419, %v3416
    %v3561 = vpack.c.b16 %v3423, %v3420
    %v3562 = vpack.c.b16 %v3424, %v3421
    %v3563 = vpack.c.b16 %v3425, %v3422
    %v3564 = vpack.c.b16 %v3429, %v3426
    %v3565 = vpack.c.b16 %v3430, %v3427
    %v3566 = vpack.c.b16 %v3431, %v3428
    %v3567 = vpack.c.b16 %v3435, %v3432
    %v3568 = vpack.c.b16 %v3436, %v3433
    %v3569 = vpack.c.b16 %v3437, %v3434
    %v3570 = vpack.c.b16 %v3441, %v3438
    %v3571 = vpack.c.b16 %v3442, %v3439
    %v3572 = vpack.c.b16 %v3443, %v3440
    %v3573 = vpack.c.b16 %v3447, %v3444
    %v3574 = vpack.c.b16 %v3448, %v3445
    %v3575 = vpack.c.b16 %v3449, %v3446
    %v3576 = vpack.c.b16 %v3453, %v3450
    %v3577 = vpack.c.b16 %v3454, %v3451
    %v3578 = vpack.c.b16 %v3455, %v3452
    %v3579 = vpack.c.b16 %v3459, %v3456
    %v3580 = vpack.c.b16 %v3460, %v3457
    %v3581 = vpack.c.b16 %v3461, %v3458
    %v3582 = vpack.c.b16 %v3465, %v3462
    %v3583 = vpack.c.b16 %v3466, %v3463
    %v3584 = vpack.c.b16 %v3467, %v3464
    %v3585 = vpack.c.b16 %v3471, %v3468
    %v3586 = vpack.c.b16 %v3472, %v3469
    %v3587 = vpack.c.b16 %v3473, %v3470
    %v3588 = vpack.c.b16 %v3477, %v3474
    %v3589 = vpack.c.b16 %v3478, %v3475
    %v3590 = vpack.c.b16 %v3479, %v3476
    %v3591 = vpack.c.b16 %v3483, %v3480
    %v3592 = vpack.c.b16 %v3484, %v3481
    %v3593 = vpack.c.b16 %v3485, %v3482
    %v3594 = vpack.c.b16 %v3489, %v3486
    %v3595 = vpack.c.b16 %v3490, %v3487
    %v3596 = vpack.c.b16 %v3491, %v3488
    %v3597 = vpack.c.b16 %v3495, %v3492
    %v3598 = vpack.c.b16 %v3496, %v3493
    %v3599 = vpack.c.b16 %v3497, %v3494
    %v3600 = vpack.c.b16 %v3501, %v3498
    %v3601 = vpack.c.b16 %v3502, %v3499
    %v3602 = vpack.c.b16 %v3503, %v3500
    %v3603 = vpack.c.b16 %v3507, %v3504
    %v3604 = vpack.c.b16 %v3508, %v3505
    %v3605 = vpack.c.b16 %v3509, %v3506
    %v3606 = vpack.c.b16 %v3513, %v3510
    %v3607 = vpack.c.b16 %v3514, %v3511
    %v3608 = vpack.c.b16 %v3515, %v3512
    %v3609 = vpack.c.b16 %v3519, %v3516
    %v3610 = vpack.c.b16 %v3520, %v3517
    %v3611 = vpack.c.b16 %v3521, %v3518
    %v3612 = vpack.c.b16 %v3525, %v3522
    %v3613 = vpack.c.b16 %v3526, %v3523
    %v3614 = vpack.c.b16 %v3527, %v3524
    %v3615 = vpack.c.b16 %v3531, %v3528
    %v3616 = vpack.c.b16 %v3532, %v3529
    %v3617 = vpack.c.b16 %v3533, %v3530
    %v3618 = vpack.c.b16 %v3537, %v3534
    %v3619 = vpack.c.b16 %v3538, %v3535
    %v3620 = vpack.c.b16 %v3539, %v3536
    %v3621 = vpack.c.b16 %v3543, %v3540
    %v3622 = vpack.c.b16 %v3544, %v3541
    %v3623 = vpack.c.b16 %v3545, %v3542
    %v3624 = vpack.c.b16 %v3549, %v3546
    %v3625 = vpack.c.b16 %v3550, %v3547
    %v3626 = vpack.c.b16 %v3551, %v3548
    %v3627 = vpack.c.b16 %v3555, %v3552
    %v3628 = vpack.c.b16 %v3556, %v3553
    %v3629 = vpack.c.b16 %v3557, %v3554
    %3702 = vmatpush.bf16.msra.mxu0 %v3579
    %3703 = vmatpush.bf16.msra.mxu0 %v3576
    %3704 = vmatpush.bf16.msra.mxu0 %v3573
    %3705 = vmatpush.bf16.msra.mxu0 %v3570
    %3706 = vmatpush.bf16.msra.mxu0 %v3567
    %3707 = vmatpush.bf16.msra.mxu0 %v3564
    %3708 = vmatpush.bf16.msra.mxu0 %v3561
    %3709 = vmatpush.bf16.msra.mxu0 %v3558
    %3710 = vmatmul.bf16.gmra.mxu0 %v3212
    %v3711 = vpop.f32.mrf.mxu0
    %v3712 = vadd.f32 %v3312, %v3711
    %v3713 = vpop.f32.mrf.mxu0
    %v3714 = vadd.f32 %v3312, %v3713
    %3715 = vdwg.mxu0
    %3716 = vmatpush.bf16.msra.mxu0 %v3603
    %3717 = vmatpush.bf16.msra.mxu0 %v3600
    %3718 = vmatpush.bf16.msra.mxu0 %v3597
    %3719 = vmatpush.bf16.msra.mxu0 %v3594
    %3720 = vmatpush.bf16.msra.mxu0 %v3591
    %3721 = vmatpush.bf16.msra.mxu0 %v3588
    %3722 = vmatpush.bf16.msra.mxu0 %v3585
    %3723 = vmatpush.bf16.msra.mxu0 %v3582
    %3724 = vmatmul.bf16.gmra.mxu0 %v3213
    %v3725 = vpop.f32.mrf.mxu0
    %v3726 = vadd.f32 %v3712, %v3725
    %v3727 = vpop.f32.mrf.mxu0
    %v3728 = vadd.f32 %v3714, %v3727
    %3729 = vdwg.mxu0
    %3730 = vmatpush.bf16.msra.mxu0 %v3627
    %3731 = vmatpush.bf16.msra.mxu0 %v3624
    %3732 = vmatpush.bf16.msra.mxu0 %v3621
    %3733 = vmatpush.bf16.msra.mxu0 %v3618
    %3734 = vmatpush.bf16.msra.mxu0 %v3615
    %3735 = vmatpush.bf16.msra.mxu0 %v3612
    %3736 = vmatpush.bf16.msra.mxu0 %v3609
    %3737 = vmatpush.bf16.msra.mxu0 %v3606
    %3738 = vmatmul.bf16.gmra.mxu0 %v3214
    %v3739 = vpop.f32.mrf.mxu0
    %v3740 = vadd.f32 %v3726, %v3739
    %v3741 = vpop.f32.mrf.mxu0
    %v3742 = vadd.f32 %v3728, %v3741
    %3743 = vdwg.mxu0
    %3744 = vmatpush.bf16.msra.mxu0 %v3580
    %3745 = vmatpush.bf16.msra.mxu0 %v3577
    %3746 = vmatpush.bf16.msra.mxu0 %v3574
    %3747 = vmatpush.bf16.msra.mxu0 %v3571
    %3748 = vmatpush.bf16.msra.mxu0 %v3568
    %3749 = vmatpush.bf16.msra.mxu0 %v3565
    %3750 = vmatpush.bf16.msra.mxu0 %v3562
    %3751 = vmatpush.bf16.msra.mxu0 %v3559
    %3752 = vmatmul.bf16.gmra.mxu0 %v3212
    %v3753 = vpop.f32.mrf.mxu0
    %v3754 = vadd.f32 %v3313, %v3753
    %v3755 = vpop.f32.mrf.mxu0
    %v3756 = vadd.f32 %v3313, %v3755
    %3757 = vdwg.mxu0
    %3758 = vmatpush.bf16.msra.mxu0 %v3604
    %3759 = vmatpush.bf16.msra.mxu0 %v3601
    %3760 = vmatpush.bf16.msra.mxu0 %v3598
    %3761 = vmatpush.bf16.msra.mxu0 %v3595
    %3762 = vmatpush.bf16.msra.mxu0 %v3592
    %3763 = vmatpush.bf16.msra.mxu0 %v3589
    %3764 = vmatpush.bf16.msra.mxu0 %v3586
    %3765 = vmatpush.bf16.msra.mxu0 %v3583
    %3766 = vmatmul.bf16.gmra.mxu0 %v3213
    %v3767 = vpop.f32.mrf.mxu0
    %v3768 = vadd.f32 %v3754, %v3767
    %v3769 = vpop.f32.mrf.mxu0
    %v3770 = vadd.f32 %v3756, %v3769
    %3771 = vdwg.mxu0
    %3772 = vmatpush.bf16.msra.mxu0 %v3628
    %3773 = vmatpush.bf16.msra.mxu0 %v3625
    %3774 = vmatpush.bf16.msra.mxu0 %v3622
    %3775 = vmatpush.bf16.msra.mxu0 %v3619
    %3776 = vmatpush.bf16.msra.mxu0 %v3616
    %3777 = vmatpush.bf16.msra.mxu0 %v3613
    %3778 = vmatpush.bf16.msra.mxu0 %v3610
    %3779 = vmatpush.bf16.msra.mxu0 %v3607
    %3780 = vmatmul.bf16.gmra.mxu0 %v3214
    %v3781 = vpop.f32.mrf.mxu0
    %v3782 = vadd.f32 %v3768, %v3781
    %v3783 = vpop.f32.mrf.mxu0
    %v3784 = vadd.f32 %v3770, %v3783
    %3785 = vdwg.mxu0
    %3786 = vmatpush.bf16.msra.mxu0 %v3581
    %3787 = vmatpush.bf16.msra.mxu0 %v3578
    %3788 = vmatpush.bf16.msra.mxu0 %v3575
    %3789 = vmatpush.bf16.msra.mxu0 %v3572
    %3790 = vmatpush.bf16.msra.mxu0 %v3569
    %3791 = vmatpush.bf16.msra.mxu0 %v3566
    %3792 = vmatpush.bf16.msra.mxu0 %v3563
    %3793 = vmatpush.bf16.msra.mxu0 %v3560
    %3794 = vmatmul.bf16.gmra.mxu0 %v3212
    %v3795 = vpop.f32.mrf.mxu0
    %v3796 = vadd.f32 %v3314, %v3795
    %v3797 = vpop.f32.mrf.mxu0
    %v3798 = vadd.f32 %v3314, %v3797
    %3799 = vdwg.mxu0
    %3800 = vmatpush.bf16.msra.mxu0 %v3605
    %3801 = vmatpush.bf16.msra.mxu0 %v3602
    %3802 = vmatpush.bf16.msra.mxu0 %v3599
    %3803 = vmatpush.bf16.msra.mxu0 %v3596
    %3804 = vmatpush.bf16.msra.mxu0 %v3593
    %3805 = vmatpush.bf16.msra.mxu0 %v3590
    %3806 = vmatpush.bf16.msra.mxu0 %v3587
    %3807 = vmatpush.bf16.msra.mxu0 %v3584
    %3808 = vmatmul.bf16.gmra.mxu0 %v3213
    %v3809 = vpop.f32.mrf.mxu0
    %v3810 = vadd.f32 %v3796, %v3809
    %v3811 = vpop.f32.mrf.mxu0
    %v3812 = vadd.f32 %v3798, %v3811
    %3813 = vdwg.mxu0
    %3814 = vmatpush.bf16.msra.mxu0 %v3629
    %3815 = vmatpush.bf16.msra.mxu0 %v3626
    %3816 = vmatpush.bf16.msra.mxu0 %v3623
    %3817 = vmatpush.bf16.msra.mxu0 %v3620
    %3818 = vmatpush.bf16.msra.mxu0 %v3617
    %3819 = vmatpush.bf16.msra.mxu0 %v3614
    %3820 = vmatpush.bf16.msra.mxu0 %v3611
    %3821 = vmatpush.bf16.msra.mxu0 %v3608
    %3822 = vmatmul.bf16.gmra.mxu0 %v3214
    %v3823 = vpop.f32.mrf.mxu0
    %v3824 = vadd.f32 %v3810, %v3823
    %v3825 = vpop.f32.mrf.mxu0
    %v3826 = vadd.f32 %v3812, %v3825
    %3827 = vdwg.mxu0
    %v3828 = vadd.f32 %v122, %v3740
    %v3829 = vadd.f32 %v123, %v3782
    %v3830 = vadd.f32 %v124, %v3824
    %v3831 = vadd.f32 %v125, %v3742
    %v3832 = vadd.f32 %v126, %v3784
    %v3833 = vadd.f32 %v127, %v3826
    %v3834 = vadd.f32 %v3828, %v3829
    %v3835 = vadd.f32 %v3834, %v3830
    %3836 = vadd.xlane.f32.xlu0 %v3835
    %v3837 = vpop.xlane.xlu0 %3836
    %v3838 = vadd.f32 %v3831, %v3832
    %v3839 = vadd.f32 %v3838, %v3833
    %3840 = vadd.xlane.f32.xlu0 %v3839
    %v3841 = vpop.xlane.xlu0 %3840
    %v3842 = vmul.f32 %v3837, 0.003125
    %v3843 = vmul.f32 %v3841, 0.003125
    %v3844 = vmul.f32 %v3828, %v3828
    %v3845 = vmul.f32 %v3829, %v3829
    %v3846 = vmul.f32 %v3830, %v3830
    %v3847 = vmul.f32 %v3831, %v3831
    %v3848 = vmul.f32 %v3832, %v3832
    %v3849 = vmul.f32 %v3833, %v3833
    %v3850 = vadd.f32 %v3844, %v3845
    %v3851 = vadd.f32 %v3850, %v3846
    %3852 = vadd.xlane.f32.xlu0 %v3851
    %v3853 = vpop.xlane.xlu0 %3852
    %v3854 = vadd.f32 %v3847, %v3848
    %v3855 = vadd.f32 %v3854, %v3849
    %3856 = vadd.xlane.f32.xlu0 %v3855
    %v3857 = vpop.xlane.xlu0 %3856
    %v3858 = vmul.f32 %v3853, 0.003125
    %v3859 = vmul.f32 %v3857, 0.003125
    %v3860 = vmul.f32 %v3842, %v3842
    %v3861 = vmul.f32 %v3843, %v3843
    %v3862 = vsub.f32 %v3858, %v3860
    %v3863 = vsub.f32 %v3859, %v3861
    %v3864 = vmax.f32 %v3862, 0.0
    %v3865 = vmax.f32 %v3863, 0.0
    %v3866 = vsub.f32 %v3828, %v3842
    %v3867 = vsub.f32 %v3829, %v3842
    %v3868 = vsub.f32 %v3830, %v3842
    %v3869 = vsub.f32 %v3831, %v3843
    %v3870 = vsub.f32 %v3832, %v3843
    %v3871 = vsub.f32 %v3833, %v3843
    %v3872 = vadd.f32 %v3864, 1e-05
    %v3873 = vadd.f32 %v3865, 1e-05
    %v3874 = vrsqrt.pop %v3872
    %v3875 = vmul.f32 %v3874, %v3872
    %v3876 = vmul.f32 %v3875, %v3874
    %v3877 = vmul.f32 0.5, %v3876
    %v3878 = vsub.f32 1.5, %v3877
    %v3879 = vmul.f32 %v3874, %v3878
    %vm3880 = vweird.f32 %v3872
    %vm3881 = vweird.f32 %v3874
    %vm3882 = vmor %vm3880, %vm3881
    %v3883 = vsel %vm3882, %v3874, %v3879
    %v3884 = vrsqrt.pop %v3873
    %v3885 = vmul.f32 %v3884, %v3873
    %v3886 = vmul.f32 %v3885, %v3884
    %v3887 = vmul.f32 0.5, %v3886
    %v3888 = vsub.f32 1.5, %v3887
    %v3889 = vmul.f32 %v3884, %v3888
    %vm3890 = vweird.f32 %v3873
    %vm3891 = vweird.f32 %v3884
    %vm3892 = vmor %vm3890, %vm3891
    %v3893 = vsel %vm3892, %v3884, %v3889
    %v3894 = vmul.f32 %v3866, %v3883
    %v3895 = vmul.f32 %v3867, %v3883
    %v3896 = vmul.f32 %v3868, %v3883
    %v3897 = vmul.f32 %v3869, %v3893
    %v3898 = vmul.f32 %v3870, %v3893
    %v3899 = vmul.f32 %v3871, %v3893
    %v3901 = vperm.slane %v134, 0
    %v3902 = vperm.slane %v134, 1
    %v3903 = vperm.slane %v134, 2
    %v3907 = vmul.f32 %v3894, %v3901
    %v3908 = vmul.f32 %v3895, %v3902
    %v3909 = vmul.f32 %v3896, %v3903
    %v3910 = vmul.f32 %v3897, %v3901
    %v3911 = vmul.f32 %v3898, %v3902
    %v3912 = vmul.f32 %v3899, %v3903
    %v3914 = vperm.slane %v136, 0
    %v3915 = vperm.slane %v136, 1
    %v3916 = vperm.slane %v136, 2
    %v3920 = vadd.f32 %v3907, %v3914
    %v3921 = vadd.f32 %v3908, %v3915
    %v3922 = vadd.f32 %v3909, %v3916
    %v3923 = vadd.f32 %v3910, %v3914
    %v3924 = vadd.f32 %v3911, %v3915
    %v3925 = vadd.f32 %v3912, %v3916
    %v3926 = vpack.c.bf16 %v3923, %v3920
    %v3927 = vpack.c.bf16 %v3924, %v3921
    %v3928 = vpack.c.bf16 %v3925, %v3922
    %v3929 = vld [vmem:[#allocation8] sm:$0xff]
    %v3930 = vld [vmem:[#allocation8 + $0x8] sm:$0xff]
    %v3931 = vld [vmem:[#allocation8 + $0x10] sm:$0xff]
    %v3932 = vld [vmem:[#allocation8 + $0x18] sm:$0xff]
    %v3933 = vld [vmem:[#allocation8 + $0x20] sm:$0xff]
    %v3934 = vld [vmem:[#allocation8 + $0x28] sm:$0xff]
    %v3935 = vld [vmem:[#allocation8 + $0x30] sm:$0xff]
    %v3936 = vld [vmem:[#allocation8 + $0x38] sm:$0xff]
    %v3937 = vld [vmem:[#allocation8 + $0x40] sm:$0xff]
    %v3938 = vld [vmem:[#allocation8 + $0x48] sm:$0xff]
    %v3939 = vld [vmem:[#allocation8 + $0x50] sm:$0xff]
    %v3940 = vld [vmem:[#allocation8 + $0x58] sm:$0xff]
    %v3941 = vld [vmem:[#allocation8 + $0x60] sm:$0xff]
    %v3942 = vld [vmem:[#allocation8 + $0x68] sm:$0xff]
    %v3943 = vld [vmem:[#allocation8 + $0x70] sm:$0xff]
    %v3944 = vld [vmem:[#allocation8 + $0x78] sm:$0xff]
    %v3945 = vld [vmem:[#allocation8 + $0x80] sm:$0xff]
    %v3946 = vld [vmem:[#allocation8 + $0x88] sm:$0xff]
    %v3947 = vld [vmem:[#allocation8 + $0x90] sm:$0xff]
    %v3948 = vld [vmem:[#allocation8 + $0x98] sm:$0xff]
    %v3949 = vld [vmem:[#allocation8 + $0xa0] sm:$0xff]
    %v3950 = vld [vmem:[#allocation8 + $0xa8] sm:$0xff]
    %v3951 = vld [vmem:[#allocation8 + $0xb0] sm:$0xff]
    %v3952 = vld [vmem:[#allocation8 + $0xb8] sm:$0xff]
    %v3953 = vld [vmem:[#allocation8 + $0xc0] sm:$0xff]
    %v3954 = vld [vmem:[#allocation8 + $0xc8] sm:$0xff]
    %v3955 = vld [vmem:[#allocation8 + $0xd0] sm:$0xff]
    %v3956 = vld [vmem:[#allocation8 + $0xd8] sm:$0xff]
    %v3957 = vld [vmem:[#allocation8 + $0xe0] sm:$0xff]
    %v3958 = vld [vmem:[#allocation8 + $0xe8] sm:$0xff]
    %v3959 = vld [vmem:[#allocation8 + $0xf0] sm:$0xff]
    %v3960 = vld [vmem:[#allocation8 + $0xf8] sm:$0xff]
    %v3961 = vld [vmem:[#allocation8 + $0x100] sm:$0xff]
    %v3962 = vld [vmem:[#allocation8 + $0x108] sm:$0xff]
    %v3963 = vld [vmem:[#allocation8 + $0x110] sm:$0xff]
    %v3964 = vld [vmem:[#allocation8 + $0x118] sm:$0xff]
    %v3965 = vld [vmem:[#allocation8 + $0x120] sm:$0xff]
    %v3966 = vld [vmem:[#allocation8 + $0x128] sm:$0xff]
    %v3967 = vld [vmem:[#allocation8 + $0x130] sm:$0xff]
    %v3968 = vld [vmem:[#allocation8 + $0x138] sm:$0xff]
    %v3969 = vld [vmem:[#allocation8 + $0x140] sm:$0xff]
    %v3970 = vld [vmem:[#allocation8 + $0x148] sm:$0xff]
    %v3971 = vld [vmem:[#allocation8 + $0x150] sm:$0xff]
    %v3972 = vld [vmem:[#allocation8 + $0x158] sm:$0xff]
    %v3973 = vld [vmem:[#allocation8 + $0x160] sm:$0xff]
    %v3974 = vld [vmem:[#allocation8 + $0x168] sm:$0xff]
    %v3975 = vld [vmem:[#allocation8 + $0x170] sm:$0xff]
    %v3976 = vld [vmem:[#allocation8 + $0x178] sm:$0xff]
    %v3977 = vld [vmem:[#allocation8 + $0x180] sm:$0xff]
    %v3978 = vld [vmem:[#allocation8 + $0x188] sm:$0xff]
    %v3979 = vld [vmem:[#allocation8 + $0x190] sm:$0xff]
    %v3980 = vld [vmem:[#allocation8 + $0x198] sm:$0xff]
    %v3981 = vld [vmem:[#allocation8 + $0x1a0] sm:$0xff]
    %v3982 = vld [vmem:[#allocation8 + $0x1a8] sm:$0xff]
    %v3983 = vld [vmem:[#allocation8 + $0x1b0] sm:$0xff]
    %v3984 = vld [vmem:[#allocation8 + $0x1b8] sm:$0xff]
    %v3985 = vld [vmem:[#allocation8 + $0x1c0] sm:$0xff]
    %v3986 = vld [vmem:[#allocation8 + $0x1c8] sm:$0xff]
    %v3987 = vld [vmem:[#allocation8 + $0x1d0] sm:$0xff]
    %v3988 = vld [vmem:[#allocation8 + $0x1d8] sm:$0xff]
    %v3989 = vld [vmem:[#allocation8 + $0x1e0] sm:$0xff]
    %v3990 = vld [vmem:[#allocation8 + $0x1e8] sm:$0xff]
    %v3991 = vld [vmem:[#allocation8 + $0x1f0] sm:$0xff]
    %v3992 = vld [vmem:[#allocation8 + $0x1f8] sm:$0xff]
    %v3993 = vld [vmem:[#allocation8 + $0x200] sm:$0xff]
    %v3994 = vld [vmem:[#allocation8 + $0x208] sm:$0xff]
    %v3995 = vld [vmem:[#allocation8 + $0x210] sm:$0xff]
    %v3996 = vld [vmem:[#allocation8 + $0x218] sm:$0xff]
    %v3997 = vld [vmem:[#allocation8 + $0x220] sm:$0xff]
    %v3998 = vld [vmem:[#allocation8 + $0x228] sm:$0xff]
    %v3999 = vld [vmem:[#allocation8 + $0x230] sm:$0xff]
    %v4000 = vld [vmem:[#allocation8 + $0x238] sm:$0xff]
    %v4001 = vld [vmem:[#allocation8 + $0x240] sm:$0xff]
    %v4002 = vld [vmem:[#allocation8 + $0x248] sm:$0xff]
    %v4003 = vld [vmem:[#allocation8 + $0x250] sm:$0xff]
    %v4004 = vld [vmem:[#allocation8 + $0x258] sm:$0xff]
    %v4005 = vld [vmem:[#allocation8 + $0x260] sm:$0xff]
    %v4006 = vld [vmem:[#allocation8 + $0x268] sm:$0xff]
    %v4007 = vld [vmem:[#allocation8 + $0x270] sm:$0xff]
    %v4008 = vld [vmem:[#allocation8 + $0x278] sm:$0xff]
    %v4009 = vld [vmem:[#allocation8 + $0x280] sm:$0xff]
    %v4010 = vld [vmem:[#allocation8 + $0x288] sm:$0xff]
    %v4011 = vld [vmem:[#allocation8 + $0x290] sm:$0xff]
    %v4012 = vld [vmem:[#allocation8 + $0x298] sm:$0xff]
    %v4013 = vld [vmem:[#allocation8 + $0x2a0] sm:$0xff]
    %v4014 = vld [vmem:[#allocation8 + $0x2a8] sm:$0xff]
    %v4015 = vld [vmem:[#allocation8 + $0x2b0] sm:$0xff]
    %v4016 = vld [vmem:[#allocation8 + $0x2b8] sm:$0xff]
    %v4017 = vld [vmem:[#allocation8 + $0x2c0] sm:$0xff]
    %v4018 = vld [vmem:[#allocation8 + $0x2c8] sm:$0xff]
    %v4019 = vld [vmem:[#allocation8 + $0x2d0] sm:$0xff]
    %v4020 = vld [vmem:[#allocation8 + $0x2d8] sm:$0xff]
    %v4021 = vld [vmem:[#allocation8 + $0x2e0] sm:$0xff]
    %v4022 = vld [vmem:[#allocation8 + $0x2e8] sm:$0xff]
    %v4023 = vld [vmem:[#allocation8 + $0x2f0] sm:$0xff]
    %v4024 = vld [vmem:[#allocation8 + $0x2f8] sm:$0xff]
    %v4025 = vld [vmem:[#allocation8 + $0x300] sm:$0xff]
    %v4026 = vld [vmem:[#allocation8 + $0x308] sm:$0xff]
    %v4027 = vld [vmem:[#allocation8 + $0x310] sm:$0xff]
    %v4028 = vld [vmem:[#allocation8 + $0x318] sm:$0xff]
    %v4029 = vld [vmem:[#allocation8 + $0x320] sm:$0xff]
    %v4030 = vld [vmem:[#allocation8 + $0x328] sm:$0xff]
    %v4031 = vld [vmem:[#allocation8 + $0x330] sm:$0xff]
    %v4032 = vld [vmem:[#allocation8 + $0x338] sm:$0xff]
    %v4033 = vld [vmem:[#allocation8 + $0x340] sm:$0xff]
    %v4034 = vld [vmem:[#allocation8 + $0x348] sm:$0xff]
    %v4035 = vld [vmem:[#allocation8 + $0x350] sm:$0xff]
    %v4036 = vld [vmem:[#allocation8 + $0x358] sm:$0xff]
    %v4037 = vld [vmem:[#allocation8 + $0x360] sm:$0xff]
    %v4038 = vld [vmem:[#allocation8 + $0x368] sm:$0xff]
    %v4039 = vld [vmem:[#allocation8 + $0x370] sm:$0xff]
    %v4040 = vld [vmem:[#allocation8 + $0x378] sm:$0xff]
    %v4041 = vld [vmem:[#allocation8 + $0x380] sm:$0xff]
    %v4042 = vld [vmem:[#allocation8 + $0x388] sm:$0xff]
    %v4043 = vld [vmem:[#allocation8 + $0x390] sm:$0xff]
    %v4044 = vld [vmem:[#allocation8 + $0x398] sm:$0xff]
    %v4045 = vld [vmem:[#allocation8 + $0x3a0] sm:$0xff]
    %v4046 = vld [vmem:[#allocation8 + $0x3a8] sm:$0xff]
    %v4047 = vld [vmem:[#allocation8 + $0x3b0] sm:$0xff]
    %v4048 = vld [vmem:[#allocation8 + $0x3b8] sm:$0xff]
    %v4049 = vld [vmem:[#allocation8 + $0x3c0] sm:$0xff]
    %v4050 = vld [vmem:[#allocation8 + $0x3c8] sm:$0xff]
    %v4051 = vld [vmem:[#allocation8 + $0x3d0] sm:$0xff]
    %v4052 = vld [vmem:[#allocation8 + $0x3d8] sm:$0xff]
    %v4053 = vld [vmem:[#allocation8 + $0x3e0] sm:$0xff]
    %v4054 = vld [vmem:[#allocation8 + $0x3e8] sm:$0xff]
    %v4055 = vld [vmem:[#allocation8 + $0x3f0] sm:$0xff]
    %v4056 = vld [vmem:[#allocation8 + $0x3f8] sm:$0xff]
    %v4057 = vld [vmem:[#allocation8 + $0x400] sm:$0xff]
    %v4058 = vld [vmem:[#allocation8 + $0x408] sm:$0xff]
    %v4059 = vld [vmem:[#allocation8 + $0x410] sm:$0xff]
    %v4060 = vld [vmem:[#allocation8 + $0x418] sm:$0xff]
    %v4061 = vld [vmem:[#allocation8 + $0x420] sm:$0xff]
    %v4062 = vld [vmem:[#allocation8 + $0x428] sm:$0xff]
    %v4063 = vld [vmem:[#allocation8 + $0x430] sm:$0xff]
    %v4064 = vld [vmem:[#allocation8 + $0x438] sm:$0xff]
    %v4065 = vld [vmem:[#allocation8 + $0x440] sm:$0xff]
    %v4066 = vld [vmem:[#allocation8 + $0x448] sm:$0xff]
    %v4067 = vld [vmem:[#allocation8 + $0x450] sm:$0xff]
    %v4068 = vld [vmem:[#allocation8 + $0x458] sm:$0xff]
    %v4069 = vld [vmem:[#allocation8 + $0x460] sm:$0xff]
    %v4070 = vld [vmem:[#allocation8 + $0x468] sm:$0xff]
    %v4071 = vld [vmem:[#allocation8 + $0x470] sm:$0xff]
    %v4072 = vld [vmem:[#allocation8 + $0x478] sm:$0xff]
    %v4073 = vld [vmem:[#allocation8 + $0x480] sm:$0xff]
    %v4074 = vld [vmem:[#allocation8 + $0x488] sm:$0xff]
    %v4075 = vld [vmem:[#allocation8 + $0x490] sm:$0xff]
    %v4076 = vld [vmem:[#allocation8 + $0x498] sm:$0xff]
    %v4077 = vld [vmem:[#allocation8 + $0x4a0] sm:$0xff]
    %v4078 = vld [vmem:[#allocation8 + $0x4a8] sm:$0xff]
    %v4079 = vld [vmem:[#allocation8 + $0x4b0] sm:$0xff]
    %v4080 = vld [vmem:[#allocation8 + $0x4b8] sm:$0xff]
    %v4081 = vld [vmem:[#allocation8 + $0x4c0] sm:$0xff]
    %v4082 = vld [vmem:[#allocation8 + $0x4c8] sm:$0xff]
    %v4083 = vld [vmem:[#allocation8 + $0x4d0] sm:$0xff]
    %v4084 = vld [vmem:[#allocation8 + $0x4d8] sm:$0xff]
    %v4085 = vld [vmem:[#allocation8 + $0x4e0] sm:$0xff]
    %v4086 = vld [vmem:[#allocation8 + $0x4e8] sm:$0xff]
    %v4087 = vld [vmem:[#allocation8 + $0x4f0] sm:$0xff]
    %v4088 = vld [vmem:[#allocation8 + $0x4f8] sm:$0xff]
    %v4089 = vld [vmem:[#allocation8 + $0x500] sm:$0xff]
    %v4090 = vld [vmem:[#allocation8 + $0x508] sm:$0xff]
    %v4091 = vld [vmem:[#allocation8 + $0x510] sm:$0xff]
    %v4092 = vld [vmem:[#allocation8 + $0x518] sm:$0xff]
    %v4093 = vld [vmem:[#allocation8 + $0x520] sm:$0xff]
    %v4094 = vld [vmem:[#allocation8 + $0x528] sm:$0xff]
    %v4095 = vld [vmem:[#allocation8 + $0x530] sm:$0xff]
    %v4096 = vld [vmem:[#allocation8 + $0x538] sm:$0xff]
    %v4097 = vld [vmem:[#allocation8 + $0x540] sm:$0xff]
    %v4098 = vld [vmem:[#allocation8 + $0x548] sm:$0xff]
    %v4099 = vld [vmem:[#allocation8 + $0x550] sm:$0xff]
    %v4100 = vld [vmem:[#allocation8 + $0x558] sm:$0xff]
    %v4101 = vld [vmem:[#allocation8 + $0x560] sm:$0xff]
    %v4102 = vld [vmem:[#allocation8 + $0x568] sm:$0xff]
    %v4103 = vld [vmem:[#allocation8 + $0x570] sm:$0xff]
    %v4104 = vld [vmem:[#allocation8 + $0x578] sm:$0xff]
    %v4105 = vld [vmem:[#allocation8 + $0x580] sm:$0xff]
    %v4106 = vld [vmem:[#allocation8 + $0x588] sm:$0xff]
    %v4107 = vld [vmem:[#allocation8 + $0x590] sm:$0xff]
    %v4108 = vld [vmem:[#allocation8 + $0x598] sm:$0xff]
    %v4109 = vld [vmem:[#allocation8 + $0x5a0] sm:$0xff]
    %v4110 = vld [vmem:[#allocation8 + $0x5a8] sm:$0xff]
    %v4111 = vld [vmem:[#allocation8 + $0x5b0] sm:$0xff]
    %v4112 = vld [vmem:[#allocation8 + $0x5b8] sm:$0xff]
    %v4113 = vld [vmem:[#allocation8 + $0x5c0] sm:$0xff]
    %v4114 = vld [vmem:[#allocation8 + $0x5c8] sm:$0xff]
    %v4115 = vld [vmem:[#allocation8 + $0x5d0] sm:$0xff]
    %v4116 = vld [vmem:[#allocation8 + $0x5d8] sm:$0xff]
    %v4117 = vld [vmem:[#allocation8 + $0x5e0] sm:$0xff]
    %v4118 = vld [vmem:[#allocation8 + $0x5e8] sm:$0xff]
    %v4119 = vld [vmem:[#allocation8 + $0x5f0] sm:$0xff]
    %v4120 = vld [vmem:[#allocation8 + $0x5f8] sm:$0xff]
    %v4121 = vld [vmem:[#allocation8 + $0x600] sm:$0xff]
    %v4122 = vld [vmem:[#allocation8 + $0x608] sm:$0xff]
    %v4123 = vld [vmem:[#allocation8 + $0x610] sm:$0xff]
    %v4124 = vld [vmem:[#allocation8 + $0x618] sm:$0xff]
    %v4125 = vld [vmem:[#allocation8 + $0x620] sm:$0xff]
    %v4126 = vld [vmem:[#allocation8 + $0x628] sm:$0xff]
    %v4127 = vld [vmem:[#allocation8 + $0x630] sm:$0xff]
    %v4128 = vld [vmem:[#allocation8 + $0x638] sm:$0xff]
    %v4129 = vld [vmem:[#allocation8 + $0x640] sm:$0xff]
    %v4130 = vld [vmem:[#allocation8 + $0x648] sm:$0xff]
    %v4131 = vld [vmem:[#allocation8 + $0x650] sm:$0xff]
    %v4132 = vld [vmem:[#allocation8 + $0x658] sm:$0xff]
    %v4133 = vld [vmem:[#allocation8 + $0x660] sm:$0xff]
    %v4134 = vld [vmem:[#allocation8 + $0x668] sm:$0xff]
    %v4135 = vld [vmem:[#allocation8 + $0x670] sm:$0xff]
    %v4136 = vld [vmem:[#allocation8 + $0x678] sm:$0xff]
    %v4137 = vld [vmem:[#allocation8 + $0x680] sm:$0xff]
    %v4138 = vld [vmem:[#allocation8 + $0x688] sm:$0xff]
    %v4139 = vld [vmem:[#allocation8 + $0x690] sm:$0xff]
    %v4140 = vld [vmem:[#allocation8 + $0x698] sm:$0xff]
    %v4141 = vld [vmem:[#allocation8 + $0x6a0] sm:$0xff]
    %v4142 = vld [vmem:[#allocation8 + $0x6a8] sm:$0xff]
    %v4143 = vld [vmem:[#allocation8 + $0x6b0] sm:$0xff]
    %v4144 = vld [vmem:[#allocation8 + $0x6b8] sm:$0xff]
    %v4145 = vld [vmem:[#allocation8 + $0x6c0] sm:$0xff]
    %v4146 = vld [vmem:[#allocation8 + $0x6c8] sm:$0xff]
    %v4147 = vld [vmem:[#allocation8 + $0x6d0] sm:$0xff]
    %v4148 = vld [vmem:[#allocation8 + $0x6d8] sm:$0xff]
    %v4149 = vld [vmem:[#allocation8 + $0x6e0] sm:$0xff]
    %v4150 = vld [vmem:[#allocation8 + $0x6e8] sm:$0xff]
    %v4151 = vld [vmem:[#allocation8 + $0x6f0] sm:$0xff]
    %v4152 = vld [vmem:[#allocation8 + $0x6f8] sm:$0xff]
    %v4153 = vld [vmem:[#allocation8 + $0x700] sm:$0xff]
    %v4154 = vld [vmem:[#allocation8 + $0x708] sm:$0xff]
    %v4155 = vld [vmem:[#allocation8 + $0x710] sm:$0xff]
    %v4156 = vld [vmem:[#allocation8 + $0x718] sm:$0xff]
    %v4157 = vld [vmem:[#allocation8 + $0x720] sm:$0xff]
    %v4158 = vld [vmem:[#allocation8 + $0x728] sm:$0xff]
    %v4159 = vld [vmem:[#allocation8 + $0x730] sm:$0xff]
    %v4160 = vld [vmem:[#allocation8 + $0x738] sm:$0xff]
    %v4161 = vld [vmem:[#allocation8 + $0x740] sm:$0xff]
    %v4162 = vld [vmem:[#allocation8 + $0x748] sm:$0xff]
    %v4163 = vld [vmem:[#allocation8 + $0x750] sm:$0xff]
    %v4164 = vld [vmem:[#allocation8 + $0x758] sm:$0xff]
    %v4165 = vld [vmem:[#allocation8 + $0x760] sm:$0xff]
    %v4166 = vld [vmem:[#allocation8 + $0x768] sm:$0xff]
    %v4167 = vld [vmem:[#allocation8 + $0x770] sm:$0xff]
    %v4168 = vld [vmem:[#allocation8 + $0x778] sm:$0xff]
    %v4171 = vperm.slane %v152, 0
    %v4172 = vperm.slane %v152, 1
    %v4173 = vperm.slane %v152, 2
    %v4174 = vperm.slane %v152, 3
    %v4175 = vperm.slane %v152, 4
    %v4176 = vperm.slane %v152, 5
    %v4177 = vperm.slane %v152, 6
    %v4178 = vperm.slane %v152, 7
    %v4179 = vperm.slane %v154, 0
    %v4180 = vperm.slane %v154, 1
    %v4431 = vunpack.c.l.b16 %v3929
    %v4432 = vunpack.c.h.b16 %v3929
    %v4433 = vunpack.c.l.b16 %v3930
    %v4434 = vunpack.c.h.b16 %v3930
    %v4435 = vunpack.c.l.b16 %v3931
    %v4436 = vunpack.c.h.b16 %v3931
    %v4437 = vunpack.c.l.b16 %v3932
    %v4438 = vunpack.c.h.b16 %v3932
    %v4439 = vunpack.c.l.b16 %v3933
    %v4440 = vunpack.c.h.b16 %v3933
    %v4441 = vunpack.c.l.b16 %v3934
    %v4442 = vunpack.c.h.b16 %v3934
    %v4443 = vunpack.c.l.b16 %v3935
    %v4444 = vunpack.c.h.b16 %v3935
    %v4445 = vunpack.c.l.b16 %v3936
    %v4446 = vunpack.c.h.b16 %v3936
    %v4447 = vunpack.c.l.b16 %v3937
    %v4448 = vunpack.c.h.b16 %v3937
    %v4449 = vunpack.c.l.b16 %v3938
    %v4450 = vunpack.c.h.b16 %v3938
    %v4451 = vunpack.c.l.b16 %v3939
    %v4452 = vunpack.c.h.b16 %v3939
    %v4453 = vunpack.c.l.b16 %v3940
    %v4454 = vunpack.c.h.b16 %v3940
    %v4455 = vunpack.c.l.b16 %v3941
    %v4456 = vunpack.c.h.b16 %v3941
    %v4457 = vunpack.c.l.b16 %v3942
    %v4458 = vunpack.c.h.b16 %v3942
    %v4459 = vunpack.c.l.b16 %v3943
    %v4460 = vunpack.c.h.b16 %v3943
    %v4461 = vunpack.c.l.b16 %v3944
    %v4462 = vunpack.c.h.b16 %v3944
    %v4463 = vunpack.c.l.b16 %v3945
    %v4464 = vunpack.c.h.b16 %v3945
    %v4465 = vunpack.c.l.b16 %v3946
    %v4466 = vunpack.c.h.b16 %v3946
    %v4467 = vunpack.c.l.b16 %v3947
    %v4468 = vunpack.c.h.b16 %v3947
    %v4469 = vunpack.c.l.b16 %v3948
    %v4470 = vunpack.c.h.b16 %v3948
    %v4471 = vunpack.c.l.b16 %v3949
    %v4472 = vunpack.c.h.b16 %v3949
    %v4473 = vunpack.c.l.b16 %v3950
    %v4474 = vunpack.c.h.b16 %v3950
    %v4475 = vunpack.c.l.b16 %v3951
    %v4476 = vunpack.c.h.b16 %v3951
    %v4477 = vunpack.c.l.b16 %v3952
    %v4478 = vunpack.c.h.b16 %v3952
    %v4479 = vunpack.c.l.b16 %v3953
    %v4480 = vunpack.c.h.b16 %v3953
    %v4481 = vunpack.c.l.b16 %v3954
    %v4482 = vunpack.c.h.b16 %v3954
    %v4483 = vunpack.c.l.b16 %v3955
    %v4484 = vunpack.c.h.b16 %v3955
    %v4485 = vunpack.c.l.b16 %v3956
    %v4486 = vunpack.c.h.b16 %v3956
    %v4487 = vunpack.c.l.b16 %v3957
    %v4488 = vunpack.c.h.b16 %v3957
    %v4489 = vunpack.c.l.b16 %v3958
    %v4490 = vunpack.c.h.b16 %v3958
    %v4491 = vunpack.c.l.b16 %v3959
    %v4492 = vunpack.c.h.b16 %v3959
    %v4493 = vunpack.c.l.b16 %v3960
    %v4494 = vunpack.c.h.b16 %v3960
    %v4495 = vunpack.c.l.b16 %v3961
    %v4496 = vunpack.c.h.b16 %v3961
    %v4497 = vunpack.c.l.b16 %v3962
    %v4498 = vunpack.c.h.b16 %v3962
    %v4499 = vunpack.c.l.b16 %v3963
    %v4500 = vunpack.c.h.b16 %v3963
    %v4501 = vunpack.c.l.b16 %v3964
    %v4502 = vunpack.c.h.b16 %v3964
    %v4503 = vunpack.c.l.b16 %v3965
    %v4504 = vunpack.c.h.b16 %v3965
    %v4505 = vunpack.c.l.b16 %v3966
    %v4506 = vunpack.c.h.b16 %v3966
    %v4507 = vunpack.c.l.b16 %v3967
    %v4508 = vunpack.c.h.b16 %v3967
    %v4509 = vunpack.c.l.b16 %v3968
    %v4510 = vunpack.c.h.b16 %v3968
    %v4511 = vunpack.c.l.b16 %v3969
    %v4512 = vunpack.c.h.b16 %v3969
    %v4513 = vunpack.c.l.b16 %v3970
    %v4514 = vunpack.c.h.b16 %v3970
    %v4515 = vunpack.c.l.b16 %v3971
    %v4516 = vunpack.c.h.b16 %v3971
    %v4517 = vunpack.c.l.b16 %v3972
    %v4518 = vunpack.c.h.b16 %v3972
    %v4519 = vunpack.c.l.b16 %v3973
    %v4520 = vunpack.c.h.b16 %v3973
    %v4521 = vunpack.c.l.b16 %v3974
    %v4522 = vunpack.c.h.b16 %v3974
    %v4523 = vunpack.c.l.b16 %v3975
    %v4524 = vunpack.c.h.b16 %v3975
    %v4525 = vunpack.c.l.b16 %v3976
    %v4526 = vunpack.c.h.b16 %v3976
    %v4527 = vunpack.c.l.b16 %v3977
    %v4528 = vunpack.c.h.b16 %v3977
    %v4529 = vunpack.c.l.b16 %v3978
    %v4530 = vunpack.c.h.b16 %v3978
    %v4531 = vunpack.c.l.b16 %v3979
    %v4532 = vunpack.c.h.b16 %v3979
    %v4533 = vunpack.c.l.b16 %v3980
    %v4534 = vunpack.c.h.b16 %v3980
    %v4535 = vunpack.c.l.b16 %v3981
    %v4536 = vunpack.c.h.b16 %v3981
    %v4537 = vunpack.c.l.b16 %v3982
    %v4538 = vunpack.c.h.b16 %v3982
    %v4539 = vunpack.c.l.b16 %v3983
    %v4540 = vunpack.c.h.b16 %v3983
    %v4541 = vunpack.c.l.b16 %v3984
    %v4542 = vunpack.c.h.b16 %v3984
    %v4543 = vunpack.c.l.b16 %v3985
    %v4544 = vunpack.c.h.b16 %v3985
    %v4545 = vunpack.c.l.b16 %v3986
    %v4546 = vunpack.c.h.b16 %v3986
    %v4547 = vunpack.c.l.b16 %v3987
    %v4548 = vunpack.c.h.b16 %v3987
    %v4549 = vunpack.c.l.b16 %v3988
    %v4550 = vunpack.c.h.b16 %v3988
    %v4551 = vunpack.c.l.b16 %v3989
    %v4552 = vunpack.c.h.b16 %v3989
    %v4553 = vunpack.c.l.b16 %v3990
    %v4554 = vunpack.c.h.b16 %v3990
    %v4555 = vunpack.c.l.b16 %v3991
    %v4556 = vunpack.c.h.b16 %v3991
    %v4557 = vunpack.c.l.b16 %v3992
    %v4558 = vunpack.c.h.b16 %v3992
    %v4559 = vunpack.c.l.b16 %v3993
    %v4560 = vunpack.c.h.b16 %v3993
    %v4561 = vunpack.c.l.b16 %v3994
    %v4562 = vunpack.c.h.b16 %v3994
    %v4563 = vunpack.c.l.b16 %v3995
    %v4564 = vunpack.c.h.b16 %v3995
    %v4565 = vunpack.c.l.b16 %v3996
    %v4566 = vunpack.c.h.b16 %v3996
    %v4567 = vunpack.c.l.b16 %v3997
    %v4568 = vunpack.c.h.b16 %v3997
    %v4569 = vunpack.c.l.b16 %v3998
    %v4570 = vunpack.c.h.b16 %v3998
    %v4571 = vunpack.c.l.b16 %v3999
    %v4572 = vunpack.c.h.b16 %v3999
    %v4573 = vunpack.c.l.b16 %v4000
    %v4574 = vunpack.c.h.b16 %v4000
    %v4575 = vunpack.c.l.b16 %v4001
    %v4576 = vunpack.c.h.b16 %v4001
    %v4577 = vunpack.c.l.b16 %v4002
    %v4578 = vunpack.c.h.b16 %v4002
    %v4579 = vunpack.c.l.b16 %v4003
    %v4580 = vunpack.c.h.b16 %v4003
    %v4581 = vunpack.c.l.b16 %v4004
    %v4582 = vunpack.c.h.b16 %v4004
    %v4583 = vunpack.c.l.b16 %v4005
    %v4584 = vunpack.c.h.b16 %v4005
    %v4585 = vunpack.c.l.b16 %v4006
    %v4586 = vunpack.c.h.b16 %v4006
    %v4587 = vunpack.c.l.b16 %v4007
    %v4588 = vunpack.c.h.b16 %v4007
    %v4589 = vunpack.c.l.b16 %v4008
    %v4590 = vunpack.c.h.b16 %v4008
    %v4591 = vunpack.c.l.b16 %v4009
    %v4592 = vunpack.c.h.b16 %v4009
    %v4593 = vunpack.c.l.b16 %v4010
    %v4594 = vunpack.c.h.b16 %v4010
    %v4595 = vunpack.c.l.b16 %v4011
    %v4596 = vunpack.c.h.b16 %v4011
    %v4597 = vunpack.c.l.b16 %v4012
    %v4598 = vunpack.c.h.b16 %v4012
    %v4599 = vunpack.c.l.b16 %v4013
    %v4600 = vunpack.c.h.b16 %v4013
    %v4601 = vunpack.c.l.b16 %v4014
    %v4602 = vunpack.c.h.b16 %v4014
    %v4603 = vunpack.c.l.b16 %v4015
    %v4604 = vunpack.c.h.b16 %v4015
    %v4605 = vunpack.c.l.b16 %v4016
    %v4606 = vunpack.c.h.b16 %v4016
    %v4607 = vunpack.c.l.b16 %v4017
    %v4608 = vunpack.c.h.b16 %v4017
    %v4609 = vunpack.c.l.b16 %v4018
    %v4610 = vunpack.c.h.b16 %v4018
    %v4611 = vunpack.c.l.b16 %v4019
    %v4612 = vunpack.c.h.b16 %v4019
    %v4613 = vunpack.c.l.b16 %v4020
    %v4614 = vunpack.c.h.b16 %v4020
    %v4615 = vunpack.c.l.b16 %v4021
    %v4616 = vunpack.c.h.b16 %v4021
    %v4617 = vunpack.c.l.b16 %v4022
    %v4618 = vunpack.c.h.b16 %v4022
    %v4619 = vunpack.c.l.b16 %v4023
    %v4620 = vunpack.c.h.b16 %v4023
    %v4621 = vunpack.c.l.b16 %v4024
    %v4622 = vunpack.c.h.b16 %v4024
    %v4623 = vunpack.c.l.b16 %v4025
    %v4624 = vunpack.c.h.b16 %v4025
    %v4625 = vunpack.c.l.b16 %v4026
    %v4626 = vunpack.c.h.b16 %v4026
    %v4627 = vunpack.c.l.b16 %v4027
    %v4628 = vunpack.c.h.b16 %v4027
    %v4629 = vunpack.c.l.b16 %v4028
    %v4630 = vunpack.c.h.b16 %v4028
    %v4631 = vunpack.c.l.b16 %v4029
    %v4632 = vunpack.c.h.b16 %v4029
    %v4633 = vunpack.c.l.b16 %v4030
    %v4634 = vunpack.c.h.b16 %v4030
    %v4635 = vunpack.c.l.b16 %v4031
    %v4636 = vunpack.c.h.b16 %v4031
    %v4637 = vunpack.c.l.b16 %v4032
    %v4638 = vunpack.c.h.b16 %v4032
    %v4639 = vunpack.c.l.b16 %v4033
    %v4640 = vunpack.c.h.b16 %v4033
    %v4641 = vunpack.c.l.b16 %v4034
    %v4642 = vunpack.c.h.b16 %v4034
    %v4643 = vunpack.c.l.b16 %v4035
    %v4644 = vunpack.c.h.b16 %v4035
    %v4645 = vunpack.c.l.b16 %v4036
    %v4646 = vunpack.c.h.b16 %v4036
    %v4647 = vunpack.c.l.b16 %v4037
    %v4648 = vunpack.c.h.b16 %v4037
    %v4649 = vunpack.c.l.b16 %v4038
    %v4650 = vunpack.c.h.b16 %v4038
    %v4651 = vunpack.c.l.b16 %v4039
    %v4652 = vunpack.c.h.b16 %v4039
    %v4653 = vunpack.c.l.b16 %v4040
    %v4654 = vunpack.c.h.b16 %v4040
    %v4655 = vunpack.c.l.b16 %v4041
    %v4656 = vunpack.c.h.b16 %v4041
    %v4657 = vunpack.c.l.b16 %v4042
    %v4658 = vunpack.c.h.b16 %v4042
    %v4659 = vunpack.c.l.b16 %v4043
    %v4660 = vunpack.c.h.b16 %v4043
    %v4661 = vunpack.c.l.b16 %v4044
    %v4662 = vunpack.c.h.b16 %v4044
    %v4663 = vunpack.c.l.b16 %v4045
    %v4664 = vunpack.c.h.b16 %v4045
    %v4665 = vunpack.c.l.b16 %v4046
    %v4666 = vunpack.c.h.b16 %v4046
    %v4667 = vunpack.c.l.b16 %v4047
    %v4668 = vunpack.c.h.b16 %v4047
    %v4669 = vunpack.c.l.b16 %v4048
    %v4670 = vunpack.c.h.b16 %v4048
    %v4671 = vunpack.c.l.b16 %v4049
    %v4672 = vunpack.c.h.b16 %v4049
    %v4673 = vunpack.c.l.b16 %v4050
    %v4674 = vunpack.c.h.b16 %v4050
    %v4675 = vunpack.c.l.b16 %v4051
    %v4676 = vunpack.c.h.b16 %v4051
    %v4677 = vunpack.c.l.b16 %v4052
    %v4678 = vunpack.c.h.b16 %v4052
    %v4679 = vunpack.c.l.b16 %v4053
    %v4680 = vunpack.c.h.b16 %v4053
    %v4681 = vunpack.c.l.b16 %v4054
    %v4682 = vunpack.c.h.b16 %v4054
    %v4683 = vunpack.c.l.b16 %v4055
    %v4684 = vunpack.c.h.b16 %v4055
    %v4685 = vunpack.c.l.b16 %v4056
    %v4686 = vunpack.c.h.b16 %v4056
    %v4687 = vunpack.c.l.b16 %v4057
    %v4688 = vunpack.c.h.b16 %v4057
    %v4689 = vunpack.c.l.b16 %v4058
    %v4690 = vunpack.c.h.b16 %v4058
    %v4691 = vunpack.c.l.b16 %v4059
    %v4692 = vunpack.c.h.b16 %v4059
    %v4693 = vunpack.c.l.b16 %v4060
    %v4694 = vunpack.c.h.b16 %v4060
    %v4695 = vunpack.c.l.b16 %v4061
    %v4696 = vunpack.c.h.b16 %v4061
    %v4697 = vunpack.c.l.b16 %v4062
    %v4698 = vunpack.c.h.b16 %v4062
    %v4699 = vunpack.c.l.b16 %v4063
    %v4700 = vunpack.c.h.b16 %v4063
    %v4701 = vunpack.c.l.b16 %v4064
    %v4702 = vunpack.c.h.b16 %v4064
    %v4703 = vunpack.c.l.b16 %v4065
    %v4704 = vunpack.c.h.b16 %v4065
    %v4705 = vunpack.c.l.b16 %v4066
    %v4706 = vunpack.c.h.b16 %v4066
    %v4707 = vunpack.c.l.b16 %v4067
    %v4708 = vunpack.c.h.b16 %v4067
    %v4709 = vunpack.c.l.b16 %v4068
    %v4710 = vunpack.c.h.b16 %v4068
    %v4711 = vunpack.c.l.b16 %v4069
    %v4712 = vunpack.c.h.b16 %v4069
    %v4713 = vunpack.c.l.b16 %v4070
    %v4714 = vunpack.c.h.b16 %v4070
    %v4715 = vunpack.c.l.b16 %v4071
    %v4716 = vunpack.c.h.b16 %v4071
    %v4717 = vunpack.c.l.b16 %v4072
    %v4718 = vunpack.c.h.b16 %v4072
    %v4719 = vunpack.c.l.b16 %v4073
    %v4720 = vunpack.c.h.b16 %v4073
    %v4721 = vunpack.c.l.b16 %v4074
    %v4722 = vunpack.c.h.b16 %v4074
    %v4723 = vunpack.c.l.b16 %v4075
    %v4724 = vunpack.c.h.b16 %v4075
    %v4725 = vunpack.c.l.b16 %v4076
    %v4726 = vunpack.c.h.b16 %v4076
    %v4727 = vunpack.c.l.b16 %v4077
    %v4728 = vunpack.c.h.b16 %v4077
    %v4729 = vunpack.c.l.b16 %v4078
    %v4730 = vunpack.c.h.b16 %v4078
    %v4731 = vunpack.c.l.b16 %v4079
    %v4732 = vunpack.c.h.b16 %v4079
    %v4733 = vunpack.c.l.b16 %v4080
    %v4734 = vunpack.c.h.b16 %v4080
    %v4735 = vunpack.c.l.b16 %v4081
    %v4736 = vunpack.c.h.b16 %v4081
    %v4737 = vunpack.c.l.b16 %v4082
    %v4738 = vunpack.c.h.b16 %v4082
    %v4739 = vunpack.c.l.b16 %v4083
    %v4740 = vunpack.c.h.b16 %v4083
    %v4741 = vunpack.c.l.b16 %v4084
    %v4742 = vunpack.c.h.b16 %v4084
    %v4743 = vunpack.c.l.b16 %v4085
    %v4744 = vunpack.c.h.b16 %v4085
    %v4745 = vunpack.c.l.b16 %v4086
    %v4746 = vunpack.c.h.b16 %v4086
    %v4747 = vunpack.c.l.b16 %v4087
    %v4748 = vunpack.c.h.b16 %v4087
    %v4749 = vunpack.c.l.b16 %v4088
    %v4750 = vunpack.c.h.b16 %v4088
    %v4751 = vunpack.c.l.b16 %v4089
    %v4752 = vunpack.c.h.b16 %v4089
    %v4753 = vunpack.c.l.b16 %v4090
    %v4754 = vunpack.c.h.b16 %v4090
    %v4755 = vunpack.c.l.b16 %v4091
    %v4756 = vunpack.c.h.b16 %v4091
    %v4757 = vunpack.c.l.b16 %v4092
    %v4758 = vunpack.c.h.b16 %v4092
    %v4759 = vunpack.c.l.b16 %v4093
    %v4760 = vunpack.c.h.b16 %v4093
    %v4761 = vunpack.c.l.b16 %v4094
    %v4762 = vunpack.c.h.b16 %v4094
    %v4763 = vunpack.c.l.b16 %v4095
    %v4764 = vunpack.c.h.b16 %v4095
    %v4765 = vunpack.c.l.b16 %v4096
    %v4766 = vunpack.c.h.b16 %v4096
    %v4767 = vunpack.c.l.b16 %v4097
    %v4768 = vunpack.c.h.b16 %v4097
    %v4769 = vunpack.c.l.b16 %v4098
    %v4770 = vunpack.c.h.b16 %v4098
    %v4771 = vunpack.c.l.b16 %v4099
    %v4772 = vunpack.c.h.b16 %v4099
    %v4773 = vunpack.c.l.b16 %v4100
    %v4774 = vunpack.c.h.b16 %v4100
    %v4775 = vunpack.c.l.b16 %v4101
    %v4776 = vunpack.c.h.b16 %v4101
    %v4777 = vunpack.c.l.b16 %v4102
    %v4778 = vunpack.c.h.b16 %v4102
    %v4779 = vunpack.c.l.b16 %v4103
    %v4780 = vunpack.c.h.b16 %v4103
    %v4781 = vunpack.c.l.b16 %v4104
    %v4782 = vunpack.c.h.b16 %v4104
    %v4783 = vunpack.c.l.b16 %v4105
    %v4784 = vunpack.c.h.b16 %v4105
    %v4785 = vunpack.c.l.b16 %v4106
    %v4786 = vunpack.c.h.b16 %v4106
    %v4787 = vunpack.c.l.b16 %v4107
    %v4788 = vunpack.c.h.b16 %v4107
    %v4789 = vunpack.c.l.b16 %v4108
    %v4790 = vunpack.c.h.b16 %v4108
    %v4791 = vunpack.c.l.b16 %v4109
    %v4792 = vunpack.c.h.b16 %v4109
    %v4793 = vunpack.c.l.b16 %v4110
    %v4794 = vunpack.c.h.b16 %v4110
    %v4795 = vunpack.c.l.b16 %v4111
    %v4796 = vunpack.c.h.b16 %v4111
    %v4797 = vunpack.c.l.b16 %v4112
    %v4798 = vunpack.c.h.b16 %v4112
    %v4799 = vunpack.c.l.b16 %v4113
    %v4800 = vunpack.c.h.b16 %v4113
    %v4801 = vunpack.c.l.b16 %v4114
    %v4802 = vunpack.c.h.b16 %v4114
    %v4803 = vunpack.c.l.b16 %v4115
    %v4804 = vunpack.c.h.b16 %v4115
    %v4805 = vunpack.c.l.b16 %v4116
    %v4806 = vunpack.c.h.b16 %v4116
    %v4807 = vunpack.c.l.b16 %v4117
    %v4808 = vunpack.c.h.b16 %v4117
    %v4809 = vunpack.c.l.b16 %v4118
    %v4810 = vunpack.c.h.b16 %v4118
    %v4811 = vunpack.c.l.b16 %v4119
    %v4812 = vunpack.c.h.b16 %v4119
    %v4813 = vunpack.c.l.b16 %v4120
    %v4814 = vunpack.c.h.b16 %v4120
    %v4815 = vunpack.c.l.b16 %v4121
    %v4816 = vunpack.c.h.b16 %v4121
    %v4817 = vunpack.c.l.b16 %v4122
    %v4818 = vunpack.c.h.b16 %v4122
    %v4819 = vunpack.c.l.b16 %v4123
    %v4820 = vunpack.c.h.b16 %v4123
    %v4821 = vunpack.c.l.b16 %v4124
    %v4822 = vunpack.c.h.b16 %v4124
    %v4823 = vunpack.c.l.b16 %v4125
    %v4824 = vunpack.c.h.b16 %v4125
    %v4825 = vunpack.c.l.b16 %v4126
    %v4826 = vunpack.c.h.b16 %v4126
    %v4827 = vunpack.c.l.b16 %v4127
    %v4828 = vunpack.c.h.b16 %v4127
    %v4829 = vunpack.c.l.b16 %v4128
    %v4830 = vunpack.c.h.b16 %v4128
    %v4831 = vunpack.c.l.b16 %v4129
    %v4832 = vunpack.c.h.b16 %v4129
    %v4833 = vunpack.c.l.b16 %v4130
    %v4834 = vunpack.c.h.b16 %v4130
    %v4835 = vunpack.c.l.b16 %v4131
    %v4836 = vunpack.c.h.b16 %v4131
    %v4837 = vunpack.c.l.b16 %v4132
    %v4838 = vunpack.c.h.b16 %v4132
    %v4839 = vunpack.c.l.b16 %v4133
    %v4840 = vunpack.c.h.b16 %v4133
    %v4841 = vunpack.c.l.b16 %v4134
    %v4842 = vunpack.c.h.b16 %v4134
    %v4843 = vunpack.c.l.b16 %v4135
    %v4844 = vunpack.c.h.b16 %v4135
    %v4845 = vunpack.c.l.b16 %v4136
    %v4846 = vunpack.c.h.b16 %v4136
    %v4847 = vunpack.c.l.b16 %v4137
    %v4848 = vunpack.c.h.b16 %v4137
    %v4849 = vunpack.c.l.b16 %v4138
    %v4850 = vunpack.c.h.b16 %v4138
    %v4851 = vunpack.c.l.b16 %v4139
    %v4852 = vunpack.c.h.b16 %v4139
    %v4853 = vunpack.c.l.b16 %v4140
    %v4854 = vunpack.c.h.b16 %v4140
    %v4855 = vunpack.c.l.b16 %v4141
    %v4856 = vunpack.c.h.b16 %v4141
    %v4857 = vunpack.c.l.b16 %v4142
    %v4858 = vunpack.c.h.b16 %v4142
    %v4859 = vunpack.c.l.b16 %v4143
    %v4860 = vunpack.c.h.b16 %v4143
    %v4861 = vunpack.c.l.b16 %v4144
    %v4862 = vunpack.c.h.b16 %v4144
    %v4863 = vunpack.c.l.b16 %v4145
    %v4864 = vunpack.c.h.b16 %v4145
    %v4865 = vunpack.c.l.b16 %v4146
    %v4866 = vunpack.c.h.b16 %v4146
    %v4867 = vunpack.c.l.b16 %v4147
    %v4868 = vunpack.c.h.b16 %v4147
    %v4869 = vunpack.c.l.b16 %v4148
    %v4870 = vunpack.c.h.b16 %v4148
    %v4871 = vunpack.c.l.b16 %v4149
    %v4872 = vunpack.c.h.b16 %v4149
    %v4873 = vunpack.c.l.b16 %v4150
    %v4874 = vunpack.c.h.b16 %v4150
    %v4875 = vunpack.c.l.b16 %v4151
    %v4876 = vunpack.c.h.b16 %v4151
    %v4877 = vunpack.c.l.b16 %v4152
    %v4878 = vunpack.c.h.b16 %v4152
    %v4879 = vunpack.c.l.b16 %v4153
    %v4880 = vunpack.c.h.b16 %v4153
    %v4881 = vunpack.c.l.b16 %v4154
    %v4882 = vunpack.c.h.b16 %v4154
    %v4883 = vunpack.c.l.b16 %v4155
    %v4884 = vunpack.c.h.b16 %v4155
    %v4885 = vunpack.c.l.b16 %v4156
    %v4886 = vunpack.c.h.b16 %v4156
    %v4887 = vunpack.c.l.b16 %v4157
    %v4888 = vunpack.c.h.b16 %v4157
    %v4889 = vunpack.c.l.b16 %v4158
    %v4890 = vunpack.c.h.b16 %v4158
    %v4891 = vunpack.c.l.b16 %v4159
    %v4892 = vunpack.c.h.b16 %v4159
    %v4893 = vunpack.c.l.b16 %v4160
    %v4894 = vunpack.c.h.b16 %v4160
    %v4895 = vunpack.c.l.b16 %v4161
    %v4896 = vunpack.c.h.b16 %v4161
    %v4897 = vunpack.c.l.b16 %v4162
    %v4898 = vunpack.c.h.b16 %v4162
    %v4899 = vunpack.c.l.b16 %v4163
    %v4900 = vunpack.c.h.b16 %v4163
    %v4901 = vunpack.c.l.b16 %v4164
    %v4902 = vunpack.c.h.b16 %v4164
    %v4903 = vunpack.c.l.b16 %v4165
    %v4904 = vunpack.c.h.b16 %v4165
    %v4905 = vunpack.c.l.b16 %v4166
    %v4906 = vunpack.c.h.b16 %v4166
    %v4907 = vunpack.c.l.b16 %v4167
    %v4908 = vunpack.c.h.b16 %v4167
    %v4909 = vunpack.c.l.b16 %v4168
    %v4910 = vunpack.c.h.b16 %v4168
    %v4911 = vpack.c.b16 %v4441, %v4431
    %v4912 = vpack.c.b16 %v4442, %v4432
    %v4913 = vpack.c.b16 %v4443, %v4433
    %v4914 = vpack.c.b16 %v4444, %v4434
    %v4915 = vpack.c.b16 %v4445, %v4435
    %v4916 = vpack.c.b16 %v4446, %v4436
    %v4917 = vpack.c.b16 %v4447, %v4437
    %v4918 = vpack.c.b16 %v4448, %v4438
    %v4919 = vpack.c.b16 %v4449, %v4439
    %v4920 = vpack.c.b16 %v4450, %v4440
    %v4921 = vpack.c.b16 %v4461, %v4451
    %v4922 = vpack.c.b16 %v4462, %v4452
    %v4923 = vpack.c.b16 %v4463, %v4453
    %v4924 = vpack.c.b16 %v4464, %v4454
    %v4925 = vpack.c.b16 %v4465, %v4455
    %v4926 = vpack.c.b16 %v4466, %v4456
    %v4927 = vpack.c.b16 %v4467, %v4457
    %v4928 = vpack.c.b16 %v4468, %v4458
    %v4929 = vpack.c.b16 %v4469, %v4459
    %v4930 = vpack.c.b16 %v4470, %v4460
    %v4931 = vpack.c.b16 %v4481, %v4471
    %v4932 = vpack.c.b16 %v4482, %v4472
    %v4933 = vpack.c.b16 %v4483, %v4473
    %v4934 = vpack.c.b16 %v4484, %v4474
    %v4935 = vpack.c.b16 %v4485, %v4475
    %v4936 = vpack.c.b16 %v4486, %v4476
    %v4937 = vpack.c.b16 %v4487, %v4477
    %v4938 = vpack.c.b16 %v4488, %v4478
    %v4939 = vpack.c.b16 %v4489, %v4479
    %v4940 = vpack.c.b16 %v4490, %v4480
    %v4941 = vpack.c.b16 %v4501, %v4491
    %v4942 = vpack.c.b16 %v4502, %v4492
    %v4943 = vpack.c.b16 %v4503, %v4493
    %v4944 = vpack.c.b16 %v4504, %v4494
    %v4945 = vpack.c.b16 %v4505, %v4495
    %v4946 = vpack.c.b16 %v4506, %v4496
    %v4947 = vpack.c.b16 %v4507, %v4497
    %v4948 = vpack.c.b16 %v4508, %v4498
    %v4949 = vpack.c.b16 %v4509, %v4499
    %v4950 = vpack.c.b16 %v4510, %v4500
    %v4951 = vpack.c.b16 %v4521, %v4511
    %v4952 = vpack.c.b16 %v4522, %v4512
    %v4953 = vpack.c.b16 %v4523, %v4513
    %v4954 = vpack.c.b16 %v4524, %v4514
    %v4955 = vpack.c.b16 %v4525, %v4515
    %v4956 = vpack.c.b16 %v4526, %v4516
    %v4957 = vpack.c.b16 %v4527, %v4517
    %v4958 = vpack.c.b16 %v4528, %v4518
    %v4959 = vpack.c.b16 %v4529, %v4519
    %v4960 = vpack.c.b16 %v4530, %v4520
    %v4961 = vpack.c.b16 %v4541, %v4531
    %v4962 = vpack.c.b16 %v4542, %v4532
    %v4963 = vpack.c.b16 %v4543, %v4533
    %v4964 = vpack.c.b16 %v4544, %v4534
    %v4965 = vpack.c.b16 %v4545, %v4535
    %v4966 = vpack.c.b16 %v4546, %v4536
    %v4967 = vpack.c.b16 %v4547, %v4537
    %v4968 = vpack.c.b16 %v4548, %v4538
    %v4969 = vpack.c.b16 %v4549, %v4539
    %v4970 = vpack.c.b16 %v4550, %v4540
    %v4971 = vpack.c.b16 %v4561, %v4551
    %v4972 = vpack.c.b16 %v4562, %v4552
    %v4973 = vpack.c.b16 %v4563, %v4553
    %v4974 = vpack.c.b16 %v4564, %v4554
    %v4975 = vpack.c.b16 %v4565, %v4555
    %v4976 = vpack.c.b16 %v4566, %v4556
    %v4977 = vpack.c.b16 %v4567, %v4557
    %v4978 = vpack.c.b16 %v4568, %v4558
    %v4979 = vpack.c.b16 %v4569, %v4559
    %v4980 = vpack.c.b16 %v4570, %v4560
    %v4981 = vpack.c.b16 %v4581, %v4571
    %v4982 = vpack.c.b16 %v4582, %v4572
    %v4983 = vpack.c.b16 %v4583, %v4573
    %v4984 = vpack.c.b16 %v4584, %v4574
    %v4985 = vpack.c.b16 %v4585, %v4575
    %v4986 = vpack.c.b16 %v4586, %v4576
    %v4987 = vpack.c.b16 %v4587, %v4577
    %v4988 = vpack.c.b16 %v4588, %v4578
    %v4989 = vpack.c.b16 %v4589, %v4579
    %v4990 = vpack.c.b16 %v4590, %v4580
    %v4991 = vpack.c.b16 %v4601, %v4591
    %v4992 = vpack.c.b16 %v4602, %v4592
    %v4993 = vpack.c.b16 %v4603, %v4593
    %v4994 = vpack.c.b16 %v4604, %v4594
    %v4995 = vpack.c.b16 %v4605, %v4595
    %v4996 = vpack.c.b16 %v4606, %v4596
    %v4997 = vpack.c.b16 %v4607, %v4597
    %v4998 = vpack.c.b16 %v4608, %v4598
    %v4999 = vpack.c.b16 %v4609, %v4599
    %v5000 = vpack.c.b16 %v4610, %v4600
    %v5001 = vpack.c.b16 %v4621, %v4611
    %v5002 = vpack.c.b16 %v4622, %v4612
    %v5003 = vpack.c.b16 %v4623, %v4613
    %v5004 = vpack.c.b16 %v4624, %v4614
    %v5005 = vpack.c.b16 %v4625, %v4615
    %v5006 = vpack.c.b16 %v4626, %v4616
    %v5007 = vpack.c.b16 %v4627, %v4617
    %v5008 = vpack.c.b16 %v4628, %v4618
    %v5009 = vpack.c.b16 %v4629, %v4619
    %v5010 = vpack.c.b16 %v4630, %v4620
    %v5011 = vpack.c.b16 %v4641, %v4631
    %v5012 = vpack.c.b16 %v4642, %v4632
    %v5013 = vpack.c.b16 %v4643, %v4633
    %v5014 = vpack.c.b16 %v4644, %v4634
    %v5015 = vpack.c.b16 %v4645, %v4635
    %v5016 = vpack.c.b16 %v4646, %v4636
    %v5017 = vpack.c.b16 %v4647, %v4637
    %v5018 = vpack.c.b16 %v4648, %v4638
    %v5019 = vpack.c.b16 %v4649, %v4639
    %v5020 = vpack.c.b16 %v4650, %v4640
    %v5021 = vpack.c.b16 %v4661, %v4651
    %v5022 = vpack.c.b16 %v4662, %v4652
    %v5023 = vpack.c.b16 %v4663, %v4653
    %v5024 = vpack.c.b16 %v4664, %v4654
    %v5025 = vpack.c.b16 %v4665, %v4655
    %v5026 = vpack.c.b16 %v4666, %v4656
    %v5027 = vpack.c.b16 %v4667, %v4657
    %v5028 = vpack.c.b16 %v4668, %v4658
    %v5029 = vpack.c.b16 %v4669, %v4659
    %v5030 = vpack.c.b16 %v4670, %v4660
    %v5031 = vpack.c.b16 %v4681, %v4671
    %v5032 = vpack.c.b16 %v4682, %v4672
    %v5033 = vpack.c.b16 %v4683, %v4673
    %v5034 = vpack.c.b16 %v4684, %v4674
    %v5035 = vpack.c.b16 %v4685, %v4675
    %v5036 = vpack.c.b16 %v4686, %v4676
    %v5037 = vpack.c.b16 %v4687, %v4677
    %v5038 = vpack.c.b16 %v4688, %v4678
    %v5039 = vpack.c.b16 %v4689, %v4679
    %v5040 = vpack.c.b16 %v4690, %v4680
    %v5041 = vpack.c.b16 %v4701, %v4691
    %v5042 = vpack.c.b16 %v4702, %v4692
    %v5043 = vpack.c.b16 %v4703, %v4693
    %v5044 = vpack.c.b16 %v4704, %v4694
    %v5045 = vpack.c.b16 %v4705, %v4695
    %v5046 = vpack.c.b16 %v4706, %v4696
    %v5047 = vpack.c.b16 %v4707, %v4697
    %v5048 = vpack.c.b16 %v4708, %v4698
    %v5049 = vpack.c.b16 %v4709, %v4699
    %v5050 = vpack.c.b16 %v4710, %v4700
    %v5051 = vpack.c.b16 %v4721, %v4711
    %v5052 = vpack.c.b16 %v4722, %v4712
    %v5053 = vpack.c.b16 %v4723, %v4713
    %v5054 = vpack.c.b16 %v4724, %v4714
    %v5055 = vpack.c.b16 %v4725, %v4715
    %v5056 = vpack.c.b16 %v4726, %v4716
    %v5057 = vpack.c.b16 %v4727, %v4717
    %v5058 = vpack.c.b16 %v4728, %v4718
    %v5059 = vpack.c.b16 %v4729, %v4719
    %v5060 = vpack.c.b16 %v4730, %v4720
    %v5061 = vpack.c.b16 %v4741, %v4731
    %v5062 = vpack.c.b16 %v4742, %v4732
    %v5063 = vpack.c.b16 %v4743, %v4733
    %v5064 = vpack.c.b16 %v4744, %v4734
    %v5065 = vpack.c.b16 %v4745, %v4735
    %v5066 = vpack.c.b16 %v4746, %v4736
    %v5067 = vpack.c.b16 %v4747, %v4737
    %v5068 = vpack.c.b16 %v4748, %v4738
    %v5069 = vpack.c.b16 %v4749, %v4739
    %v5070 = vpack.c.b16 %v4750, %v4740
    %v5071 = vpack.c.b16 %v4761, %v4751
    %v5072 = vpack.c.b16 %v4762, %v4752
    %v5073 = vpack.c.b16 %v4763, %v4753
    %v5074 = vpack.c.b16 %v4764, %v4754
    %v5075 = vpack.c.b16 %v4765, %v4755
    %v5076 = vpack.c.b16 %v4766, %v4756
    %v5077 = vpack.c.b16 %v4767, %v4757
    %v5078 = vpack.c.b16 %v4768, %v4758
    %v5079 = vpack.c.b16 %v4769, %v4759
    %v5080 = vpack.c.b16 %v4770, %v4760
    %v5081 = vpack.c.b16 %v4781, %v4771
    %v5082 = vpack.c.b16 %v4782, %v4772
    %v5083 = vpack.c.b16 %v4783, %v4773
    %v5084 = vpack.c.b16 %v4784, %v4774
    %v5085 = vpack.c.b16 %v4785, %v4775
    %v5086 = vpack.c.b16 %v4786, %v4776
    %v5087 = vpack.c.b16 %v4787, %v4777
    %v5088 = vpack.c.b16 %v4788, %v4778
    %v5089 = vpack.c.b16 %v4789, %v4779
    %v5090 = vpack.c.b16 %v4790, %v4780
    %v5091 = vpack.c.b16 %v4801, %v4791
    %v5092 = vpack.c.b16 %v4802, %v4792
    %v5093 = vpack.c.b16 %v4803, %v4793
    %v5094 = vpack.c.b16 %v4804, %v4794
    %v5095 = vpack.c.b16 %v4805, %v4795
    %v5096 = vpack.c.b16 %v4806, %v4796
    %v5097 = vpack.c.b16 %v4807, %v4797
    %v5098 = vpack.c.b16 %v4808, %v4798
    %v5099 = vpack.c.b16 %v4809, %v4799
    %v5100 = vpack.c.b16 %v4810, %v4800
    %v5101 = vpack.c.b16 %v4821, %v4811
    %v5102 = vpack.c.b16 %v4822, %v4812
    %v5103 = vpack.c.b16 %v4823, %v4813
    %v5104 = vpack.c.b16 %v4824, %v4814
    %v5105 = vpack.c.b16 %v4825, %v4815
    %v5106 = vpack.c.b16 %v4826, %v4816
    %v5107 = vpack.c.b16 %v4827, %v4817
    %v5108 = vpack.c.b16 %v4828, %v4818
    %v5109 = vpack.c.b16 %v4829, %v4819
    %v5110 = vpack.c.b16 %v4830, %v4820
    %v5111 = vpack.c.b16 %v4841, %v4831
    %v5112 = vpack.c.b16 %v4842, %v4832
    %v5113 = vpack.c.b16 %v4843, %v4833
    %v5114 = vpack.c.b16 %v4844, %v4834
    %v5115 = vpack.c.b16 %v4845, %v4835
    %v5116 = vpack.c.b16 %v4846, %v4836
    %v5117 = vpack.c.b16 %v4847, %v4837
    %v5118 = vpack.c.b16 %v4848, %v4838
    %v5119 = vpack.c.b16 %v4849, %v4839
    %v5120 = vpack.c.b16 %v4850, %v4840
    %v5121 = vpack.c.b16 %v4861, %v4851
    %v5122 = vpack.c.b16 %v4862, %v4852
    %v5123 = vpack.c.b16 %v4863, %v4853
    %v5124 = vpack.c.b16 %v4864, %v4854
    %v5125 = vpack.c.b16 %v4865, %v4855
    %v5126 = vpack.c.b16 %v4866, %v4856
    %v5127 = vpack.c.b16 %v4867, %v4857
    %v5128 = vpack.c.b16 %v4868, %v4858
    %v5129 = vpack.c.b16 %v4869, %v4859
    %v5130 = vpack.c.b16 %v4870, %v4860
    %v5131 = vpack.c.b16 %v4881, %v4871
    %v5132 = vpack.c.b16 %v4882, %v4872
    %v5133 = vpack.c.b16 %v4883, %v4873
    %v5134 = vpack.c.b16 %v4884, %v4874
    %v5135 = vpack.c.b16 %v4885, %v4875
    %v5136 = vpack.c.b16 %v4886, %v4876
    %v5137 = vpack.c.b16 %v4887, %v4877
    %v5138 = vpack.c.b16 %v4888, %v4878
    %v5139 = vpack.c.b16 %v4889, %v4879
    %v5140 = vpack.c.b16 %v4890, %v4880
    %v5141 = vpack.c.b16 %v4901, %v4891
    %v5142 = vpack.c.b16 %v4902, %v4892
    %v5143 = vpack.c.b16 %v4903, %v4893
    %v5144 = vpack.c.b16 %v4904, %v4894
    %v5145 = vpack.c.b16 %v4905, %v4895
    %v5146 = vpack.c.b16 %v4906, %v4896
    %v5147 = vpack.c.b16 %v4907, %v4897
    %v5148 = vpack.c.b16 %v4908, %v4898
    %v5149 = vpack.c.b16 %v4909, %v4899
    %v5150 = vpack.c.b16 %v4910, %v4900
    %5391 = vmatpush.bf16.msra.mxu0 %v4981
    %5392 = vmatpush.bf16.msra.mxu0 %v4971
    %5393 = vmatpush.bf16.msra.mxu0 %v4961
    %5394 = vmatpush.bf16.msra.mxu0 %v4951
    %5395 = vmatpush.bf16.msra.mxu0 %v4941
    %5396 = vmatpush.bf16.msra.mxu0 %v4931
    %5397 = vmatpush.bf16.msra.mxu0 %v4921
    %5398 = vmatpush.bf16.msra.mxu0 %v4911
    %5399 = vmatmul.bf16.gmra.mxu0 %v3926
    %v5400 = vpop.f32.mrf.mxu0
    %v5401 = vadd.f32 %v4171, %v5400
    %v5402 = vpop.f32.mrf.mxu0
    %v5403 = vadd.f32 %v4171, %v5402
    %5404 = vdwg.mxu0
    %5405 = vmatpush.bf16.msra.mxu0 %v5061
    %5406 = vmatpush.bf16.msra.mxu0 %v5051
    %5407 = vmatpush.bf16.msra.mxu0 %v5041
    %5408 = vmatpush.bf16.msra.mxu0 %v5031
    %5409 = vmatpush.bf16.msra.mxu0 %v5021
    %5410 = vmatpush.bf16.msra.mxu0 %v5011
    %5411 = vmatpush.bf16.msra.mxu0 %v5001
    %5412 = vmatpush.bf16.msra.mxu0 %v4991
    %5413 = vmatmul.bf16.gmra.mxu0 %v3927
    %v5414 = vpop.f32.mrf.mxu0
    %v5415 = vadd.f32 %v5401, %v5414
    %v5416 = vpop.f32.mrf.mxu0
    %v5417 = vadd.f32 %v5403, %v5416
    %5418 = vdwg.mxu0
    %5419 = vmatpush.bf16.msra.mxu0 %v5141
    %5420 = vmatpush.bf16.msra.mxu0 %v5131
    %5421 = vmatpush.bf16.msra.mxu0 %v5121
    %5422 = vmatpush.bf16.msra.mxu0 %v5111
    %5423 = vmatpush.bf16.msra.mxu0 %v5101
    %5424 = vmatpush.bf16.msra.mxu0 %v5091
    %5425 = vmatpush.bf16.msra.mxu0 %v5081
    %5426 = vmatpush.bf16.msra.mxu0 %v5071
    %5427 = vmatmul.bf16.gmra.mxu0 %v3928
    %v5428 = vpop.f32.mrf.mxu0
    %v5429 = vadd.f32 %v5415, %v5428
    %v5430 = vpop.f32.mrf.mxu0
    %v5431 = vadd.f32 %v5417, %v5430
    %5432 = vdwg.mxu0
    %5433 = vmatpush.bf16.msra.mxu0 %v4982
    %5434 = vmatpush.bf16.msra.mxu0 %v4972
    %5435 = vmatpush.bf16.msra.mxu0 %v4962
    %5436 = vmatpush.bf16.msra.mxu0 %v4952
    %5437 = vmatpush.bf16.msra.mxu0 %v4942
    %5438 = vmatpush.bf16.msra.mxu0 %v4932
    %5439 = vmatpush.bf16.msra.mxu0 %v4922
    %5440 = vmatpush.bf16.msra.mxu0 %v4912
    %5441 = vmatmul.bf16.gmra.mxu0 %v3926
    %v5442 = vpop.f32.mrf.mxu0
    %v5443 = vadd.f32 %v4172, %v5442
    %v5444 = vpop.f32.mrf.mxu0
    %v5445 = vadd.f32 %v4172, %v5444
    %5446 = vdwg.mxu0
    %5447 = vmatpush.bf16.msra.mxu0 %v5062
    %5448 = vmatpush.bf16.msra.mxu0 %v5052
    %5449 = vmatpush.bf16.msra.mxu0 %v5042
    %5450 = vmatpush.bf16.msra.mxu0 %v5032
    %5451 = vmatpush.bf16.msra.mxu0 %v5022
    %5452 = vmatpush.bf16.msra.mxu0 %v5012
    %5453 = vmatpush.bf16.msra.mxu0 %v5002
    %5454 = vmatpush.bf16.msra.mxu0 %v4992
    %5455 = vmatmul.bf16.gmra.mxu0 %v3927
    %v5456 = vpop.f32.mrf.mxu0
    %v5457 = vadd.f32 %v5443, %v5456
    %v5458 = vpop.f32.mrf.mxu0
    %v5459 = vadd.f32 %v5445, %v5458
    %5460 = vdwg.mxu0
    %5461 = vmatpush.bf16.msra.mxu0 %v5142
    %5462 = vmatpush.bf16.msra.mxu0 %v5132
    %5463 = vmatpush.bf16.msra.mxu0 %v5122
    %5464 = vmatpush.bf16.msra.mxu0 %v5112
    %5465 = vmatpush.bf16.msra.mxu0 %v5102
    %5466 = vmatpush.bf16.msra.mxu0 %v5092
    %5467 = vmatpush.bf16.msra.mxu0 %v5082
    %5468 = vmatpush.bf16.msra.mxu0 %v5072
    %5469 = vmatmul.bf16.gmra.mxu0 %v3928
    %v5470 = vpop.f32.mrf.mxu0
    %v5471 = vadd.f32 %v5457, %v5470
    %v5472 = vpop.f32.mrf.mxu0
    %v5473 = vadd.f32 %v5459, %v5472
    %5474 = vdwg.mxu0
    %5475 = vmatpush.bf16.msra.mxu0 %v4983
    %5476 = vmatpush.bf16.msra.mxu0 %v4973
    %5477 = vmatpush.bf16.msra.mxu0 %v4963
    %5478 = vmatpush.bf16.msra.mxu0 %v4953
    %5479 = vmatpush.bf16.msra.mxu0 %v4943
    %5480 = vmatpush.bf16.msra.mxu0 %v4933
    %5481 = vmatpush.bf16.msra.mxu0 %v4923
    %5482 = vmatpush.bf16.msra.mxu0 %v4913
    %5483 = vmatmul.bf16.gmra.mxu0 %v3926
    %v5484 = vpop.f32.mrf.mxu0
    %v5485 = vadd.f32 %v4173, %v5484
    %v5486 = vpop.f32.mrf.mxu0
    %v5487 = vadd.f32 %v4173, %v5486
    %5488 = vdwg.mxu0
    %5489 = vmatpush.bf16.msra.mxu0 %v5063
    %5490 = vmatpush.bf16.msra.mxu0 %v5053
    %5491 = vmatpush.bf16.msra.mxu0 %v5043
    %5492 = vmatpush.bf16.msra.mxu0 %v5033
    %5493 = vmatpush.bf16.msra.mxu0 %v5023
    %5494 = vmatpush.bf16.msra.mxu0 %v5013
    %5495 = vmatpush.bf16.msra.mxu0 %v5003
    %5496 = vmatpush.bf16.msra.mxu0 %v4993
    %5497 = vmatmul.bf16.gmra.mxu0 %v3927
    %v5498 = vpop.f32.mrf.mxu0
    %v5499 = vadd.f32 %v5485, %v5498
    %v5500 = vpop.f32.mrf.mxu0
    %v5501 = vadd.f32 %v5487, %v5500
    %5502 = vdwg.mxu0
    %5503 = vmatpush.bf16.msra.mxu0 %v5143
    %5504 = vmatpush.bf16.msra.mxu0 %v5133
    %5505 = vmatpush.bf16.msra.mxu0 %v5123
    %5506 = vmatpush.bf16.msra.mxu0 %v5113
    %5507 = vmatpush.bf16.msra.mxu0 %v5103
    %5508 = vmatpush.bf16.msra.mxu0 %v5093
    %5509 = vmatpush.bf16.msra.mxu0 %v5083
    %5510 = vmatpush.bf16.msra.mxu0 %v5073
    %5511 = vmatmul.bf16.gmra.mxu0 %v3928
    %v5512 = vpop.f32.mrf.mxu0
    %v5513 = vadd.f32 %v5499, %v5512
    %v5514 = vpop.f32.mrf.mxu0
    %v5515 = vadd.f32 %v5501, %v5514
    %5516 = vdwg.mxu0
    %5517 = vmatpush.bf16.msra.mxu0 %v4984
    %5518 = vmatpush.bf16.msra.mxu0 %v4974
    %5519 = vmatpush.bf16.msra.mxu0 %v4964
    %5520 = vmatpush.bf16.msra.mxu0 %v4954
    %5521 = vmatpush.bf16.msra.mxu0 %v4944
    %5522 = vmatpush.bf16.msra.mxu0 %v4934
    %5523 = vmatpush.bf16.msra.mxu0 %v4924
    %5524 = vmatpush.bf16.msra.mxu0 %v4914
    %5525 = vmatmul.bf16.gmra.mxu0 %v3926
    %v5526 = vpop.f32.mrf.mxu0
    %v5527 = vadd.f32 %v4174, %v5526
    %v5528 = vpop.f32.mrf.mxu0
    %v5529 = vadd.f32 %v4174, %v5528
    %5530 = vdwg.mxu0
    %5531 = vmatpush.bf16.msra.mxu0 %v5064
    %5532 = vmatpush.bf16.msra.mxu0 %v5054
    %5533 = vmatpush.bf16.msra.mxu0 %v5044
    %5534 = vmatpush.bf16.msra.mxu0 %v5034
    %5535 = vmatpush.bf16.msra.mxu0 %v5024
    %5536 = vmatpush.bf16.msra.mxu0 %v5014
    %5537 = vmatpush.bf16.msra.mxu0 %v5004
    %5538 = vmatpush.bf16.msra.mxu0 %v4994
    %5539 = vmatmul.bf16.gmra.mxu0 %v3927
    %v5540 = vpop.f32.mrf.mxu0
    %v5541 = vadd.f32 %v5527, %v5540
    %v5542 = vpop.f32.mrf.mxu0
    %v5543 = vadd.f32 %v5529, %v5542
    %5544 = vdwg.mxu0
    %5545 = vmatpush.bf16.msra.mxu0 %v5144
    %5546 = vmatpush.bf16.msra.mxu0 %v5134
    %5547 = vmatpush.bf16.msra.mxu0 %v5124
    %5548 = vmatpush.bf16.msra.mxu0 %v5114
    %5549 = vmatpush.bf16.msra.mxu0 %v5104
    %5550 = vmatpush.bf16.msra.mxu0 %v5094
    %5551 = vmatpush.bf16.msra.mxu0 %v5084
    %5552 = vmatpush.bf16.msra.mxu0 %v5074
    %5553 = vmatmul.bf16.gmra.mxu0 %v3928
    %v5554 = vpop.f32.mrf.mxu0
    %v5555 = vadd.f32 %v5541, %v5554
    %v5556 = vpop.f32.mrf.mxu0
    %v5557 = vadd.f32 %v5543, %v5556
    %5558 = vdwg.mxu0
    %5559 = vmatpush.bf16.msra.mxu0 %v4985
    %5560 = vmatpush.bf16.msra.mxu0 %v4975
    %5561 = vmatpush.bf16.msra.mxu0 %v4965
    %5562 = vmatpush.bf16.msra.mxu0 %v4955
    %5563 = vmatpush.bf16.msra.mxu0 %v4945
    %5564 = vmatpush.bf16.msra.mxu0 %v4935
    %5565 = vmatpush.bf16.msra.mxu0 %v4925
    %5566 = vmatpush.bf16.msra.mxu0 %v4915
    %5567 = vmatmul.bf16.gmra.mxu0 %v3926
    %v5568 = vpop.f32.mrf.mxu0
    %v5569 = vadd.f32 %v4175, %v5568
    %v5570 = vpop.f32.mrf.mxu0
    %v5571 = vadd.f32 %v4175, %v5570
    %5572 = vdwg.mxu0
    %5573 = vmatpush.bf16.msra.mxu0 %v5065
    %5574 = vmatpush.bf16.msra.mxu0 %v5055
    %5575 = vmatpush.bf16.msra.mxu0 %v5045
    %5576 = vmatpush.bf16.msra.mxu0 %v5035
    %5577 = vmatpush.bf16.msra.mxu0 %v5025
    %5578 = vmatpush.bf16.msra.mxu0 %v5015
    %5579 = vmatpush.bf16.msra.mxu0 %v5005
    %5580 = vmatpush.bf16.msra.mxu0 %v4995
    %5581 = vmatmul.bf16.gmra.mxu0 %v3927
    %v5582 = vpop.f32.mrf.mxu0
    %v5583 = vadd.f32 %v5569, %v5582
    %v5584 = vpop.f32.mrf.mxu0
    %v5585 = vadd.f32 %v5571, %v5584
    %5586 = vdwg.mxu0
    %5587 = vmatpush.bf16.msra.mxu0 %v5145
    %5588 = vmatpush.bf16.msra.mxu0 %v5135
    %5589 = vmatpush.bf16.msra.mxu0 %v5125
    %5590 = vmatpush.bf16.msra.mxu0 %v5115
    %5591 = vmatpush.bf16.msra.mxu0 %v5105
    %5592 = vmatpush.bf16.msra.mxu0 %v5095
    %5593 = vmatpush.bf16.msra.mxu0 %v5085
    %5594 = vmatpush.bf16.msra.mxu0 %v5075
    %5595 = vmatmul.bf16.gmra.mxu0 %v3928
    %v5596 = vpop.f32.mrf.mxu0
    %v5597 = vadd.f32 %v5583, %v5596
    %v5598 = vpop.f32.mrf.mxu0
    %v5599 = vadd.f32 %v5585, %v5598
    %5600 = vdwg.mxu0
    %5601 = vmatpush.bf16.msra.mxu0 %v4986
    %5602 = vmatpush.bf16.msra.mxu0 %v4976
    %5603 = vmatpush.bf16.msra.mxu0 %v4966
    %5604 = vmatpush.bf16.msra.mxu0 %v4956
    %5605 = vmatpush.bf16.msra.mxu0 %v4946
    %5606 = vmatpush.bf16.msra.mxu0 %v4936
    %5607 = vmatpush.bf16.msra.mxu0 %v4926
    %5608 = vmatpush.bf16.msra.mxu0 %v4916
    %5609 = vmatmul.bf16.gmra.mxu0 %v3926
    %v5610 = vpop.f32.mrf.mxu0
    %v5611 = vadd.f32 %v4176, %v5610
    %v5612 = vpop.f32.mrf.mxu0
    %v5613 = vadd.f32 %v4176, %v5612
    %5614 = vdwg.mxu0
    %5615 = vmatpush.bf16.msra.mxu0 %v5066
    %5616 = vmatpush.bf16.msra.mxu0 %v5056
    %5617 = vmatpush.bf16.msra.mxu0 %v5046
    %5618 = vmatpush.bf16.msra.mxu0 %v5036
    %5619 = vmatpush.bf16.msra.mxu0 %v5026
    %5620 = vmatpush.bf16.msra.mxu0 %v5016
    %5621 = vmatpush.bf16.msra.mxu0 %v5006
    %5622 = vmatpush.bf16.msra.mxu0 %v4996
    %5623 = vmatmul.bf16.gmra.mxu0 %v3927
    %v5624 = vpop.f32.mrf.mxu0
    %v5625 = vadd.f32 %v5611, %v5624
    %v5626 = vpop.f32.mrf.mxu0
    %v5627 = vadd.f32 %v5613, %v5626
    %5628 = vdwg.mxu0
    %5629 = vmatpush.bf16.msra.mxu0 %v5146
    %5630 = vmatpush.bf16.msra.mxu0 %v5136
    %5631 = vmatpush.bf16.msra.mxu0 %v5126
    %5632 = vmatpush.bf16.msra.mxu0 %v5116
    %5633 = vmatpush.bf16.msra.mxu0 %v5106
    %5634 = vmatpush.bf16.msra.mxu0 %v5096
    %5635 = vmatpush.bf16.msra.mxu0 %v5086
    %5636 = vmatpush.bf16.msra.mxu0 %v5076
    %5637 = vmatmul.bf16.gmra.mxu0 %v3928
    %v5638 = vpop.f32.mrf.mxu0
    %v5639 = vadd.f32 %v5625, %v5638
    %v5640 = vpop.f32.mrf.mxu0
    %v5641 = vadd.f32 %v5627, %v5640
    %5642 = vdwg.mxu0
    %5643 = vmatpush.bf16.msra.mxu0 %v4987
    %5644 = vmatpush.bf16.msra.mxu0 %v4977
    %5645 = vmatpush.bf16.msra.mxu0 %v4967
    %5646 = vmatpush.bf16.msra.mxu0 %v4957
    %5647 = vmatpush.bf16.msra.mxu0 %v4947
    %5648 = vmatpush.bf16.msra.mxu0 %v4937
    %5649 = vmatpush.bf16.msra.mxu0 %v4927
    %5650 = vmatpush.bf16.msra.mxu0 %v4917
    %5651 = vmatmul.bf16.gmra.mxu0 %v3926
    %v5652 = vpop.f32.mrf.mxu0
    %v5653 = vadd.f32 %v4177, %v5652
    %v5654 = vpop.f32.mrf.mxu0
    %v5655 = vadd.f32 %v4177, %v5654
    %5656 = vdwg.mxu0
    %5657 = vmatpush.bf16.msra.mxu0 %v5067
    %5658 = vmatpush.bf16.msra.mxu0 %v5057
    %5659 = vmatpush.bf16.msra.mxu0 %v5047
    %5660 = vmatpush.bf16.msra.mxu0 %v5037
    %5661 = vmatpush.bf16.msra.mxu0 %v5027
    %5662 = vmatpush.bf16.msra.mxu0 %v5017
    %5663 = vmatpush.bf16.msra.mxu0 %v5007
    %5664 = vmatpush.bf16.msra.mxu0 %v4997
    %5665 = vmatmul.bf16.gmra.mxu0 %v3927
    %v5666 = vpop.f32.mrf.mxu0
    %v5667 = vadd.f32 %v5653, %v5666
    %v5668 = vpop.f32.mrf.mxu0
    %v5669 = vadd.f32 %v5655, %v5668
    %5670 = vdwg.mxu0
    %5671 = vmatpush.bf16.msra.mxu0 %v5147
    %5672 = vmatpush.bf16.msra.mxu0 %v5137
    %5673 = vmatpush.bf16.msra.mxu0 %v5127
    %5674 = vmatpush.bf16.msra.mxu0 %v5117
    %5675 = vmatpush.bf16.msra.mxu0 %v5107
    %5676 = vmatpush.bf16.msra.mxu0 %v5097
    %5677 = vmatpush.bf16.msra.mxu0 %v5087
    %5678 = vmatpush.bf16.msra.mxu0 %v5077
    %5679 = vmatmul.bf16.gmra.mxu0 %v3928
    %v5680 = vpop.f32.mrf.mxu0
    %v5681 = vadd.f32 %v5667, %v5680
    %v5682 = vpop.f32.mrf.mxu0
    %v5683 = vadd.f32 %v5669, %v5682
    %5684 = vdwg.mxu0
    %5685 = vmatpush.bf16.msra.mxu0 %v4988
    %5686 = vmatpush.bf16.msra.mxu0 %v4978
    %5687 = vmatpush.bf16.msra.mxu0 %v4968
    %5688 = vmatpush.bf16.msra.mxu0 %v4958
    %5689 = vmatpush.bf16.msra.mxu0 %v4948
    %5690 = vmatpush.bf16.msra.mxu0 %v4938
    %5691 = vmatpush.bf16.msra.mxu0 %v4928
    %5692 = vmatpush.bf16.msra.mxu0 %v4918
    %5693 = vmatmul.bf16.gmra.mxu0 %v3926
    %v5694 = vpop.f32.mrf.mxu0
    %v5695 = vadd.f32 %v4178, %v5694
    %v5696 = vpop.f32.mrf.mxu0
    %v5697 = vadd.f32 %v4178, %v5696
    %5698 = vdwg.mxu0
    %5699 = vmatpush.bf16.msra.mxu0 %v5068
    %5700 = vmatpush.bf16.msra.mxu0 %v5058
    %5701 = vmatpush.bf16.msra.mxu0 %v5048
    %5702 = vmatpush.bf16.msra.mxu0 %v5038
    %5703 = vmatpush.bf16.msra.mxu0 %v5028
    %5704 = vmatpush.bf16.msra.mxu0 %v5018
    %5705 = vmatpush.bf16.msra.mxu0 %v5008
    %5706 = vmatpush.bf16.msra.mxu0 %v4998
    %5707 = vmatmul.bf16.gmra.mxu0 %v3927
    %v5708 = vpop.f32.mrf.mxu0
    %v5709 = vadd.f32 %v5695, %v5708
    %v5710 = vpop.f32.mrf.mxu0
    %v5711 = vadd.f32 %v5697, %v5710
    %5712 = vdwg.mxu0
    %5713 = vmatpush.bf16.msra.mxu0 %v5148
    %5714 = vmatpush.bf16.msra.mxu0 %v5138
    %5715 = vmatpush.bf16.msra.mxu0 %v5128
    %5716 = vmatpush.bf16.msra.mxu0 %v5118
    %5717 = vmatpush.bf16.msra.mxu0 %v5108
    %5718 = vmatpush.bf16.msra.mxu0 %v5098
    %5719 = vmatpush.bf16.msra.mxu0 %v5088
    %5720 = vmatpush.bf16.msra.mxu0 %v5078
    %5721 = vmatmul.bf16.gmra.mxu0 %v3928
    %v5722 = vpop.f32.mrf.mxu0
    %v5723 = vadd.f32 %v5709, %v5722
    %v5724 = vpop.f32.mrf.mxu0
    %v5725 = vadd.f32 %v5711, %v5724
    %5726 = vdwg.mxu0
    %5727 = vmatpush.bf16.msra.mxu0 %v4989
    %5728 = vmatpush.bf16.msra.mxu0 %v4979
    %5729 = vmatpush.bf16.msra.mxu0 %v4969
    %5730 = vmatpush.bf16.msra.mxu0 %v4959
    %5731 = vmatpush.bf16.msra.mxu0 %v4949
    %5732 = vmatpush.bf16.msra.mxu0 %v4939
    %5733 = vmatpush.bf16.msra.mxu0 %v4929
    %5734 = vmatpush.bf16.msra.mxu0 %v4919
    %5735 = vmatmul.bf16.gmra.mxu0 %v3926
    %v5736 = vpop.f32.mrf.mxu0
    %v5737 = vadd.f32 %v4179, %v5736
    %v5738 = vpop.f32.mrf.mxu0
    %v5739 = vadd.f32 %v4179, %v5738
    %5740 = vdwg.mxu0
    %5741 = vmatpush.bf16.msra.mxu0 %v5069
    %5742 = vmatpush.bf16.msra.mxu0 %v5059
    %5743 = vmatpush.bf16.msra.mxu0 %v5049
    %5744 = vmatpush.bf16.msra.mxu0 %v5039
    %5745 = vmatpush.bf16.msra.mxu0 %v5029
    %5746 = vmatpush.bf16.msra.mxu0 %v5019
    %5747 = vmatpush.bf16.msra.mxu0 %v5009
    %5748 = vmatpush.bf16.msra.mxu0 %v4999
    %5749 = vmatmul.bf16.gmra.mxu0 %v3927
    %v5750 = vpop.f32.mrf.mxu0
    %v5751 = vadd.f32 %v5737, %v5750
    %v5752 = vpop.f32.mrf.mxu0
    %v5753 = vadd.f32 %v5739, %v5752
    %5754 = vdwg.mxu0
    %5755 = vmatpush.bf16.msra.mxu0 %v5149
    %5756 = vmatpush.bf16.msra.mxu0 %v5139
    %5757 = vmatpush.bf16.msra.mxu0 %v5129
    %5758 = vmatpush.bf16.msra.mxu0 %v5119
    %5759 = vmatpush.bf16.msra.mxu0 %v5109
    %5760 = vmatpush.bf16.msra.mxu0 %v5099
    %5761 = vmatpush.bf16.msra.mxu0 %v5089
    %5762 = vmatpush.bf16.msra.mxu0 %v5079
    %5763 = vmatmul.bf16.gmra.mxu0 %v3928
    %v5764 = vpop.f32.mrf.mxu0
    %v5765 = vadd.f32 %v5751, %v5764
    %v5766 = vpop.f32.mrf.mxu0
    %v5767 = vadd.f32 %v5753, %v5766
    %5768 = vdwg.mxu0
    %5769 = vmatpush.bf16.msra.mxu0 %v4990
    %5770 = vmatpush.bf16.msra.mxu0 %v4980
    %5771 = vmatpush.bf16.msra.mxu0 %v4970
    %5772 = vmatpush.bf16.msra.mxu0 %v4960
    %5773 = vmatpush.bf16.msra.mxu0 %v4950
    %5774 = vmatpush.bf16.msra.mxu0 %v4940
    %5775 = vmatpush.bf16.msra.mxu0 %v4930
    %5776 = vmatpush.bf16.msra.mxu0 %v4920
    %5777 = vmatmul.bf16.gmra.mxu0 %v3926
    %v5778 = vpop.f32.mrf.mxu0
    %v5779 = vadd.f32 %v4180, %v5778
    %v5780 = vpop.f32.mrf.mxu0
    %v5781 = vadd.f32 %v4180, %v5780
    %5782 = vdwg.mxu0
    %5783 = vmatpush.bf16.msra.mxu0 %v5070
    %5784 = vmatpush.bf16.msra.mxu0 %v5060
    %5785 = vmatpush.bf16.msra.mxu0 %v5050
    %5786 = vmatpush.bf16.msra.mxu0 %v5040
    %5787 = vmatpush.bf16.msra.mxu0 %v5030
    %5788 = vmatpush.bf16.msra.mxu0 %v5020
    %5789 = vmatpush.bf16.msra.mxu0 %v5010
    %5790 = vmatpush.bf16.msra.mxu0 %v5000
    %5791 = vmatmul.bf16.gmra.mxu0 %v3927
    %v5792 = vpop.f32.mrf.mxu0
    %v5793 = vadd.f32 %v5779, %v5792
    %v5794 = vpop.f32.mrf.mxu0
    %v5795 = vadd.f32 %v5781, %v5794
    %5796 = vdwg.mxu0
    %5797 = vmatpush.bf16.msra.mxu0 %v5150
    %5798 = vmatpush.bf16.msra.mxu0 %v5140
    %5799 = vmatpush.bf16.msra.mxu0 %v5130
    %5800 = vmatpush.bf16.msra.mxu0 %v5120
    %5801 = vmatpush.bf16.msra.mxu0 %v5110
    %5802 = vmatpush.bf16.msra.mxu0 %v5100
    %5803 = vmatpush.bf16.msra.mxu0 %v5090
    %5804 = vmatpush.bf16.msra.mxu0 %v5080
    %5805 = vmatmul.bf16.gmra.mxu0 %v3928
    %v5806 = vpop.f32.mrf.mxu0
    %v5807 = vadd.f32 %v5793, %v5806
    %v5808 = vpop.f32.mrf.mxu0
    %v5809 = vadd.f32 %v5795, %v5808
    %5810 = vdwg.mxu0
    %v5811 = vmul.f32 %v5429, %v5429
    %v5812 = vmul.f32 %v5471, %v5471
    %v5813 = vmul.f32 %v5513, %v5513
    %v5814 = vmul.f32 %v5555, %v5555
    %v5815 = vmul.f32 %v5597, %v5597
    %v5816 = vmul.f32 %v5639, %v5639
    %v5817 = vmul.f32 %v5681, %v5681
    %v5818 = vmul.f32 %v5723, %v5723
    %v5819 = vmul.f32 %v5765, %v5765
    %v5820 = vmul.f32 %v5807, %v5807
    %v5821 = vmul.f32 %v5431, %v5431
    %v5822 = vmul.f32 %v5473, %v5473
    %v5823 = vmul.f32 %v5515, %v5515
    %v5824 = vmul.f32 %v5557, %v5557
    %v5825 = vmul.f32 %v5599, %v5599
    %v5826 = vmul.f32 %v5641, %v5641
    %v5827 = vmul.f32 %v5683, %v5683
    %v5828 = vmul.f32 %v5725, %v5725
    %v5829 = vmul.f32 %v5767, %v5767
    %v5830 = vmul.f32 %v5809, %v5809
    %v5831 = vmul.f32 %v5429, %v5811
    %v5832 = vmul.f32 %v5471, %v5812
    %v5833 = vmul.f32 %v5513, %v5813
    %v5834 = vmul.f32 %v5555, %v5814
    %v5835 = vmul.f32 %v5597, %v5815
    %v5836 = vmul.f32 %v5639, %v5816
    %v5837 = vmul.f32 %v5681, %v5817
    %v5838 = vmul.f32 %v5723, %v5818
    %v5839 = vmul.f32 %v5765, %v5819
    %v5840 = vmul.f32 %v5807, %v5820
    %v5841 = vmul.f32 %v5431, %v5821
    %v5842 = vmul.f32 %v5473, %v5822
    %v5843 = vmul.f32 %v5515, %v5823
    %v5844 = vmul.f32 %v5557, %v5824
    %v5845 = vmul.f32 %v5599, %v5825
    %v5846 = vmul.f32 %v5641, %v5826
    %v5847 = vmul.f32 %v5683, %v5827
    %v5848 = vmul.f32 %v5725, %v5828
    %v5849 = vmul.f32 %v5767, %v5829
    %v5850 = vmul.f32 %v5809, %v5830
    %v5851 = vmul.f32 %v5831, 0.044715
    %v5852 = vmul.f32 %v5832, 0.044715
    %v5853 = vmul.f32 %v5833, 0.044715
    %v5854 = vmul.f32 %v5834, 0.044715
    %v5855 = vmul.f32 %v5835, 0.044715
    %v5856 = vmul.f32 %v5836, 0.044715
    %v5857 = vmul.f32 %v5837, 0.044715
    %v5858 = vmul.f32 %v5838, 0.044715
    %v5859 = vmul.f32 %v5839, 0.044715
    %v5860 = vmul.f32 %v5840, 0.044715
    %v5861 = vmul.f32 %v5841, 0.044715
    %v5862 = vmul.f32 %v5842, 0.044715
    %v5863 = vmul.f32 %v5843, 0.044715
    %v5864 = vmul.f32 %v5844, 0.044715
    %v5865 = vmul.f32 %v5845, 0.044715
    %v5866 = vmul.f32 %v5846, 0.044715
    %v5867 = vmul.f32 %v5847, 0.044715
    %v5868 = vmul.f32 %v5848, 0.044715
    %v5869 = vmul.f32 %v5849, 0.044715
    %v5870 = vmul.f32 %v5850, 0.044715
    %v5871 = vadd.f32 %v5429, %v5851
    %v5872 = vadd.f32 %v5471, %v5852
    %v5873 = vadd.f32 %v5513, %v5853
    %v5874 = vadd.f32 %v5555, %v5854
    %v5875 = vadd.f32 %v5597, %v5855
    %v5876 = vadd.f32 %v5639, %v5856
    %v5877 = vadd.f32 %v5681, %v5857
    %v5878 = vadd.f32 %v5723, %v5858
    %v5879 = vadd.f32 %v5765, %v5859
    %v5880 = vadd.f32 %v5807, %v5860
    %v5881 = vadd.f32 %v5431, %v5861
    %v5882 = vadd.f32 %v5473, %v5862
    %v5883 = vadd.f32 %v5515, %v5863
    %v5884 = vadd.f32 %v5557, %v5864
    %v5885 = vadd.f32 %v5599, %v5865
    %v5886 = vadd.f32 %v5641, %v5866
    %v5887 = vadd.f32 %v5683, %v5867
    %v5888 = vadd.f32 %v5725, %v5868
    %v5889 = vadd.f32 %v5767, %v5869
    %v5890 = vadd.f32 %v5809, %v5870
    %v5891 = vmul.f32 %v5871, 0.7978846
    %v5892 = vmul.f32 %v5872, 0.7978846
    %v5893 = vmul.f32 %v5873, 0.7978846
    %v5894 = vmul.f32 %v5874, 0.7978846
    %v5895 = vmul.f32 %v5875, 0.7978846
    %v5896 = vmul.f32 %v5876, 0.7978846
    %v5897 = vmul.f32 %v5877, 0.7978846
    %v5898 = vmul.f32 %v5878, 0.7978846
    %v5899 = vmul.f32 %v5879, 0.7978846
    %v5900 = vmul.f32 %v5880, 0.7978846
    %v5901 = vmul.f32 %v5881, 0.7978846
    %v5902 = vmul.f32 %v5882, 0.7978846
    %v5903 = vmul.f32 %v5883, 0.7978846
    %v5904 = vmul.f32 %v5884, 0.7978846
    %v5905 = vmul.f32 %v5885, 0.7978846
    %v5906 = vmul.f32 %v5886, 0.7978846
    %v5907 = vmul.f32 %v5887, 0.7978846
    %v5908 = vmul.f32 %v5888, 0.7978846
    %v5909 = vmul.f32 %v5889, 0.7978846
    %v5910 = vmul.f32 %v5890, 0.7978846
    %v5911 = vtanh.pop %v5891
    %v5912 = vtanh.pop %v5892
    %v5913 = vtanh.pop %v5893
    %v5914 = vtanh.pop %v5894
    %v5915 = vtanh.pop %v5895
    %v5916 = vtanh.pop %v5896
    %v5917 = vtanh.pop %v5897
    %v5918 = vtanh.pop %v5898
    %v5919 = vtanh.pop %v5899
    %v5920 = vtanh.pop %v5900
    %v5921 = vtanh.pop %v5901
    %v5922 = vtanh.pop %v5902
    %v5923 = vtanh.pop %v5903
    %v5924 = vtanh.pop %v5904
    %v5925 = vtanh.pop %v5905
    %v5926 = vtanh.pop %v5906
    %v5927 = vtanh.pop %v5907
    %v5928 = vtanh.pop %v5908
    %v5929 = vtanh.pop %v5909
    %v5930 = vtanh.pop %v5910
    %v5931 = vadd.f32 %v5911, 1.0
    %v5932 = vadd.f32 %v5912, 1.0
    %v5933 = vadd.f32 %v5913, 1.0
    %v5934 = vadd.f32 %v5914, 1.0
    %v5935 = vadd.f32 %v5915, 1.0
    %v5936 = vadd.f32 %v5916, 1.0
    %v5937 = vadd.f32 %v5917, 1.0
    %v5938 = vadd.f32 %v5918, 1.0
    %v5939 = vadd.f32 %v5919, 1.0
    %v5940 = vadd.f32 %v5920, 1.0
    %v5941 = vadd.f32 %v5921, 1.0
    %v5942 = vadd.f32 %v5922, 1.0
    %v5943 = vadd.f32 %v5923, 1.0
    %v5944 = vadd.f32 %v5924, 1.0
    %v5945 = vadd.f32 %v5925, 1.0
    %v5946 = vadd.f32 %v5926, 1.0
    %v5947 = vadd.f32 %v5927, 1.0
    %v5948 = vadd.f32 %v5928, 1.0
    %v5949 = vadd.f32 %v5929, 1.0
    %v5950 = vadd.f32 %v5930, 1.0
    %v5951 = vmul.f32 %v5931, 0.5
    %v5952 = vmul.f32 %v5932, 0.5
    %v5953 = vmul.f32 %v5933, 0.5
    %v5954 = vmul.f32 %v5934, 0.5
    %v5955 = vmul.f32 %v5935, 0.5
    %v5956 = vmul.f32 %v5936, 0.5
    %v5957 = vmul.f32 %v5937, 0.5
    %v5958 = vmul.f32 %v5938, 0.5
    %v5959 = vmul.f32 %v5939, 0.5
    %v5960 = vmul.f32 %v5940, 0.5
    %v5961 = vmul.f32 %v5941, 0.5
    %v5962 = vmul.f32 %v5942, 0.5
    %v5963 = vmul.f32 %v5943, 0.5
    %v5964 = vmul.f32 %v5944, 0.5
    %v5965 = vmul.f32 %v5945, 0.5
    %v5966 = vmul.f32 %v5946, 0.5
    %v5967 = vmul.f32 %v5947, 0.5
    %v5968 = vmul.f32 %v5948, 0.5
    %v5969 = vmul.f32 %v5949, 0.5
    %v5970 = vmul.f32 %v5950, 0.5
    %v5971 = vmul.f32 %v5429, %v5951
    %v5972 = vmul.f32 %v5471, %v5952
    %v5973 = vmul.f32 %v5513, %v5953
    %v5974 = vmul.f32 %v5555, %v5954
    %v5975 = vmul.f32 %v5597, %v5955
    %v5976 = vmul.f32 %v5639, %v5956
    %v5977 = vmul.f32 %v5681, %v5957
    %v5978 = vmul.f32 %v5723, %v5958
    %v5979 = vmul.f32 %v5765, %v5959
    %v5980 = vmul.f32 %v5807, %v5960
    %v5981 = vmul.f32 %v5431, %v5961
    %v5982 = vmul.f32 %v5473, %v5962
    %v5983 = vmul.f32 %v5515, %v5963
    %v5984 = vmul.f32 %v5557, %v5964
    %v5985 = vmul.f32 %v5599, %v5965
    %v5986 = vmul.f32 %v5641, %v5966
    %v5987 = vmul.f32 %v5683, %v5967
    %v5988 = vmul.f32 %v5725, %v5968
    %v5989 = vmul.f32 %v5767, %v5969
    %v5990 = vmul.f32 %v5809, %v5970
    %v5991 = vpack.c.bf16 %v5981, %v5971
    %v5992 = vpack.c.bf16 %v5982, %v5972
    %v5993 = vpack.c.bf16 %v5983, %v5973
    %v5994 = vpack.c.bf16 %v5984, %v5974
    %v5995 = vpack.c.bf16 %v5985, %v5975
    %v5996 = vpack.c.bf16 %v5986, %v5976
    %v5997 = vpack.c.bf16 %v5987, %v5977
    %v5998 = vpack.c.bf16 %v5988, %v5978
    %v5999 = vpack.c.bf16 %v5989, %v5979
    %v6000 = vpack.c.bf16 %v5990, %v5980
    %v6001 = vld [vmem:[#allocation10] sm:$0xff]
    %v6002 = vld [vmem:[#allocation10 + $0x8] sm:$0xf]
    %v6003 = vld [vmem:[#allocation10 + $0xc] sm:$0xff]
    %v6004 = vld [vmem:[#allocation10 + $0x14] sm:$0xf]
    %v6005 = vld [vmem:[#allocation10 + $0x18] sm:$0xff]
    %v6006 = vld [vmem:[#allocation10 + $0x20] sm:$0xf]
    %v6007 = vld [vmem:[#allocation10 + $0x24] sm:$0xff]
    %v6008 = vld [vmem:[#allocation10 + $0x2c] sm:$0xf]
    %v6009 = vld [vmem:[#allocation10 + $0x30] sm:$0xff]
    %v6010 = vld [vmem:[#allocation10 + $0x38] sm:$0xf]
    %v6011 = vld [vmem:[#allocation10 + $0x3c] sm:$0xff]
    %v6012 = vld [vmem:[#allocation10 + $0x44] sm:$0xf]
    %v6013 = vld [vmem:[#allocation10 + $0x48] sm:$0xff]
    %v6014 = vld [vmem:[#allocation10 + $0x50] sm:$0xf]
    %v6015 = vld [vmem:[#allocation10 + $0x54] sm:$0xff]
    %v6016 = vld [vmem:[#allocation10 + $0x5c] sm:$0xf]
    %v6017 = vld [vmem:[#allocation10 + $0x60] sm:$0xff]
    %v6018 = vld [vmem:[#allocation10 + $0x68] sm:$0xf]
    %v6019 = vld [vmem:[#allocation10 + $0x6c] sm:$0xff]
    %v6020 = vld [vmem:[#allocation10 + $0x74] sm:$0xf]
    %v6021 = vld [vmem:[#allocation10 + $0x78] sm:$0xff]
    %v6022 = vld [vmem:[#allocation10 + $0x80] sm:$0xf]
    %v6023 = vld [vmem:[#allocation10 + $0x84] sm:$0xff]
    %v6024 = vld [vmem:[#allocation10 + $0x8c] sm:$0xf]
    %v6025 = vld [vmem:[#allocation10 + $0x90] sm:$0xff]
    %v6026 = vld [vmem:[#allocation10 + $0x98] sm:$0xf]
    %v6027 = vld [vmem:[#allocation10 + $0x9c] sm:$0xff]
    %v6028 = vld [vmem:[#allocation10 + $0xa4] sm:$0xf]
    %v6029 = vld [vmem:[#allocation10 + $0xa8] sm:$0xff]
    %v6030 = vld [vmem:[#allocation10 + $0xb0] sm:$0xf]
    %v6031 = vld [vmem:[#allocation10 + $0xb4] sm:$0xff]
    %v6032 = vld [vmem:[#allocation10 + $0xbc] sm:$0xf]
    %v6033 = vld [vmem:[#allocation10 + $0xc0] sm:$0xff]
    %v6034 = vld [vmem:[#allocation10 + $0xc8] sm:$0xf]
    %v6035 = vld [vmem:[#allocation10 + $0xcc] sm:$0xff]
    %v6036 = vld [vmem:[#allocation10 + $0xd4] sm:$0xf]
    %v6037 = vld [vmem:[#allocation10 + $0xd8] sm:$0xff]
    %v6038 = vld [vmem:[#allocation10 + $0xe0] sm:$0xf]
    %v6039 = vld [vmem:[#allocation10 + $0xe4] sm:$0xff]
    %v6040 = vld [vmem:[#allocation10 + $0xec] sm:$0xf]
    %v6041 = vld [vmem:[#allocation10 + $0xf0] sm:$0xff]
    %v6042 = vld [vmem:[#allocation10 + $0xf8] sm:$0xf]
    %v6043 = vld [vmem:[#allocation10 + $0xfc] sm:$0xff]
    %v6044 = vld [vmem:[#allocation10 + $0x104] sm:$0xf]
    %v6045 = vld [vmem:[#allocation10 + $0x108] sm:$0xff]
    %v6046 = vld [vmem:[#allocation10 + $0x110] sm:$0xf]
    %v6047 = vld [vmem:[#allocation10 + $0x114] sm:$0xff]
    %v6048 = vld [vmem:[#allocation10 + $0x11c] sm:$0xf]
    %v6049 = vld [vmem:[#allocation10 + $0x120] sm:$0xff]
    %v6050 = vld [vmem:[#allocation10 + $0x128] sm:$0xf]
    %v6051 = vld [vmem:[#allocation10 + $0x12c] sm:$0xff]
    %v6052 = vld [vmem:[#allocation10 + $0x134] sm:$0xf]
    %v6053 = vld [vmem:[#allocation10 + $0x138] sm:$0xff]
    %v6054 = vld [vmem:[#allocation10 + $0x140] sm:$0xf]
    %v6055 = vld [vmem:[#allocation10 + $0x144] sm:$0xff]
    %v6056 = vld [vmem:[#allocation10 + $0x14c] sm:$0xf]
    %v6057 = vld [vmem:[#allocation10 + $0x150] sm:$0xff]
    %v6058 = vld [vmem:[#allocation10 + $0x158] sm:$0xf]
    %v6059 = vld [vmem:[#allocation10 + $0x15c] sm:$0xff]
    %v6060 = vld [vmem:[#allocation10 + $0x164] sm:$0xf]
    %v6061 = vld [vmem:[#allocation10 + $0x168] sm:$0xff]
    %v6062 = vld [vmem:[#allocation10 + $0x170] sm:$0xf]
    %v6063 = vld [vmem:[#allocation10 + $0x174] sm:$0xff]
    %v6064 = vld [vmem:[#allocation10 + $0x17c] sm:$0xf]
    %v6065 = vld [vmem:[#allocation10 + $0x180] sm:$0xff]
    %v6066 = vld [vmem:[#allocation10 + $0x188] sm:$0xf]
    %v6067 = vld [vmem:[#allocation10 + $0x18c] sm:$0xff]
    %v6068 = vld [vmem:[#allocation10 + $0x194] sm:$0xf]
    %v6069 = vld [vmem:[#allocation10 + $0x198] sm:$0xff]
    %v6070 = vld [vmem:[#allocation10 + $0x1a0] sm:$0xf]
    %v6071 = vld [vmem:[#allocation10 + $0x1a4] sm:$0xff]
    %v6072 = vld [vmem:[#allocation10 + $0x1ac] sm:$0xf]
    %v6073 = vld [vmem:[#allocation10 + $0x1b0] sm:$0xff]
    %v6074 = vld [vmem:[#allocation10 + $0x1b8] sm:$0xf]
    %v6075 = vld [vmem:[#allocation10 + $0x1bc] sm:$0xff]
    %v6076 = vld [vmem:[#allocation10 + $0x1c4] sm:$0xf]
    %v6077 = vld [vmem:[#allocation10 + $0x1c8] sm:$0xff]
    %v6078 = vld [vmem:[#allocation10 + $0x1d0] sm:$0xf]
    %v6079 = vld [vmem:[#allocation10 + $0x1d4] sm:$0xff]
    %v6080 = vld [vmem:[#allocation10 + $0x1dc] sm:$0xf]
    %v6081 = vld [vmem:[#allocation10 + $0x1e0] sm:$0xff]
    %v6082 = vld [vmem:[#allocation10 + $0x1e8] sm:$0xf]
    %v6083 = vld [vmem:[#allocation10 + $0x1ec] sm:$0xff]
    %v6084 = vld [vmem:[#allocation10 + $0x1f4] sm:$0xf]
    %v6085 = vld [vmem:[#allocation10 + $0x1f8] sm:$0xff]
    %v6086 = vld [vmem:[#allocation10 + $0x200] sm:$0xf]
    %v6087 = vld [vmem:[#allocation10 + $0x204] sm:$0xff]
    %v6088 = vld [vmem:[#allocation10 + $0x20c] sm:$0xf]
    %v6089 = vld [vmem:[#allocation10 + $0x210] sm:$0xff]
    %v6090 = vld [vmem:[#allocation10 + $0x218] sm:$0xf]
    %v6091 = vld [vmem:[#allocation10 + $0x21c] sm:$0xff]
    %v6092 = vld [vmem:[#allocation10 + $0x224] sm:$0xf]
    %v6093 = vld [vmem:[#allocation10 + $0x228] sm:$0xff]
    %v6094 = vld [vmem:[#allocation10 + $0x230] sm:$0xf]
    %v6095 = vld [vmem:[#allocation10 + $0x234] sm:$0xff]
    %v6096 = vld [vmem:[#allocation10 + $0x23c] sm:$0xf]
    %v6097 = vld [vmem:[#allocation10 + $0x240] sm:$0xff]
    %v6098 = vld [vmem:[#allocation10 + $0x248] sm:$0xf]
    %v6099 = vld [vmem:[#allocation10 + $0x24c] sm:$0xff]
    %v6100 = vld [vmem:[#allocation10 + $0x254] sm:$0xf]
    %v6101 = vld [vmem:[#allocation10 + $0x258] sm:$0xff]
    %v6102 = vld [vmem:[#allocation10 + $0x260] sm:$0xf]
    %v6103 = vld [vmem:[#allocation10 + $0x264] sm:$0xff]
    %v6104 = vld [vmem:[#allocation10 + $0x26c] sm:$0xf]
    %v6105 = vld [vmem:[#allocation10 + $0x270] sm:$0xff]
    %v6106 = vld [vmem:[#allocation10 + $0x278] sm:$0xf]
    %v6107 = vld [vmem:[#allocation10 + $0x27c] sm:$0xff]
    %v6108 = vld [vmem:[#allocation10 + $0x284] sm:$0xf]
    %v6109 = vld [vmem:[#allocation10 + $0x288] sm:$0xff]
    %v6110 = vld [vmem:[#allocation10 + $0x290] sm:$0xf]
    %v6111 = vld [vmem:[#allocation10 + $0x294] sm:$0xff]
    %v6112 = vld [vmem:[#allocation10 + $0x29c] sm:$0xf]
    %v6113 = vld [vmem:[#allocation10 + $0x2a0] sm:$0xff]
    %v6114 = vld [vmem:[#allocation10 + $0x2a8] sm:$0xf]
    %v6115 = vld [vmem:[#allocation10 + $0x2ac] sm:$0xff]
    %v6116 = vld [vmem:[#allocation10 + $0x2b4] sm:$0xf]
    %v6117 = vld [vmem:[#allocation10 + $0x2b8] sm:$0xff]
    %v6118 = vld [vmem:[#allocation10 + $0x2c0] sm:$0xf]
    %v6119 = vld [vmem:[#allocation10 + $0x2c4] sm:$0xff]
    %v6120 = vld [vmem:[#allocation10 + $0x2cc] sm:$0xf]
    %v6121 = vld [vmem:[#allocation10 + $0x2d0] sm:$0xff]
    %v6122 = vld [vmem:[#allocation10 + $0x2d8] sm:$0xf]
    %v6123 = vld [vmem:[#allocation10 + $0x2dc] sm:$0xff]
    %v6124 = vld [vmem:[#allocation10 + $0x2e4] sm:$0xf]
    %v6125 = vld [vmem:[#allocation10 + $0x2e8] sm:$0xff]
    %v6126 = vld [vmem:[#allocation10 + $0x2f0] sm:$0xf]
    %v6127 = vld [vmem:[#allocation10 + $0x2f4] sm:$0xff]
    %v6128 = vld [vmem:[#allocation10 + $0x2fc] sm:$0xf]
    %v6129 = vld [vmem:[#allocation10 + $0x300] sm:$0xff]
    %v6130 = vld [vmem:[#allocation10 + $0x308] sm:$0xf]
    %v6131 = vld [vmem:[#allocation10 + $0x30c] sm:$0xff]
    %v6132 = vld [vmem:[#allocation10 + $0x314] sm:$0xf]
    %v6133 = vld [vmem:[#allocation10 + $0x318] sm:$0xff]
    %v6134 = vld [vmem:[#allocation10 + $0x320] sm:$0xf]
    %v6135 = vld [vmem:[#allocation10 + $0x324] sm:$0xff]
    %v6136 = vld [vmem:[#allocation10 + $0x32c] sm:$0xf]
    %v6137 = vld [vmem:[#allocation10 + $0x330] sm:$0xff]
    %v6138 = vld [vmem:[#allocation10 + $0x338] sm:$0xf]
    %v6139 = vld [vmem:[#allocation10 + $0x33c] sm:$0xff]
    %v6140 = vld [vmem:[#allocation10 + $0x344] sm:$0xf]
    %v6141 = vld [vmem:[#allocation10 + $0x348] sm:$0xff]
    %v6142 = vld [vmem:[#allocation10 + $0x350] sm:$0xf]
    %v6143 = vld [vmem:[#allocation10 + $0x354] sm:$0xff]
    %v6144 = vld [vmem:[#allocation10 + $0x35c] sm:$0xf]
    %v6145 = vld [vmem:[#allocation10 + $0x360] sm:$0xff]
    %v6146 = vld [vmem:[#allocation10 + $0x368] sm:$0xf]
    %v6147 = vld [vmem:[#allocation10 + $0x36c] sm:$0xff]
    %v6148 = vld [vmem:[#allocation10 + $0x374] sm:$0xf]
    %v6149 = vld [vmem:[#allocation10 + $0x378] sm:$0xff]
    %v6150 = vld [vmem:[#allocation10 + $0x380] sm:$0xf]
    %v6151 = vld [vmem:[#allocation10 + $0x384] sm:$0xff]
    %v6152 = vld [vmem:[#allocation10 + $0x38c] sm:$0xf]
    %v6153 = vld [vmem:[#allocation10 + $0x390] sm:$0xff]
    %v6154 = vld [vmem:[#allocation10 + $0x398] sm:$0xf]
    %v6155 = vld [vmem:[#allocation10 + $0x39c] sm:$0xff]
    %v6156 = vld [vmem:[#allocation10 + $0x3a4] sm:$0xf]
    %v6157 = vld [vmem:[#allocation10 + $0x3a8] sm:$0xff]
    %v6158 = vld [vmem:[#allocation10 + $0x3b0] sm:$0xf]
    %v6159 = vld [vmem:[#allocation10 + $0x3b4] sm:$0xff]
    %v6160 = vld [vmem:[#allocation10 + $0x3bc] sm:$0xf]
    %v6161 = vld [vmem:[#allocation10 + $0x3c0] sm:$0xff]
    %v6162 = vld [vmem:[#allocation10 + $0x3c8] sm:$0xf]
    %v6163 = vld [vmem:[#allocation10 + $0x3cc] sm:$0xff]
    %v6164 = vld [vmem:[#allocation10 + $0x3d4] sm:$0xf]
    %v6165 = vld [vmem:[#allocation10 + $0x3d8] sm:$0xff]
    %v6166 = vld [vmem:[#allocation10 + $0x3e0] sm:$0xf]
    %v6167 = vld [vmem:[#allocation10 + $0x3e4] sm:$0xff]
    %v6168 = vld [vmem:[#allocation10 + $0x3ec] sm:$0xf]
    %v6169 = vld [vmem:[#allocation10 + $0x3f0] sm:$0xff]
    %v6170 = vld [vmem:[#allocation10 + $0x3f8] sm:$0xf]
    %v6171 = vld [vmem:[#allocation10 + $0x3fc] sm:$0xff]
    %v6172 = vld [vmem:[#allocation10 + $0x404] sm:$0xf]
    %v6173 = vld [vmem:[#allocation10 + $0x408] sm:$0xff]
    %v6174 = vld [vmem:[#allocation10 + $0x410] sm:$0xf]
    %v6175 = vld [vmem:[#allocation10 + $0x414] sm:$0xff]
    %v6176 = vld [vmem:[#allocation10 + $0x41c] sm:$0xf]
    %v6177 = vld [vmem:[#allocation10 + $0x420] sm:$0xff]
    %v6178 = vld [vmem:[#allocation10 + $0x428] sm:$0xf]
    %v6179 = vld [vmem:[#allocation10 + $0x42c] sm:$0xff]
    %v6180 = vld [vmem:[#allocation10 + $0x434] sm:$0xf]
    %v6181 = vld [vmem:[#allocation10 + $0x438] sm:$0xff]
    %v6182 = vld [vmem:[#allocation10 + $0x440] sm:$0xf]
    %v6183 = vld [vmem:[#allocation10 + $0x444] sm:$0xff]
    %v6184 = vld [vmem:[#allocation10 + $0x44c] sm:$0xf]
    %v6185 = vld [vmem:[#allocation10 + $0x450] sm:$0xff]
    %v6186 = vld [vmem:[#allocation10 + $0x458] sm:$0xf]
    %v6187 = vld [vmem:[#allocation10 + $0x45c] sm:$0xff]
    %v6188 = vld [vmem:[#allocation10 + $0x464] sm:$0xf]
    %v6189 = vld [vmem:[#allocation10 + $0x468] sm:$0xff]
    %v6190 = vld [vmem:[#allocation10 + $0x470] sm:$0xf]
    %v6191 = vld [vmem:[#allocation10 + $0x474] sm:$0xff]
    %v6192 = vld [vmem:[#allocation10 + $0x47c] sm:$0xf]
    %v6193 = vld [vmem:[#allocation10 + $0x480] sm:$0xff]
    %v6194 = vld [vmem:[#allocation10 + $0x488] sm:$0xf]
    %v6195 = vld [vmem:[#allocation10 + $0x48c] sm:$0xff]
    %v6196 = vld [vmem:[#allocation10 + $0x494] sm:$0xf]
    %v6197 = vld [vmem:[#allocation10 + $0x498] sm:$0xff]
    %v6198 = vld [vmem:[#allocation10 + $0x4a0] sm:$0xf]
    %v6199 = vld [vmem:[#allocation10 + $0x4a4] sm:$0xff]
    %v6200 = vld [vmem:[#allocation10 + $0x4ac] sm:$0xf]
    %v6201 = vld [vmem:[#allocation10 + $0x4b0] sm:$0xff]
    %v6202 = vld [vmem:[#allocation10 + $0x4b8] sm:$0xf]
    %v6203 = vld [vmem:[#allocation10 + $0x4bc] sm:$0xff]
    %v6204 = vld [vmem:[#allocation10 + $0x4c4] sm:$0xf]
    %v6205 = vld [vmem:[#allocation10 + $0x4c8] sm:$0xff]
    %v6206 = vld [vmem:[#allocation10 + $0x4d0] sm:$0xf]
    %v6207 = vld [vmem:[#allocation10 + $0x4d4] sm:$0xff]
    %v6208 = vld [vmem:[#allocation10 + $0x4dc] sm:$0xf]
    %v6209 = vld [vmem:[#allocation10 + $0x4e0] sm:$0xff]
    %v6210 = vld [vmem:[#allocation10 + $0x4e8] sm:$0xf]
    %v6211 = vld [vmem:[#allocation10 + $0x4ec] sm:$0xff]
    %v6212 = vld [vmem:[#allocation10 + $0x4f4] sm:$0xf]
    %v6213 = vld [vmem:[#allocation10 + $0x4f8] sm:$0xff]
    %v6214 = vld [vmem:[#allocation10 + $0x500] sm:$0xf]
    %v6215 = vld [vmem:[#allocation10 + $0x504] sm:$0xff]
    %v6216 = vld [vmem:[#allocation10 + $0x50c] sm:$0xf]
    %v6217 = vld [vmem:[#allocation10 + $0x510] sm:$0xff]
    %v6218 = vld [vmem:[#allocation10 + $0x518] sm:$0xf]
    %v6219 = vld [vmem:[#allocation10 + $0x51c] sm:$0xff]
    %v6220 = vld [vmem:[#allocation10 + $0x524] sm:$0xf]
    %v6221 = vld [vmem:[#allocation10 + $0x528] sm:$0xff]
    %v6222 = vld [vmem:[#allocation10 + $0x530] sm:$0xf]
    %v6223 = vld [vmem:[#allocation10 + $0x534] sm:$0xff]
    %v6224 = vld [vmem:[#allocation10 + $0x53c] sm:$0xf]
    %v6225 = vld [vmem:[#allocation10 + $0x540] sm:$0xff]
    %v6226 = vld [vmem:[#allocation10 + $0x548] sm:$0xf]
    %v6227 = vld [vmem:[#allocation10 + $0x54c] sm:$0xff]
    %v6228 = vld [vmem:[#allocation10 + $0x554] sm:$0xf]
    %v6229 = vld [vmem:[#allocation10 + $0x558] sm:$0xff]
    %v6230 = vld [vmem:[#allocation10 + $0x560] sm:$0xf]
    %v6231 = vld [vmem:[#allocation10 + $0x564] sm:$0xff]
    %v6232 = vld [vmem:[#allocation10 + $0x56c] sm:$0xf]
    %v6233 = vld [vmem:[#allocation10 + $0x570] sm:$0xff]
    %v6234 = vld [vmem:[#allocation10 + $0x578] sm:$0xf]
    %v6235 = vld [vmem:[#allocation10 + $0x57c] sm:$0xff]
    %v6236 = vld [vmem:[#allocation10 + $0x584] sm:$0xf]
    %v6237 = vld [vmem:[#allocation10 + $0x588] sm:$0xff]
    %v6238 = vld [vmem:[#allocation10 + $0x590] sm:$0xf]
    %v6239 = vld [vmem:[#allocation10 + $0x594] sm:$0xff]
    %v6240 = vld [vmem:[#allocation10 + $0x59c] sm:$0xf]
    %v6241 = vld [vmem:[#allocation10 + $0x5a0] sm:$0xff]
    %v6242 = vld [vmem:[#allocation10 + $0x5a8] sm:$0xf]
    %v6243 = vld [vmem:[#allocation10 + $0x5ac] sm:$0xff]
    %v6244 = vld [vmem:[#allocation10 + $0x5b4] sm:$0xf]
    %v6245 = vld [vmem:[#allocation10 + $0x5b8] sm:$0xff]
    %v6246 = vld [vmem:[#allocation10 + $0x5c0] sm:$0xf]
    %v6247 = vld [vmem:[#allocation10 + $0x5c4] sm:$0xff]
    %v6248 = vld [vmem:[#allocation10 + $0x5cc] sm:$0xf]
    %v6249 = vld [vmem:[#allocation10 + $0x5d0] sm:$0xff]
    %v6250 = vld [vmem:[#allocation10 + $0x5d8] sm:$0xf]
    %v6251 = vld [vmem:[#allocation10 + $0x5dc] sm:$0xff]
    %v6252 = vld [vmem:[#allocation10 + $0x5e4] sm:$0xf]
    %v6253 = vld [vmem:[#allocation10 + $0x5e8] sm:$0xff]
    %v6254 = vld [vmem:[#allocation10 + $0x5f0] sm:$0xf]
    %v6255 = vld [vmem:[#allocation10 + $0x5f4] sm:$0xff]
    %v6256 = vld [vmem:[#allocation10 + $0x5fc] sm:$0xf]
    %v6257 = vld [vmem:[#allocation10 + $0x600] sm:$0xff]
    %v6258 = vld [vmem:[#allocation10 + $0x608] sm:$0xf]
    %v6259 = vld [vmem:[#allocation10 + $0x60c] sm:$0xff]
    %v6260 = vld [vmem:[#allocation10 + $0x614] sm:$0xf]
    %v6261 = vld [vmem:[#allocation10 + $0x618] sm:$0xff]
    %v6262 = vld [vmem:[#allocation10 + $0x620] sm:$0xf]
    %v6263 = vld [vmem:[#allocation10 + $0x624] sm:$0xff]
    %v6264 = vld [vmem:[#allocation10 + $0x62c] sm:$0xf]
    %v6265 = vld [vmem:[#allocation10 + $0x630] sm:$0xff]
    %v6266 = vld [vmem:[#allocation10 + $0x638] sm:$0xf]
    %v6267 = vld [vmem:[#allocation10 + $0x63c] sm:$0xff]
    %v6268 = vld [vmem:[#allocation10 + $0x644] sm:$0xf]
    %v6269 = vld [vmem:[#allocation10 + $0x648] sm:$0xff]
    %v6270 = vld [vmem:[#allocation10 + $0x650] sm:$0xf]
    %v6271 = vld [vmem:[#allocation10 + $0x654] sm:$0xff]
    %v6272 = vld [vmem:[#allocation10 + $0x65c] sm:$0xf]
    %v6273 = vld [vmem:[#allocation10 + $0x660] sm:$0xff]
    %v6274 = vld [vmem:[#allocation10 + $0x668] sm:$0xf]
    %v6275 = vld [vmem:[#allocation10 + $0x66c] sm:$0xff]
    %v6276 = vld [vmem:[#allocation10 + $0x674] sm:$0xf]
    %v6277 = vld [vmem:[#allocation10 + $0x678] sm:$0xff]
    %v6278 = vld [vmem:[#allocation10 + $0x680] sm:$0xf]
    %v6279 = vld [vmem:[#allocation10 + $0x684] sm:$0xff]
    %v6280 = vld [vmem:[#allocation10 + $0x68c] sm:$0xf]
    %v6281 = vld [vmem:[#allocation10 + $0x690] sm:$0xff]
    %v6282 = vld [vmem:[#allocation10 + $0x698] sm:$0xf]
    %v6283 = vld [vmem:[#allocation10 + $0x69c] sm:$0xff]
    %v6284 = vld [vmem:[#allocation10 + $0x6a4] sm:$0xf]
    %v6285 = vld [vmem:[#allocation10 + $0x6a8] sm:$0xff]
    %v6286 = vld [vmem:[#allocation10 + $0x6b0] sm:$0xf]
    %v6287 = vld [vmem:[#allocation10 + $0x6b4] sm:$0xff]
    %v6288 = vld [vmem:[#allocation10 + $0x6bc] sm:$0xf]
    %v6289 = vld [vmem:[#allocation10 + $0x6c0] sm:$0xff]
    %v6290 = vld [vmem:[#allocation10 + $0x6c8] sm:$0xf]
    %v6291 = vld [vmem:[#allocation10 + $0x6cc] sm:$0xff]
    %v6292 = vld [vmem:[#allocation10 + $0x6d4] sm:$0xf]
    %v6293 = vld [vmem:[#allocation10 + $0x6d8] sm:$0xff]
    %v6294 = vld [vmem:[#allocation10 + $0x6e0] sm:$0xf]
    %v6295 = vld [vmem:[#allocation10 + $0x6e4] sm:$0xff]
    %v6296 = vld [vmem:[#allocation10 + $0x6ec] sm:$0xf]
    %v6297 = vld [vmem:[#allocation10 + $0x6f0] sm:$0xff]
    %v6298 = vld [vmem:[#allocation10 + $0x6f8] sm:$0xf]
    %v6299 = vld [vmem:[#allocation10 + $0x6fc] sm:$0xff]
    %v6300 = vld [vmem:[#allocation10 + $0x704] sm:$0xf]
    %v6301 = vld [vmem:[#allocation10 + $0x708] sm:$0xff]
    %v6302 = vld [vmem:[#allocation10 + $0x710] sm:$0xf]
    %v6303 = vld [vmem:[#allocation10 + $0x714] sm:$0xff]
    %v6304 = vld [vmem:[#allocation10 + $0x71c] sm:$0xf]
    %v6305 = vld [vmem:[#allocation10 + $0x720] sm:$0xff]
    %v6306 = vld [vmem:[#allocation10 + $0x728] sm:$0xf]
    %v6307 = vld [vmem:[#allocation10 + $0x72c] sm:$0xff]
    %v6308 = vld [vmem:[#allocation10 + $0x734] sm:$0xf]
    %v6309 = vld [vmem:[#allocation10 + $0x738] sm:$0xff]
    %v6310 = vld [vmem:[#allocation10 + $0x740] sm:$0xf]
    %v6311 = vld [vmem:[#allocation10 + $0x744] sm:$0xff]
    %v6312 = vld [vmem:[#allocation10 + $0x74c] sm:$0xf]
    %v6313 = vld [vmem:[#allocation10 + $0x750] sm:$0xff]
    %v6314 = vld [vmem:[#allocation10 + $0x758] sm:$0xf]
    %v6315 = vld [vmem:[#allocation10 + $0x75c] sm:$0xff]
    %v6316 = vld [vmem:[#allocation10 + $0x764] sm:$0xf]
    %v6317 = vld [vmem:[#allocation10 + $0x768] sm:$0xff]
    %v6318 = vld [vmem:[#allocation10 + $0x770] sm:$0xf]
    %v6319 = vld [vmem:[#allocation10 + $0x774] sm:$0xff]
    %v6320 = vld [vmem:[#allocation10 + $0x77c] sm:$0xf]
    %v6322 = vperm.slane %v138, 0
    %v6323 = vperm.slane %v138, 1
    %v6324 = vperm.slane %v138, 2
    %v6648 = vunpack.c.l.b16 %v6001
    %v6649 = vunpack.c.h.b16 %v6001
    %v6650 = vunpack.c.l.b16 %v6002
    %v6651 = vunpack.c.l.b16 %v6003
    %v6652 = vunpack.c.h.b16 %v6003
    %v6653 = vunpack.c.l.b16 %v6004
    %v6654 = vunpack.c.l.b16 %v6005
    %v6655 = vunpack.c.h.b16 %v6005
    %v6656 = vunpack.c.l.b16 %v6006
    %v6657 = vunpack.c.l.b16 %v6007
    %v6658 = vunpack.c.h.b16 %v6007
    %v6659 = vunpack.c.l.b16 %v6008
    %v6660 = vunpack.c.l.b16 %v6009
    %v6661 = vunpack.c.h.b16 %v6009
    %v6662 = vunpack.c.l.b16 %v6010
    %v6663 = vunpack.c.l.b16 %v6011
    %v6664 = vunpack.c.h.b16 %v6011
    %v6665 = vunpack.c.l.b16 %v6012
    %v6666 = vunpack.c.l.b16 %v6013
    %v6667 = vunpack.c.h.b16 %v6013
    %v6668 = vunpack.c.l.b16 %v6014
    %v6669 = vunpack.c.l.b16 %v6015
    %v6670 = vunpack.c.h.b16 %v6015
    %v6671 = vunpack.c.l.b16 %v6016
    %v6672 = vunpack.c.l.b16 %v6017
    %v6673 = vunpack.c.h.b16 %v6017
    %v6674 = vunpack.c.l.b16 %v6018
    %v6675 = vunpack.c.l.b16 %v6019
    %v6676 = vunpack.c.h.b16 %v6019
    %v6677 = vunpack.c.l.b16 %v6020
    %v6678 = vunpack.c.l.b16 %v6021
    %v6679 = vunpack.c.h.b16 %v6021
    %v6680 = vunpack.c.l.b16 %v6022
    %v6681 = vunpack.c.l.b16 %v6023
    %v6682 = vunpack.c.h.b16 %v6023
    %v6683 = vunpack.c.l.b16 %v6024
    %v6684 = vunpack.c.l.b16 %v6025
    %v6685 = vunpack.c.h.b16 %v6025
    %v6686 = vunpack.c.l.b16 %v6026
    %v6687 = vunpack.c.l.b16 %v6027
    %v6688 = vunpack.c.h.b16 %v6027
    %v6689 = vunpack.c.l.b16 %v6028
    %v6690 = vunpack.c.l.b16 %v6029
    %v6691 = vunpack.c.h.b16 %v6029
    %v6692 = vunpack.c.l.b16 %v6030
    %v6693 = vunpack.c.l.b16 %v6031
    %v6694 = vunpack.c.h.b16 %v6031
    %v6695 = vunpack.c.l.b16 %v6032
    %v6696 = vunpack.c.l.b16 %v6033
    %v6697 = vunpack.c.h.b16 %v6033
    %v6698 = vunpack.c.l.b16 %v6034
    %v6699 = vunpack.c.l.b16 %v6035
    %v6700 = vunpack.c.h.b16 %v6035
    %v6701 = vunpack.c.l.b16 %v6036
    %v6702 = vunpack.c.l.b16 %v6037
    %v6703 = vunpack.c.h.b16 %v6037
    %v6704 = vunpack.c.l.b16 %v6038
    %v6705 = vunpack.c.l.b16 %v6039
    %v6706 = vunpack.c.h.b16 %v6039
    %v6707 = vunpack.c.l.b16 %v6040
    %v6708 = vunpack.c.l.b16 %v6041
    %v6709 = vunpack.c.h.b16 %v6041
    %v6710 = vunpack.c.l.b16 %v6042
    %v6711 = vunpack.c.l.b16 %v6043
    %v6712 = vunpack.c.h.b16 %v6043
    %v6713 = vunpack.c.l.b16 %v6044
    %v6714 = vunpack.c.l.b16 %v6045
    %v6715 = vunpack.c.h.b16 %v6045
    %v6716 = vunpack.c.l.b16 %v6046
    %v6717 = vunpack.c.l.b16 %v6047
    %v6718 = vunpack.c.h.b16 %v6047
    %v6719 = vunpack.c.l.b16 %v6048
    %v6720 = vunpack.c.l.b16 %v6049
    %v6721 = vunpack.c.h.b16 %v6049
    %v6722 = vunpack.c.l.b16 %v6050
    %v6723 = vunpack.c.l.b16 %v6051
    %v6724 = vunpack.c.h.b16 %v6051
    %v6725 = vunpack.c.l.b16 %v6052
    %v6726 = vunpack.c.l.b16 %v6053
    %v6727 = vunpack.c.h.b16 %v6053
    %v6728 = vunpack.c.l.b16 %v6054
    %v6729 = vunpack.c.l.b16 %v6055
    %v6730 = vunpack.c.h.b16 %v6055
    %v6731 = vunpack.c.l.b16 %v6056
    %v6732 = vunpack.c.l.b16 %v6057
    %v6733 = vunpack.c.h.b16 %v6057
    %v6734 = vunpack.c.l.b16 %v6058
    %v6735 = vunpack.c.l.b16 %v6059
    %v6736 = vunpack.c.h.b16 %v6059
    %v6737 = vunpack.c.l.b16 %v6060
    %v6738 = vunpack.c.l.b16 %v6061
    %v6739 = vunpack.c.h.b16 %v6061
    %v6740 = vunpack.c.l.b16 %v6062
    %v6741 = vunpack.c.l.b16 %v6063
    %v6742 = vunpack.c.h.b16 %v6063
    %v6743 = vunpack.c.l.b16 %v6064
    %v6744 = vunpack.c.l.b16 %v6065
    %v6745 = vunpack.c.h.b16 %v6065
    %v6746 = vunpack.c.l.b16 %v6066
    %v6747 = vunpack.c.l.b16 %v6067
    %v6748 = vunpack.c.h.b16 %v6067
    %v6749 = vunpack.c.l.b16 %v6068
    %v6750 = vunpack.c.l.b16 %v6069
    %v6751 = vunpack.c.h.b16 %v6069
    %v6752 = vunpack.c.l.b16 %v6070
    %v6753 = vunpack.c.l.b16 %v6071
    %v6754 = vunpack.c.h.b16 %v6071
    %v6755 = vunpack.c.l.b16 %v6072
    %v6756 = vunpack.c.l.b16 %v6073
    %v6757 = vunpack.c.h.b16 %v6073
    %v6758 = vunpack.c.l.b16 %v6074
    %v6759 = vunpack.c.l.b16 %v6075
    %v6760 = vunpack.c.h.b16 %v6075
    %v6761 = vunpack.c.l.b16 %v6076
    %v6762 = vunpack.c.l.b16 %v6077
    %v6763 = vunpack.c.h.b16 %v6077
    %v6764 = vunpack.c.l.b16 %v6078
    %v6765 = vunpack.c.l.b16 %v6079
    %v6766 = vunpack.c.h.b16 %v6079
    %v6767 = vunpack.c.l.b16 %v6080
    %v6768 = vunpack.c.l.b16 %v6081
    %v6769 = vunpack.c.h.b16 %v6081
    %v6770 = vunpack.c.l.b16 %v6082
    %v6771 = vunpack.c.l.b16 %v6083
    %v6772 = vunpack.c.h.b16 %v6083
    %v6773 = vunpack.c.l.b16 %v6084
    %v6774 = vunpack.c.l.b16 %v6085
    %v6775 = vunpack.c.h.b16 %v6085
    %v6776 = vunpack.c.l.b16 %v6086
    %v6777 = vunpack.c.l.b16 %v6087
    %v6778 = vunpack.c.h.b16 %v6087
    %v6779 = vunpack.c.l.b16 %v6088
    %v6780 = vunpack.c.l.b16 %v6089
    %v6781 = vunpack.c.h.b16 %v6089
    %v6782 = vunpack.c.l.b16 %v6090
    %v6783 = vunpack.c.l.b16 %v6091
    %v6784 = vunpack.c.h.b16 %v6091
    %v6785 = vunpack.c.l.b16 %v6092
    %v6786 = vunpack.c.l.b16 %v6093
    %v6787 = vunpack.c.h.b16 %v6093
    %v6788 = vunpack.c.l.b16 %v6094
    %v6789 = vunpack.c.l.b16 %v6095
    %v6790 = vunpack.c.h.b16 %v6095
    %v6791 = vunpack.c.l.b16 %v6096
    %v6792 = vunpack.c.l.b16 %v6097
    %v6793 = vunpack.c.h.b16 %v6097
    %v6794 = vunpack.c.l.b16 %v6098
    %v6795 = vunpack.c.l.b16 %v6099
    %v6796 = vunpack.c.h.b16 %v6099
    %v6797 = vunpack.c.l.b16 %v6100
    %v6798 = vunpack.c.l.b16 %v6101
    %v6799 = vunpack.c.h.b16 %v6101
    %v6800 = vunpack.c.l.b16 %v6102
    %v6801 = vunpack.c.l.b16 %v6103
    %v6802 = vunpack.c.h.b16 %v6103
    %v6803 = vunpack.c.l.b16 %v6104
    %v6804 = vunpack.c.l.b16 %v6105
    %v6805 = vunpack.c.h.b16 %v6105
    %v6806 = vunpack.c.l.b16 %v6106
    %v6807 = vunpack.c.l.b16 %v6107
    %v6808 = vunpack.c.h.b16 %v6107
    %v6809 = vunpack.c.l.b16 %v6108
    %v6810 = vunpack.c.l.b16 %v6109
    %v6811 = vunpack.c.h.b16 %v6109
    %v6812 = vunpack.c.l.b16 %v6110
    %v6813 = vunpack.c.l.b16 %v6111
    %v6814 = vunpack.c.h.b16 %v6111
    %v6815 = vunpack.c.l.b16 %v6112
    %v6816 = vunpack.c.l.b16 %v6113
    %v6817 = vunpack.c.h.b16 %v6113
    %v6818 = vunpack.c.l.b16 %v6114
    %v6819 = vunpack.c.l.b16 %v6115
    %v6820 = vunpack.c.h.b16 %v6115
    %v6821 = vunpack.c.l.b16 %v6116
    %v6822 = vunpack.c.l.b16 %v6117
    %v6823 = vunpack.c.h.b16 %v6117
    %v6824 = vunpack.c.l.b16 %v6118
    %v6825 = vunpack.c.l.b16 %v6119
    %v6826 = vunpack.c.h.b16 %v6119
    %v6827 = vunpack.c.l.b16 %v6120
    %v6828 = vunpack.c.l.b16 %v6121
    %v6829 = vunpack.c.h.b16 %v6121
    %v6830 = vunpack.c.l.b16 %v6122
    %v6831 = vunpack.c.l.b16 %v6123
    %v6832 = vunpack.c.h.b16 %v6123
    %v6833 = vunpack.c.l.b16 %v6124
    %v6834 = vunpack.c.l.b16 %v6125
    %v6835 = vunpack.c.h.b16 %v6125
    %v6836 = vunpack.c.l.b16 %v6126
    %v6837 = vunpack.c.l.b16 %v6127
    %v6838 = vunpack.c.h.b16 %v6127
    %v6839 = vunpack.c.l.b16 %v6128
    %v6840 = vunpack.c.l.b16 %v6129
    %v6841 = vunpack.c.h.b16 %v6129
    %v6842 = vunpack.c.l.b16 %v6130
    %v6843 = vunpack.c.l.b16 %v6131
    %v6844 = vunpack.c.h.b16 %v6131
    %v6845 = vunpack.c.l.b16 %v6132
    %v6846 = vunpack.c.l.b16 %v6133
    %v6847 = vunpack.c.h.b16 %v6133
    %v6848 = vunpack.c.l.b16 %v6134
    %v6849 = vunpack.c.l.b16 %v6135
    %v6850 = vunpack.c.h.b16 %v6135
    %v6851 = vunpack.c.l.b16 %v6136
    %v6852 = vunpack.c.l.b16 %v6137
    %v6853 = vunpack.c.h.b16 %v6137
    %v6854 = vunpack.c.l.b16 %v6138
    %v6855 = vunpack.c.l.b16 %v6139
    %v6856 = vunpack.c.h.b16 %v6139
    %v6857 = vunpack.c.l.b16 %v6140
    %v6858 = vunpack.c.l.b16 %v6141
    %v6859 = vunpack.c.h.b16 %v6141
    %v6860 = vunpack.c.l.b16 %v6142
    %v6861 = vunpack.c.l.b16 %v6143
    %v6862 = vunpack.c.h.b16 %v6143
    %v6863 = vunpack.c.l.b16 %v6144
    %v6864 = vunpack.c.l.b16 %v6145
    %v6865 = vunpack.c.h.b16 %v6145
    %v6866 = vunpack.c.l.b16 %v6146
    %v6867 = vunpack.c.l.b16 %v6147
    %v6868 = vunpack.c.h.b16 %v6147
    %v6869 = vunpack.c.l.b16 %v6148
    %v6870 = vunpack.c.l.b16 %v6149
    %v6871 = vunpack.c.h.b16 %v6149
    %v6872 = vunpack.c.l.b16 %v6150
    %v6873 = vunpack.c.l.b16 %v6151
    %v6874 = vunpack.c.h.b16 %v6151
    %v6875 = vunpack.c.l.b16 %v6152
    %v6876 = vunpack.c.l.b16 %v6153
    %v6877 = vunpack.c.h.b16 %v6153
    %v6878 = vunpack.c.l.b16 %v6154
    %v6879 = vunpack.c.l.b16 %v6155
    %v6880 = vunpack.c.h.b16 %v6155
    %v6881 = vunpack.c.l.b16 %v6156
    %v6882 = vunpack.c.l.b16 %v6157
    %v6883 = vunpack.c.h.b16 %v6157
    %v6884 = vunpack.c.l.b16 %v6158
    %v6885 = vunpack.c.l.b16 %v6159
    %v6886 = vunpack.c.h.b16 %v6159
    %v6887 = vunpack.c.l.b16 %v6160
    %v6888 = vunpack.c.l.b16 %v6161
    %v6889 = vunpack.c.h.b16 %v6161
    %v6890 = vunpack.c.l.b16 %v6162
    %v6891 = vunpack.c.l.b16 %v6163
    %v6892 = vunpack.c.h.b16 %v6163
    %v6893 = vunpack.c.l.b16 %v6164
    %v6894 = vunpack.c.l.b16 %v6165
    %v6895 = vunpack.c.h.b16 %v6165
    %v6896 = vunpack.c.l.b16 %v6166
    %v6897 = vunpack.c.l.b16 %v6167
    %v6898 = vunpack.c.h.b16 %v6167
    %v6899 = vunpack.c.l.b16 %v6168
    %v6900 = vunpack.c.l.b16 %v6169
    %v6901 = vunpack.c.h.b16 %v6169
    %v6902 = vunpack.c.l.b16 %v6170
    %v6903 = vunpack.c.l.b16 %v6171
    %v6904 = vunpack.c.h.b16 %v6171
    %v6905 = vunpack.c.l.b16 %v6172
    %v6906 = vunpack.c.l.b16 %v6173
    %v6907 = vunpack.c.h.b16 %v6173
    %v6908 = vunpack.c.l.b16 %v6174
    %v6909 = vunpack.c.l.b16 %v6175
    %v6910 = vunpack.c.h.b16 %v6175
    %v6911 = vunpack.c.l.b16 %v6176
    %v6912 = vunpack.c.l.b16 %v6177
    %v6913 = vunpack.c.h.b16 %v6177
    %v6914 = vunpack.c.l.b16 %v6178
    %v6915 = vunpack.c.l.b16 %v6179
    %v6916 = vunpack.c.h.b16 %v6179
    %v6917 = vunpack.c.l.b16 %v6180
    %v6918 = vunpack.c.l.b16 %v6181
    %v6919 = vunpack.c.h.b16 %v6181
    %v6920 = vunpack.c.l.b16 %v6182
    %v6921 = vunpack.c.l.b16 %v6183
    %v6922 = vunpack.c.h.b16 %v6183
    %v6923 = vunpack.c.l.b16 %v6184
    %v6924 = vunpack.c.l.b16 %v6185
    %v6925 = vunpack.c.h.b16 %v6185
    %v6926 = vunpack.c.l.b16 %v6186
    %v6927 = vunpack.c.l.b16 %v6187
    %v6928 = vunpack.c.h.b16 %v6187
    %v6929 = vunpack.c.l.b16 %v6188
    %v6930 = vunpack.c.l.b16 %v6189
    %v6931 = vunpack.c.h.b16 %v6189
    %v6932 = vunpack.c.l.b16 %v6190
    %v6933 = vunpack.c.l.b16 %v6191
    %v6934 = vunpack.c.h.b16 %v6191
    %v6935 = vunpack.c.l.b16 %v6192
    %v6936 = vunpack.c.l.b16 %v6193
    %v6937 = vunpack.c.h.b16 %v6193
    %v6938 = vunpack.c.l.b16 %v6194
    %v6939 = vunpack.c.l.b16 %v6195
    %v6940 = vunpack.c.h.b16 %v6195
    %v6941 = vunpack.c.l.b16 %v6196
    %v6942 = vunpack.c.l.b16 %v6197
    %v6943 = vunpack.c.h.b16 %v6197
    %v6944 = vunpack.c.l.b16 %v6198
    %v6945 = vunpack.c.l.b16 %v6199
    %v6946 = vunpack.c.h.b16 %v6199
    %v6947 = vunpack.c.l.b16 %v6200
    %v6948 = vunpack.c.l.b16 %v6201
    %v6949 = vunpack.c.h.b16 %v6201
    %v6950 = vunpack.c.l.b16 %v6202
    %v6951 = vunpack.c.l.b16 %v6203
    %v6952 = vunpack.c.h.b16 %v6203
    %v6953 = vunpack.c.l.b16 %v6204
    %v6954 = vunpack.c.l.b16 %v6205
    %v6955 = vunpack.c.h.b16 %v6205
    %v6956 = vunpack.c.l.b16 %v6206
    %v6957 = vunpack.c.l.b16 %v6207
    %v6958 = vunpack.c.h.b16 %v6207
    %v6959 = vunpack.c.l.b16 %v6208
    %v6960 = vunpack.c.l.b16 %v6209
    %v6961 = vunpack.c.h.b16 %v6209
    %v6962 = vunpack.c.l.b16 %v6210
    %v6963 = vunpack.c.l.b16 %v6211
    %v6964 = vunpack.c.h.b16 %v6211
    %v6965 = vunpack.c.l.b16 %v6212
    %v6966 = vunpack.c.l.b16 %v6213
    %v6967 = vunpack.c.h.b16 %v6213
    %v6968 = vunpack.c.l.b16 %v6214
    %v6969 = vunpack.c.l.b16 %v6215
    %v6970 = vunpack.c.h.b16 %v6215
    %v6971 = vunpack.c.l.b16 %v6216
    %v6972 = vunpack.c.l.b16 %v6217
    %v6973 = vunpack.c.h.b16 %v6217
    %v6974 = vunpack.c.l.b16 %v6218
    %v6975 = vunpack.c.l.b16 %v6219
    %v6976 = vunpack.c.h.b16 %v6219
    %v6977 = vunpack.c.l.b16 %v6220
    %v6978 = vunpack.c.l.b16 %v6221
    %v6979 = vunpack.c.h.b16 %v6221
    %v6980 = vunpack.c.l.b16 %v6222
    %v6981 = vunpack.c.l.b16 %v6223
    %v6982 = vunpack.c.h.b16 %v6223
    %v6983 = vunpack.c.l.b16 %v6224
    %v6984 = vunpack.c.l.b16 %v6225
    %v6985 = vunpack.c.h.b16 %v6225
    %v6986 = vunpack.c.l.b16 %v6226
    %v6987 = vunpack.c.l.b16 %v6227
    %v6988 = vunpack.c.h.b16 %v6227
    %v6989 = vunpack.c.l.b16 %v6228
    %v6990 = vunpack.c.l.b16 %v6229
    %v6991 = vunpack.c.h.b16 %v6229
    %v6992 = vunpack.c.l.b16 %v6230
    %v6993 = vunpack.c.l.b16 %v6231
    %v6994 = vunpack.c.h.b16 %v6231
    %v6995 = vunpack.c.l.b16 %v6232
    %v6996 = vunpack.c.l.b16 %v6233
    %v6997 = vunpack.c.h.b16 %v6233
    %v6998 = vunpack.c.l.b16 %v6234
    %v6999 = vunpack.c.l.b16 %v6235
    %v7000 = vunpack.c.h.b16 %v6235
    %v7001 = vunpack.c.l.b16 %v6236
    %v7002 = vunpack.c.l.b16 %v6237
    %v7003 = vunpack.c.h.b16 %v6237
    %v7004 = vunpack.c.l.b16 %v6238
    %v7005 = vunpack.c.l.b16 %v6239
    %v7006 = vunpack.c.h.b16 %v6239
    %v7007 = vunpack.c.l.b16 %v6240
    %v7008 = vunpack.c.l.b16 %v6241
    %v7009 = vunpack.c.h.b16 %v6241
    %v7010 = vunpack.c.l.b16 %v6242
    %v7011 = vunpack.c.l.b16 %v6243
    %v7012 = vunpack.c.h.b16 %v6243
    %v7013 = vunpack.c.l.b16 %v6244
    %v7014 = vunpack.c.l.b16 %v6245
    %v7015 = vunpack.c.h.b16 %v6245
    %v7016 = vunpack.c.l.b16 %v6246
    %v7017 = vunpack.c.l.b16 %v6247
    %v7018 = vunpack.c.h.b16 %v6247
    %v7019 = vunpack.c.l.b16 %v6248
    %v7020 = vunpack.c.l.b16 %v6249
    %v7021 = vunpack.c.h.b16 %v6249
    %v7022 = vunpack.c.l.b16 %v6250
    %v7023 = vunpack.c.l.b16 %v6251
    %v7024 = vunpack.c.h.b16 %v6251
    %v7025 = vunpack.c.l.b16 %v6252
    %v7026 = vunpack.c.l.b16 %v6253
    %v7027 = vunpack.c.h.b16 %v6253
    %v7028 = vunpack.c.l.b16 %v6254
    %v7029 = vunpack.c.l.b16 %v6255
    %v7030 = vunpack.c.h.b16 %v6255
    %v7031 = vunpack.c.l.b16 %v6256
    %v7032 = vunpack.c.l.b16 %v6257
    %v7033 = vunpack.c.h.b16 %v6257
    %v7034 = vunpack.c.l.b16 %v6258
    %v7035 = vunpack.c.l.b16 %v6259
    %v7036 = vunpack.c.h.b16 %v6259
    %v7037 = vunpack.c.l.b16 %v6260
    %v7038 = vunpack.c.l.b16 %v6261
    %v7039 = vunpack.c.h.b16 %v6261
    %v7040 = vunpack.c.l.b16 %v6262
    %v7041 = vunpack.c.l.b16 %v6263
    %v7042 = vunpack.c.h.b16 %v6263
    %v7043 = vunpack.c.l.b16 %v6264
    %v7044 = vunpack.c.l.b16 %v6265
    %v7045 = vunpack.c.h.b16 %v6265
    %v7046 = vunpack.c.l.b16 %v6266
    %v7047 = vunpack.c.l.b16 %v6267
    %v7048 = vunpack.c.h.b16 %v6267
    %v7049 = vunpack.c.l.b16 %v6268
    %v7050 = vunpack.c.l.b16 %v6269
    %v7051 = vunpack.c.h.b16 %v6269
    %v7052 = vunpack.c.l.b16 %v6270
    %v7053 = vunpack.c.l.b16 %v6271
    %v7054 = vunpack.c.h.b16 %v6271
    %v7055 = vunpack.c.l.b16 %v6272
    %v7056 = vunpack.c.l.b16 %v6273
    %v7057 = vunpack.c.h.b16 %v6273
    %v7058 = vunpack.c.l.b16 %v6274
    %v7059 = vunpack.c.l.b16 %v6275
    %v7060 = vunpack.c.h.b16 %v6275
    %v7061 = vunpack.c.l.b16 %v6276
    %v7062 = vunpack.c.l.b16 %v6277
    %v7063 = vunpack.c.h.b16 %v6277
    %v7064 = vunpack.c.l.b16 %v6278
    %v7065 = vunpack.c.l.b16 %v6279
    %v7066 = vunpack.c.h.b16 %v6279
    %v7067 = vunpack.c.l.b16 %v6280
    %v7068 = vunpack.c.l.b16 %v6281
    %v7069 = vunpack.c.h.b16 %v6281
    %v7070 = vunpack.c.l.b16 %v6282
    %v7071 = vunpack.c.l.b16 %v6283
    %v7072 = vunpack.c.h.b16 %v6283
    %v7073 = vunpack.c.l.b16 %v6284
    %v7074 = vunpack.c.l.b16 %v6285
    %v7075 = vunpack.c.h.b16 %v6285
    %v7076 = vunpack.c.l.b16 %v6286
    %v7077 = vunpack.c.l.b16 %v6287
    %v7078 = vunpack.c.h.b16 %v6287
    %v7079 = vunpack.c.l.b16 %v6288
    %v7080 = vunpack.c.l.b16 %v6289
    %v7081 = vunpack.c.h.b16 %v6289
    %v7082 = vunpack.c.l.b16 %v6290
    %v7083 = vunpack.c.l.b16 %v6291
    %v7084 = vunpack.c.h.b16 %v6291
    %v7085 = vunpack.c.l.b16 %v6292
    %v7086 = vunpack.c.l.b16 %v6293
    %v7087 = vunpack.c.h.b16 %v6293
    %v7088 = vunpack.c.l.b16 %v6294
    %v7089 = vunpack.c.l.b16 %v6295
    %v7090 = vunpack.c.h.b16 %v6295
    %v7091 = vunpack.c.l.b16 %v6296
    %v7092 = vunpack.c.l.b16 %v6297
    %v7093 = vunpack.c.h.b16 %v6297
    %v7094 = vunpack.c.l.b16 %v6298
    %v7095 = vunpack.c.l.b16 %v6299
    %v7096 = vunpack.c.h.b16 %v6299
    %v7097 = vunpack.c.l.b16 %v6300
    %v7098 = vunpack.c.l.b16 %v6301
    %v7099 = vunpack.c.h.b16 %v6301
    %v7100 = vunpack.c.l.b16 %v6302
    %v7101 = vunpack.c.l.b16 %v6303
    %v7102 = vunpack.c.h.b16 %v6303
    %v7103 = vunpack.c.l.b16 %v6304
    %v7104 = vunpack.c.l.b16 %v6305
    %v7105 = vunpack.c.h.b16 %v6305
    %v7106 = vunpack.c.l.b16 %v6306
    %v7107 = vunpack.c.l.b16 %v6307
    %v7108 = vunpack.c.h.b16 %v6307
    %v7109 = vunpack.c.l.b16 %v6308
    %v7110 = vunpack.c.l.b16 %v6309
    %v7111 = vunpack.c.h.b16 %v6309
    %v7112 = vunpack.c.l.b16 %v6310
    %v7113 = vunpack.c.l.b16 %v6311
    %v7114 = vunpack.c.h.b16 %v6311
    %v7115 = vunpack.c.l.b16 %v6312
    %v7116 = vunpack.c.l.b16 %v6313
    %v7117 = vunpack.c.h.b16 %v6313
    %v7118 = vunpack.c.l.b16 %v6314
    %v7119 = vunpack.c.l.b16 %v6315
    %v7120 = vunpack.c.h.b16 %v6315
    %v7121 = vunpack.c.l.b16 %v6316
    %v7122 = vunpack.c.l.b16 %v6317
    %v7123 = vunpack.c.h.b16 %v6317
    %v7124 = vunpack.c.l.b16 %v6318
    %v7125 = vunpack.c.l.b16 %v6319
    %v7126 = vunpack.c.h.b16 %v6319
    %v7127 = vunpack.c.l.b16 %v6320
    %v7128 = vpack.c.b16 %v6651, %v6648
    %v7129 = vpack.c.b16 %v6652, %v6649
    %v7130 = vpack.c.b16 %v6653, %v6650
    %v7131 = vpack.c.b16 %v6657, %v6654
    %v7132 = vpack.c.b16 %v6658, %v6655
    %v7133 = vpack.c.b16 %v6659, %v6656
    %v7134 = vpack.c.b16 %v6663, %v6660
    %v7135 = vpack.c.b16 %v6664, %v6661
    %v7136 = vpack.c.b16 %v6665, %v6662
    %v7137 = vpack.c.b16 %v6669, %v6666
    %v7138 = vpack.c.b16 %v6670, %v6667
    %v7139 = vpack.c.b16 %v6671, %v6668
    %v7140 = vpack.c.b16 %v6675, %v6672
    %v7141 = vpack.c.b16 %v6676, %v6673
    %v7142 = vpack.c.b16 %v6677, %v6674
    %v7143 = vpack.c.b16 %v6681, %v6678
    %v7144 = vpack.c.b16 %v6682, %v6679
    %v7145 = vpack.c.b16 %v6683, %v6680
    %v7146 = vpack.c.b16 %v6687, %v6684
    %v7147 = vpack.c.b16 %v6688, %v6685
    %v7148 = vpack.c.b16 %v6689, %v6686
    %v7149 = vpack.c.b16 %v6693, %v6690
    %v7150 = vpack.c.b16 %v6694, %v6691
    %v7151 = vpack.c.b16 %v6695, %v6692
    %v7152 = vpack.c.b16 %v6699, %v6696
    %v7153 = vpack.c.b16 %v6700, %v6697
    %v7154 = vpack.c.b16 %v6701, %v6698
    %v7155 = vpack.c.b16 %v6705, %v6702
    %v7156 = vpack.c.b16 %v6706, %v6703
    %v7157 = vpack.c.b16 %v6707, %v6704
    %v7158 = vpack.c.b16 %v6711, %v6708
    %v7159 = vpack.c.b16 %v6712, %v6709
    %v7160 = vpack.c.b16 %v6713, %v6710
    %v7161 = vpack.c.b16 %v6717, %v6714
    %v7162 = vpack.c.b16 %v6718, %v6715
    %v7163 = vpack.c.b16 %v6719, %v6716
    %v7164 = vpack.c.b16 %v6723, %v6720
    %v7165 = vpack.c.b16 %v6724, %v6721
    %v7166 = vpack.c.b16 %v6725, %v6722
    %v7167 = vpack.c.b16 %v6729, %v6726
    %v7168 = vpack.c.b16 %v6730, %v6727
    %v7169 = vpack.c.b16 %v6731, %v6728
    %v7170 = vpack.c.b16 %v6735, %v6732
    %v7171 = vpack.c.b16 %v6736, %v6733
    %v7172 = vpack.c.b16 %v6737, %v6734
    %v7173 = vpack.c.b16 %v6741, %v6738
    %v7174 = vpack.c.b16 %v6742, %v6739
    %v7175 = vpack.c.b16 %v6743, %v6740
    %v7176 = vpack.c.b16 %v6747, %v6744
    %v7177 = vpack.c.b16 %v6748, %v6745
    %v7178 = vpack.c.b16 %v6749, %v6746
    %v7179 = vpack.c.b16 %v6753, %v6750
    %v7180 = vpack.c.b16 %v6754, %v6751
    %v7181 = vpack.c.b16 %v6755, %v6752
    %v7182 = vpack.c.b16 %v6759, %v6756
    %v7183 = vpack.c.b16 %v6760, %v6757
    %v7184 = vpack.c.b16 %v6761, %v6758
    %v7185 = vpack.c.b16 %v6765, %v6762
    %v7186 = vpack.c.b16 %v6766, %v6763
    %v7187 = vpack.c.b16 %v6767, %v6764
    %v7188 = vpack.c.b16 %v6771, %v6768
    %v7189 = vpack.c.b16 %v6772, %v6769
    %v7190 = vpack.c.b16 %v6773, %v6770
    %v7191 = vpack.c.b16 %v6777, %v6774
    %v7192 = vpack.c.b16 %v6778, %v6775
    %v7193 = vpack.c.b16 %v6779, %v6776
    %v7194 = vpack.c.b16 %v6783, %v6780
    %v7195 = vpack.c.b16 %v6784, %v6781
    %v7196 = vpack.c.b16 %v6785, %v6782
    %v7197 = vpack.c.b16 %v6789, %v6786
    %v7198 = vpack.c.b16 %v6790, %v6787
    %v7199 = vpack.c.b16 %v6791, %v6788
    %v7200 = vpack.c.b16 %v6795, %v6792
    %v7201 = vpack.c.b16 %v6796, %v6793
    %v7202 = vpack.c.b16 %v6797, %v6794
    %v7203 = vpack.c.b16 %v6801, %v6798
    %v7204 = vpack.c.b16 %v6802, %v6799
    %v7205 = vpack.c.b16 %v6803, %v6800
    %v7206 = vpack.c.b16 %v6807, %v6804
    %v7207 = vpack.c.b16 %v6808, %v6805
    %v7208 = vpack.c.b16 %v6809, %v6806
    %v7209 = vpack.c.b16 %v6813, %v6810
    %v7210 = vpack.c.b16 %v6814, %v6811
    %v7211 = vpack.c.b16 %v6815, %v6812
    %v7212 = vpack.c.b16 %v6819, %v6816
    %v7213 = vpack.c.b16 %v6820, %v6817
    %v7214 = vpack.c.b16 %v6821, %v6818
    %v7215 = vpack.c.b16 %v6825, %v6822
    %v7216 = vpack.c.b16 %v6826, %v6823
    %v7217 = vpack.c.b16 %v6827, %v6824
    %v7218 = vpack.c.b16 %v6831, %v6828
    %v7219 = vpack.c.b16 %v6832, %v6829
    %v7220 = vpack.c.b16 %v6833, %v6830
    %v7221 = vpack.c.b16 %v6837, %v6834
    %v7222 = vpack.c.b16 %v6838, %v6835
    %v7223 = vpack.c.b16 %v6839, %v6836
    %v7224 = vpack.c.b16 %v6843, %v6840
    %v7225 = vpack.c.b16 %v6844, %v6841
    %v7226 = vpack.c.b16 %v6845, %v6842
    %v7227 = vpack.c.b16 %v6849, %v6846
    %v7228 = vpack.c.b16 %v6850, %v6847
    %v7229 = vpack.c.b16 %v6851, %v6848
    %v7230 = vpack.c.b16 %v6855, %v6852
    %v7231 = vpack.c.b16 %v6856, %v6853
    %v7232 = vpack.c.b16 %v6857, %v6854
    %v7233 = vpack.c.b16 %v6861, %v6858
    %v7234 = vpack.c.b16 %v6862, %v6859
    %v7235 = vpack.c.b16 %v6863, %v6860
    %v7236 = vpack.c.b16 %v6867, %v6864
    %v7237 = vpack.c.b16 %v6868, %v6865
    %v7238 = vpack.c.b16 %v6869, %v6866
    %v7239 = vpack.c.b16 %v6873, %v6870
    %v7240 = vpack.c.b16 %v6874, %v6871
    %v7241 = vpack.c.b16 %v6875, %v6872
    %v7242 = vpack.c.b16 %v6879, %v6876
    %v7243 = vpack.c.b16 %v6880, %v6877
    %v7244 = vpack.c.b16 %v6881, %v6878
    %v7245 = vpack.c.b16 %v6885, %v6882
    %v7246 = vpack.c.b16 %v6886, %v6883
    %v7247 = vpack.c.b16 %v6887, %v6884
    %v7248 = vpack.c.b16 %v6891, %v6888
    %v7249 = vpack.c.b16 %v6892, %v6889
    %v7250 = vpack.c.b16 %v6893, %v6890
    %v7251 = vpack.c.b16 %v6897, %v6894
    %v7252 = vpack.c.b16 %v6898, %v6895
    %v7253 = vpack.c.b16 %v6899, %v6896
    %v7254 = vpack.c.b16 %v6903, %v6900
    %v7255 = vpack.c.b16 %v6904, %v6901
    %v7256 = vpack.c.b16 %v6905, %v6902
    %v7257 = vpack.c.b16 %v6909, %v6906
    %v7258 = vpack.c.b16 %v6910, %v6907
    %v7259 = vpack.c.b16 %v6911, %v6908
    %v7260 = vpack.c.b16 %v6915, %v6912
    %v7261 = vpack.c.b16 %v6916, %v6913
    %v7262 = vpack.c.b16 %v6917, %v6914
    %v7263 = vpack.c.b16 %v6921, %v6918
    %v7264 = vpack.c.b16 %v6922, %v6919
    %v7265 = vpack.c.b16 %v6923, %v6920
    %v7266 = vpack.c.b16 %v6927, %v6924
    %v7267 = vpack.c.b16 %v6928, %v6925
    %v7268 = vpack.c.b16 %v6929, %v6926
    %v7269 = vpack.c.b16 %v6933, %v6930
    %v7270 = vpack.c.b16 %v6934, %v6931
    %v7271 = vpack.c.b16 %v6935, %v6932
    %v7272 = vpack.c.b16 %v6939, %v6936
    %v7273 = vpack.c.b16 %v6940, %v6937
    %v7274 = vpack.c.b16 %v6941, %v6938
    %v7275 = vpack.c.b16 %v6945, %v6942
    %v7276 = vpack.c.b16 %v6946, %v6943
    %v7277 = vpack.c.b16 %v6947, %v6944
    %v7278 = vpack.c.b16 %v6951, %v6948
    %v7279 = vpack.c.b16 %v6952, %v6949
    %v7280 = vpack.c.b16 %v6953, %v6950
    %v7281 = vpack.c.b16 %v6957, %v6954
    %v7282 = vpack.c.b16 %v6958, %v6955
    %v7283 = vpack.c.b16 %v6959, %v6956
    %v7284 = vpack.c.b16 %v6963, %v6960
    %v7285 = vpack.c.b16 %v6964, %v6961
    %v7286 = vpack.c.b16 %v6965, %v6962
    %v7287 = vpack.c.b16 %v6969, %v6966
    %v7288 = vpack.c.b16 %v6970, %v6967
    %v7289 = vpack.c.b16 %v6971, %v6968
    %v7290 = vpack.c.b16 %v6975, %v6972
    %v7291 = vpack.c.b16 %v6976, %v6973
    %v7292 = vpack.c.b16 %v6977, %v6974
    %v7293 = vpack.c.b16 %v6981, %v6978
    %v7294 = vpack.c.b16 %v6982, %v6979
    %v7295 = vpack.c.b16 %v6983, %v6980
    %v7296 = vpack.c.b16 %v6987, %v6984
    %v7297 = vpack.c.b16 %v6988, %v6985
    %v7298 = vpack.c.b16 %v6989, %v6986
    %v7299 = vpack.c.b16 %v6993, %v6990
    %v7300 = vpack.c.b16 %v6994, %v6991
    %v7301 = vpack.c.b16 %v6995, %v6992
    %v7302 = vpack.c.b16 %v6999, %v6996
    %v7303 = vpack.c.b16 %v7000, %v6997
    %v7304 = vpack.c.b16 %v7001, %v6998
    %v7305 = vpack.c.b16 %v7005, %v7002
    %v7306 = vpack.c.b16 %v7006, %v7003
    %v7307 = vpack.c.b16 %v7007, %v7004
    %v7308 = vpack.c.b16 %v7011, %v7008
    %v7309 = vpack.c.b16 %v7012, %v7009
    %v7310 = vpack.c.b16 %v7013, %v7010
    %v7311 = vpack.c.b16 %v7017, %v7014
    %v7312 = vpack.c.b16 %v7018, %v7015
    %v7313 = vpack.c.b16 %v7019, %v7016
    %v7314 = vpack.c.b16 %v7023, %v7020
    %v7315 = vpack.c.b16 %v7024, %v7021
    %v7316 = vpack.c.b16 %v7025, %v7022
    %v7317 = vpack.c.b16 %v7029, %v7026
    %v7318 = vpack.c.b16 %v7030, %v7027
    %v7319 = vpack.c.b16 %v7031, %v7028
    %v7320 = vpack.c.b16 %v7035, %v7032
    %v7321 = vpack.c.b16 %v7036, %v7033
    %v7322 = vpack.c.b16 %v7037, %v7034
    %v7323 = vpack.c.b16 %v7041, %v7038
    %v7324 = vpack.c.b16 %v7042, %v7039
    %v7325 = vpack.c.b16 %v7043, %v7040
    %v7326 = vpack.c.b16 %v7047, %v7044
    %v7327 = vpack.c.b16 %v7048, %v7045
    %v7328 = vpack.c.b16 %v7049, %v7046
    %v7329 = vpack.c.b16 %v7053, %v7050
    %v7330 = vpack.c.b16 %v7054, %v7051
    %v7331 = vpack.c.b16 %v7055, %v7052
    %v7332 = vpack.c.b16 %v7059, %v7056
    %v7333 = vpack.c.b16 %v7060, %v7057
    %v7334 = vpack.c.b16 %v7061, %v7058
    %v7335 = vpack.c.b16 %v7065, %v7062
    %v7336 = vpack.c.b16 %v7066, %v7063
    %v7337 = vpack.c.b16 %v7067, %v7064
    %v7338 = vpack.c.b16 %v7071, %v7068
    %v7339 = vpack.c.b16 %v7072, %v7069
    %v7340 = vpack.c.b16 %v7073, %v7070
    %v7341 = vpack.c.b16 %v7077, %v7074
    %v7342 = vpack.c.b16 %v7078, %v7075
    %v7343 = vpack.c.b16 %v7079, %v7076
    %v7344 = vpack.c.b16 %v7083, %v7080
    %v7345 = vpack.c.b16 %v7084, %v7081
    %v7346 = vpack.c.b16 %v7085, %v7082
    %v7347 = vpack.c.b16 %v7089, %v7086
    %v7348 = vpack.c.b16 %v7090, %v7087
    %v7349 = vpack.c.b16 %v7091, %v7088
    %v7350 = vpack.c.b16 %v7095, %v7092
    %v7351 = vpack.c.b16 %v7096, %v7093
    %v7352 = vpack.c.b16 %v7097, %v7094
    %v7353 = vpack.c.b16 %v7101, %v7098
    %v7354 = vpack.c.b16 %v7102, %v7099
    %v7355 = vpack.c.b16 %v7103, %v7100
    %v7356 = vpack.c.b16 %v7107, %v7104
    %v7357 = vpack.c.b16 %v7108, %v7105
    %v7358 = vpack.c.b16 %v7109, %v7106
    %v7359 = vpack.c.b16 %v7113, %v7110
    %v7360 = vpack.c.b16 %v7114, %v7111
    %v7361 = vpack.c.b16 %v7115, %v7112
    %v7362 = vpack.c.b16 %v7119, %v7116
    %v7363 = vpack.c.b16 %v7120, %v7117
    %v7364 = vpack.c.b16 %v7121, %v7118
    %v7365 = vpack.c.b16 %v7125, %v7122
    %v7366 = vpack.c.b16 %v7126, %v7123
    %v7367 = vpack.c.b16 %v7127, %v7124
    %7608 = vmatpush.bf16.msra.mxu0 %v7149
    %7609 = vmatpush.bf16.msra.mxu0 %v7146
    %7610 = vmatpush.bf16.msra.mxu0 %v7143
    %7611 = vmatpush.bf16.msra.mxu0 %v7140
    %7612 = vmatpush.bf16.msra.mxu0 %v7137
    %7613 = vmatpush.bf16.msra.mxu0 %v7134
    %7614 = vmatpush.bf16.msra.mxu0 %v7131
    %7615 = vmatpush.bf16.msra.mxu0 %v7128
    %7616 = vmatmul.bf16.gmra.mxu0 %v5991
    %v7617 = vpop.f32.mrf.mxu0
    %v7618 = vadd.f32 %v6322, %v7617
    %v7619 = vpop.f32.mrf.mxu0
    %v7620 = vadd.f32 %v6322, %v7619
    %7621 = vdwg.mxu0
    %7622 = vmatpush.bf16.msra.mxu0 %v7173
    %7623 = vmatpush.bf16.msra.mxu0 %v7170
    %7624 = vmatpush.bf16.msra.mxu0 %v7167
    %7625 = vmatpush.bf16.msra.mxu0 %v7164
    %7626 = vmatpush.bf16.msra.mxu0 %v7161
    %7627 = vmatpush.bf16.msra.mxu0 %v7158
    %7628 = vmatpush.bf16.msra.mxu0 %v7155
    %7629 = vmatpush.bf16.msra.mxu0 %v7152
    %7630 = vmatmul.bf16.gmra.mxu0 %v5992
    %v7631 = vpop.f32.mrf.mxu0
    %v7632 = vadd.f32 %v7618, %v7631
    %v7633 = vpop.f32.mrf.mxu0
    %v7634 = vadd.f32 %v7620, %v7633
    %7635 = vdwg.mxu0
    %7636 = vmatpush.bf16.msra.mxu0 %v7197
    %7637 = vmatpush.bf16.msra.mxu0 %v7194
    %7638 = vmatpush.bf16.msra.mxu0 %v7191
    %7639 = vmatpush.bf16.msra.mxu0 %v7188
    %7640 = vmatpush.bf16.msra.mxu0 %v7185
    %7641 = vmatpush.bf16.msra.mxu0 %v7182
    %7642 = vmatpush.bf16.msra.mxu0 %v7179
    %7643 = vmatpush.bf16.msra.mxu0 %v7176
    %7644 = vmatmul.bf16.gmra.mxu0 %v5993
    %v7645 = vpop.f32.mrf.mxu0
    %v7646 = vadd.f32 %v7632, %v7645
    %v7647 = vpop.f32.mrf.mxu0
    %v7648 = vadd.f32 %v7634, %v7647
    %7649 = vdwg.mxu0
    %7650 = vmatpush.bf16.msra.mxu0 %v7221
    %7651 = vmatpush.bf16.msra.mxu0 %v7218
    %7652 = vmatpush.bf16.msra.mxu0 %v7215
    %7653 = vmatpush.bf16.msra.mxu0 %v7212
    %7654 = vmatpush.bf16.msra.mxu0 %v7209
    %7655 = vmatpush.bf16.msra.mxu0 %v7206
    %7656 = vmatpush.bf16.msra.mxu0 %v7203
    %7657 = vmatpush.bf16.msra.mxu0 %v7200
    %7658 = vmatmul.bf16.gmra.mxu0 %v5994
    %v7659 = vpop.f32.mrf.mxu0
    %v7660 = vadd.f32 %v7646, %v7659
    %v7661 = vpop.f32.mrf.mxu0
    %v7662 = vadd.f32 %v7648, %v7661
    %7663 = vdwg.mxu0
    %7664 = vmatpush.bf16.msra.mxu0 %v7245
    %7665 = vmatpush.bf16.msra.mxu0 %v7242
    %7666 = vmatpush.bf16.msra.mxu0 %v7239
    %7667 = vmatpush.bf16.msra.mxu0 %v7236
    %7668 = vmatpush.bf16.msra.mxu0 %v7233
    %7669 = vmatpush.bf16.msra.mxu0 %v7230
    %7670 = vmatpush.bf16.msra.mxu0 %v7227
    %7671 = vmatpush.bf16.msra.mxu0 %v7224
    %7672 = vmatmul.bf16.gmra.mxu0 %v5995
    %v7673 = vpop.f32.mrf.mxu0
    %v7674 = vadd.f32 %v7660, %v7673
    %v7675 = vpop.f32.mrf.mxu0
    %v7676 = vadd.f32 %v7662, %v7675
    %7677 = vdwg.mxu0
    %7678 = vmatpush.bf16.msra.mxu0 %v7269
    %7679 = vmatpush.bf16.msra.mxu0 %v7266
    %7680 = vmatpush.bf16.msra.mxu0 %v7263
    %7681 = vmatpush.bf16.msra.mxu0 %v7260
    %7682 = vmatpush.bf16.msra.mxu0 %v7257
    %7683 = vmatpush.bf16.msra.mxu0 %v7254
    %7684 = vmatpush.bf16.msra.mxu0 %v7251
    %7685 = vmatpush.bf16.msra.mxu0 %v7248
    %7686 = vmatmul.bf16.gmra.mxu0 %v5996
    %v7687 = vpop.f32.mrf.mxu0
    %v7688 = vadd.f32 %v7674, %v7687
    %v7689 = vpop.f32.mrf.mxu0
    %v7690 = vadd.f32 %v7676, %v7689
    %7691 = vdwg.mxu0
    %7692 = vmatpush.bf16.msra.mxu0 %v7293
    %7693 = vmatpush.bf16.msra.mxu0 %v7290
    %7694 = vmatpush.bf16.msra.mxu0 %v7287
    %7695 = vmatpush.bf16.msra.mxu0 %v7284
    %7696 = vmatpush.bf16.msra.mxu0 %v7281
    %7697 = vmatpush.bf16.msra.mxu0 %v7278
    %7698 = vmatpush.bf16.msra.mxu0 %v7275
    %7699 = vmatpush.bf16.msra.mxu0 %v7272
    %7700 = vmatmul.bf16.gmra.mxu0 %v5997
    %v7701 = vpop.f32.mrf.mxu0
    %v7702 = vadd.f32 %v7688, %v7701
    %v7703 = vpop.f32.mrf.mxu0
    %v7704 = vadd.f32 %v7690, %v7703
    %7705 = vdwg.mxu0
    %7706 = vmatpush.bf16.msra.mxu0 %v7317
    %7707 = vmatpush.bf16.msra.mxu0 %v7314
    %7708 = vmatpush.bf16.msra.mxu0 %v7311
    %7709 = vmatpush.bf16.msra.mxu0 %v7308
    %7710 = vmatpush.bf16.msra.mxu0 %v7305
    %7711 = vmatpush.bf16.msra.mxu0 %v7302
    %7712 = vmatpush.bf16.msra.mxu0 %v7299
    %7713 = vmatpush.bf16.msra.mxu0 %v7296
    %7714 = vmatmul.bf16.gmra.mxu0 %v5998
    %v7715 = vpop.f32.mrf.mxu0
    %v7716 = vadd.f32 %v7702, %v7715
    %v7717 = vpop.f32.mrf.mxu0
    %v7718 = vadd.f32 %v7704, %v7717
    %7719 = vdwg.mxu0
    %7720 = vmatpush.bf16.msra.mxu0 %v7341
    %7721 = vmatpush.bf16.msra.mxu0 %v7338
    %7722 = vmatpush.bf16.msra.mxu0 %v7335
    %7723 = vmatpush.bf16.msra.mxu0 %v7332
    %7724 = vmatpush.bf16.msra.mxu0 %v7329
    %7725 = vmatpush.bf16.msra.mxu0 %v7326
    %7726 = vmatpush.bf16.msra.mxu0 %v7323
    %7727 = vmatpush.bf16.msra.mxu0 %v7320
    %7728 = vmatmul.bf16.gmra.mxu0 %v5999
    %v7729 = vpop.f32.mrf.mxu0
    %v7730 = vadd.f32 %v7716, %v7729
    %v7731 = vpop.f32.mrf.mxu0
    %v7732 = vadd.f32 %v7718, %v7731
    %7733 = vdwg.mxu0
    %7734 = vmatpush.bf16.msra.mxu0 %v7365
    %7735 = vmatpush.bf16.msra.mxu0 %v7362
    %7736 = vmatpush.bf16.msra.mxu0 %v7359
    %7737 = vmatpush.bf16.msra.mxu0 %v7356
    %7738 = vmatpush.bf16.msra.mxu0 %v7353
    %7739 = vmatpush.bf16.msra.mxu0 %v7350
    %7740 = vmatpush.bf16.msra.mxu0 %v7347
    %7741 = vmatpush.bf16.msra.mxu0 %v7344
    %7742 = vmatmul.bf16.gmra.mxu0 %v6000
    %v7743 = vpop.f32.mrf.mxu0
    %v7744 = vadd.f32 %v7730, %v7743
    %v7745 = vpop.f32.mrf.mxu0
    %v7746 = vadd.f32 %v7732, %v7745
    %7747 = vdwg.mxu0
    %7748 = vmatpush.bf16.msra.mxu0 %v7150
    %7749 = vmatpush.bf16.msra.mxu0 %v7147
    %7750 = vmatpush.bf16.msra.mxu0 %v7144
    %7751 = vmatpush.bf16.msra.mxu0 %v7141
    %7752 = vmatpush.bf16.msra.mxu0 %v7138
    %7753 = vmatpush.bf16.msra.mxu0 %v7135
    %7754 = vmatpush.bf16.msra.mxu0 %v7132
    %7755 = vmatpush.bf16.msra.mxu0 %v7129
    %7756 = vmatmul.bf16.gmra.mxu0 %v5991
    %v7757 = vpop.f32.mrf.mxu0
    %v7758 = vadd.f32 %v6323, %v7757
    %v7759 = vpop.f32.mrf.mxu0
    %v7760 = vadd.f32 %v6323, %v7759
    %7761 = vdwg.mxu0
    %7762 = vmatpush.bf16.msra.mxu0 %v7174
    %7763 = vmatpush.bf16.msra.mxu0 %v7171
    %7764 = vmatpush.bf16.msra.mxu0 %v7168
    %7765 = vmatpush.bf16.msra.mxu0 %v7165
    %7766 = vmatpush.bf16.msra.mxu0 %v7162
    %7767 = vmatpush.bf16.msra.mxu0 %v7159
    %7768 = vmatpush.bf16.msra.mxu0 %v7156
    %7769 = vmatpush.bf16.msra.mxu0 %v7153
    %7770 = vmatmul.bf16.gmra.mxu0 %v5992
    %v7771 = vpop.f32.mrf.mxu0
    %v7772 = vadd.f32 %v7758, %v7771
    %v7773 = vpop.f32.mrf.mxu0
    %v7774 = vadd.f32 %v7760, %v7773
    %7775 = vdwg.mxu0
    %7776 = vmatpush.bf16.msra.mxu0 %v7198
    %7777 = vmatpush.bf16.msra.mxu0 %v7195
    %7778 = vmatpush.bf16.msra.mxu0 %v7192
    %7779 = vmatpush.bf16.msra.mxu0 %v7189
    %7780 = vmatpush.bf16.msra.mxu0 %v7186
    %7781 = vmatpush.bf16.msra.mxu0 %v7183
    %7782 = vmatpush.bf16.msra.mxu0 %v7180
    %7783 = vmatpush.bf16.msra.mxu0 %v7177
    %7784 = vmatmul.bf16.gmra.mxu0 %v5993
    %v7785 = vpop.f32.mrf.mxu0
    %v7786 = vadd.f32 %v7772, %v7785
    %v7787 = vpop.f32.mrf.mxu0
    %v7788 = vadd.f32 %v7774, %v7787
    %7789 = vdwg.mxu0
    %7790 = vmatpush.bf16.msra.mxu0 %v7222
    %7791 = vmatpush.bf16.msra.mxu0 %v7219
    %7792 = vmatpush.bf16.msra.mxu0 %v7216
    %7793 = vmatpush.bf16.msra.mxu0 %v7213
    %7794 = vmatpush.bf16.msra.mxu0 %v7210
    %7795 = vmatpush.bf16.msra.mxu0 %v7207
    %7796 = vmatpush.bf16.msra.mxu0 %v7204
    %7797 = vmatpush.bf16.msra.mxu0 %v7201
    %7798 = vmatmul.bf16.gmra.mxu0 %v5994
    %v7799 = vpop.f32.mrf.mxu0
    %v7800 = vadd.f32 %v7786, %v7799
    %v7801 = vpop.f32.mrf.mxu0
    %v7802 = vadd.f32 %v7788, %v7801
    %7803 = vdwg.mxu0
    %7804 = vmatpush.bf16.msra.mxu0 %v7246
    %7805 = vmatpush.bf16.msra.mxu0 %v7243
    %7806 = vmatpush.bf16.msra.mxu0 %v7240
    %7807 = vmatpush.bf16.msra.mxu0 %v7237
    %7808 = vmatpush.bf16.msra.mxu0 %v7234
    %7809 = vmatpush.bf16.msra.mxu0 %v7231
    %7810 = vmatpush.bf16.msra.mxu0 %v7228
    %7811 = vmatpush.bf16.msra.mxu0 %v7225
    %7812 = vmatmul.bf16.gmra.mxu0 %v5995
    %v7813 = vpop.f32.mrf.mxu0
    %v7814 = vadd.f32 %v7800, %v7813
    %v7815 = vpop.f32.mrf.mxu0
    %v7816 = vadd.f32 %v7802, %v7815
    %7817 = vdwg.mxu0
    %7818 = vmatpush.bf16.msra.mxu0 %v7270
    %7819 = vmatpush.bf16.msra.mxu0 %v7267
    %7820 = vmatpush.bf16.msra.mxu0 %v7264
    %7821 = vmatpush.bf16.msra.mxu0 %v7261
    %7822 = vmatpush.bf16.msra.mxu0 %v7258
    %7823 = vmatpush.bf16.msra.mxu0 %v7255
    %7824 = vmatpush.bf16.msra.mxu0 %v7252
    %7825 = vmatpush.bf16.msra.mxu0 %v7249
    %7826 = vmatmul.bf16.gmra.mxu0 %v5996
    %v7827 = vpop.f32.mrf.mxu0
    %v7828 = vadd.f32 %v7814, %v7827
    %v7829 = vpop.f32.mrf.mxu0
    %v7830 = vadd.f32 %v7816, %v7829
    %7831 = vdwg.mxu0
    %7832 = vmatpush.bf16.msra.mxu0 %v7294
    %7833 = vmatpush.bf16.msra.mxu0 %v7291
    %7834 = vmatpush.bf16.msra.mxu0 %v7288
    %7835 = vmatpush.bf16.msra.mxu0 %v7285
    %7836 = vmatpush.bf16.msra.mxu0 %v7282
    %7837 = vmatpush.bf16.msra.mxu0 %v7279
    %7838 = vmatpush.bf16.msra.mxu0 %v7276
    %7839 = vmatpush.bf16.msra.mxu0 %v7273
    %7840 = vmatmul.bf16.gmra.mxu0 %v5997
    %v7841 = vpop.f32.mrf.mxu0
    %v7842 = vadd.f32 %v7828, %v7841
    %v7843 = vpop.f32.mrf.mxu0
    %v7844 = vadd.f32 %v7830, %v7843
    %7845 = vdwg.mxu0
    %7846 = vmatpush.bf16.msra.mxu0 %v7318
    %7847 = vmatpush.bf16.msra.mxu0 %v7315
    %7848 = vmatpush.bf16.msra.mxu0 %v7312
    %7849 = vmatpush.bf16.msra.mxu0 %v7309
    %7850 = vmatpush.bf16.msra.mxu0 %v7306
    %7851 = vmatpush.bf16.msra.mxu0 %v7303
    %7852 = vmatpush.bf16.msra.mxu0 %v7300
    %7853 = vmatpush.bf16.msra.mxu0 %v7297
    %7854 = vmatmul.bf16.gmra.mxu0 %v5998
    %v7855 = vpop.f32.mrf.mxu0
    %v7856 = vadd.f32 %v7842, %v7855
    %v7857 = vpop.f32.mrf.mxu0
    %v7858 = vadd.f32 %v7844, %v7857
    %7859 = vdwg.mxu0
    %7860 = vmatpush.bf16.msra.mxu0 %v7342
    %7861 = vmatpush.bf16.msra.mxu0 %v7339
    %7862 = vmatpush.bf16.msra.mxu0 %v7336
    %7863 = vmatpush.bf16.msra.mxu0 %v7333
    %7864 = vmatpush.bf16.msra.mxu0 %v7330
    %7865 = vmatpush.bf16.msra.mxu0 %v7327
    %7866 = vmatpush.bf16.msra.mxu0 %v7324
    %7867 = vmatpush.bf16.msra.mxu0 %v7321
    %7868 = vmatmul.bf16.gmra.mxu0 %v5999
    %v7869 = vpop.f32.mrf.mxu0
    %v7870 = vadd.f32 %v7856, %v7869
    %v7871 = vpop.f32.mrf.mxu0
    %v7872 = vadd.f32 %v7858, %v7871
    %7873 = vdwg.mxu0
    %7874 = vmatpush.bf16.msra.mxu0 %v7366
    %7875 = vmatpush.bf16.msra.mxu0 %v7363
    %7876 = vmatpush.bf16.msra.mxu0 %v7360
    %7877 = vmatpush.bf16.msra.mxu0 %v7357
    %7878 = vmatpush.bf16.msra.mxu0 %v7354
    %7879 = vmatpush.bf16.msra.mxu0 %v7351
    %7880 = vmatpush.bf16.msra.mxu0 %v7348
    %7881 = vmatpush.bf16.msra.mxu0 %v7345
    %7882 = vmatmul.bf16.gmra.mxu0 %v6000
    %v7883 = vpop.f32.mrf.mxu0
    %v7884 = vadd.f32 %v7870, %v7883
    %v7885 = vpop.f32.mrf.mxu0
    %v7886 = vadd.f32 %v7872, %v7885
    %7887 = vdwg.mxu0
    %7888 = vmatpush.bf16.msra.mxu0 %v7151
    %7889 = vmatpush.bf16.msra.mxu0 %v7148
    %7890 = vmatpush.bf16.msra.mxu0 %v7145
    %7891 = vmatpush.bf16.msra.mxu0 %v7142
    %7892 = vmatpush.bf16.msra.mxu0 %v7139
    %7893 = vmatpush.bf16.msra.mxu0 %v7136
    %7894 = vmatpush.bf16.msra.mxu0 %v7133
    %7895 = vmatpush.bf16.msra.mxu0 %v7130
    %7896 = vmatmul.bf16.gmra.mxu0 %v5991
    %v7897 = vpop.f32.mrf.mxu0
    %v7898 = vadd.f32 %v6324, %v7897
    %v7899 = vpop.f32.mrf.mxu0
    %v7900 = vadd.f32 %v6324, %v7899
    %7901 = vdwg.mxu0
    %7902 = vmatpush.bf16.msra.mxu0 %v7175
    %7903 = vmatpush.bf16.msra.mxu0 %v7172
    %7904 = vmatpush.bf16.msra.mxu0 %v7169
    %7905 = vmatpush.bf16.msra.mxu0 %v7166
    %7906 = vmatpush.bf16.msra.mxu0 %v7163
    %7907 = vmatpush.bf16.msra.mxu0 %v7160
    %7908 = vmatpush.bf16.msra.mxu0 %v7157
    %7909 = vmatpush.bf16.msra.mxu0 %v7154
    %7910 = vmatmul.bf16.gmra.mxu0 %v5992
    %v7911 = vpop.f32.mrf.mxu0
    %v7912 = vadd.f32 %v7898, %v7911
    %v7913 = vpop.f32.mrf.mxu0
    %v7914 = vadd.f32 %v7900, %v7913
    %7915 = vdwg.mxu0
    %7916 = vmatpush.bf16.msra.mxu0 %v7199
    %7917 = vmatpush.bf16.msra.mxu0 %v7196
    %7918 = vmatpush.bf16.msra.mxu0 %v7193
    %7919 = vmatpush.bf16.msra.mxu0 %v7190
    %7920 = vmatpush.bf16.msra.mxu0 %v7187
    %7921 = vmatpush.bf16.msra.mxu0 %v7184
    %7922 = vmatpush.bf16.msra.mxu0 %v7181
    %7923 = vmatpush.bf16.msra.mxu0 %v7178
    %7924 = vmatmul.bf16.gmra.mxu0 %v5993
    %v7925 = vpop.f32.mrf.mxu0
    %v7926 = vadd.f32 %v7912, %v7925
    %v7927 = vpop.f32.mrf.mxu0
    %v7928 = vadd.f32 %v7914, %v7927
    %7929 = vdwg.mxu0
    %7930 = vmatpush.bf16.msra.mxu0 %v7223
    %7931 = vmatpush.bf16.msra.mxu0 %v7220
    %7932 = vmatpush.bf16.msra.mxu0 %v7217
    %7933 = vmatpush.bf16.msra.mxu0 %v7214
    %7934 = vmatpush.bf16.msra.mxu0 %v7211
    %7935 = vmatpush.bf16.msra.mxu0 %v7208
    %7936 = vmatpush.bf16.msra.mxu0 %v7205
    %7937 = vmatpush.bf16.msra.mxu0 %v7202
    %7938 = vmatmul.bf16.gmra.mxu0 %v5994
    %v7939 = vpop.f32.mrf.mxu0
    %v7940 = vadd.f32 %v7926, %v7939
    %v7941 = vpop.f32.mrf.mxu0
    %v7942 = vadd.f32 %v7928, %v7941
    %7943 = vdwg.mxu0
    %7944 = vmatpush.bf16.msra.mxu0 %v7247
    %7945 = vmatpush.bf16.msra.mxu0 %v7244
    %7946 = vmatpush.bf16.msra.mxu0 %v7241
    %7947 = vmatpush.bf16.msra.mxu0 %v7238
    %7948 = vmatpush.bf16.msra.mxu0 %v7235
    %7949 = vmatpush.bf16.msra.mxu0 %v7232
    %7950 = vmatpush.bf16.msra.mxu0 %v7229
    %7951 = vmatpush.bf16.msra.mxu0 %v7226
    %7952 = vmatmul.bf16.gmra.mxu0 %v5995
    %v7953 = vpop.f32.mrf.mxu0
    %v7954 = vadd.f32 %v7940, %v7953
    %v7955 = vpop.f32.mrf.mxu0
    %v7956 = vadd.f32 %v7942, %v7955
    %7957 = vdwg.mxu0
    %7958 = vmatpush.bf16.msra.mxu0 %v7271
    %7959 = vmatpush.bf16.msra.mxu0 %v7268
    %7960 = vmatpush.bf16.msra.mxu0 %v7265
    %7961 = vmatpush.bf16.msra.mxu0 %v7262
    %7962 = vmatpush.bf16.msra.mxu0 %v7259
    %7963 = vmatpush.bf16.msra.mxu0 %v7256
    %7964 = vmatpush.bf16.msra.mxu0 %v7253
    %7965 = vmatpush.bf16.msra.mxu0 %v7250
    %7966 = vmatmul.bf16.gmra.mxu0 %v5996
    %v7967 = vpop.f32.mrf.mxu0
    %v7968 = vadd.f32 %v7954, %v7967
    %v7969 = vpop.f32.mrf.mxu0
    %v7970 = vadd.f32 %v7956, %v7969
    %7971 = vdwg.mxu0
    %7972 = vmatpush.bf16.msra.mxu0 %v7295
    %7973 = vmatpush.bf16.msra.mxu0 %v7292
    %7974 = vmatpush.bf16.msra.mxu0 %v7289
    %7975 = vmatpush.bf16.msra.mxu0 %v7286
    %7976 = vmatpush.bf16.msra.mxu0 %v7283
    %7977 = vmatpush.bf16.msra.mxu0 %v7280
    %7978 = vmatpush.bf16.msra.mxu0 %v7277
    %7979 = vmatpush.bf16.msra.mxu0 %v7274
    %7980 = vmatmul.bf16.gmra.mxu0 %v5997
    %v7981 = vpop.f32.mrf.mxu0
    %v7982 = vadd.f32 %v7968, %v7981
    %v7983 = vpop.f32.mrf.mxu0
    %v7984 = vadd.f32 %v7970, %v7983
    %7985 = vdwg.mxu0
    %7986 = vmatpush.bf16.msra.mxu0 %v7319
    %7987 = vmatpush.bf16.msra.mxu0 %v7316
    %7988 = vmatpush.bf16.msra.mxu0 %v7313
    %7989 = vmatpush.bf16.msra.mxu0 %v7310
    %7990 = vmatpush.bf16.msra.mxu0 %v7307
    %7991 = vmatpush.bf16.msra.mxu0 %v7304
    %7992 = vmatpush.bf16.msra.mxu0 %v7301
    %7993 = vmatpush.bf16.msra.mxu0 %v7298
    %7994 = vmatmul.bf16.gmra.mxu0 %v5998
    %v7995 = vpop.f32.mrf.mxu0
    %v7996 = vadd.f32 %v7982, %v7995
    %v7997 = vpop.f32.mrf.mxu0
    %v7998 = vadd.f32 %v7984, %v7997
    %7999 = vdwg.mxu0
    %8000 = vmatpush.bf16.msra.mxu0 %v7343
    %8001 = vmatpush.bf16.msra.mxu0 %v7340
    %8002 = vmatpush.bf16.msra.mxu0 %v7337
    %8003 = vmatpush.bf16.msra.mxu0 %v7334
    %8004 = vmatpush.bf16.msra.mxu0 %v7331
    %8005 = vmatpush.bf16.msra.mxu0 %v7328
    %8006 = vmatpush.bf16.msra.mxu0 %v7325
    %8007 = vmatpush.bf16.msra.mxu0 %v7322
    %8008 = vmatmul.bf16.gmra.mxu0 %v5999
    %v8009 = vpop.f32.mrf.mxu0
    %v8010 = vadd.f32 %v7996, %v8009
    %v8011 = vpop.f32.mrf.mxu0
    %v8012 = vadd.f32 %v7998, %v8011
    %8013 = vdwg.mxu0
    %8014 = vmatpush.bf16.msra.mxu0 %v7367
    %8015 = vmatpush.bf16.msra.mxu0 %v7364
    %8016 = vmatpush.bf16.msra.mxu0 %v7361
    %8017 = vmatpush.bf16.msra.mxu0 %v7358
    %8018 = vmatpush.bf16.msra.mxu0 %v7355
    %8019 = vmatpush.bf16.msra.mxu0 %v7352
    %8020 = vmatpush.bf16.msra.mxu0 %v7349
    %8021 = vmatpush.bf16.msra.mxu0 %v7346
    %8022 = vmatmul.bf16.gmra.mxu0 %v6000
    %v8023 = vpop.f32.mrf.mxu0
    %v8024 = vadd.f32 %v8010, %v8023
    %v8025 = vpop.f32.mrf.mxu0
    %v8026 = vadd.f32 %v8012, %v8025
    %8027 = vdwg.mxu0
    %v8028 = vadd.f32 %v3828, %v7744
    %v8029 = vadd.f32 %v3829, %v7884
    %v8030 = vadd.f32 %v3830, %v8024
    %v8031 = vadd.f32 %v3831, %v7746
    %v8032 = vadd.f32 %v3832, %v7886
    %v8033 = vadd.f32 %v3833, %v8026
    %v8034 = vadd.f32 %v8028, %v8029
    %v8035 = vadd.f32 %v8034, %v8030
    %8036 = vadd.xlane.f32.xlu0 %v8035
    %v8037 = vpop.xlane.xlu0 %8036
    %v8038 = vadd.f32 %v8031, %v8032
    %v8039 = vadd.f32 %v8038, %v8033
    %8040 = vadd.xlane.f32.xlu0 %v8039
    %v8041 = vpop.xlane.xlu0 %8040
    %v8042 = vmul.f32 %v8037, 0.003125
    %v8043 = vmul.f32 %v8041, 0.003125
    %v8044 = vmul.f32 %v8028, %v8028
    %v8045 = vmul.f32 %v8029, %v8029
    %v8046 = vmul.f32 %v8030, %v8030
    %v8047 = vmul.f32 %v8031, %v8031
    %v8048 = vmul.f32 %v8032, %v8032
    %v8049 = vmul.f32 %v8033, %v8033
    %v8050 = vadd.f32 %v8044, %v8045
    %v8051 = vadd.f32 %v8050, %v8046
    %8052 = vadd.xlane.f32.xlu0 %v8051
    %v8053 = vpop.xlane.xlu0 %8052
    %v8054 = vadd.f32 %v8047, %v8048
    %v8055 = vadd.f32 %v8054, %v8049
    %8056 = vadd.xlane.f32.xlu0 %v8055
    %v8057 = vpop.xlane.xlu0 %8056
    %v8058 = vmul.f32 %v8053, 0.003125
    %v8059 = vmul.f32 %v8057, 0.003125
    %v8060 = vmul.f32 %v8042, %v8042
    %v8061 = vmul.f32 %v8043, %v8043
    %v8062 = vsub.f32 %v8058, %v8060
    %v8063 = vsub.f32 %v8059, %v8061
    %v8064 = vmax.f32 %v8062, 0.0
    %v8065 = vmax.f32 %v8063, 0.0
    %v8066 = vsub.f32 %v8028, %v8042
    %v8067 = vsub.f32 %v8029, %v8042
    %v8068 = vsub.f32 %v8030, %v8042
    %v8069 = vsub.f32 %v8031, %v8043
    %v8070 = vsub.f32 %v8032, %v8043
    %v8071 = vsub.f32 %v8033, %v8043
    %v8072 = vadd.f32 %v8064, 1e-05
    %v8073 = vadd.f32 %v8065, 1e-05
    %v8074 = vrsqrt.pop %v8072
    %v8075 = vmul.f32 %v8074, %v8072
    %v8076 = vmul.f32 %v8075, %v8074
    %v8077 = vmul.f32 0.5, %v8076
    %v8078 = vsub.f32 1.5, %v8077
    %v8079 = vmul.f32 %v8074, %v8078
    %vm8080 = vweird.f32 %v8072
    %vm8081 = vweird.f32 %v8074
    %vm8082 = vmor %vm8080, %vm8081
    %v8083 = vsel %vm8082, %v8074, %v8079
    %v8084 = vrsqrt.pop %v8073
    %v8085 = vmul.f32 %v8084, %v8073
    %v8086 = vmul.f32 %v8085, %v8084
    %v8087 = vmul.f32 0.5, %v8086
    %v8088 = vsub.f32 1.5, %v8087
    %v8089 = vmul.f32 %v8084, %v8088
    %vm8090 = vweird.f32 %v8073
    %vm8091 = vweird.f32 %v8084
    %vm8092 = vmor %vm8090, %vm8091
    %v8093 = vsel %vm8092, %v8084, %v8089
    %v8094 = vmul.f32 %v8066, %v8083
    %v8095 = vmul.f32 %v8067, %v8083
    %v8096 = vmul.f32 %v8068, %v8083
    %v8097 = vmul.f32 %v8069, %v8093
    %v8098 = vmul.f32 %v8070, %v8093
    %v8099 = vmul.f32 %v8071, %v8093
    %v8101 = vperm.slane %v140, 0
    %v8102 = vperm.slane %v140, 1
    %v8103 = vperm.slane %v140, 2
    %v8107 = vmul.f32 %v8094, %v8101
    %v8108 = vmul.f32 %v8095, %v8102
    %v8109 = vmul.f32 %v8096, %v8103
    %v8110 = vmul.f32 %v8097, %v8101
    %v8111 = vmul.f32 %v8098, %v8102
    %v8112 = vmul.f32 %v8099, %v8103
    %v8114 = vperm.slane %v142, 0
    %v8115 = vperm.slane %v142, 1
    %v8116 = vperm.slane %v142, 2
    %v8120 = vadd.f32 %v8107, %v8114
    %v8121 = vadd.f32 %v8108, %v8115
    %v8122 = vadd.f32 %v8109, %v8116
    %v8123 = vadd.f32 %v8110, %v8114
    %v8124 = vadd.f32 %v8111, %v8115
    %v8125 = vadd.f32 %v8112, %v8116
    %v8126 = vrot.slane %v8120, 4
    %v8127 = vadd.f32 %v8120, %v8126
    %v8128 = vrot.slane %v8127, 2
    %v8129 = vadd.f32 %v8127, %v8128
    %v8130 = vrot.slane %v8129, 1
    %v8131 = vadd.f32 %v8129, %v8130
    %v8132 = vrot.slane %v8121, 4
    %v8133 = vadd.f32 %v8121, %v8132
    %v8134 = vrot.slane %v8133, 2
    %v8135 = vadd.f32 %v8133, %v8134
    %v8136 = vrot.slane %v8135, 1
    %v8137 = vadd.f32 %v8135, %v8136
    %v8138 = vrot.slane %v8122, 4
    %v8139 = vadd.f32 %v8122, %v8138
    %v8140 = vrot.slane %v8139, 2
    %v8141 = vadd.f32 %v8139, %v8140
    %v8142 = vrot.slane %v8141, 1
    %v8143 = vadd.f32 %v8141, %v8142
    %v8144 = vrot.slane %v8123, 4
    %v8145 = vadd.f32 %v8123, %v8144
    %v8146 = vrot.slane %v8145, 2
    %v8147 = vadd.f32 %v8145, %v8146
    %v8148 = vrot.slane %v8147, 1
    %v8149 = vadd.f32 %v8147, %v8148
    %v8150 = vrot.slane %v8124, 4
    %v8151 = vadd.f32 %v8124, %v8150
    %v8152 = vrot.slane %v8151, 2
    %v8153 = vadd.f32 %v8151, %v8152
    %v8154 = vrot.slane %v8153, 1
    %v8155 = vadd.f32 %v8153, %v8154
    %v8156 = vrot.slane %v8125, 4
    %v8157 = vadd.f32 %v8125, %v8156
    %v8158 = vrot.slane %v8157, 2
    %v8159 = vadd.f32 %v8157, %v8158
    %v8160 = vrot.slane %v8159, 1
    %v8161 = vadd.f32 %v8159, %v8160
    %v8162 = vmul.f32 %v8131, 0.125
    %v8163 = vmul.f32 %v8137, 0.125
    %v8164 = vmul.f32 %v8143, 0.125
    %v8165 = vmul.f32 %v8149, 0.125
    %v8166 = vmul.f32 %v8155, 0.125
    %v8167 = vmul.f32 %v8161, 0.125
    %v8168 = vpack.c.bf16 %v8162, %v8162
    %v8169 = vpack.c.bf16 %v8163, %v8163
    %v8170 = vpack.c.bf16 %v8164, %v8164
    %v8171 = vpack.c.bf16 %v8165, %v8165
    %v8172 = vpack.c.bf16 %v8166, %v8166
    %v8173 = vpack.c.bf16 %v8167, %v8167
    %v8174 = vld [vmem:[#allocation11] sm:$0xf]
    %v8175 = vld [vmem:[#allocation11 + $0x4] sm:$0xf]
    %v8176 = vld [vmem:[#allocation11 + $0x8] sm:$0xf]
    %v8177 = vld [vmem:[#allocation11 + $0xc] sm:$0xf]
    %v8178 = vld [vmem:[#allocation11 + $0x10] sm:$0xf]
    %v8179 = vld [vmem:[#allocation11 + $0x14] sm:$0xf]
    %v8180 = vld [vmem:[#allocation11 + $0x18] sm:$0xf]
    %v8181 = vld [vmem:[#allocation11 + $0x1c] sm:$0xf]
    %v8182 = vld [vmem:[#allocation11 + $0x20] sm:$0xf]
    %v8183 = vld [vmem:[#allocation11 + $0x24] sm:$0xf]
    %v8184 = vld [vmem:[#allocation11 + $0x28] sm:$0xf]
    %v8185 = vld [vmem:[#allocation11 + $0x2c] sm:$0xf]
    %v8186 = vld [vmem:[#allocation11 + $0x30] sm:$0xf]
    %v8187 = vld [vmem:[#allocation11 + $0x34] sm:$0xf]
    %v8188 = vld [vmem:[#allocation11 + $0x38] sm:$0xf]
    %v8189 = vld [vmem:[#allocation11 + $0x3c] sm:$0xf]
    %v8190 = vld [vmem:[#allocation11 + $0x40] sm:$0xf]
    %v8191 = vld [vmem:[#allocation11 + $0x44] sm:$0xf]
    %v8192 = vld [vmem:[#allocation11 + $0x48] sm:$0xf]
    %v8193 = vld [vmem:[#allocation11 + $0x4c] sm:$0xf]
    %v8194 = vld [vmem:[#allocation11 + $0x50] sm:$0xf]
    %v8195 = vld [vmem:[#allocation11 + $0x54] sm:$0xf]
    %v8196 = vld [vmem:[#allocation11 + $0x58] sm:$0xf]
    %v8197 = vld [vmem:[#allocation11 + $0x5c] sm:$0xf]
    %v8198 = vld [vmem:[#allocation11 + $0x60] sm:$0xf]
    %v8199 = vld [vmem:[#allocation11 + $0x64] sm:$0xf]
    %v8200 = vld [vmem:[#allocation11 + $0x68] sm:$0xf]
    %v8201 = vld [vmem:[#allocation11 + $0x6c] sm:$0xf]
    %v8202 = vld [vmem:[#allocation11 + $0x70] sm:$0xf]
    %v8203 = vld [vmem:[#allocation11 + $0x74] sm:$0xf]
    %v8204 = vld [vmem:[#allocation11 + $0x78] sm:$0xf]
    %v8205 = vld [vmem:[#allocation11 + $0x7c] sm:$0xf]
    %v8206 = vld [vmem:[#allocation11 + $0x80] sm:$0xf]
    %v8207 = vld [vmem:[#allocation11 + $0x84] sm:$0xf]
    %v8208 = vld [vmem:[#allocation11 + $0x88] sm:$0xf]
    %v8209 = vld [vmem:[#allocation11 + $0x8c] sm:$0xf]
    %v8210 = vld [vmem:[#allocation11 + $0x90] sm:$0xf]
    %v8211 = vld [vmem:[#allocation11 + $0x94] sm:$0xf]
    %v8212 = vld [vmem:[#allocation11 + $0x98] sm:$0xf]
    %v8213 = vld [vmem:[#allocation11 + $0x9c] sm:$0xf]
    %v8214 = vld [vmem:[#allocation11 + $0xa0] sm:$0xf]
    %v8215 = vld [vmem:[#allocation11 + $0xa4] sm:$0xf]
    %v8216 = vld [vmem:[#allocation11 + $0xa8] sm:$0xf]
    %v8217 = vld [vmem:[#allocation11 + $0xac] sm:$0xf]
    %v8218 = vld [vmem:[#allocation11 + $0xb0] sm:$0xf]
    %v8219 = vld [vmem:[#allocation11 + $0xb4] sm:$0xf]
    %v8220 = vld [vmem:[#allocation11 + $0xb8] sm:$0xf]
    %v8221 = vld [vmem:[#allocation11 + $0xbc] sm:$0xf]
    %v8228 = vunpack.c.l.b16 %v8168
    %v8229 = vunpack.c.l.b16 %v8169
    %v8230 = vunpack.c.l.b16 %v8170
    %v8231 = vunpack.c.l.b16 %v8171
    %v8232 = vunpack.c.l.b16 %v8172
    %v8233 = vunpack.c.l.b16 %v8173
    %vm8234 = vcmask 1041409
    %v8235 = vsel %vm8234, %v8231, %v8228
    %v8236 = vsel %vm8234, %v8232, %v8229
    %v8237 = vsel %vm8234, %v8233, %v8230
    %v8238 = vpack.c.b16 %v8235, %v8235
    %v8239 = vpack.c.b16 %v8236, %v8236
    %v8240 = vpack.c.b16 %v8237, %v8237
    %v8292 = vunpack.c.l.b16 %v8174
    %v8293 = vunpack.c.l.b16 %v8175
    %v8294 = vunpack.c.l.b16 %v8176
    %v8295 = vunpack.c.l.b16 %v8177
    %v8296 = vunpack.c.l.b16 %v8178
    %v8297 = vunpack.c.l.b16 %v8179
    %v8298 = vunpack.c.l.b16 %v8180
    %v8299 = vunpack.c.l.b16 %v8181
    %v8300 = vunpack.c.l.b16 %v8182
    %v8301 = vunpack.c.l.b16 %v8183
    %v8302 = vunpack.c.l.b16 %v8184
    %v8303 = vunpack.c.l.b16 %v8185
    %v8304 = vunpack.c.l.b16 %v8186
    %v8305 = vunpack.c.l.b16 %v8187
    %v8306 = vunpack.c.l.b16 %v8188
    %v8307 = vunpack.c.l.b16 %v8189
    %v8308 = vunpack.c.l.b16 %v8190
    %v8309 = vunpack.c.l.b16 %v8191
    %v8310 = vunpack.c.l.b16 %v8192
    %v8311 = vunpack.c.l.b16 %v8193
    %v8312 = vunpack.c.l.b16 %v8194
    %v8313 = vunpack.c.l.b16 %v8195
    %v8314 = vunpack.c.l.b16 %v8196
    %v8315 = vunpack.c.l.b16 %v8197
    %v8316 = vunpack.c.l.b16 %v8198
    %v8317 = vunpack.c.l.b16 %v8199
    %v8318 = vunpack.c.l.b16 %v8200
    %v8319 = vunpack.c.l.b16 %v8201
    %v8320 = vunpack.c.l.b16 %v8202
    %v8321 = vunpack.c.l.b16 %v8203
    %v8322 = vunpack.c.l.b16 %v8204
    %v8323 = vunpack.c.l.b16 %v8205
    %v8324 = vunpack.c.l.b16 %v8206
    %v8325 = vunpack.c.l.b16 %v8207
    %v8326 = vunpack.c.l.b16 %v8208
    %v8327 = vunpack.c.l.b16 %v8209
    %v8328 = vunpack.c.l.b16 %v8210
    %v8329 = vunpack.c.l.b16 %v8211
    %v8330 = vunpack.c.l.b16 %v8212
    %v8331 = vunpack.c.l.b16 %v8213
    %v8332 = vunpack.c.l.b16 %v8214
    %v8333 = vunpack.c.l.b16 %v8215
    %v8334 = vunpack.c.l.b16 %v8216
    %v8335 = vunpack.c.l.b16 %v8217
    %v8336 = vunpack.c.l.b16 %v8218
    %v8337 = vunpack.c.l.b16 %v8219
    %v8338 = vunpack.c.l.b16 %v8220
    %v8339 = vunpack.c.l.b16 %v8221
    %v8340 = vpack.c.b16 %v8293, %v8292
    %v8341 = vpack.c.b16 %v8295, %v8294
    %v8342 = vpack.c.b16 %v8297, %v8296
    %v8343 = vpack.c.b16 %v8299, %v8298
    %v8344 = vpack.c.b16 %v8301, %v8300
    %v8345 = vpack.c.b16 %v8303, %v8302
    %v8346 = vpack.c.b16 %v8305, %v8304
    %v8347 = vpack.c.b16 %v8307, %v8306
    %v8348 = vpack.c.b16 %v8309, %v8308
    %v8349 = vpack.c.b16 %v8311, %v8310
    %v8350 = vpack.c.b16 %v8313, %v8312
    %v8351 = vpack.c.b16 %v8315, %v8314
    %v8352 = vpack.c.b16 %v8317, %v8316
    %v8353 = vpack.c.b16 %v8319, %v8318
    %v8354 = vpack.c.b16 %v8321, %v8320
    %v8355 = vpack.c.b16 %v8323, %v8322
    %v8356 = vpack.c.b16 %v8325, %v8324
    %v8357 = vpack.c.b16 %v8327, %v8326
    %v8358 = vpack.c.b16 %v8329, %v8328
    %v8359 = vpack.c.b16 %v8331, %v8330
    %v8360 = vpack.c.b16 %v8333, %v8332
    %v8361 = vpack.c.b16 %v8335, %v8334
    %v8362 = vpack.c.b16 %v8337, %v8336
    %v8363 = vpack.c.b16 %v8339, %v8338
    %8388 = vmatpush.bf16.msra.mxu0 %v8347
    %8389 = vmatpush.bf16.msra.mxu0 %v8346
    %8390 = vmatpush.bf16.msra.mxu0 %v8345
    %8391 = vmatpush.bf16.msra.mxu0 %v8344
    %8392 = vmatpush.bf16.msra.mxu0 %v8343
    %8393 = vmatpush.bf16.msra.mxu0 %v8342
    %8394 = vmatpush.bf16.msra.mxu0 %v8341
    %8395 = vmatpush.bf16.msra.mxu0 %v8340
    %8396 = vmatmul.bf16.gmra.mxu0 %v8238
    %v8397 = vpop.f32.mrf.mxu0
    %v8398 = vadd.f32 %v155, %v8397
    %v8399 = vpop.f32.mrf.mxu0
    %8400 = vdwg.mxu0
    %8401 = vmatpush.bf16.msra.mxu0 %v8355
    %8402 = vmatpush.bf16.msra.mxu0 %v8354
    %8403 = vmatpush.bf16.msra.mxu0 %v8353
    %8404 = vmatpush.bf16.msra.mxu0 %v8352
    %8405 = vmatpush.bf16.msra.mxu0 %v8351
    %8406 = vmatpush.bf16.msra.mxu0 %v8350
    %8407 = vmatpush.bf16.msra.mxu0 %v8349
    %8408 = vmatpush.bf16.msra.mxu0 %v8348
    %8409 = vmatmul.bf16.gmra.mxu0 %v8239
    %v8410 = vpop.f32.mrf.mxu0
    %v8411 = vadd.f32 %v8398, %v8410
    %v8412 = vpop.f32.mrf.mxu0
    %8413 = vdwg.mxu0
    %8414 = vmatpush.bf16.msra.mxu0 %v8363
    %8415 = vmatpush.bf16.msra.mxu0 %v8362
    %8416 = vmatpush.bf16.msra.mxu0 %v8361
    %8417 = vmatpush.bf16.msra.mxu0 %v8360
    %8418 = vmatpush.bf16.msra.mxu0 %v8359
    %8419 = vmatpush.bf16.msra.mxu0 %v8358
    %8420 = vmatpush.bf16.msra.mxu0 %v8357
    %8421 = vmatpush.bf16.msra.mxu0 %v8356
    %8422 = vmatmul.bf16.gmra.mxu0 %v8240
    %v8423 = vpop.f32.mrf.mxu0
    %v8424 = vadd.f32 %v8411, %v8423
    %v8425 = vpop.f32.mrf.mxu0
    %8426 = vdwg.mxu0
    %v8428 = vrot.slane %v8424, 1
    %8430 = vst [vmem:[#allocation13] sm:$0x1] %v8424
    %8431 = vst [vmem:[#allocation13 + $0x1] sm:$0x1] %v8428
    // Predicated region
    $region54: #{_lambda_.1} parent=1 // pred_check
      _
    $region55: #{_lambda_.1} parent=1 // pred_check_branch
      %8433 = sbr.rel (0) target = $region57
    $region56: #{_lambda_.1} parent=1 // pred_region
      %8435 = vsyncadd [#allocation4], 0
      %s8436 = sshll.u32 [#allocation13], 4
      %s8437 = int_to_ptr.vmem [resolvable:$true] %s8436
      %s8438 = sshll.u32 %s7, 4
      %s8439 = int_to_ptr.hbm [resolvable:$true] %s8438
      %8444 = dma.vmem_to_hbm [thread:$0]  %s8437, 32, %s8439, [#allocation4], 16, 16, 1
    $region57: #{_lambda_.1} parent=1 // pred_fallthru
      _
    // Predicated region
    $region58: #{_lambda_.1} parent=1 // pred_check
      _
    $region59: #{_lambda_.1} parent=1 // pred_check_branch
      %8446 = sbr.rel (0) target = $region61
    $region60: #{_lambda_.1} parent=1 // pred_region
      %8448 = dma.done [#allocation4], 32
    $region61: #{_lambda_.1} parent=1 // pred_fallthru
      _
    %8449 = vsyncpa [#allocation3], 1
    %8450 = vsyncpa [#allocation6], 1
    %8451 = vsyncpa [#allocation9], 1
    %8452 = vsyncpa [#allocation12], 1
    %8453 = vsyncpa [#allocation4], 1

</llo_original>
